<compile_context>
chip_gen: v7x
topology: tpu7x:2x2x1
jax: 0.10.0
libtpu: 0.0.40
codegen_flags: <defaults>
</compile_context>

<pallas_src>
import numpy as np

import jax
import jax.numpy as jnp
from jax.experimental import pallas as pl
from jax.experimental.pallas import tpu as pltpu

_BN_EPS = 1e-5
# Eval-mode BN with running_mean=0, running_var=1, gamma=1, beta=0 folds to a
# single positive per-channel scale; ReLU(s*z) == s*ReLU(z), so folding into
# the weights is exact.
_BN_SCALE = 1.0 / (1.0 + _BN_EPS) ** 0.5


# ----------------------------------------------------------------------------
# Pallas kernel: fused multi-input / multi-tap matmul + ReLU (+ 1x1 epilogue)
# ----------------------------------------------------------------------------
def _make_conv_kernel(num_inputs, kh_list, wo, m_out, has_epi):
    """Builds kernel(*x_refs, *w_refs, [w_epi], o_ref).

    x_refs[i]: (rows_i, K_i) bf16 slab for one image (W-only im2col).
    w_refs[i]: (kh_i, K_i, Cout) bf16 per-H-tap weights (BN folded in).
    For each input, the kh H-taps are static row-slices of the slab; all taps
    of all inputs accumulate into one f32 accumulator (MXU dots), followed by
    ReLU and an optional fused 1x1-conv epilogue (second dot) + ReLU.
    """
    def kernel(*refs):
        x_refs = refs[:num_inputs]
        w_refs = refs[num_inputs:2 * num_inputs]
        w_epi = refs[2 * num_inputs] if has_epi else None
        o_ref = refs[-1]

        acc = None
        for x_ref, w_ref, kh in zip(x_refs, w_refs, kh_list):
            for di in range(kh):                                  # static taps
                lhs = x_ref[di * wo: di * wo + m_out, :]          # static slice
                d = jnp.dot(lhs, w_ref[di],
                            preferred_element_type=jnp.float32)
                acc = d if acc is None else acc + d
        y = jnp.maximum(acc, 0.0)                                 # ReLU (f32)
        if has_epi:                                               # fused 1x1
            y = jnp.dot(y.astype(jnp.bfloat16), w_epi[...],
                        preferred_element_type=jnp.float32)
            y = jnp.maximum(y, 0.0)
        o_ref[...] = y.astype(o_ref.dtype)
    return kernel


def fused_conv(inputs, weights, kh_list, ho, wo, epi_w=None,
               out_dtype=jnp.bfloat16):
    """inputs[i]:  (N, rows_i, K_i) bf16 slabs (W-only im2col / flat patches).
       weights[i]: (kh_i, K_i, Cout) bf16 per-H-tap weights.
       epi_w:      optional (Cout, Cout2) bf16 fused 1x1-conv weight.
       returns     (N, ho*wo, Cout_final)."""
    n = int(inputs[0].shape[0])
    m_out = ho * wo
    cout = int(weights[0].shape[-1])
    cfin = int(epi_w.shape[-1]) if epi_w is not None else cout
    has_epi = epi_w is not None

    kernel = _make_conv_kernel(len(inputs), tuple(kh_list), wo, m_out, has_epi)

    # One image per grid step (256 output rows for the full-res convs);
    # inputs/outputs are squeezed to 2D blocks, weights stay VMEM-resident.
    in_specs = [pl.BlockSpec((None, int(x.shape[1]), int(x.shape[2])),
                             lambda i: (i, 0, 0)) for x in inputs]
    in_specs += [pl.BlockSpec(tuple(int(s) for s in w.shape),
                              lambda i: (0, 0, 0)) for w in weights]
    args = list(inputs) + list(weights)
    if has_epi:
        in_specs.append(pl.BlockSpec(tuple(int(s) for s in epi_w.shape),
                                     lambda i: (0, 0)))
        args.append(epi_w)

    flops = 2 * n * m_out * cout * sum(int(w.shape[0]) * int(w.shape[1])
                                       for w in weights)
    if has_epi:
        flops += 2 * n * m_out * cout * cfin
    bytes_accessed = sum(int(a.size) * np.dtype(a.dtype).itemsize for a in args)
    bytes_accessed += n * m_out * cfin * np.dtype(out_dtype).itemsize

    return pl.pallas_call(
        kernel,
        out_shape=jax.ShapeDtypeStruct((n, m_out, cfin), out_dtype),
        grid=(n,),
        in_specs=in_specs,
        out_specs=pl.BlockSpec((None, m_out, cfin), lambda i: (i, 0, 0)),
        compiler_params=pltpu.CompilerParams(
            dimension_semantics=("parallel",),
            vmem_limit_bytes=32 * 1024 * 1024),
        cost_estimate=pl.CostEstimate(flops=flops, transcendentals=0,
                                      bytes_accessed=bytes_accessed),
    )(*args)


# ----------------------------------------------------------------------------
# Glue (data movement only, stays in XLA, all bf16)
# ----------------------------------------------------------------------------
def _wtap_slab(x, kw, ph, pw):
    """NHWC -> (N, (H+2ph)*Wo, kw*C) W-only im2col for stride-1 convs.
    The kh H-taps are taken inside the kernel, so HBM traffic is ~kw x the
    activation instead of kh*kw x for a full im2col."""
    n, hgt, wdt, c = x.shape
    xp = jnp.pad(x, ((0, 0), (ph, ph), (pw, pw), (0, 0)))
    wo = wdt + 2 * pw - kw + 1
    cols = [xp[:, :, j:j + wo, :] for j in range(kw)]
    xw = jnp.concatenate(cols, axis=-1)                  # (N, H+2ph, Wo, kw*C)
    return xw.reshape(n, (hgt + 2 * ph) * wo, kw * c), wo


def _im2col(x, kh, kw, stride, pad):
    """Full im2col for the (tiny) strided convs; (N, Ho*Wo, kh*kw*C)."""
    n, hgt, wdt, c = x.shape
    ph, pw = pad
    xp = jnp.pad(x, ((0, 0), (ph, ph), (pw, pw), (0, 0)))
    ho = (hgt + 2 * ph - kh) // stride + 1
    wo = (wdt + 2 * pw - kw) // stride + 1
    cols = [xp[:, i:i + stride * ho:stride, j:j + stride * wo:stride, :]
            for i in range(kh) for j in range(kw)]
    patches = jnp.concatenate(cols, axis=-1)             # (N, Ho, Wo, kh*kw*C)
    return patches.reshape(n, ho * wo, kh * kw * c), ho, wo


def _upsample_nearest(x, ho, wo):
    n, hgt, wdt, c = x.shape
    ih = (jnp.arange(ho) * hgt) // ho
    iw = (jnp.arange(wo) * wdt) // wo
    return x[:, ih][:, :, iw]


# ----------------------------------------------------------------------------
# Weight preparation (BN folded, bf16, layouts matching the kernel)
# ----------------------------------------------------------------------------
def _tap_w(w_oihw, bn=True):
    """OIHW -> (kh, kw*Cin, Cout) bf16 (dj-major, cin-minor per tap)."""
    cout, cin, kh, kw = w_oihw.shape
    w = jnp.transpose(w_oihw, (2, 3, 1, 0)).reshape(kh, kw * cin, cout)
    if bn:
        w = w * _BN_SCALE
    return w.astype(jnp.bfloat16)


def _flat_w(w_oihw, bn=True):
    """OIHW -> (1, kh*kw*Cin, Cout) bf16 (matches full-im2col patch order)."""
    cout, cin, kh, kw = w_oihw.shape
    w = jnp.transpose(w_oihw, (2, 3, 1, 0)).reshape(1, kh * kw * cin, cout)
    if bn:
        w = w * _BN_SCALE
    return w.astype(jnp.bfloat16)


def _pw_w(w_oihw, bn=True):
    """1x1 OIHW -> (Cin, Cout) bf16 epilogue weight."""
    w = jnp.transpose(w_oihw[:, :, 0, 0], (1, 0))
    if bn:
        w = w * _BN_SCALE
    return w.astype(jnp.bfloat16)


# ----------------------------------------------------------------------------
# Parameter construction (deterministic, synthetic)
# ----------------------------------------------------------------------------
def init_params(key, c):
    h = c // 2
    shapes = {
        "fc1": (c, c, 3, 3), "fc2": (c, c, 3, 3), "fc3": (c, c, 1, 1),
        "fc4": (c, c, 1, 1), "defc": (c, c, 3, 3), "fc5": (c, c, 1, 1),
        "fc6": (h, c, 3, 3), "fc7": (h, h, 1, 3), "fc8": (h, h, 3, 1),
        "fc9": (h, h, 1, 1), "fc10": (h, c, 3, 3), "fc11": (h, h, 1, 5),
        "fc12": (h, h, 5, 1), "fc13": (h, h, 1, 1),
        "fc14": (c, 2 * c, 1, 1), "fc15": (c, 2 * c, 3, 3),
    }
    params = {}
    for name, shp in sorted(shapes.items()):
        key, sub = jax.random.split(key)
        params[name] = 0.05 * jax.random.normal(sub, shp, jnp.float32)
    return params


# ----------------------------------------------------------------------------
# Forward pass (cleaned interpretation of the PyTorch module)
# ----------------------------------------------------------------------------
@jax.jit
def self_attention_forward(x_nchw, params):
    p = params
    x = jnp.transpose(x_nchw, (0, 2, 3, 1)).astype(jnp.bfloat16)  # NCHW -> NHWC
    n, hgt, wdt, c = x.shape
    hh = c // 2

    # TODO(synk): original 3x3 convs have no padding, which makes the later
    # channel merges impossible; SAME padding (pad=1) keeps the graph formed.

    # ---- branch x1: fc1 -> (fc2 + fc3) -> (defc + fc4) ----
    slab, wo = _wtap_slab(x, 3, 1, 1)
    x1 = fused_conv([slab], [_tap_w(p["fc1"])], [3], hgt, wo)
    slab, wo = _wtap_slab(x1.reshape(n, hgt, wdt, c), 3, 1, 1)
    x1 = fused_conv([slab], [_tap_w(p["fc2"])], [3], hgt, wo,
                    epi_w=_pw_w(p["fc3"]))
    # TODO(synk): DeformConv2d is undefined in the source; approximated with
    # a plain 3x3 conv (no BN) + ReLU.
    slab, wo = _wtap_slab(x1.reshape(n, hgt, wdt, c), 3, 1, 1)
    x1 = fused_conv([slab], [_tap_w(p["defc"], bn=False)], [3], hgt, wo,
                    epi_w=_pw_w(p["fc4"]))                        # (n, H*W, c)

    # ---- x2 = relu(bn(fc5(x))): pure 1x1 matmul ----
    x2 = fused_conv([x.reshape(n, hgt * wdt, c)], [_flat_w(p["fc5"])],
                    [1], hgt, wdt)                                # (n, H*W, c)
    x2_im = x2.reshape(n, hgt, wdt, c)

    # ---- sibling fusion: fc6 and fc10 both read x2 -> single conv (Cout concat) ----
    w610 = jnp.concatenate([_tap_w(p["fc6"]), _tap_w(p["fc10"])], axis=-1)
    slab, wo = _wtap_slab(x2_im, 3, 1, 1)
    x34 = fused_conv([slab], [w610], [3], hgt, wo)
    x3_0 = x34[:, :, :hh].reshape(n, hgt, wdt, hh)
    x4_0 = x34[:, :, hh:].reshape(n, hgt, wdt, hh)

    # ---- x3 tower: fc7 (1x3, s2) -> (fc8 (3x1, s2) + fc9) ----
    pat, ho3, wo3 = _im2col(x3_0, 1, 3, 2, (0, 1))
    x3 = fused_conv([pat], [_flat_w(p["fc7"])], [1], ho3, wo3)
    pat, ho3, wo3 = _im2col(x3.reshape(n, ho3, wo3, hh), 3, 1, 2, (1, 0))
    x3 = fused_conv([pat], [_flat_w(p["fc8"])], [1], ho3, wo3,
                    epi_w=_pw_w(p["fc9"]))

    # ---- x4 tower: fc11 (1x5, s2) -> (fc12 (5x1, s2) + fc13) ----
    pat, ho4, wo4 = _im2col(x4_0, 1, 5, 2, (0, 1))
    x4 = fused_conv([pat], [_flat_w(p["fc11"])], [1], ho4, wo4)
    pat, ho4, wo4 = _im2col(x4.reshape(n, ho4, wo4, hh), 5, 1, 2, (1, 0))
    x4 = fused_conv([pat], [_flat_w(p["fc12"])], [1], ho4, wo4,
                    epi_w=_pw_w(p["fc13"]))

    # TODO(synk): torch.concat of spatially mismatched tensors is ill-defined;
    # x3/x4 are nearest-upsampled to x2's spatial size before the merge.
    x3u = _upsample_nearest(x3.reshape(n, ho3, wo3, hh), hgt, wdt)
    x4u = _upsample_nearest(x4.reshape(n, ho4, wo4, hh), hgt, wdt)
    x3u = x3u.reshape(n, hgt * wdt, hh)
    x4u = x4u.reshape(n, hgt * wdt, hh)

    # ---- fc14: 1x1 over concat([x4u, x3u, x2]) -- concat replaced by K-split ----
    w14 = (jnp.transpose(p["fc14"][:, :, 0, 0], (1, 0)) * _BN_SCALE
           ).astype(jnp.bfloat16)                                 # (2c, c)
    x5 = fused_conv([x4u, x3u, x2],
                    [w14[:hh].reshape(1, hh, c),
                     w14[hh:2 * hh].reshape(1, hh, c),
                     w14[2 * hh:].reshape(1, c, c)],
                    [1, 1, 1], hgt, wdt)                          # (n, H*W, c)

    # TODO(synk): `out` is used before assignment in the original; interpreted
    # as the x1 branch output, giving a 2*C-channel input to fc15 (no BN).
    # ---- fc15: 3x3 over concat([x5, x1]) -- concat replaced by K-split ----
    w15 = jnp.transpose(p["fc15"], (2, 3, 1, 0))                  # (3, 3, 2c, c)
    w15_x5 = w15[:, :, :c, :].reshape(3, 3 * c, c).astype(jnp.bfloat16)
    w15_x1 = w15[:, :, c:, :].reshape(3, 3 * c, c).astype(jnp.bfloat16)
    slab5, wo = _wtap_slab(x5.reshape(n, hgt, wdt, c), 3, 1, 1)
    slab1, _ = _wtap_slab(x1.reshape(n, hgt, wdt, c), 3, 1, 1)
    out = fused_conv([slab5, slab1], [w15_x5, w15_x1], [3, 3], hgt, wo,
                     out_dtype=jnp.float32)

    out = out.reshape(n, hgt, wdt, c)
    return jnp.transpose(out, (0, 3, 1, 2))                       # NHWC -> NCHW


# ----------------------------------------------------------------------------
if __name__ == "__main__":
    key = jax.random.PRNGKey(0)
    k_x, k_p = jax.random.split(key)

    N, C, H, W = 2, 16, 16, 16                   # small in_planes=16 config
    x = jax.random.normal(k_x, (N, C, H, W), jnp.float32)
    params = init_params(k_p, C)

    out = self_attention_forward(x, params)
    jax.block_until_ready(out)
    assert out.shape == (N, C, H, W), out.shape
    assert bool(jnp.all(jnp.isfinite(out)))
    print("KERNEL_OK")
</pallas_src>

<mosaic_0001>
module attributes {stable_mosaic.version = 11 : i64} {
  func.func @kernel(%arg0: i32, %arg1: memref<1x256x16xbf16, #tpu.memory_space<vmem>>, %arg2: memref<1x16x16xbf16, #tpu.memory_space<vmem>>, %arg3: memref<1x256x16xbf16, #tpu.memory_space<vmem>>) attributes {dimension_semantics = [#tpu.dimension_semantics<parallel>], iteration_bounds = array<i64: 2>, scalar_prefetch = 0 : i64, scratch_operands = 0 : i64, tpu.core_type = #tpu.core_type<tc>, window_params = [{transform_indices = @transform_0, window_bounds = array<i64: 1, 256, 16>}, {pipeline_mode = #tpu.pipeline_mode<synchronous>, transform_indices = @transform_1, window_bounds = array<i64: 1, 16, 16>}, {transform_indices = @transform_2, window_bounds = array<i64: 1, 256, 16>}]} {
    %c0 = arith.constant 0 : index
    %c0_0 = arith.constant 0 : index
    %c0_1 = arith.constant 0 : index
    %0 = vector.load %arg1[%c0, %c0_0, %c0_1] : memref<1x256x16xbf16, #tpu.memory_space<vmem>>, vector<1x256x16xbf16>
    %1 = vector.shape_cast %0 : vector<1x256x16xbf16> to vector<256x16xbf16>
    %c0_2 = arith.constant 0 : index
    %c0_3 = arith.constant 0 : index
    %c0_4 = arith.constant 0 : index
    %2 = vector.load %arg2[%c0_2, %c0_3, %c0_4] : memref<1x16x16xbf16, #tpu.memory_space<vmem>>, vector<1x16x16xbf16>
    %3 = vector.shape_cast %2 : vector<1x16x16xbf16> to vector<16x16xbf16>
    %cst = arith.constant dense<0.000000e+00> : vector<256x16xf32>
    %4 = tpu.matmul %1, %3, %cst {dimension_numbers = #tpu.dot_dimension_numbers<[1], [0], [0], [1], [0, 0, 1, 1], [], []>} : vector<256x16xbf16>, vector<16x16xbf16>, vector<256x16xf32> -> vector<256x16xf32>
    %cst_5 = arith.constant 0.000000e+00 : f32
    %5 = vector.broadcast %cst_5 : f32 to vector<256x16xf32>
    %6 = arith.maximumf %4, %5 : vector<256x16xf32>
    %7 = arith.truncf %6 : vector<256x16xf32> to vector<256x16xbf16>
    %c0_6 = arith.constant 0 : index
    %c0_7 = arith.constant 0 : index
    %c0_8 = arith.constant 0 : index
    %8 = vector.load %arg3[%c0_6, %c0_7, %c0_8] : memref<1x256x16xbf16, #tpu.memory_space<vmem>>, vector<1x256x16xbf16>
    %9 = vector.shape_cast %8 : vector<1x256x16xbf16> to vector<256x16xbf16>
    %10 = vector.shape_cast %7 : vector<256x16xbf16> to vector<1x256x16xbf16>
    tpu.vector_store %arg3[%c0_6, %c0_7, %c0_8], %10 {strides = array<i32>} : memref<1x256x16xbf16, #tpu.memory_space<vmem>>, vector<1x256x16xbf16>,
    return
  }
  func.func @transform_0(%arg0: i32) -> (i32, i32, i32) {
    %c0_i32 = arith.constant 0 : i32
    %c0_i32_0 = arith.constant 0 : i32
    %c0_i32_1 = arith.constant 0 : i32
    return %arg0, %c0_i32, %c0_i32_0 : i32, i32, i32
  }
  func.func @transform_1(%arg0: i32) -> (i32, i32, i32) {
    %c0_i32 = arith.constant 0 : i32
    %c0_i32_0 = arith.constant 0 : i32
    %c0_i32_1 = arith.constant 0 : i32
    %c0_i32_2 = arith.constant 0 : i32
    return %c0_i32, %c0_i32_0, %c0_i32_1 : i32, i32, i32
  }
  func.func @transform_2(%arg0: i32) -> (i32, i32, i32) {
    %c0_i32 = arith.constant 0 : i32
    %c0_i32_0 = arith.constant 0 : i32
    %c0_i32_1 = arith.constant 0 : i32
    return %arg0, %c0_i32, %c0_i32_0 : i32, i32, i32
  }
}

module attributes {stable_mosaic.version = 11 : i64} {
  func.func @kernel(%arg0: i32, %arg1: memref<1x288x48xbf16, #tpu.memory_space<vmem>>, %arg2: memref<3x48x16xbf16, #tpu.memory_space<vmem>>, %arg3: memref<1x256x16xbf16, #tpu.memory_space<vmem>>) attributes {dimension_semantics = [#tpu.dimension_semantics<parallel>], iteration_bounds = array<i64: 2>, scalar_prefetch = 0 : i64, scratch_operands = 0 : i64, tpu.core_type = #tpu.core_type<tc>, window_params = [{transform_indices = @transform_0, window_bounds = array<i64: 1, 288, 48>}, {pipeline_mode = #tpu.pipeline_mode<synchronous>, transform_indices = @transform_1, window_bounds = array<i64: 3, 48, 16>}, {transform_indices = @transform_2, window_bounds = array<i64: 1, 256, 16>}]} {
    %c0 = arith.constant 0 : index
    %c0_0 = arith.constant 0 : index
    %c0_1 = arith.constant 0 : index
    %0 = vector.load %arg1[%c0, %c0_0, %c0_1] : memref<1x288x48xbf16, #tpu.memory_space<vmem>>, vector<1x256x48xbf16>
    %1 = vector.shape_cast %0 : vector<1x256x48xbf16> to vector<256x48xbf16>
    %c0_2 = arith.constant 0 : index
    %c0_3 = arith.constant 0 : index
    %c0_4 = arith.constant 0 : index
    %2 = vector.load %arg2[%c0_2, %c0_3, %c0_4] : memref<3x48x16xbf16, #tpu.memory_space<vmem>>, vector<1x48x16xbf16>
    %3 = vector.shape_cast %2 : vector<1x48x16xbf16> to vector<48x16xbf16>
    %cst = arith.constant dense<0.000000e+00> : vector<256x16xf32>
    %4 = tpu.matmul %1, %3, %cst {dimension_numbers = #tpu.dot_dimension_numbers<[1], [0], [0], [1], [0, 0, 1, 1], [], []>} : vector<256x48xbf16>, vector<48x16xbf16>, vector<256x16xf32> -> vector<256x16xf32>
    %c0_5 = arith.constant 0 : index
    %c16 = arith.constant 16 : index
    %c0_6 = arith.constant 0 : index
    %5 = vector.load %arg1[%c0_5, %c16, %c0_6] : memref<1x288x48xbf16, #tpu.memory_space<vmem>>, vector<1x256x48xbf16>
    %6 = vector.shape_cast %5 : vector<1x256x48xbf16> to vector<256x48xbf16>
    %c1 = arith.constant 1 : index
    %c0_7 = arith.constant 0 : index
    %c0_8 = arith.constant 0 : index
    %7 = vector.load %arg2[%c1, %c0_7, %c0_8] : memref<3x48x16xbf16, #tpu.memory_space<vmem>>, vector<1x48x16xbf16>
    %8 = vector.shape_cast %7 : vector<1x48x16xbf16> to vector<48x16xbf16>
    %cst_9 = arith.constant dense<0.000000e+00> : vector<256x16xf32>
    %9 = tpu.matmul %6, %8, %cst_9 {dimension_numbers = #tpu.dot_dimension_numbers<[1], [0], [0], [1], [0, 0, 1, 1], [], []>} : vector<256x48xbf16>, vector<48x16xbf16>, vector<256x16xf32> -> vector<256x16xf32>
    %10 = arith.addf %4, %9 : vector<256x16xf32>
    %c0_10 = arith.constant 0 : index
    %c32 = arith.constant 32 : index
    %c0_11 = arith.constant 0 : index
    %11 = vector.load %arg1[%c0_10, %c32, %c0_11] : memref<1x288x48xbf16, #tpu.memory_space<vmem>>, vector<1x256x48xbf16>
    %12 = vector.shape_cast %11 : vector<1x256x48xbf16> to vector<256x48xbf16>
    %c2 = arith.constant 2 : index
    %c0_12 = arith.constant 0 : index
    %c0_13 = arith.constant 0 : index
    %13 = vector.load %arg2[%c2, %c0_12, %c0_13] : memref<3x48x16xbf16, #tpu.memory_space<vmem>>, vector<1x48x16xbf16>
    %14 = vector.shape_cast %13 : vector<1x48x16xbf16> to vector<48x16xbf16>
    %cst_14 = arith.constant dense<0.000000e+00> : vector<256x16xf32>
    %15 = tpu.matmul %12, %14, %cst_14 {dimension_numbers = #tpu.dot_dimension_numbers<[1], [0], [0], [1], [0, 0, 1, 1], [], []>} : vector<256x48xbf16>, vector<48x16xbf16>, vector<256x16xf32> -> vector<256x16xf32>
    %16 = arith.addf %10, %15 : vector<256x16xf32>
    %cst_15 = arith.constant 0.000000e+00 : f32
    %17 = vector.broadcast %cst_15 : f32 to vector<256x16xf32>
    %18 = arith.maximumf %16, %17 : vector<256x16xf32>
    %19 = arith.truncf %18 : vector<256x16xf32> to vector<256x16xbf16>
    %c0_16 = arith.constant 0 : index
    %c0_17 = arith.constant 0 : index
    %c0_18 = arith.constant 0 : index
    %20 = vector.load %arg3[%c0_16, %c0_17, %c0_18] : memref<1x256x16xbf16, #tpu.memory_space<vmem>>, vector<1x256x16xbf16>
    %21 = vector.shape_cast %20 : vector<1x256x16xbf16> to vector<256x16xbf16>
    %22 = vector.shape_cast %19 : vector<256x16xbf16> to vector<1x256x16xbf16>
    tpu.vector_store %arg3[%c0_16, %c0_17, %c0_18], %22 {strides = array<i32>} : memref<1x256x16xbf16, #tpu.memory_space<vmem>>, vector<1x256x16xbf16>,
    return
  }
  func.func @transform_0(%arg0: i32) -> (i32, i32, i32) {
    %c0_i32 = arith.constant 0 : i32
    %c0_i32_0 = arith.constant 0 : i32
    %c0_i32_1 = arith.constant 0 : i32
    return %arg0, %c0_i32, %c0_i32_0 : i32, i32, i32
  }
  func.func @transform_1(%arg0: i32) -> (i32, i32, i32) {
    %c0_i32 = arith.constant 0 : i32
    %c0_i32_0 = arith.constant 0 : i32
    %c0_i32_1 = arith.constant 0 : i32
    %c0_i32_2 = arith.constant 0 : i32
    return %c0_i32, %c0_i32_0, %c0_i32_1 : i32, i32, i32
  }
  func.func @transform_2(%arg0: i32) -> (i32, i32, i32) {
    %c0_i32 = arith.constant 0 : i32
    %c0_i32_0 = arith.constant 0 : i32
    %c0_i32_1 = arith.constant 0 : i32
    return %arg0, %c0_i32, %c0_i32_0 : i32, i32, i32
  }
}

module attributes {stable_mosaic.version = 11 : i64} {
  func.func @kernel(%arg0: i32, %arg1: memref<1x56x40xbf16, #tpu.memory_space<vmem>>, %arg2: memref<1x40x8xbf16, #tpu.memory_space<vmem>>, %arg3: memref<1x56x8xbf16, #tpu.memory_space<vmem>>) attributes {dimension_semantics = [#tpu.dimension_semantics<parallel>], iteration_bounds = array<i64: 2>, scalar_prefetch = 0 : i64, scratch_operands = 0 : i64, tpu.core_type = #tpu.core_type<tc>, window_params = [{transform_indices = @transform_0, window_bounds = array<i64: 1, 56, 40>}, {pipeline_mode = #tpu.pipeline_mode<synchronous>, transform_indices = @transform_1, window_bounds = array<i64: 1, 40, 8>}, {transform_indices = @transform_2, window_bounds = array<i64: 1, 56, 8>}]} {
    %c0 = arith.constant 0 : index
    %c0_0 = arith.constant 0 : index
    %c0_1 = arith.constant 0 : index
    %0 = vector.load %arg1[%c0, %c0_0, %c0_1] : memref<1x56x40xbf16, #tpu.memory_space<vmem>>, vector<1x56x40xbf16>
    %1 = vector.shape_cast %0 : vector<1x56x40xbf16> to vector<56x40xbf16>
    %c0_2 = arith.constant 0 : index
    %c0_3 = arith.constant 0 : index
    %c0_4 = arith.constant 0 : index
    %2 = vector.load %arg2[%c0_2, %c0_3, %c0_4] : memref<1x40x8xbf16, #tpu.memory_space<vmem>>, vector<1x40x8xbf16>
    %3 = vector.shape_cast %2 : vector<1x40x8xbf16> to vector<40x8xbf16>
    %cst = arith.constant dense<0.000000e+00> : vector<56x8xf32>
    %4 = tpu.matmul %1, %3, %cst {dimension_numbers = #tpu.dot_dimension_numbers<[1], [0], [0], [1], [0, 0, 1, 1], [], []>} : vector<56x40xbf16>, vector<40x8xbf16>, vector<56x8xf32> -> vector<56x8xf32>
    %cst_5 = arith.constant 0.000000e+00 : f32
    %5 = vector.broadcast %cst_5 : f32 to vector<56x8xf32>
    %6 = arith.maximumf %4, %5 : vector<56x8xf32>
    %7 = arith.truncf %6 : vector<56x8xf32> to vector<56x8xbf16>
    %c0_6 = arith.constant 0 : index
    %c0_7 = arith.constant 0 : index
    %c0_8 = arith.constant 0 : index
    %8 = vector.load %arg3[%c0_6, %c0_7, %c0_8] : memref<1x56x8xbf16, #tpu.memory_space<vmem>>, vector<1x56x8xbf16>
    %9 = vector.shape_cast %8 : vector<1x56x8xbf16> to vector<56x8xbf16>
    %10 = vector.shape_cast %7 : vector<56x8xbf16> to vector<1x56x8xbf16>
    tpu.vector_store %arg3[%c0_6, %c0_7, %c0_8], %10 {strides = array<i32>} : memref<1x56x8xbf16, #tpu.memory_space<vmem>>, vector<1x56x8xbf16>,
    return
  }
  func.func @transform_0(%arg0: i32) -> (i32, i32, i32) {
    %c0_i32 = arith.constant 0 : i32
    %c0_i32_0 = arith.constant 0 : i32
    %c0_i32_1 = arith.constant 0 : i32
    return %arg0, %c0_i32, %c0_i32_0 : i32, i32, i32
  }
  func.func @transform_1(%arg0: i32) -> (i32, i32, i32) {
    %c0_i32 = arith.constant 0 : i32
    %c0_i32_0 = arith.constant 0 : i32
    %c0_i32_1 = arith.constant 0 : i32
    %c0_i32_2 = arith.constant 0 : i32
    return %c0_i32, %c0_i32_0, %c0_i32_1 : i32, i32, i32
  }
  func.func @transform_2(%arg0: i32) -> (i32, i32, i32) {
    %c0_i32 = arith.constant 0 : i32
    %c0_i32_0 = arith.constant 0 : i32
    %c0_i32_1 = arith.constant 0 : i32
    return %arg0, %c0_i32, %c0_i32_0 : i32, i32, i32
  }
}

module attributes {stable_mosaic.version = 11 : i64} {
  func.func @kernel(%arg0: i32, %arg1: memref<1x12x40xbf16, #tpu.memory_space<vmem>>, %arg2: memref<1x40x8xbf16, #tpu.memory_space<vmem>>, %arg3: memref<8x8xbf16, #tpu.memory_space<vmem>>, %arg4: memref<1x12x8xbf16, #tpu.memory_space<vmem>>) attributes {dimension_semantics = [#tpu.dimension_semantics<parallel>], iteration_bounds = array<i64: 2>, scalar_prefetch = 0 : i64, scratch_operands = 0 : i64, tpu.core_type = #tpu.core_type<tc>, window_params = [{transform_indices = @transform_0, window_bounds = array<i64: 1, 12, 40>}, {pipeline_mode = #tpu.pipeline_mode<synchronous>, transform_indices = @transform_1, window_bounds = array<i64: 1, 40, 8>}, {pipeline_mode = #tpu.pipeline_mode<synchronous>, transform_indices = @transform_2, window_bounds = array<i64: 8, 8>}, {transform_indices = @transform_3, window_bounds = array<i64: 1, 12, 8>}]} {
    %c0 = arith.constant 0 : index
    %c0_0 = arith.constant 0 : index
    %c0_1 = arith.constant 0 : index
    %0 = vector.load %arg1[%c0, %c0_0, %c0_1] : memref<1x12x40xbf16, #tpu.memory_space<vmem>>, vector<1x12x40xbf16>
    %1 = vector.shape_cast %0 : vector<1x12x40xbf16> to vector<12x40xbf16>
    %c0_2 = arith.constant 0 : index
    %c0_3 = arith.constant 0 : index
    %c0_4 = arith.constant 0 : index
    %2 = vector.load %arg2[%c0_2, %c0_3, %c0_4] : memref<1x40x8xbf16, #tpu.memory_space<vmem>>, vector<1x40x8xbf16>
    %3 = vector.shape_cast %2 : vector<1x40x8xbf16> to vector<40x8xbf16>
    %cst = arith.constant dense<0.000000e+00> : vector<12x8xf32>
    %4 = tpu.matmul %1, %3, %cst {dimension_numbers = #tpu.dot_dimension_numbers<[1], [0], [0], [1], [0, 0, 1, 1], [], []>} : vector<12x40xbf16>, vector<40x8xbf16>, vector<12x8xf32> -> vector<12x8xf32>
    %cst_5 = arith.constant 0.000000e+00 : f32
    %5 = vector.broadcast %cst_5 : f32 to vector<12x8xf32>
    %6 = arith.maximumf %4, %5 : vector<12x8xf32>
    %7 = arith.truncf %6 : vector<12x8xf32> to vector<12x8xbf16>
    %c0_6 = arith.constant 0 : index
    %c0_7 = arith.constant 0 : index
    %8 = vector.load %arg3[%c0_6, %c0_7] : memref<8x8xbf16, #tpu.memory_space<vmem>>, vector<8x8xbf16>
    %cst_8 = arith.constant dense<0.000000e+00> : vector<12x8xf32>
    %9 = tpu.matmul %7, %8, %cst_8 {dimension_numbers = #tpu.dot_dimension_numbers<[1], [0], [0], [1], [0, 0, 1, 1], [], []>} : vector<12x8xbf16>, vector<8x8xbf16>, vector<12x8xf32> -> vector<12x8xf32>
    %cst_9 = arith.constant 0.000000e+00 : f32
    %10 = vector.broadcast %cst_9 : f32 to vector<12x8xf32>
    %11 = arith.maximumf %9, %10 : vector<12x8xf32>
    %12 = arith.truncf %11 : vector<12x8xf32> to vector<12x8xbf16>
    %c0_10 = arith.constant 0 : index
    %c0_11 = arith.constant 0 : index
    %c0_12 = arith.constant 0 : index
    %13 = vector.load %arg4[%c0_10, %c0_11, %c0_12] : memref<1x12x8xbf16, #tpu.memory_space<vmem>>, vector<1x12x8xbf16>
    %14 = vector.shape_cast %13 : vector<1x12x8xbf16> to vector<12x8xbf16>
    %15 = vector.shape_cast %12 : vector<12x8xbf16> to vector<1x12x8xbf16>
    tpu.vector_store %arg4[%c0_10, %c0_11, %c0_12], %15 {strides = array<i32>} : memref<1x12x8xbf16, #tpu.memory_space<vmem>>, vector<1x12x8xbf16>,
    return
  }
  func.func @transform_0(%arg0: i32) -> (i32, i32, i32) {
    %c0_i32 = arith.constant 0 : i32
    %c0_i32_0 = arith.constant 0 : i32
    %c0_i32_1 = arith.constant 0 : i32
    return %arg0, %c0_i32, %c0_i32_0 : i32, i32, i32
  }
  func.func @transform_1(%arg0: i32) -> (i32, i32, i32) {
    %c0_i32 = arith.constant 0 : i32
    %c0_i32_0 = arith.constant 0 : i32
    %c0_i32_1 = arith.constant 0 : i32
    %c0_i32_2 = arith.constant 0 : i32
    return %c0_i32, %c0_i32_0, %c0_i32_1 : i32, i32, i32
  }
  func.func @transform_2(%arg0: i32) -> (i32, i32) {
    %c0_i32 = arith.constant 0 : i32
    %c0_i32_0 = arith.constant 0 : i32
    %c0_i32_1 = arith.constant 0 : i32
    return %c0_i32, %c0_i32_0 : i32, i32
  }
  func.func @transform_3(%arg0: i32) -> (i32, i32, i32) {
    %c0_i32 = arith.constant 0 : i32
    %c0_i32_0 = arith.constant 0 : i32
    %c0_i32_1 = arith.constant 0 : i32
    return %arg0, %c0_i32, %c0_i32_0 : i32, i32, i32
  }
}

module attributes {stable_mosaic.version = 11 : i64} {
  func.func @kernel(%arg0: i32, %arg1: memref<1x64x24xbf16, #tpu.memory_space<vmem>>, %arg2: memref<1x24x8xbf16, #tpu.memory_space<vmem>>, %arg3: memref<1x64x8xbf16, #tpu.memory_space<vmem>>) attributes {dimension_semantics = [#tpu.dimension_semantics<parallel>], iteration_bounds = array<i64: 2>, scalar_prefetch = 0 : i64, scratch_operands = 0 : i64, tpu.core_type = #tpu.core_type<tc>, window_params = [{transform_indices = @transform_0, window_bounds = array<i64: 1, 64, 24>}, {pipeline_mode = #tpu.pipeline_mode<synchronous>, transform_indices = @transform_1, window_bounds = array<i64: 1, 24, 8>}, {transform_indices = @transform_2, window_bounds = array<i64: 1, 64, 8>}]} {
    %c0 = arith.constant 0 : index
    %c0_0 = arith.constant 0 : index
    %c0_1 = arith.constant 0 : index
    %0 = vector.load %arg1[%c0, %c0_0, %c0_1] : memref<1x64x24xbf16, #tpu.memory_space<vmem>>, vector<1x64x24xbf16>
    %1 = vector.shape_cast %0 : vector<1x64x24xbf16> to vector<64x24xbf16>
    %c0_2 = arith.constant 0 : index
    %c0_3 = arith.constant 0 : index
    %c0_4 = arith.constant 0 : index
    %2 = vector.load %arg2[%c0_2, %c0_3, %c0_4] : memref<1x24x8xbf16, #tpu.memory_space<vmem>>, vector<1x24x8xbf16>
    %3 = vector.shape_cast %2 : vector<1x24x8xbf16> to vector<24x8xbf16>
    %cst = arith.constant dense<0.000000e+00> : vector<64x8xf32>
    %4 = tpu.matmul %1, %3, %cst {dimension_numbers = #tpu.dot_dimension_numbers<[1], [0], [0], [1], [0, 0, 1, 1], [], []>} : vector<64x24xbf16>, vector<24x8xbf16>, vector<64x8xf32> -> vector<64x8xf32>
    %cst_5 = arith.constant 0.000000e+00 : f32
    %5 = vector.broadcast %cst_5 : f32 to vector<64x8xf32>
    %6 = arith.maximumf %4, %5 : vector<64x8xf32>
    %7 = arith.truncf %6 : vector<64x8xf32> to vector<64x8xbf16>
    %c0_6 = arith.constant 0 : index
    %c0_7 = arith.constant 0 : index
    %c0_8 = arith.constant 0 : index
    %8 = vector.load %arg3[%c0_6, %c0_7, %c0_8] : memref<1x64x8xbf16, #tpu.memory_space<vmem>>, vector<1x64x8xbf16>
    %9 = vector.shape_cast %8 : vector<1x64x8xbf16> to vector<64x8xbf16>
    %10 = vector.shape_cast %7 : vector<64x8xbf16> to vector<1x64x8xbf16>
    tpu.vector_store %arg3[%c0_6, %c0_7, %c0_8], %10 {strides = array<i32>} : memref<1x64x8xbf16, #tpu.memory_space<vmem>>, vector<1x64x8xbf16>,
    return
  }
  func.func @transform_0(%arg0: i32) -> (i32, i32, i32) {
    %c0_i32 = arith.constant 0 : i32
    %c0_i32_0 = arith.constant 0 : i32
    %c0_i32_1 = arith.constant 0 : i32
    return %arg0, %c0_i32, %c0_i32_0 : i32, i32, i32
  }
  func.func @transform_1(%arg0: i32) -> (i32, i32, i32) {
    %c0_i32 = arith.constant 0 : i32
    %c0_i32_0 = arith.constant 0 : i32
    %c0_i32_1 = arith.constant 0 : i32
    %c0_i32_2 = arith.constant 0 : i32
    return %c0_i32, %c0_i32_0, %c0_i32_1 : i32, i32, i32
  }
  func.func @transform_2(%arg0: i32) -> (i32, i32, i32) {
    %c0_i32 = arith.constant 0 : i32
    %c0_i32_0 = arith.constant 0 : i32
    %c0_i32_1 = arith.constant 0 : i32
    return %arg0, %c0_i32, %c0_i32_0 : i32, i32, i32
  }
}

module attributes {stable_mosaic.version = 11 : i64} {
  func.func @kernel(%arg0: i32, %arg1: memref<1x16x24xbf16, #tpu.memory_space<vmem>>, %arg2: memref<1x24x8xbf16, #tpu.memory_space<vmem>>, %arg3: memref<8x8xbf16, #tpu.memory_space<vmem>>, %arg4: memref<1x16x8xbf16, #tpu.memory_space<vmem>>) attributes {dimension_semantics = [#tpu.dimension_semantics<parallel>], iteration_bounds = array<i64: 2>, scalar_prefetch = 0 : i64, scratch_operands = 0 : i64, tpu.core_type = #tpu.core_type<tc>, window_params = [{transform_indices = @transform_0, window_bounds = array<i64: 1, 16, 24>}, {pipeline_mode = #tpu.pipeline_mode<synchronous>, transform_indices = @transform_1, window_bounds = array<i64: 1, 24, 8>}, {pipeline_mode = #tpu.pipeline_mode<synchronous>, transform_indices = @transform_2, window_bounds = array<i64: 8, 8>}, {transform_indices = @transform_3, window_bounds = array<i64: 1, 16, 8>}]} {
    %c0 = arith.constant 0 : index
    %c0_0 = arith.constant 0 : index
    %c0_1 = arith.constant 0 : index
    %0 = vector.load %arg1[%c0, %c0_0, %c0_1] : memref<1x16x24xbf16, #tpu.memory_space<vmem>>, vector<1x16x24xbf16>
    %1 = vector.shape_cast %0 : vector<1x16x24xbf16> to vector<16x24xbf16>
    %c0_2 = arith.constant 0 : index
    %c0_3 = arith.constant 0 : index
    %c0_4 = arith.constant 0 : index
    %2 = vector.load %arg2[%c0_2, %c0_3, %c0_4] : memref<1x24x8xbf16, #tpu.memory_space<vmem>>, vector<1x24x8xbf16>
    %3 = vector.shape_cast %2 : vector<1x24x8xbf16> to vector<24x8xbf16>
    %cst = arith.constant dense<0.000000e+00> : vector<16x8xf32>
    %4 = tpu.matmul %1, %3, %cst {dimension_numbers = #tpu.dot_dimension_numbers<[1], [0], [0], [1], [0, 0, 1, 1], [], []>} : vector<16x24xbf16>, vector<24x8xbf16>, vector<16x8xf32> -> vector<16x8xf32>
    %cst_5 = arith.constant 0.000000e+00 : f32
    %5 = vector.broadcast %cst_5 : f32 to vector<16x8xf32>
    %6 = arith.maximumf %4, %5 : vector<16x8xf32>
    %7 = arith.truncf %6 : vector<16x8xf32> to vector<16x8xbf16>
    %c0_6 = arith.constant 0 : index
    %c0_7 = arith.constant 0 : index
    %8 = vector.load %arg3[%c0_6, %c0_7] : memref<8x8xbf16, #tpu.memory_space<vmem>>, vector<8x8xbf16>
    %cst_8 = arith.constant dense<0.000000e+00> : vector<16x8xf32>
    %9 = tpu.matmul %7, %8, %cst_8 {dimension_numbers = #tpu.dot_dimension_numbers<[1], [0], [0], [1], [0, 0, 1, 1], [], []>} : vector<16x8xbf16>, vector<8x8xbf16>, vector<16x8xf32> -> vector<16x8xf32>
    %cst_9 = arith.constant 0.000000e+00 : f32
    %10 = vector.broadcast %cst_9 : f32 to vector<16x8xf32>
    %11 = arith.maximumf %9, %10 : vector<16x8xf32>
    %12 = arith.truncf %11 : vector<16x8xf32> to vector<16x8xbf16>
    %c0_10 = arith.constant 0 : index
    %c0_11 = arith.constant 0 : index
    %c0_12 = arith.constant 0 : index
    %13 = vector.load %arg4[%c0_10, %c0_11, %c0_12] : memref<1x16x8xbf16, #tpu.memory_space<vmem>>, vector<1x16x8xbf16>
    %14 = vector.shape_cast %13 : vector<1x16x8xbf16> to vector<16x8xbf16>
    %15 = vector.shape_cast %12 : vector<16x8xbf16> to vector<1x16x8xbf16>
    tpu.vector_store %arg4[%c0_10, %c0_11, %c0_12], %15 {strides = array<i32>} : memref<1x16x8xbf16, #tpu.memory_space<vmem>>, vector<1x16x8xbf16>,
    return
  }
  func.func @transform_0(%arg0: i32) -> (i32, i32, i32) {
    %c0_i32 = arith.constant 0 : i32
    %c0_i32_0 = arith.constant 0 : i32
    %c0_i32_1 = arith.constant 0 : i32
    return %arg0, %c0_i32, %c0_i32_0 : i32, i32, i32
  }
  func.func @transform_1(%arg0: i32) -> (i32, i32, i32) {
    %c0_i32 = arith.constant 0 : i32
    %c0_i32_0 = arith.constant 0 : i32
    %c0_i32_1 = arith.constant 0 : i32
    %c0_i32_2 = arith.constant 0 : i32
    return %c0_i32, %c0_i32_0, %c0_i32_1 : i32, i32, i32
  }
  func.func @transform_2(%arg0: i32) -> (i32, i32) {
    %c0_i32 = arith.constant 0 : i32
    %c0_i32_0 = arith.constant 0 : i32
    %c0_i32_1 = arith.constant 0 : i32
    return %c0_i32, %c0_i32_0 : i32, i32
  }
  func.func @transform_3(%arg0: i32) -> (i32, i32, i32) {
    %c0_i32 = arith.constant 0 : i32
    %c0_i32_0 = arith.constant 0 : i32
    %c0_i32_1 = arith.constant 0 : i32
    return %arg0, %c0_i32, %c0_i32_0 : i32, i32, i32
  }
}

module attributes {stable_mosaic.version = 11 : i64} {
  func.func @kernel(%arg0: i32, %arg1: memref<1x256x8xbf16, #tpu.memory_space<vmem>>, %arg2: memref<1x256x8xbf16, #tpu.memory_space<vmem>>, %arg3: memref<1x256x16xbf16, #tpu.memory_space<vmem>>, %arg4: memref<1x8x16xbf16, #tpu.memory_space<vmem>>, %arg5: memref<1x8x16xbf16, #tpu.memory_space<vmem>>, %arg6: memref<1x16x16xbf16, #tpu.memory_space<vmem>>, %arg7: memref<1x256x16xbf16, #tpu.memory_space<vmem>>) attributes {dimension_semantics = [#tpu.dimension_semantics<parallel>], iteration_bounds = array<i64: 2>, scalar_prefetch = 0 : i64, scratch_operands = 0 : i64, tpu.core_type = #tpu.core_type<tc>, window_params = [{transform_indices = @transform_0, window_bounds = array<i64: 1, 256, 8>}, {transform_indices = @transform_1, window_bounds = array<i64: 1, 256, 8>}, {transform_indices = @transform_2, window_bounds = array<i64: 1, 256, 16>}, {pipeline_mode = #tpu.pipeline_mode<synchronous>, transform_indices = @transform_3, window_bounds = array<i64: 1, 8, 16>}, {pipeline_mode = #tpu.pipeline_mode<synchronous>, transform_indices = @transform_4, window_bounds = array<i64: 1, 8, 16>}, {pipeline_mode = #tpu.pipeline_mode<synchronous>, transform_indices = @transform_5, window_bounds = array<i64: 1, 16, 16>}, {transform_indices = @transform_6, window_bounds = array<i64: 1, 256, 16>}]} {
    %c0 = arith.constant 0 : index
    %c0_0 = arith.constant 0 : index
    %c0_1 = arith.constant 0 : index
    %0 = vector.load %arg1[%c0, %c0_0, %c0_1] : memref<1x256x8xbf16, #tpu.memory_space<vmem>>, vector<1x256x8xbf16>
    %1 = vector.shape_cast %0 : vector<1x256x8xbf16> to vector<256x8xbf16>
    %c0_2 = arith.constant 0 : index
    %c0_3 = arith.constant 0 : index
    %c0_4 = arith.constant 0 : index
    %2 = vector.load %arg4[%c0_2, %c0_3, %c0_4] : memref<1x8x16xbf16, #tpu.memory_space<vmem>>, vector<1x8x16xbf16>
    %3 = vector.shape_cast %2 : vector<1x8x16xbf16> to vector<8x16xbf16>
    %cst = arith.constant dense<0.000000e+00> : vector<256x16xf32>
    %4 = tpu.matmul %1, %3, %cst {dimension_numbers = #tpu.dot_dimension_numbers<[1], [0], [0], [1], [0, 0, 1, 1], [], []>} : vector<256x8xbf16>, vector<8x16xbf16>, vector<256x16xf32> -> vector<256x16xf32>
    %c0_5 = arith.constant 0 : index
    %c0_6 = arith.constant 0 : index
    %c0_7 = arith.constant 0 : index
    %5 = vector.load %arg2[%c0_5, %c0_6, %c0_7] : memref<1x256x8xbf16, #tpu.memory_space<vmem>>, vector<1x256x8xbf16>
    %6 = vector.shape_cast %5 : vector<1x256x8xbf16> to vector<256x8xbf16>
    %c0_8 = arith.constant 0 : index
    %c0_9 = arith.constant 0 : index
    %c0_10 = arith.constant 0 : index
    %7 = vector.load %arg5[%c0_8, %c0_9, %c0_10] : memref<1x8x16xbf16, #tpu.memory_space<vmem>>, vector<1x8x16xbf16>
    %8 = vector.shape_cast %7 : vector<1x8x16xbf16> to vector<8x16xbf16>
    %cst_11 = arith.constant dense<0.000000e+00> : vector<256x16xf32>
    %9 = tpu.matmul %6, %8, %cst_11 {dimension_numbers = #tpu.dot_dimension_numbers<[1], [0], [0], [1], [0, 0, 1, 1], [], []>} : vector<256x8xbf16>, vector<8x16xbf16>, vector<256x16xf32> -> vector<256x16xf32>
    %10 = arith.addf %4, %9 : vector<256x16xf32>
    %c0_12 = arith.constant 0 : index
    %c0_13 = arith.constant 0 : index
    %c0_14 = arith.constant 0 : index
    %11 = vector.load %arg3[%c0_12, %c0_13, %c0_14] : memref<1x256x16xbf16, #tpu.memory_space<vmem>>, vector<1x256x16xbf16>
    %12 = vector.shape_cast %11 : vector<1x256x16xbf16> to vector<256x16xbf16>
    %c0_15 = arith.constant 0 : index
    %c0_16 = arith.constant 0 : index
    %c0_17 = arith.constant 0 : index
    %13 = vector.load %arg6[%c0_15, %c0_16, %c0_17] : memref<1x16x16xbf16, #tpu.memory_space<vmem>>, vector<1x16x16xbf16>
    %14 = vector.shape_cast %13 : vector<1x16x16xbf16> to vector<16x16xbf16>
    %cst_18 = arith.constant dense<0.000000e+00> : vector<256x16xf32>
    %15 = tpu.matmul %12, %14, %cst_18 {dimension_numbers = #tpu.dot_dimension_numbers<[1], [0], [0], [1], [0, 0, 1, 1], [], []>} : vector<256x16xbf16>, vector<16x16xbf16>, vector<256x16xf32> -> vector<256x16xf32>
    %16 = arith.addf %10, %15 : vector<256x16xf32>
    %cst_19 = arith.constant 0.000000e+00 : f32
    %17 = vector.broadcast %cst_19 : f32 to vector<256x16xf32>
    %18 = arith.maximumf %16, %17 : vector<256x16xf32>
    %19 = arith.truncf %18 : vector<256x16xf32> to vector<256x16xbf16>
    %c0_20 = arith.constant 0 : index
    %c0_21 = arith.constant 0 : index
    %c0_22 = arith.constant 0 : index
    %20 = vector.load %arg7[%c0_20, %c0_21, %c0_22] : memref<1x256x16xbf16, #tpu.memory_space<vmem>>, vector<1x256x16xbf16>
    %21 = vector.shape_cast %20 : vector<1x256x16xbf16> to vector<256x16xbf16>
    %22 = vector.shape_cast %19 : vector<256x16xbf16> to vector<1x256x16xbf16>
    tpu.vector_store %arg7[%c0_20, %c0_21, %c0_22], %22 {strides = array<i32>} : memref<1x256x16xbf16, #tpu.memory_space<vmem>>, vector<1x256x16xbf16>,
    return
  }
  func.func @transform_0(%arg0: i32) -> (i32, i32, i32) {
    %c0_i32 = arith.constant 0 : i32
    %c0_i32_0 = arith.constant 0 : i32
    %c0_i32_1 = arith.constant 0 : i32
    return %arg0, %c0_i32, %c0_i32_0 : i32, i32, i32
  }
  func.func @transform_1(%arg0: i32) -> (i32, i32, i32) {
    %c0_i32 = arith.constant 0 : i32
    %c0_i32_0 = arith.constant 0 : i32
    %c0_i32_1 = arith.constant 0 : i32
    return %arg0, %c0_i32, %c0_i32_0 : i32, i32, i32
  }
  func.func @transform_2(%arg0: i32) -> (i32, i32, i32) {
    %c0_i32 = arith.constant 0 : i32
    %c0_i32_0 = arith.constant 0 : i32
    %c0_i32_1 = arith.constant 0 : i32
    return %arg0, %c0_i32, %c0_i32_0 : i32, i32, i32
  }
  func.func @transform_3(%arg0: i32) -> (i32, i32, i32) {
    %c0_i32 = arith.constant 0 : i32
    %c0_i32_0 = arith.constant 0 : i32
    %c0_i32_1 = arith.constant 0 : i32
    %c0_i32_2 = arith.constant 0 : i32
    return %c0_i32, %c0_i32_0, %c0_i32_1 : i32, i32, i32
  }
  func.func @transform_4(%arg0: i32) -> (i32, i32, i32) {
    %c0_i32 = arith.constant 0 : i32
    %c0_i32_0 = arith.constant 0 : i32
    %c0_i32_1 = arith.constant 0 : i32
    %c0_i32_2 = arith.constant 0 : i32
    return %c0_i32, %c0_i32_0, %c0_i32_1 : i32, i32, i32
  }
  func.func @transform_5(%arg0: i32) -> (i32, i32, i32) {
    %c0_i32 = arith.constant 0 : i32
    %c0_i32_0 = arith.constant 0 : i32
    %c0_i32_1 = arith.constant 0 : i32
    %c0_i32_2 = arith.constant 0 : i32
    return %c0_i32, %c0_i32_0, %c0_i32_1 : i32, i32, i32
  }
  func.func @transform_6(%arg0: i32) -> (i32, i32, i32) {
    %c0_i32 = arith.constant 0 : i32
    %c0_i32_0 = arith.constant 0 : i32
    %c0_i32_1 = arith.constant 0 : i32
    return %arg0, %c0_i32, %c0_i32_0 : i32, i32, i32
  }
}

module attributes {stable_mosaic.version = 11 : i64} {
  func.func @kernel(%arg0: i32, %arg1: memref<1x288x48xbf16, #tpu.memory_space<vmem>>, %arg2: memref<1x288x48xbf16, #tpu.memory_space<vmem>>, %arg3: memref<3x48x16xbf16, #tpu.memory_space<vmem>>, %arg4: memref<3x48x16xbf16, #tpu.memory_space<vmem>>, %arg5: memref<1x256x16xf32, #tpu.memory_space<vmem>>) attributes {dimension_semantics = [#tpu.dimension_semantics<parallel>], iteration_bounds = array<i64: 2>, scalar_prefetch = 0 : i64, scratch_operands = 0 : i64, tpu.core_type = #tpu.core_type<tc>, window_params = [{transform_indices = @transform_0, window_bounds = array<i64: 1, 288, 48>}, {transform_indices = @transform_1, window_bounds = array<i64: 1, 288, 48>}, {pipeline_mode = #tpu.pipeline_mode<synchronous>, transform_indices = @transform_2, window_bounds = array<i64: 3, 48, 16>}, {pipeline_mode = #tpu.pipeline_mode<synchronous>, transform_indices = @transform_3, window_bounds = array<i64: 3, 48, 16>}, {transform_indices = @transform_4, window_bounds = array<i64: 1, 256, 16>}]} {
    %c0 = arith.constant 0 : index
    %c0_0 = arith.constant 0 : index
    %c0_1 = arith.constant 0 : index
    %0 = vector.load %arg1[%c0, %c0_0, %c0_1] : memref<1x288x48xbf16, #tpu.memory_space<vmem>>, vector<1x256x48xbf16>
    %1 = vector.shape_cast %0 : vector<1x256x48xbf16> to vector<256x48xbf16>
    %c0_2 = arith.constant 0 : index
    %c0_3 = arith.constant 0 : index
    %c0_4 = arith.constant 0 : index
    %2 = vector.load %arg3[%c0_2, %c0_3, %c0_4] : memref<3x48x16xbf16, #tpu.memory_space<vmem>>, vector<1x48x16xbf16>
    %3 = vector.shape_cast %2 : vector<1x48x16xbf16> to vector<48x16xbf16>
    %cst = arith.constant dense<0.000000e+00> : vector<256x16xf32>
    %4 = tpu.matmul %1, %3, %cst {dimension_numbers = #tpu.dot_dimension_numbers<[1], [0], [0], [1], [0, 0, 1, 1], [], []>} : vector<256x48xbf16>, vector<48x16xbf16>, vector<256x16xf32> -> vector<256x16xf32>
    %c0_5 = arith.constant 0 : index
    %c16 = arith.constant 16 : index
    %c0_6 = arith.constant 0 : index
    %5 = vector.load %arg1[%c0_5, %c16, %c0_6] : memref<1x288x48xbf16, #tpu.memory_space<vmem>>, vector<1x256x48xbf16>
    %6 = vector.shape_cast %5 : vector<1x256x48xbf16> to vector<256x48xbf16>
    %c1 = arith.constant 1 : index
    %c0_7 = arith.constant 0 : index
    %c0_8 = arith.constant 0 : index
    %7 = vector.load %arg3[%c1, %c0_7, %c0_8] : memref<3x48x16xbf16, #tpu.memory_space<vmem>>, vector<1x48x16xbf16>
    %8 = vector.shape_cast %7 : vector<1x48x16xbf16> to vector<48x16xbf16>
    %cst_9 = arith.constant dense<0.000000e+00> : vector<256x16xf32>
    %9 = tpu.matmul %6, %8, %cst_9 {dimension_numbers = #tpu.dot_dimension_numbers<[1], [0], [0], [1], [0, 0, 1, 1], [], []>} : vector<256x48xbf16>, vector<48x16xbf16>, vector<256x16xf32> -> vector<256x16xf32>
    %10 = arith.addf %4, %9 : vector<256x16xf32>
    %c0_10 = arith.constant 0 : index
    %c32 = arith.constant 32 : index
    %c0_11 = arith.constant 0 : index
    %11 = vector.load %arg1[%c0_10, %c32, %c0_11] : memref<1x288x48xbf16, #tpu.memory_space<vmem>>, vector<1x256x48xbf16>
    %12 = vector.shape_cast %11 : vector<1x256x48xbf16> to vector<256x48xbf16>
    %c2 = arith.constant 2 : index
    %c0_12 = arith.constant 0 : index
    %c0_13 = arith.constant 0 : index
    %13 = vector.load %arg3[%c2, %c0_12, %c0_13] : memref<3x48x16xbf16, #tpu.memory_space<vmem>>, vector<1x48x16xbf16>
    %14 = vector.shape_cast %13 : vector<1x48x16xbf16> to vector<48x16xbf16>
    %cst_14 = arith.constant dense<0.000000e+00> : vector<256x16xf32>
    %15 = tpu.matmul %12, %14, %cst_14 {dimension_numbers = #tpu.dot_dimension_numbers<[1], [0], [0], [1], [0, 0, 1, 1], [], []>} : vector<256x48xbf16>, vector<48x16xbf16>, vector<256x16xf32> -> vector<256x16xf32>
    %16 = arith.addf %10, %15 : vector<256x16xf32>
    %c0_15 = arith.constant 0 : index
    %c0_16 = arith.constant 0 : index
    %c0_17 = arith.constant 0 : index
    %17 = vector.load %arg2[%c0_15, %c0_16, %c0_17] : memref<1x288x48xbf16, #tpu.memory_space<vmem>>, vector<1x256x48xbf16>
    %18 = vector.shape_cast %17 : vector<1x256x48xbf16> to vector<256x48xbf16>
    %c0_18 = arith.constant 0 : index
    %c0_19 = arith.constant 0 : index
    %c0_20 = arith.constant 0 : index
    %19 = vector.load %arg4[%c0_18, %c0_19, %c0_20] : memref<3x48x16xbf16, #tpu.memory_space<vmem>>, vector<1x48x16xbf16>
    %20 = vector.shape_cast %19 : vector<1x48x16xbf16> to vector<48x16xbf16>
    %cst_21 = arith.constant dense<0.000000e+00> : vector<256x16xf32>
    %21 = tpu.matmul %18, %20, %cst_21 {dimension_numbers = #tpu.dot_dimension_numbers<[1], [0], [0], [1], [0, 0, 1, 1], [], []>} : vector<256x48xbf16>, vector<48x16xbf16>, vector<256x16xf32> -> vector<256x16xf32>
    %22 = arith.addf %16, %21 : vector<256x16xf32>
    %c0_22 = arith.constant 0 : index
    %c16_23 = arith.constant 16 : index
    %c0_24 = arith.constant 0 : index
    %23 = vector.load %arg2[%c0_22, %c16_23, %c0_24] : memref<1x288x48xbf16, #tpu.memory_space<vmem>>, vector<1x256x48xbf16>
    %24 = vector.shape_cast %23 : vector<1x256x48xbf16> to vector<256x48xbf16>
    %c1_25 = arith.constant 1 : index
    %c0_26 = arith.constant 0 : index
    %c0_27 = arith.constant 0 : index
    %25 = vector.load %arg4[%c1_25, %c0_26, %c0_27] : memref<3x48x16xbf16, #tpu.memory_space<vmem>>, vector<1x48x16xbf16>
    %26 = vector.shape_cast %25 : vector<1x48x16xbf16> to vector<48x16xbf16>
    %cst_28 = arith.constant dense<0.000000e+00> : vector<256x16xf32>
    %27 = tpu.matmul %24, %26, %cst_28 {dimension_numbers = #tpu.dot_dimension_numbers<[1], [0], [0], [1], [0, 0, 1, 1], [], []>} : vector<256x48xbf16>, vector<48x16xbf16>, vector<256x16xf32> -> vector<256x16xf32>
    %28 = arith.addf %22, %27 : vector<256x16xf32>
    %c0_29 = arith.constant 0 : index
    %c32_30 = arith.constant 32 : index
    %c0_31 = arith.constant 0 : index
    %29 = vector.load %arg2[%c0_29, %c32_30, %c0_31] : memref<1x288x48xbf16, #tpu.memory_space<vmem>>, vector<1x256x48xbf16>
    %30 = vector.shape_cast %29 : vector<1x256x48xbf16> to vector<256x48xbf16>
    %c2_32 = arith.constant 2 : index
    %c0_33 = arith.constant 0 : index
    %c0_34 = arith.constant 0 : index
    %31 = vector.load %arg4[%c2_32, %c0_33, %c0_34] : memref<3x48x16xbf16, #tpu.memory_space<vmem>>, vector<1x48x16xbf16>
    %32 = vector.shape_cast %31 : vector<1x48x16xbf16> to vector<48x16xbf16>
    %cst_35 = arith.constant dense<0.000000e+00> : vector<256x16xf32>
    %33 = tpu.matmul %30, %32, %cst_35 {dimension_numbers = #tpu.dot_dimension_numbers<[1], [0], [0], [1], [0, 0, 1, 1], [], []>} : vector<256x48xbf16>, vector<48x16xbf16>, vector<256x16xf32> -> vector<256x16xf32>
    %34 = arith.addf %28, %33 : vector<256x16xf32>
    %cst_36 = arith.constant 0.000000e+00 : f32
    %35 = vector.broadcast %cst_36 : f32 to vector<256x16xf32>
    %36 = arith.maximumf %34, %35 : vector<256x16xf32>
    %c0_37 = arith.constant 0 : index
    %c0_38 = arith.constant 0 : index
    %c0_39 = arith.constant 0 : index
    %37 = vector.load %arg5[%c0_37, %c0_38, %c0_39] : memref<1x256x16xf32, #tpu.memory_space<vmem>>, vector<1x256x16xf32>
    %38 = vector.shape_cast %37 : vector<1x256x16xf32> to vector<256x16xf32>
    %39 = vector.shape_cast %36 : vector<256x16xf32> to vector<1x256x16xf32>
    tpu.vector_store %arg5[%c0_37, %c0_38, %c0_39], %39 {strides = array<i32>} : memref<1x256x16xf32, #tpu.memory_space<vmem>>, vector<1x256x16xf32>,
    return
  }
  func.func @transform_0(%arg0: i32) -> (i32, i32, i32) {
    %c0_i32 = arith.constant 0 : i32
    %c0_i32_0 = arith.constant 0 : i32
    %c0_i32_1 = arith.constant 0 : i32
    return %arg0, %c0_i32, %c0_i32_0 : i32, i32, i32
  }
  func.func @transform_1(%arg0: i32) -> (i32, i32, i32) {
    %c0_i32 = arith.constant 0 : i32
    %c0_i32_0 = arith.constant 0 : i32
    %c0_i32_1 = arith.constant 0 : i32
    return %arg0, %c0_i32, %c0_i32_0 : i32, i32, i32
  }
  func.func @transform_2(%arg0: i32) -> (i32, i32, i32) {
    %c0_i32 = arith.constant 0 : i32
    %c0_i32_0 = arith.constant 0 : i32
    %c0_i32_1 = arith.constant 0 : i32
    %c0_i32_2 = arith.constant 0 : i32
    return %c0_i32, %c0_i32_0, %c0_i32_1 : i32, i32, i32
  }
  func.func @transform_3(%arg0: i32) -> (i32, i32, i32) {
    %c0_i32 = arith.constant 0 : i32
    %c0_i32_0 = arith.constant 0 : i32
    %c0_i32_1 = arith.constant 0 : i32
    %c0_i32_2 = arith.constant 0 : i32
    return %c0_i32, %c0_i32_0, %c0_i32_1 : i32, i32, i32
  }
  func.func @transform_4(%arg0: i32) -> (i32, i32, i32) {
    %c0_i32 = arith.constant 0 : i32
    %c0_i32_0 = arith.constant 0 : i32
    %c0_i32_1 = arith.constant 0 : i32
    return %arg0, %c0_i32, %c0_i32_0 : i32, i32, i32
  }
}

module attributes {stable_mosaic.version = 11 : i64} {
  func.func @kernel(%arg0: i32, %arg1: memref<1x288x48xbf16, #tpu.memory_space<vmem>>, %arg2: memref<3x48x16xbf16, #tpu.memory_space<vmem>>, %arg3: memref<16x16xbf16, #tpu.memory_space<vmem>>, %arg4: memref<1x256x16xbf16, #tpu.memory_space<vmem>>) attributes {dimension_semantics = [#tpu.dimension_semantics<parallel>], iteration_bounds = array<i64: 2>, scalar_prefetch = 0 : i64, scratch_operands = 0 : i64, tpu.core_type = #tpu.core_type<tc>, window_params = [{transform_indices = @transform_0, window_bounds = array<i64: 1, 288, 48>}, {pipeline_mode = #tpu.pipeline_mode<synchronous>, transform_indices = @transform_1, window_bounds = array<i64: 3, 48, 16>}, {pipeline_mode = #tpu.pipeline_mode<synchronous>, transform_indices = @transform_2, window_bounds = array<i64: 16, 16>}, {transform_indices = @transform_3, window_bounds = array<i64: 1, 256, 16>}]} {
    %c0 = arith.constant 0 : index
    %c0_0 = arith.constant 0 : index
    %c0_1 = arith.constant 0 : index
    %0 = vector.load %arg1[%c0, %c0_0, %c0_1] : memref<1x288x48xbf16, #tpu.memory_space<vmem>>, vector<1x256x48xbf16>
    %1 = vector.shape_cast %0 : vector<1x256x48xbf16> to vector<256x48xbf16>
    %c0_2 = arith.constant 0 : index
    %c0_3 = arith.constant 0 : index
    %c0_4 = arith.constant 0 : index
    %2 = vector.load %arg2[%c0_2, %c0_3, %c0_4] : memref<3x48x16xbf16, #tpu.memory_space<vmem>>, vector<1x48x16xbf16>
    %3 = vector.shape_cast %2 : vector<1x48x16xbf16> to vector<48x16xbf16>
    %cst = arith.constant dense<0.000000e+00> : vector<256x16xf32>
    %4 = tpu.matmul %1, %3, %cst {dimension_numbers = #tpu.dot_dimension_numbers<[1], [0], [0], [1], [0, 0, 1, 1], [], []>} : vector<256x48xbf16>, vector<48x16xbf16>, vector<256x16xf32> -> vector<256x16xf32>
    %c0_5 = arith.constant 0 : index
    %c16 = arith.constant 16 : index
    %c0_6 = arith.constant 0 : index
    %5 = vector.load %arg1[%c0_5, %c16, %c0_6] : memref<1x288x48xbf16, #tpu.memory_space<vmem>>, vector<1x256x48xbf16>
    %6 = vector.shape_cast %5 : vector<1x256x48xbf16> to vector<256x48xbf16>
    %c1 = arith.constant 1 : index
    %c0_7 = arith.constant 0 : index
    %c0_8 = arith.constant 0 : index
    %7 = vector.load %arg2[%c1, %c0_7, %c0_8] : memref<3x48x16xbf16, #tpu.memory_space<vmem>>, vector<1x48x16xbf16>
    %8 = vector.shape_cast %7 : vector<1x48x16xbf16> to vector<48x16xbf16>
    %cst_9 = arith.constant dense<0.000000e+00> : vector<256x16xf32>
    %9 = tpu.matmul %6, %8, %cst_9 {dimension_numbers = #tpu.dot_dimension_numbers<[1], [0], [0], [1], [0, 0, 1, 1], [], []>} : vector<256x48xbf16>, vector<48x16xbf16>, vector<256x16xf32> -> vector<256x16xf32>
    %10 = arith.addf %4, %9 : vector<256x16xf32>
    %c0_10 = arith.constant 0 : index
    %c32 = arith.constant 32 : index
    %c0_11 = arith.constant 0 : index
    %11 = vector.load %arg1[%c0_10, %c32, %c0_11] : memref<1x288x48xbf16, #tpu.memory_space<vmem>>, vector<1x256x48xbf16>
    %12 = vector.shape_cast %11 : vector<1x256x48xbf16> to vector<256x48xbf16>
    %c2 = arith.constant 2 : index
    %c0_12 = arith.constant 0 : index
    %c0_13 = arith.constant 0 : index
    %13 = vector.load %arg2[%c2, %c0_12, %c0_13] : memref<3x48x16xbf16, #tpu.memory_space<vmem>>, vector<1x48x16xbf16>
    %14 = vector.shape_cast %13 : vector<1x48x16xbf16> to vector<48x16xbf16>
    %cst_14 = arith.constant dense<0.000000e+00> : vector<256x16xf32>
    %15 = tpu.matmul %12, %14, %cst_14 {dimension_numbers = #tpu.dot_dimension_numbers<[1], [0], [0], [1], [0, 0, 1, 1], [], []>} : vector<256x48xbf16>, vector<48x16xbf16>, vector<256x16xf32> -> vector<256x16xf32>
    %16 = arith.addf %10, %15 : vector<256x16xf32>
    %cst_15 = arith.constant 0.000000e+00 : f32
    %17 = vector.broadcast %cst_15 : f32 to vector<256x16xf32>
    %18 = arith.maximumf %16, %17 : vector<256x16xf32>
    %19 = arith.truncf %18 : vector<256x16xf32> to vector<256x16xbf16>
    %c0_16 = arith.constant 0 : index
    %c0_17 = arith.constant 0 : index
    %20 = vector.load %arg3[%c0_16, %c0_17] : memref<16x16xbf16, #tpu.memory_space<vmem>>, vector<16x16xbf16>
    %cst_18 = arith.constant dense<0.000000e+00> : vector<256x16xf32>
    %21 = tpu.matmul %19, %20, %cst_18 {dimension_numbers = #tpu.dot_dimension_numbers<[1], [0], [0], [1], [0, 0, 1, 1], [], []>} : vector<256x16xbf16>, vector<16x16xbf16>, vector<256x16xf32> -> vector<256x16xf32>
    %cst_19 = arith.constant 0.000000e+00 : f32
    %22 = vector.broadcast %cst_19 : f32 to vector<256x16xf32>
    %23 = arith.maximumf %21, %22 : vector<256x16xf32>
    %24 = arith.truncf %23 : vector<256x16xf32> to vector<256x16xbf16>
    %c0_20 = arith.constant 0 : index
    %c0_21 = arith.constant 0 : index
    %c0_22 = arith.constant 0 : index
    %25 = vector.load %arg4[%c0_20, %c0_21, %c0_22] : memref<1x256x16xbf16, #tpu.memory_space<vmem>>, vector<1x256x16xbf16>
    %26 = vector.shape_cast %25 : vector<1x256x16xbf16> to vector<256x16xbf16>
    %27 = vector.shape_cast %24 : vector<256x16xbf16> to vector<1x256x16xbf16>
    tpu.vector_store %arg4[%c0_20, %c0_21, %c0_22], %27 {strides = array<i32>} : memref<1x256x16xbf16, #tpu.memory_space<vmem>>, vector<1x256x16xbf16>,
    return
  }
  func.func @transform_0(%arg0: i32) -> (i32, i32, i32) {
    %c0_i32 = arith.constant 0 : i32
    %c0_i32_0 = arith.constant 0 : i32
    %c0_i32_1 = arith.constant 0 : i32
    return %arg0, %c0_i32, %c0_i32_0 : i32, i32, i32
  }
  func.func @transform_1(%arg0: i32) -> (i32, i32, i32) {
    %c0_i32 = arith.constant 0 : i32
    %c0_i32_0 = arith.constant 0 : i32
    %c0_i32_1 = arith.constant 0 : i32
    %c0_i32_2 = arith.constant 0 : i32
    return %c0_i32, %c0_i32_0, %c0_i32_1 : i32, i32, i32
  }
  func.func @transform_2(%arg0: i32) -> (i32, i32) {
    %c0_i32 = arith.constant 0 : i32
    %c0_i32_0 = arith.constant 0 : i32
    %c0_i32_1 = arith.constant 0 : i32
    return %c0_i32, %c0_i32_0 : i32, i32
  }
  func.func @transform_3(%arg0: i32) -> (i32, i32, i32) {
    %c0_i32 = arith.constant 0 : i32
    %c0_i32_0 = arith.constant 0 : i32
    %c0_i32_1 = arith.constant 0 : i32
    return %arg0, %c0_i32, %c0_i32_0 : i32, i32, i32
  }
}

</mosaic_0001>

<llo_original>
// kernel: self_attention_forward.14
$region0: #{self_attention_forward.14}
  #allocation0 [shape = 'u32[]', space=smem, size = 0x4, offset = 0x4, fixed_abs, tag = 'smem constant byte address 0x4 - core index']
  #allocation1 [shape = 'u32[144,128]{1,0:T(1,128)}', space=vmem, size = 0x12000, scoped, tag = 'internal scratch']
  %s0 = inlined_call_operand.vmem [shape: bf16[2,256,16], index: 0, kind: input, shape index: {}]
  %s1 = inlined_call_operand.vmem [shape: bf16[1,16,16], index: 1, kind: input, shape index: {}]
  %s2 = inlined_call_operand.vmem [shape: bf16[2,256,16], index: 2, kind: output, shape index: {}]
  %s3 = sld [smem:[#allocation0]]
  $region41: #{self_attention_forward.14} parent=0
    _
  %s5 = ssub.s32 1, %s3
  %s6 = scalar_select 0, %s5, %s3
  loop: start=0, step=1, limit=4
  $region2: #{self_attention_forward.14} parent=0 // loop_pre_header
    _
  $region3: #{self_attention_forward.14} parent=0 // loop_header
    %s8 = sphi 0, %s12
    %p9 = scmp.ge.s32.totalorder %s8, 4
    %s18 = sphi 0, %s20
    %s21 = sphi 0, %s18
    %s22 = sphi 0, %s21
    %s38 = sphi 0, %s22
    %s42 = sphi 0, %s42
    %s44 = sphi 0, %s42
    %s45 = sphi 0, %s44
    %s59 = sphi 0, %s45
    %s65 = sphi 0, %s67
    %s68 = sphi 0, %s65
    %s69 = sphi 0, %s68
    %s85 = sphi 0, %s69
  $region4: #{self_attention_forward.14} parent=0 // loop_header_branch
    %11 = sbr.rel (%p9) target = $region8
  $region5: #{self_attention_forward.14} parent=0 // loop_body
    %s13 = ssub.s32 %s8, 1
    %s14 = ssub.s32 %s8, 2
    %s15 = sadd.s32 %s8, 1
    %s16 = ssub.s32 %s8, %s15
    %p17 = scmp.eq.s32.totalorder %s16, 0
    %s19 = sadd.s32 %s18, 1
    %s20 = scalar_select %p17, %s18, %s19
    %p23 = pneg %p17
    %p24 = scmp.eq.s32.totalorder %s8, 1
    %p25 = por %p23, %p24
    %p26 = scmp.ne.s32.totalorder %s18, %s21
    %p27 = scmp.eq.s32.totalorder %s8, 0
    %p28 = por %p26, %p27
    %p29 = scmp.ne.s32.totalorder %s18, %s21
    %p30 = scmp.eq.s32.totalorder %s13, 1
    %p31 = por %p29, %p30
    %p32 = scmp.ne.s32.totalorder %s21, %s22
    %p33 = scmp.eq.s32.totalorder %s13, 0
    %p34 = por %p32, %p33
    %p35 = scmp.ne.s32.totalorder %s21, %s22
    %p36 = scmp.eq.s32.totalorder %s14, 1
    %p37 = por %p35, %p36
    %p39 = scmp.ne.s32.totalorder %s22, %s38
    %p40 = scmp.eq.s32.totalorder %s14, 0
    %p41 = por %p39, %p40
    %s43 = sadd.s32 %s42, 1
    %p46 = scmp.eq.s32.totalorder %s8, 1
    %p47 = scmp.ne.s32.totalorder %s42, %s44
    %p48 = scmp.eq.s32.totalorder %s8, 0
    %p49 = por %p47, %p48
    %p50 = scmp.ne.s32.totalorder %s42, %s44
    %p51 = scmp.eq.s32.totalorder %s13, 1
    %p52 = por %p50, %p51
    %p53 = scmp.ne.s32.totalorder %s44, %s45
    %p54 = scmp.eq.s32.totalorder %s13, 0
    %p55 = por %p53, %p54
    %p56 = scmp.ne.s32.totalorder %s44, %s45
    %p57 = scmp.eq.s32.totalorder %s14, 1
    %p58 = por %p56, %p57
    %p60 = scmp.ne.s32.totalorder %s45, %s59
    %p61 = scmp.eq.s32.totalorder %s14, 0
    %p62 = por %p60, %p61
    %s63 = ssub.s32 %s8, %s15
    %p64 = scmp.eq.s32.totalorder %s63, 0
    %s66 = sadd.s32 %s65, 1
    %s67 = scalar_select %p64, %s65, %s66
    %p70 = pneg %p64
    %p71 = scmp.eq.s32.totalorder %s8, 1
    %p72 = por %p70, %p71
    %p73 = scmp.ne.s32.totalorder %s65, %s68
    %p74 = scmp.eq.s32.totalorder %s8, 0
    %p75 = por %p73, %p74
    %p76 = scmp.ne.s32.totalorder %s65, %s68
    %p77 = scmp.eq.s32.totalorder %s13, 1
    %p78 = por %p76, %p77
    %p79 = scmp.ne.s32.totalorder %s68, %s69
    %p80 = scmp.eq.s32.totalorder %s13, 0
    %p81 = por %p79, %p80
    %p82 = scmp.ne.s32.totalorder %s68, %s69
    %p83 = scmp.eq.s32.totalorder %s14, 1
    %p84 = por %p82, %p83
    %p86 = scmp.ne.s32.totalorder %s69, %s85
    %p87 = scmp.eq.s32.totalorder %s14, 0
    %p88 = por %p86, %p87
    %p89 = scmp.le.s32.totalorder 1, %s8
    %p90 = scmp.lt.s32.totalorder %s8, 3
    %p91 = pnand %p89, %p90
    %p92 = pneg %p91
    // Predicated region
    $region9: #{self_attention_forward.14} parent=5 // pred_check
      _
    $region10: #{self_attention_forward.14} parent=5 // pred_check_branch
      %94 = sbr.rel (%p91) target = $region12
    $region11: #{self_attention_forward.14} parent=5 // pred_region
      %s95 = ssub.s32 %s8, 1
      // Predicated region
      $region13: #{self_attention_forward.14} parent=11 // pred_check
        %p96 = pneg %p55
      $region14: #{self_attention_forward.14} parent=11 // pred_check_branch
        %98 = sbr.rel (%p96) target = $region16
      $region15: #{self_attention_forward.14} parent=11 // pred_region
        _
      $region16: #{self_attention_forward.14} parent=11 // pred_fallthru
        _
    $region12: #{self_attention_forward.14} parent=5 // pred_fallthru
      _
    %p99 = scmp.lt.s32.totalorder %s8, 2
    // Predicated region
    $region17: #{self_attention_forward.14} parent=5 // pred_check
      %p100 = pneg %p99
    $region18: #{self_attention_forward.14} parent=5 // pred_check_branch
      %102 = sbr.rel (%p100) target = $region20
    $region19: #{self_attention_forward.14} parent=5 // pred_region
      // Predicated region
      $region21: #{self_attention_forward.14} parent=19 // pred_check
        %p103 = pneg %p28
      $region22: #{self_attention_forward.14} parent=19 // pred_check_branch
        %105 = sbr.rel (%p103) target = $region24
      $region23: #{self_attention_forward.14} parent=19 // pred_region
        %p106 = scmp.lt.s32.totalorder %s8, 1
        %s107 = scalar_select %p106, %s8, 1
        %s108 = smul.addr %s107, 32
        %s109 = smul.addr %s108, 4
        %s110 = scalar_lea.vmem %s0, %s109
      $region24: #{self_attention_forward.14} parent=19 // pred_fallthru
        _
    $region20: #{self_attention_forward.14} parent=5 // pred_fallthru
      _
    %p111 = scmp.le.s32.totalorder 1, %s8
    %p112 = scmp.lt.s32.totalorder %s8, 3
    %p113 = pnand %p111, %p112
    %p114 = pneg %p113
    // Predicated region
    $region25: #{self_attention_forward.14} parent=5 // pred_check
      _
    $region26: #{self_attention_forward.14} parent=5 // pred_check_branch
      %116 = sbr.rel (%p113) target = $region28
    $region27: #{self_attention_forward.14} parent=5 // pred_region
      %s117 = ssub.s32 %s8, 1
      %p118 = scmp.lt.s32.totalorder %s13, 1
      %s119 = scalar_select %p118, %s13, 1
      %s120 = smul.addr %s119, 32
      %s121 = smul.addr %s120, 4
      %s122 = scalar_lea.vmem %s0, %s121
      %p123 = pneg %p34
      %p124 = pneg %p31
      %p125 = pneg %p55
      %p126 = pneg %p52
      %p127 = pneg %p81
      %p128 = pneg %p78
      %p129 = scmp.lt.s32.totalorder %s13, 1
      %s130 = scalar_select %p129, %s13, 1
      %s131 = smul.addr %s130, 32
      %s132 = smul.addr %s131, 4
      %s133 = scalar_lea.vmem %s2, %s132
      %p134 = scmp.lt.s32.totalorder %s13, 1
      %s135 = scalar_select %p134, %s13, 1
      %s136 = smul.addr %s135, 32
      %s137 = smul.addr %s136, 4
      %s138 = scalar_lea.vmem %s0, %s137
      %p139 = scmp.lt.s32.totalorder %s13, 1
      %s140 = scalar_select %p139, %s13, 1
      %s141 = smul.addr %s140, 32
      %s142 = smul.addr %s141, 4
      %s143 = scalar_lea.vmem %s2, %s142
      %v145 = vld [vmem:[%s138] sm:$0xf]
      %v146 = vld [vmem:[%s138 + $0x4] sm:$0xf]
      %v147 = vld [vmem:[%s138 + $0x8] sm:$0xf]
      %v148 = vld [vmem:[%s138 + $0xc] sm:$0xf]
      %v149 = vld [vmem:[%s138 + $0x10] sm:$0xf]
      %v150 = vld [vmem:[%s138 + $0x14] sm:$0xf]
      %v151 = vld [vmem:[%s138 + $0x18] sm:$0xf]
      %v152 = vld [vmem:[%s138 + $0x1c] sm:$0xf]
      %v153 = vld [vmem:[%s138 + $0x20] sm:$0xf]
      %v154 = vld [vmem:[%s138 + $0x24] sm:$0xf]
      %v155 = vld [vmem:[%s138 + $0x28] sm:$0xf]
      %v156 = vld [vmem:[%s138 + $0x2c] sm:$0xf]
      %v157 = vld [vmem:[%s138 + $0x30] sm:$0xf]
      %v158 = vld [vmem:[%s138 + $0x34] sm:$0xf]
      %v159 = vld [vmem:[%s138 + $0x38] sm:$0xf]
      %v160 = vld [vmem:[%s138 + $0x3c] sm:$0xf]
      %v161 = vld [vmem:[%s138 + $0x40] sm:$0xf]
      %v162 = vld [vmem:[%s138 + $0x44] sm:$0xf]
      %v163 = vld [vmem:[%s138 + $0x48] sm:$0xf]
      %v164 = vld [vmem:[%s138 + $0x4c] sm:$0xf]
      %v165 = vld [vmem:[%s138 + $0x50] sm:$0xf]
      %v166 = vld [vmem:[%s138 + $0x54] sm:$0xf]
      %v167 = vld [vmem:[%s138 + $0x58] sm:$0xf]
      %v168 = vld [vmem:[%s138 + $0x5c] sm:$0xf]
      %v169 = vld [vmem:[%s138 + $0x60] sm:$0xf]
      %v170 = vld [vmem:[%s138 + $0x64] sm:$0xf]
      %v171 = vld [vmem:[%s138 + $0x68] sm:$0xf]
      %v172 = vld [vmem:[%s138 + $0x6c] sm:$0xf]
      %v173 = vld [vmem:[%s138 + $0x70] sm:$0xf]
      %v174 = vld [vmem:[%s138 + $0x74] sm:$0xf]
      %v175 = vld [vmem:[%s138 + $0x78] sm:$0xf]
      %v176 = vld [vmem:[%s138 + $0x7c] sm:$0xf]
      %v177 = vld [vmem:[%s1] sm:$0xf]
      %v178 = vld [vmem:[%s1 + $0x4] sm:$0xf]
      %v211 = vunpack.c.l.b16 %v145
      %v212 = vunpack.c.l.b16 %v146
      %v213 = vunpack.c.l.b16 %v147
      %v214 = vunpack.c.l.b16 %v148
      %v215 = vunpack.c.l.b16 %v149
      %v216 = vunpack.c.l.b16 %v150
      %v217 = vunpack.c.l.b16 %v151
      %v218 = vunpack.c.l.b16 %v152
      %v219 = vunpack.c.l.b16 %v153
      %v220 = vunpack.c.l.b16 %v154
      %v221 = vunpack.c.l.b16 %v155
      %v222 = vunpack.c.l.b16 %v156
      %v223 = vunpack.c.l.b16 %v157
      %v224 = vunpack.c.l.b16 %v158
      %v225 = vunpack.c.l.b16 %v159
      %v226 = vunpack.c.l.b16 %v160
      %v227 = vunpack.c.l.b16 %v161
      %v228 = vunpack.c.l.b16 %v162
      %v229 = vunpack.c.l.b16 %v163
      %v230 = vunpack.c.l.b16 %v164
      %v231 = vunpack.c.l.b16 %v165
      %v232 = vunpack.c.l.b16 %v166
      %v233 = vunpack.c.l.b16 %v167
      %v234 = vunpack.c.l.b16 %v168
      %v235 = vunpack.c.l.b16 %v169
      %v236 = vunpack.c.l.b16 %v170
      %v237 = vunpack.c.l.b16 %v171
      %v238 = vunpack.c.l.b16 %v172
      %v239 = vunpack.c.l.b16 %v173
      %v240 = vunpack.c.l.b16 %v174
      %v241 = vunpack.c.l.b16 %v175
      %v242 = vunpack.c.l.b16 %v176
      %v243 = vpack.c.b16 %v212, %v211
      %v244 = vpack.c.b16 %v214, %v213
      %v245 = vpack.c.b16 %v216, %v215
      %v246 = vpack.c.b16 %v218, %v217
      %v247 = vpack.c.b16 %v220, %v219
      %v248 = vpack.c.b16 %v222, %v221
      %v249 = vpack.c.b16 %v224, %v223
      %v250 = vpack.c.b16 %v226, %v225
      %v251 = vpack.c.b16 %v228, %v227
      %v252 = vpack.c.b16 %v230, %v229
      %v253 = vpack.c.b16 %v232, %v231
      %v254 = vpack.c.b16 %v234, %v233
      %v255 = vpack.c.b16 %v236, %v235
      %v256 = vpack.c.b16 %v238, %v237
      %v257 = vpack.c.b16 %v240, %v239
      %v258 = vpack.c.b16 %v242, %v241
      %v261 = vunpack.c.l.b16 %v177
      %v262 = vunpack.c.l.b16 %v178
      %v263 = vpack.c.b16 %v262, %v261
      %vm265 = vcmask 130048
      %v267 = vsel %vm265, %v243, 0
      %v270 = vsel %vm265, %v244, 0
      %v273 = vsel %vm265, %v245, 0
      %v276 = vsel %vm265, %v246, 0
      %v279 = vsel %vm265, %v247, 0
      %v282 = vsel %vm265, %v248, 0
      %v285 = vsel %vm265, %v249, 0
      %v288 = vsel %vm265, %v250, 0
      %v291 = vsel %vm265, %v251, 0
      %v294 = vsel %vm265, %v252, 0
      %v297 = vsel %vm265, %v253, 0
      %v300 = vsel %vm265, %v254, 0
      %v303 = vsel %vm265, %v255, 0
      %v306 = vsel %vm265, %v256, 0
      %v309 = vsel %vm265, %v257, 0
      %v312 = vsel %vm265, %v258, 0
      %314 = vmatprep.subr.bf16.mxu0 0
      %315 = vmatpush1.bf16.msra.mxu0 %v263
      %316 = vmatprep.subr.bf16.mxu0 0
      %317 = vmatpush1.bf16.msra.mxu0 0
      %318 = vmatprep.subr.bf16.mxu0 0
      %319 = vmatpush1.bf16.msra.mxu0 0
      %320 = vmatprep.subr.bf16.mxu0 0
      %321 = vmatpush1.bf16.msra.mxu0 0
      %322 = vmatprep.subr.bf16.mxu0 0
      %323 = vmatpush1.bf16.msra.mxu0 0
      %324 = vmatprep.subr.bf16.mxu0 0
      %325 = vmatpush1.bf16.msra.mxu0 0
      %326 = vmatprep.subr.bf16.mxu0 0
      %327 = vmatpush1.bf16.msra.mxu0 0
      %328 = vmatprep.subr.bf16.mxu0 0
      %329 = vmatpush1.bf16.msra.mxu0 0
      %330 = vmatprep.subr.bf16.mxu0 0
      %331 = vmatpush1.bf16.msra.mxu0 0
      %332 = vmatprep.subr.bf16.mxu0 0
      %333 = vmatpush1.bf16.msra.mxu0 0
      %334 = vmatprep.subr.bf16.mxu0 0
      %335 = vmatpush1.bf16.msra.mxu0 0
      %336 = vmatprep.subr.bf16.mxu0 0
      %337 = vmatpush1.bf16.msra.mxu0 0
      %338 = vmatprep.subr.bf16.mxu0 0
      %339 = vmatpush1.bf16.msra.mxu0 0
      %340 = vmatprep.subr.bf16.mxu0 0
      %341 = vmatpush1.bf16.msra.mxu0 0
      %342 = vmatprep.subr.bf16.mxu0 0
      %343 = vmatpush1.bf16.msra.mxu0 0
      %344 = vmatprep.subr.bf16.mxu0 0
      %345 = vmatpush1.bf16.msra.mxu0 0
      %346 = vmatprep.mubr.bf16.mxu0 0
      %347 = vmatmul.mubr.bf16.gmra.mrb[0].mxu0 %v267
      %v348 = vpop.f32.mrb[0].mxu0
      %v349 = vadd.f32 0.0, %v348
      %v350 = vpop.f32.mrb[0].mxu0
      %v351 = vpop.f32.mrb[0].mxu0
      %v352 = vadd.f32 0.0, %v351
      %v353 = vpop.f32.mrb[0].mxu0
      %354 = vmatprep.mubr.bf16.mxu0 0
      %355 = vmatmul.mubr.bf16.gmra.mrb[0].mxu0 %v270
      %v356 = vpop.f32.mrb[0].mxu0
      %v357 = vadd.f32 0.0, %v356
      %v358 = vpop.f32.mrb[0].mxu0
      %v359 = vpop.f32.mrb[0].mxu0
      %v360 = vadd.f32 0.0, %v359
      %v361 = vpop.f32.mrb[0].mxu0
      %362 = vmatprep.mubr.bf16.mxu0 0
      %363 = vmatmul.mubr.bf16.gmra.mrb[0].mxu0 %v273
      %v364 = vpop.f32.mrb[0].mxu0
      %v365 = vadd.f32 0.0, %v364
      %v366 = vpop.f32.mrb[0].mxu0
      %v367 = vpop.f32.mrb[0].mxu0
      %v368 = vadd.f32 0.0, %v367
      %v369 = vpop.f32.mrb[0].mxu0
      %370 = vmatprep.mubr.bf16.mxu0 0
      %371 = vmatmul.mubr.bf16.gmra.mrb[0].mxu0 %v276
      %v372 = vpop.f32.mrb[0].mxu0
      %v373 = vadd.f32 0.0, %v372
      %v374 = vpop.f32.mrb[0].mxu0
      %v375 = vpop.f32.mrb[0].mxu0
      %v376 = vadd.f32 0.0, %v375
      %v377 = vpop.f32.mrb[0].mxu0
      %378 = vmatprep.mubr.bf16.mxu0 0
      %379 = vmatmul.mubr.bf16.gmra.mrb[0].mxu0 %v279
      %v380 = vpop.f32.mrb[0].mxu0
      %v381 = vadd.f32 0.0, %v380
      %v382 = vpop.f32.mrb[0].mxu0
      %v383 = vpop.f32.mrb[0].mxu0
      %v384 = vadd.f32 0.0, %v383
      %v385 = vpop.f32.mrb[0].mxu0
      %386 = vmatprep.mubr.bf16.mxu0 0
      %387 = vmatmul.mubr.bf16.gmra.mrb[0].mxu0 %v282
      %v388 = vpop.f32.mrb[0].mxu0
      %v389 = vadd.f32 0.0, %v388
      %v390 = vpop.f32.mrb[0].mxu0
      %v391 = vpop.f32.mrb[0].mxu0
      %v392 = vadd.f32 0.0, %v391
      %v393 = vpop.f32.mrb[0].mxu0
      %394 = vmatprep.mubr.bf16.mxu0 0
      %395 = vmatmul.mubr.bf16.gmra.mrb[0].mxu0 %v285
      %v396 = vpop.f32.mrb[0].mxu0
      %v397 = vadd.f32 0.0, %v396
      %v398 = vpop.f32.mrb[0].mxu0
      %v399 = vpop.f32.mrb[0].mxu0
      %v400 = vadd.f32 0.0, %v399
      %v401 = vpop.f32.mrb[0].mxu0
      %402 = vmatprep.mubr.bf16.mxu0 0
      %403 = vmatmul.mubr.bf16.gmra.mrb[0].mxu0 %v288
      %v404 = vpop.f32.mrb[0].mxu0
      %v405 = vadd.f32 0.0, %v404
      %v406 = vpop.f32.mrb[0].mxu0
      %v407 = vpop.f32.mrb[0].mxu0
      %v408 = vadd.f32 0.0, %v407
      %v409 = vpop.f32.mrb[0].mxu0
      %410 = vmatprep.mubr.bf16.mxu0 0
      %411 = vmatmul.mubr.bf16.gmra.mrb[0].mxu0 %v291
      %v412 = vpop.f32.mrb[0].mxu0
      %v413 = vadd.f32 0.0, %v412
      %v414 = vpop.f32.mrb[0].mxu0
      %v415 = vpop.f32.mrb[0].mxu0
      %v416 = vadd.f32 0.0, %v415
      %v417 = vpop.f32.mrb[0].mxu0
      %418 = vmatprep.mubr.bf16.mxu0 0
      %419 = vmatmul.mubr.bf16.gmra.mrb[0].mxu0 %v294
      %v420 = vpop.f32.mrb[0].mxu0
      %v421 = vadd.f32 0.0, %v420
      %v422 = vpop.f32.mrb[0].mxu0
      %v423 = vpop.f32.mrb[0].mxu0
      %v424 = vadd.f32 0.0, %v423
      %v425 = vpop.f32.mrb[0].mxu0
      %426 = vmatprep.mubr.bf16.mxu0 0
      %427 = vmatmul.mubr.bf16.gmra.mrb[0].mxu0 %v297
      %v428 = vpop.f32.mrb[0].mxu0
      %v429 = vadd.f32 0.0, %v428
      %v430 = vpop.f32.mrb[0].mxu0
      %v431 = vpop.f32.mrb[0].mxu0
      %v432 = vadd.f32 0.0, %v431
      %v433 = vpop.f32.mrb[0].mxu0
      %434 = vmatprep.mubr.bf16.mxu0 0
      %435 = vmatmul.mubr.bf16.gmra.mrb[0].mxu0 %v300
      %v436 = vpop.f32.mrb[0].mxu0
      %v437 = vadd.f32 0.0, %v436
      %v438 = vpop.f32.mrb[0].mxu0
      %v439 = vpop.f32.mrb[0].mxu0
      %v440 = vadd.f32 0.0, %v439
      %v441 = vpop.f32.mrb[0].mxu0
      %442 = vmatprep.mubr.bf16.mxu0 0
      %443 = vmatmul.mubr.bf16.gmra.mrb[0].mxu0 %v303
      %v444 = vpop.f32.mrb[0].mxu0
      %v445 = vadd.f32 0.0, %v444
      %v446 = vpop.f32.mrb[0].mxu0
      %v447 = vpop.f32.mrb[0].mxu0
      %v448 = vadd.f32 0.0, %v447
      %v449 = vpop.f32.mrb[0].mxu0
      %450 = vmatprep.mubr.bf16.mxu0 0
      %451 = vmatmul.mubr.bf16.gmra.mrb[0].mxu0 %v306
      %v452 = vpop.f32.mrb[0].mxu0
      %v453 = vadd.f32 0.0, %v452
      %v454 = vpop.f32.mrb[0].mxu0
      %v455 = vpop.f32.mrb[0].mxu0
      %v456 = vadd.f32 0.0, %v455
      %v457 = vpop.f32.mrb[0].mxu0
      %458 = vmatprep.mubr.bf16.mxu0 0
      %459 = vmatmul.mubr.bf16.gmra.mrb[0].mxu0 %v309
      %v460 = vpop.f32.mrb[0].mxu0
      %v461 = vadd.f32 0.0, %v460
      %v462 = vpop.f32.mrb[0].mxu0
      %v463 = vpop.f32.mrb[0].mxu0
      %v464 = vadd.f32 0.0, %v463
      %v465 = vpop.f32.mrb[0].mxu0
      %466 = vmatprep.mubr.bf16.mxu0 0
      %467 = vmatmul.mubr.bf16.gmra.mrb[0].mxu0 %v312
      %v468 = vpop.f32.mrb[0].mxu0
      %v469 = vadd.f32 0.0, %v468
      %v470 = vpop.f32.mrb[0].mxu0
      %v471 = vpop.f32.mrb[0].mxu0
      %v472 = vadd.f32 0.0, %v471
      %v473 = vpop.f32.mrb[0].mxu0
      %474 = vdwg.mxu0
      %v475 = vmax.f32 %v349, 0.0
      %v476 = vmax.f32 %v352, 0.0
      %v477 = vmax.f32 %v357, 0.0
      %v478 = vmax.f32 %v360, 0.0
      %v479 = vmax.f32 %v365, 0.0
      %v480 = vmax.f32 %v368, 0.0
      %v481 = vmax.f32 %v373, 0.0
      %v482 = vmax.f32 %v376, 0.0
      %v483 = vmax.f32 %v381, 0.0
      %v484 = vmax.f32 %v384, 0.0
      %v485 = vmax.f32 %v389, 0.0
      %v486 = vmax.f32 %v392, 0.0
      %v487 = vmax.f32 %v397, 0.0
      %v488 = vmax.f32 %v400, 0.0
      %v489 = vmax.f32 %v405, 0.0
      %v490 = vmax.f32 %v408, 0.0
      %v491 = vmax.f32 %v413, 0.0
      %v492 = vmax.f32 %v416, 0.0
      %v493 = vmax.f32 %v421, 0.0
      %v494 = vmax.f32 %v424, 0.0
      %v495 = vmax.f32 %v429, 0.0
      %v496 = vmax.f32 %v432, 0.0
      %v497 = vmax.f32 %v437, 0.0
      %v498 = vmax.f32 %v440, 0.0
      %v499 = vmax.f32 %v445, 0.0
      %v500 = vmax.f32 %v448, 0.0
      %v501 = vmax.f32 %v453, 0.0
      %v502 = vmax.f32 %v456, 0.0
      %v503 = vmax.f32 %v461, 0.0
      %v504 = vmax.f32 %v464, 0.0
      %v505 = vmax.f32 %v469, 0.0
      %v506 = vmax.f32 %v472, 0.0
      %v507 = vpack.c.bf16 %v476, %v475
      %v508 = vpack.c.bf16 %v478, %v477
      %v509 = vpack.c.bf16 %v480, %v479
      %v510 = vpack.c.bf16 %v482, %v481
      %v511 = vpack.c.bf16 %v484, %v483
      %v512 = vpack.c.bf16 %v486, %v485
      %v513 = vpack.c.bf16 %v488, %v487
      %v514 = vpack.c.bf16 %v490, %v489
      %v515 = vpack.c.bf16 %v492, %v491
      %v516 = vpack.c.bf16 %v494, %v493
      %v517 = vpack.c.bf16 %v496, %v495
      %v518 = vpack.c.bf16 %v498, %v497
      %v519 = vpack.c.bf16 %v500, %v499
      %v520 = vpack.c.bf16 %v502, %v501
      %v521 = vpack.c.bf16 %v504, %v503
      %v522 = vpack.c.bf16 %v506, %v505
      %v539 = vunpack.c.l.b16 %v507
      %v540 = vunpack.c.h.b16 %v507
      %v541 = vunpack.c.l.b16 %v508
      %v542 = vunpack.c.h.b16 %v508
      %v543 = vunpack.c.l.b16 %v509
      %v544 = vunpack.c.h.b16 %v509
      %v545 = vunpack.c.l.b16 %v510
      %v546 = vunpack.c.h.b16 %v510
      %v547 = vunpack.c.l.b16 %v511
      %v548 = vunpack.c.h.b16 %v511
      %v549 = vunpack.c.l.b16 %v512
      %v550 = vunpack.c.h.b16 %v512
      %v551 = vunpack.c.l.b16 %v513
      %v552 = vunpack.c.h.b16 %v513
      %v553 = vunpack.c.l.b16 %v514
      %v554 = vunpack.c.h.b16 %v514
      %v555 = vunpack.c.l.b16 %v515
      %v556 = vunpack.c.h.b16 %v515
      %v557 = vunpack.c.l.b16 %v516
      %v558 = vunpack.c.h.b16 %v516
      %v559 = vunpack.c.l.b16 %v517
      %v560 = vunpack.c.h.b16 %v517
      %v561 = vunpack.c.l.b16 %v518
      %v562 = vunpack.c.h.b16 %v518
      %v563 = vunpack.c.l.b16 %v519
      %v564 = vunpack.c.h.b16 %v519
      %v565 = vunpack.c.l.b16 %v520
      %v566 = vunpack.c.h.b16 %v520
      %v567 = vunpack.c.l.b16 %v521
      %v568 = vunpack.c.h.b16 %v521
      %v569 = vunpack.c.l.b16 %v522
      %v570 = vunpack.c.h.b16 %v522
      %v571 = vpack.c.b16 %v539, %v539
      %v572 = vpack.c.b16 %v540, %v540
      %v573 = vpack.c.b16 %v541, %v541
      %v574 = vpack.c.b16 %v542, %v542
      %v575 = vpack.c.b16 %v543, %v543
      %v576 = vpack.c.b16 %v544, %v544
      %v577 = vpack.c.b16 %v545, %v545
      %v578 = vpack.c.b16 %v546, %v546
      %v579 = vpack.c.b16 %v547, %v547
      %v580 = vpack.c.b16 %v548, %v548
      %v581 = vpack.c.b16 %v549, %v549
      %v582 = vpack.c.b16 %v550, %v550
      %v583 = vpack.c.b16 %v551, %v551
      %v584 = vpack.c.b16 %v552, %v552
      %v585 = vpack.c.b16 %v553, %v553
      %v586 = vpack.c.b16 %v554, %v554
      %v587 = vpack.c.b16 %v555, %v555
      %v588 = vpack.c.b16 %v556, %v556
      %v589 = vpack.c.b16 %v557, %v557
      %v590 = vpack.c.b16 %v558, %v558
      %v591 = vpack.c.b16 %v559, %v559
      %v592 = vpack.c.b16 %v560, %v560
      %v593 = vpack.c.b16 %v561, %v561
      %v594 = vpack.c.b16 %v562, %v562
      %v595 = vpack.c.b16 %v563, %v563
      %v596 = vpack.c.b16 %v564, %v564
      %v597 = vpack.c.b16 %v565, %v565
      %v598 = vpack.c.b16 %v566, %v566
      %v599 = vpack.c.b16 %v567, %v567
      %v600 = vpack.c.b16 %v568, %v568
      %v601 = vpack.c.b16 %v569, %v569
      %v602 = vpack.c.b16 %v570, %v570
      %vm635 = vcmask 125952
      %636 = vst.msk [vmem:[%s143] sm:$0xf] %vm635, %v571
      %637 = vst.msk [vmem:[%s143 + $0x4] sm:$0xf] %vm635, %v572
      %638 = vst.msk [vmem:[%s143 + $0x8] sm:$0xf] %vm635, %v573
      %639 = vst.msk [vmem:[%s143 + $0xc] sm:$0xf] %vm635, %v574
      %640 = vst.msk [vmem:[%s143 + $0x10] sm:$0xf] %vm635, %v575
      %641 = vst.msk [vmem:[%s143 + $0x14] sm:$0xf] %vm635, %v576
      %642 = vst.msk [vmem:[%s143 + $0x18] sm:$0xf] %vm635, %v577
      %643 = vst.msk [vmem:[%s143 + $0x1c] sm:$0xf] %vm635, %v578
      %644 = vst.msk [vmem:[%s143 + $0x20] sm:$0xf] %vm635, %v579
      %645 = vst.msk [vmem:[%s143 + $0x24] sm:$0xf] %vm635, %v580
      %646 = vst.msk [vmem:[%s143 + $0x28] sm:$0xf] %vm635, %v581
      %647 = vst.msk [vmem:[%s143 + $0x2c] sm:$0xf] %vm635, %v582
      %648 = vst.msk [vmem:[%s143 + $0x30] sm:$0xf] %vm635, %v583
      %649 = vst.msk [vmem:[%s143 + $0x34] sm:$0xf] %vm635, %v584
      %650 = vst.msk [vmem:[%s143 + $0x38] sm:$0xf] %vm635, %v585
      %651 = vst.msk [vmem:[%s143 + $0x3c] sm:$0xf] %vm635, %v586
      %652 = vst.msk [vmem:[%s143 + $0x40] sm:$0xf] %vm635, %v587
      %653 = vst.msk [vmem:[%s143 + $0x44] sm:$0xf] %vm635, %v588
      %654 = vst.msk [vmem:[%s143 + $0x48] sm:$0xf] %vm635, %v589
      %655 = vst.msk [vmem:[%s143 + $0x4c] sm:$0xf] %vm635, %v590
      %656 = vst.msk [vmem:[%s143 + $0x50] sm:$0xf] %vm635, %v591
      %657 = vst.msk [vmem:[%s143 + $0x54] sm:$0xf] %vm635, %v592
      %658 = vst.msk [vmem:[%s143 + $0x58] sm:$0xf] %vm635, %v593
      %659 = vst.msk [vmem:[%s143 + $0x5c] sm:$0xf] %vm635, %v594
      %660 = vst.msk [vmem:[%s143 + $0x60] sm:$0xf] %vm635, %v595
      %661 = vst.msk [vmem:[%s143 + $0x64] sm:$0xf] %vm635, %v596
      %662 = vst.msk [vmem:[%s143 + $0x68] sm:$0xf] %vm635, %v597
      %663 = vst.msk [vmem:[%s143 + $0x6c] sm:$0xf] %vm635, %v598
      %664 = vst.msk [vmem:[%s143 + $0x70] sm:$0xf] %vm635, %v599
      %665 = vst.msk [vmem:[%s143 + $0x74] sm:$0xf] %vm635, %v600
      %666 = vst.msk [vmem:[%s143 + $0x78] sm:$0xf] %vm635, %v601
      %667 = vst.msk [vmem:[%s143 + $0x7c] sm:$0xf] %vm635, %v602
      %p668 = scmp.lt.s32.totalorder %s13, 1
      %s669 = scalar_select %p668, %s13, 1
      %s670 = smul.addr %s669, 32
      %s671 = smul.addr %s670, 4
      %s672 = scalar_lea.vmem %s2, %s671
      // Predicated region
      $region29: #{self_attention_forward.14} parent=27 // pred_check
        %p673 = pneg %p78
      $region30: #{self_attention_forward.14} parent=27 // pred_check_branch
        %675 = sbr.rel (%p673) target = $region32
      $region31: #{self_attention_forward.14} parent=27 // pred_region
        _
      $region32: #{self_attention_forward.14} parent=27 // pred_fallthru
        _
    $region28: #{self_attention_forward.14} parent=5 // pred_fallthru
      _
    %p676 = scmp.le.s32.totalorder 2, %s8
    // Predicated region
    $region33: #{self_attention_forward.14} parent=5 // pred_check
      %p677 = pneg %p676
    $region34: #{self_attention_forward.14} parent=5 // pred_check_branch
      %679 = sbr.rel (%p677) target = $region36
    $region35: #{self_attention_forward.14} parent=5 // pred_region
      %s680 = ssub.s32 %s8, 2
      // Predicated region
      $region37: #{self_attention_forward.14} parent=35 // pred_check
        %p681 = pneg %p84
      $region38: #{self_attention_forward.14} parent=35 // pred_check_branch
        %683 = sbr.rel (%p681) target = $region40
      $region39: #{self_attention_forward.14} parent=35 // pred_region
        %p684 = scmp.lt.s32.totalorder %s14, 1
        %s685 = scalar_select %p684, %s14, 1
        %s686 = smul.addr %s685, 32
        %s687 = smul.addr %s686, 4
        %s688 = scalar_lea.vmem %s2, %s687
      $region40: #{self_attention_forward.14} parent=35 // pred_fallthru
        _
    $region36: #{self_attention_forward.14} parent=5 // pred_fallthru
      _
  $region6: #{self_attention_forward.14} parent=0 // loop_footer
    %s12 = sadd.s32 1, %s8
  $region7: #{self_attention_forward.14} parent=0 // loop_footer_branch
    %7 = sbr.rel target = $region3
  $region8: #{self_attention_forward.14} parent=0 // loop_exit
    _

// kernel: self_attention_forward.15
$region0: #{self_attention_forward.15}
  #allocation0 [shape = 'u32[]', space=smem, size = 0x4, offset = 0x4, fixed_abs, tag = 'smem constant byte address 0x4 - core index']
  #allocation1 [shape = 'u32[144,128]{1,0:T(1,128)}', space=vmem, size = 0x12000, scoped, tag = 'internal scratch']
  %s0 = inlined_call_operand.vmem [shape: bf16[2,288,48], index: 0, kind: input, shape index: {}]
  %s1 = inlined_call_operand.vmem [shape: bf16[3,48,16], index: 1, kind: input, shape index: {}]
  %s2 = inlined_call_operand.vmem [shape: bf16[2,256,16], index: 2, kind: output, shape index: {}]
  %s3 = sld [smem:[#allocation0]]
  $region41: #{self_attention_forward.15} parent=0
    _
  %s5 = ssub.s32 1, %s3
  %s6 = scalar_select 0, %s5, %s3
  loop: start=0, step=1, limit=4
  $region2: #{self_attention_forward.15} parent=0 // loop_pre_header
    _
  $region3: #{self_attention_forward.15} parent=0 // loop_header
    %s8 = sphi 0, %s12
    %p9 = scmp.ge.s32.totalorder %s8, 4
    %s18 = sphi 0, %s20
    %s21 = sphi 0, %s18
    %s22 = sphi 0, %s21
    %s38 = sphi 0, %s22
    %s42 = sphi 0, %s42
    %s44 = sphi 0, %s42
    %s45 = sphi 0, %s44
    %s59 = sphi 0, %s45
    %s65 = sphi 0, %s67
    %s68 = sphi 0, %s65
    %s69 = sphi 0, %s68
    %s85 = sphi 0, %s69
  $region4: #{self_attention_forward.15} parent=0 // loop_header_branch
    %11 = sbr.rel (%p9) target = $region8
  $region5: #{self_attention_forward.15} parent=0 // loop_body
    %s13 = ssub.s32 %s8, 1
    %s14 = ssub.s32 %s8, 2
    %s15 = sadd.s32 %s8, 1
    %s16 = ssub.s32 %s8, %s15
    %p17 = scmp.eq.s32.totalorder %s16, 0
    %s19 = sadd.s32 %s18, 1
    %s20 = scalar_select %p17, %s18, %s19
    %p23 = pneg %p17
    %p24 = scmp.eq.s32.totalorder %s8, 1
    %p25 = por %p23, %p24
    %p26 = scmp.ne.s32.totalorder %s18, %s21
    %p27 = scmp.eq.s32.totalorder %s8, 0
    %p28 = por %p26, %p27
    %p29 = scmp.ne.s32.totalorder %s18, %s21
    %p30 = scmp.eq.s32.totalorder %s13, 1
    %p31 = por %p29, %p30
    %p32 = scmp.ne.s32.totalorder %s21, %s22
    %p33 = scmp.eq.s32.totalorder %s13, 0
    %p34 = por %p32, %p33
    %p35 = scmp.ne.s32.totalorder %s21, %s22
    %p36 = scmp.eq.s32.totalorder %s14, 1
    %p37 = por %p35, %p36
    %p39 = scmp.ne.s32.totalorder %s22, %s38
    %p40 = scmp.eq.s32.totalorder %s14, 0
    %p41 = por %p39, %p40
    %s43 = sadd.s32 %s42, 1
    %p46 = scmp.eq.s32.totalorder %s8, 1
    %p47 = scmp.ne.s32.totalorder %s42, %s44
    %p48 = scmp.eq.s32.totalorder %s8, 0
    %p49 = por %p47, %p48
    %p50 = scmp.ne.s32.totalorder %s42, %s44
    %p51 = scmp.eq.s32.totalorder %s13, 1
    %p52 = por %p50, %p51
    %p53 = scmp.ne.s32.totalorder %s44, %s45
    %p54 = scmp.eq.s32.totalorder %s13, 0
    %p55 = por %p53, %p54
    %p56 = scmp.ne.s32.totalorder %s44, %s45
    %p57 = scmp.eq.s32.totalorder %s14, 1
    %p58 = por %p56, %p57
    %p60 = scmp.ne.s32.totalorder %s45, %s59
    %p61 = scmp.eq.s32.totalorder %s14, 0
    %p62 = por %p60, %p61
    %s63 = ssub.s32 %s8, %s15
    %p64 = scmp.eq.s32.totalorder %s63, 0
    %s66 = sadd.s32 %s65, 1
    %s67 = scalar_select %p64, %s65, %s66
    %p70 = pneg %p64
    %p71 = scmp.eq.s32.totalorder %s8, 1
    %p72 = por %p70, %p71
    %p73 = scmp.ne.s32.totalorder %s65, %s68
    %p74 = scmp.eq.s32.totalorder %s8, 0
    %p75 = por %p73, %p74
    %p76 = scmp.ne.s32.totalorder %s65, %s68
    %p77 = scmp.eq.s32.totalorder %s13, 1
    %p78 = por %p76, %p77
    %p79 = scmp.ne.s32.totalorder %s68, %s69
    %p80 = scmp.eq.s32.totalorder %s13, 0
    %p81 = por %p79, %p80
    %p82 = scmp.ne.s32.totalorder %s68, %s69
    %p83 = scmp.eq.s32.totalorder %s14, 1
    %p84 = por %p82, %p83
    %p86 = scmp.ne.s32.totalorder %s69, %s85
    %p87 = scmp.eq.s32.totalorder %s14, 0
    %p88 = por %p86, %p87
    %p89 = scmp.le.s32.totalorder 1, %s8
    %p90 = scmp.lt.s32.totalorder %s8, 3
    %p91 = pnand %p89, %p90
    %p92 = pneg %p91
    // Predicated region
    $region9: #{self_attention_forward.15} parent=5 // pred_check
      _
    $region10: #{self_attention_forward.15} parent=5 // pred_check_branch
      %94 = sbr.rel (%p91) target = $region12
    $region11: #{self_attention_forward.15} parent=5 // pred_region
      %s95 = ssub.s32 %s8, 1
      // Predicated region
      $region13: #{self_attention_forward.15} parent=11 // pred_check
        %p96 = pneg %p55
      $region14: #{self_attention_forward.15} parent=11 // pred_check_branch
        %98 = sbr.rel (%p96) target = $region16
      $region15: #{self_attention_forward.15} parent=11 // pred_region
        _
      $region16: #{self_attention_forward.15} parent=11 // pred_fallthru
        _
    $region12: #{self_attention_forward.15} parent=5 // pred_fallthru
      _
    %p99 = scmp.lt.s32.totalorder %s8, 2
    // Predicated region
    $region17: #{self_attention_forward.15} parent=5 // pred_check
      %p100 = pneg %p99
    $region18: #{self_attention_forward.15} parent=5 // pred_check_branch
      %102 = sbr.rel (%p100) target = $region20
    $region19: #{self_attention_forward.15} parent=5 // pred_region
      // Predicated region
      $region21: #{self_attention_forward.15} parent=19 // pred_check
        %p103 = pneg %p28
      $region22: #{self_attention_forward.15} parent=19 // pred_check_branch
        %105 = sbr.rel (%p103) target = $region24
      $region23: #{self_attention_forward.15} parent=19 // pred_region
        %p106 = scmp.lt.s32.totalorder %s8, 1
        %s107 = scalar_select %p106, %s8, 1
        %s108 = smul.addr %s107, 36
        %s109 = smul.addr %s108, 4
        %s110 = scalar_lea.vmem %s0, %s109
      $region24: #{self_attention_forward.15} parent=19 // pred_fallthru
        _
    $region20: #{self_attention_forward.15} parent=5 // pred_fallthru
      _
    %p111 = scmp.le.s32.totalorder 1, %s8
    %p112 = scmp.lt.s32.totalorder %s8, 3
    %p113 = pnand %p111, %p112
    %p114 = pneg %p113
    // Predicated region
    $region25: #{self_attention_forward.15} parent=5 // pred_check
      _
    $region26: #{self_attention_forward.15} parent=5 // pred_check_branch
      %116 = sbr.rel (%p113) target = $region28
    $region27: #{self_attention_forward.15} parent=5 // pred_region
      %s117 = ssub.s32 %s8, 1
      %p118 = scmp.lt.s32.totalorder %s13, 1
      %s119 = scalar_select %p118, %s13, 1
      %s120 = smul.addr %s119, 36
      %s121 = smul.addr %s120, 4
      %s122 = scalar_lea.vmem %s0, %s121
      %p123 = pneg %p34
      %p124 = pneg %p31
      %p125 = pneg %p55
      %p126 = pneg %p52
      %p127 = pneg %p81
      %p128 = pneg %p78
      %p129 = scmp.lt.s32.totalorder %s13, 1
      %s130 = scalar_select %p129, %s13, 1
      %s131 = smul.addr %s130, 32
      %s132 = smul.addr %s131, 4
      %s133 = scalar_lea.vmem %s2, %s132
      %p134 = scmp.lt.s32.totalorder %s13, 1
      %s135 = scalar_select %p134, %s13, 1
      %s136 = smul.addr %s135, 36
      %s137 = smul.addr %s136, 4
      %s138 = scalar_lea.vmem %s0, %s137
      %p139 = scmp.lt.s32.totalorder %s13, 1
      %s140 = scalar_select %p139, %s13, 1
      %s141 = smul.addr %s140, 32
      %s142 = smul.addr %s141, 4
      %s143 = scalar_lea.vmem %s2, %s142
      %v145 = vld [vmem:[%s138] sm:$0xf]
      %v146 = vld [vmem:[%s138 + $0x4] sm:$0xf]
      %v147 = vld [vmem:[%s138 + $0x8] sm:$0xf]
      %v148 = vld [vmem:[%s138 + $0xc] sm:$0xf]
      %v149 = vld [vmem:[%s138 + $0x10] sm:$0xf]
      %v150 = vld [vmem:[%s138 + $0x14] sm:$0xf]
      %v151 = vld [vmem:[%s138 + $0x18] sm:$0xf]
      %v152 = vld [vmem:[%s138 + $0x1c] sm:$0xf]
      %v153 = vld [vmem:[%s138 + $0x20] sm:$0xf]
      %v154 = vld [vmem:[%s138 + $0x24] sm:$0xf]
      %v155 = vld [vmem:[%s138 + $0x28] sm:$0xf]
      %v156 = vld [vmem:[%s138 + $0x2c] sm:$0xf]
      %v157 = vld [vmem:[%s138 + $0x30] sm:$0xf]
      %v158 = vld [vmem:[%s138 + $0x34] sm:$0xf]
      %v159 = vld [vmem:[%s138 + $0x38] sm:$0xf]
      %v160 = vld [vmem:[%s138 + $0x3c] sm:$0xf]
      %v161 = vld [vmem:[%s138 + $0x40] sm:$0xf]
      %v162 = vld [vmem:[%s138 + $0x44] sm:$0xf]
      %v163 = vld [vmem:[%s138 + $0x48] sm:$0xf]
      %v164 = vld [vmem:[%s138 + $0x4c] sm:$0xf]
      %v165 = vld [vmem:[%s138 + $0x50] sm:$0xf]
      %v166 = vld [vmem:[%s138 + $0x54] sm:$0xf]
      %v167 = vld [vmem:[%s138 + $0x58] sm:$0xf]
      %v168 = vld [vmem:[%s138 + $0x5c] sm:$0xf]
      %v169 = vld [vmem:[%s138 + $0x60] sm:$0xf]
      %v170 = vld [vmem:[%s138 + $0x64] sm:$0xf]
      %v171 = vld [vmem:[%s138 + $0x68] sm:$0xf]
      %v172 = vld [vmem:[%s138 + $0x6c] sm:$0xf]
      %v173 = vld [vmem:[%s138 + $0x70] sm:$0xf]
      %v174 = vld [vmem:[%s138 + $0x74] sm:$0xf]
      %v175 = vld [vmem:[%s138 + $0x78] sm:$0xf]
      %v176 = vld [vmem:[%s138 + $0x7c] sm:$0xf]
      %v177 = vld [vmem:[%s1] sm:$0xf]
      %v178 = vld [vmem:[%s1 + $0x4] sm:$0xf]
      %v179 = vld [vmem:[%s1 + $0x8] sm:$0xf]
      %v180 = vld [vmem:[%s1 + $0xc] sm:$0xf]
      %v181 = vld [vmem:[%s1 + $0x10] sm:$0xf]
      %v182 = vld [vmem:[%s1 + $0x14] sm:$0xf]
      %v183 = vld [vmem:[%s138 + $0x80] sm:$0xf]
      %v184 = vld [vmem:[%s138 + $0x84] sm:$0xf]
      %s185 = scalar_lea.vmem %s1, 24
      %v186 = vld [vmem:[%s185] sm:$0xf]
      %v187 = vld [vmem:[%s185 + $0x4] sm:$0xf]
      %v188 = vld [vmem:[%s185 + $0x8] sm:$0xf]
      %v189 = vld [vmem:[%s185 + $0xc] sm:$0xf]
      %v190 = vld [vmem:[%s185 + $0x10] sm:$0xf]
      %v191 = vld [vmem:[%s185 + $0x14] sm:$0xf]
      %v224 = vunpack.c.l.b16 %v147
      %v225 = vunpack.c.l.b16 %v148
      %v226 = vunpack.c.l.b16 %v149
      %v227 = vunpack.c.l.b16 %v150
      %v228 = vunpack.c.l.b16 %v151
      %v229 = vunpack.c.l.b16 %v152
      %v230 = vunpack.c.l.b16 %v153
      %v231 = vunpack.c.l.b16 %v154
      %v232 = vunpack.c.l.b16 %v155
      %v233 = vunpack.c.l.b16 %v156
      %v234 = vunpack.c.l.b16 %v157
      %v235 = vunpack.c.l.b16 %v158
      %v236 = vunpack.c.l.b16 %v159
      %v237 = vunpack.c.l.b16 %v160
      %v238 = vunpack.c.l.b16 %v161
      %v239 = vunpack.c.l.b16 %v162
      %v240 = vunpack.c.l.b16 %v163
      %v241 = vunpack.c.l.b16 %v164
      %v242 = vunpack.c.l.b16 %v165
      %v243 = vunpack.c.l.b16 %v166
      %v244 = vunpack.c.l.b16 %v167
      %v245 = vunpack.c.l.b16 %v168
      %v246 = vunpack.c.l.b16 %v169
      %v247 = vunpack.c.l.b16 %v170
      %v248 = vunpack.c.l.b16 %v171
      %v249 = vunpack.c.l.b16 %v172
      %v250 = vunpack.c.l.b16 %v173
      %v251 = vunpack.c.l.b16 %v174
      %v252 = vunpack.c.l.b16 %v175
      %v253 = vunpack.c.l.b16 %v176
      %v254 = vunpack.c.l.b16 %v183
      %v255 = vunpack.c.l.b16 %v184
      %v256 = vpack.c.b16 %v225, %v224
      %v257 = vpack.c.b16 %v227, %v226
      %v258 = vpack.c.b16 %v229, %v228
      %v259 = vpack.c.b16 %v231, %v230
      %v260 = vpack.c.b16 %v233, %v232
      %v261 = vpack.c.b16 %v235, %v234
      %v262 = vpack.c.b16 %v237, %v236
      %v263 = vpack.c.b16 %v239, %v238
      %v264 = vpack.c.b16 %v241, %v240
      %v265 = vpack.c.b16 %v243, %v242
      %v266 = vpack.c.b16 %v245, %v244
      %v267 = vpack.c.b16 %v247, %v246
      %v268 = vpack.c.b16 %v249, %v248
      %v269 = vpack.c.b16 %v251, %v250
      %v270 = vpack.c.b16 %v253, %v252
      %v271 = vpack.c.b16 %v255, %v254
      %v278 = vunpack.c.l.b16 %v186
      %v279 = vunpack.c.l.b16 %v187
      %v280 = vunpack.c.l.b16 %v188
      %v281 = vunpack.c.l.b16 %v189
      %v282 = vunpack.c.l.b16 %v190
      %v283 = vunpack.c.l.b16 %v191
      %v284 = vpack.c.b16 %v279, %v278
      %v285 = vpack.c.b16 %v281, %v280
      %v286 = vpack.c.b16 %v283, %v282
      %vm290 = vcmask 392192
      %v292 = vsel %vm290, %v256, 0
      %v295 = vsel %vm290, %v257, 0
      %v298 = vsel %vm290, %v258, 0
      %v301 = vsel %vm290, %v259, 0
      %v304 = vsel %vm290, %v260, 0
      %v307 = vsel %vm290, %v261, 0
      %v310 = vsel %vm290, %v262, 0
      %v313 = vsel %vm290, %v263, 0
      %v316 = vsel %vm290, %v264, 0
      %v319 = vsel %vm290, %v265, 0
      %v322 = vsel %vm290, %v266, 0
      %v325 = vsel %vm290, %v267, 0
      %v328 = vsel %vm290, %v268, 0
      %v331 = vsel %vm290, %v269, 0
      %v334 = vsel %vm290, %v270, 0
      %v337 = vsel %vm290, %v271, 0
      %339 = vmatprep.subr.bf16.mxu0 0
      %340 = vmatpush1.bf16.msra.mxu0 %v284
      %341 = vmatprep.subr.bf16.mxu0 0
      %342 = vmatpush1.bf16.msra.mxu0 %v285
      %343 = vmatprep.subr.bf16.mxu0 0
      %344 = vmatpush1.bf16.msra.mxu0 %v286
      %345 = vmatprep.subr.bf16.mxu0 0
      %346 = vmatpush1.bf16.msra.mxu0 0
      %347 = vmatprep.subr.bf16.mxu0 0
      %348 = vmatpush1.bf16.msra.mxu0 0
      %349 = vmatprep.subr.bf16.mxu0 0
      %350 = vmatpush1.bf16.msra.mxu0 0
      %351 = vmatprep.subr.bf16.mxu0 0
      %352 = vmatpush1.bf16.msra.mxu0 0
      %353 = vmatprep.subr.bf16.mxu0 0
      %354 = vmatpush1.bf16.msra.mxu0 0
      %355 = vmatprep.subr.bf16.mxu0 0
      %356 = vmatpush1.bf16.msra.mxu0 0
      %357 = vmatprep.subr.bf16.mxu0 0
      %358 = vmatpush1.bf16.msra.mxu0 0
      %359 = vmatprep.subr.bf16.mxu0 0
      %360 = vmatpush1.bf16.msra.mxu0 0
      %361 = vmatprep.subr.bf16.mxu0 0
      %362 = vmatpush1.bf16.msra.mxu0 0
      %363 = vmatprep.subr.bf16.mxu0 0
      %364 = vmatpush1.bf16.msra.mxu0 0
      %365 = vmatprep.subr.bf16.mxu0 0
      %366 = vmatpush1.bf16.msra.mxu0 0
      %367 = vmatprep.subr.bf16.mxu0 0
      %368 = vmatpush1.bf16.msra.mxu0 0
      %369 = vmatprep.subr.bf16.mxu0 0
      %370 = vmatpush1.bf16.msra.mxu0 0
      %371 = vmatprep.mubr.bf16.mxu0 0
      %372 = vmatmul.mubr.bf16.gmra.mrb[0].mxu0 %v292
      %v373 = vpop.f32.mrb[0].mxu0
      %v374 = vadd.f32 0.0, %v373
      %v375 = vpop.f32.mrb[0].mxu0
      %v376 = vpop.f32.mrb[0].mxu0
      %v377 = vadd.f32 0.0, %v376
      %v378 = vpop.f32.mrb[0].mxu0
      %379 = vmatprep.mubr.bf16.mxu0 0
      %380 = vmatmul.mubr.bf16.gmra.mrb[0].mxu0 %v295
      %v381 = vpop.f32.mrb[0].mxu0
      %v382 = vadd.f32 0.0, %v381
      %v383 = vpop.f32.mrb[0].mxu0
      %v384 = vpop.f32.mrb[0].mxu0
      %v385 = vadd.f32 0.0, %v384
      %v386 = vpop.f32.mrb[0].mxu0
      %387 = vmatprep.mubr.bf16.mxu0 0
      %388 = vmatmul.mubr.bf16.gmra.mrb[0].mxu0 %v298
      %v389 = vpop.f32.mrb[0].mxu0
      %v390 = vadd.f32 0.0, %v389
      %v391 = vpop.f32.mrb[0].mxu0
      %v392 = vpop.f32.mrb[0].mxu0
      %v393 = vadd.f32 0.0, %v392
      %v394 = vpop.f32.mrb[0].mxu0
      %395 = vmatprep.mubr.bf16.mxu0 0
      %396 = vmatmul.mubr.bf16.gmra.mrb[0].mxu0 %v301
      %v397 = vpop.f32.mrb[0].mxu0
      %v398 = vadd.f32 0.0, %v397
      %v399 = vpop.f32.mrb[0].mxu0
      %v400 = vpop.f32.mrb[0].mxu0
      %v401 = vadd.f32 0.0, %v400
      %v402 = vpop.f32.mrb[0].mxu0
      %403 = vmatprep.mubr.bf16.mxu0 0
      %404 = vmatmul.mubr.bf16.gmra.mrb[0].mxu0 %v304
      %v405 = vpop.f32.mrb[0].mxu0
      %v406 = vadd.f32 0.0, %v405
      %v407 = vpop.f32.mrb[0].mxu0
      %v408 = vpop.f32.mrb[0].mxu0
      %v409 = vadd.f32 0.0, %v408
      %v410 = vpop.f32.mrb[0].mxu0
      %411 = vmatprep.mubr.bf16.mxu0 0
      %412 = vmatmul.mubr.bf16.gmra.mrb[0].mxu0 %v307
      %v413 = vpop.f32.mrb[0].mxu0
      %v414 = vadd.f32 0.0, %v413
      %v415 = vpop.f32.mrb[0].mxu0
      %v416 = vpop.f32.mrb[0].mxu0
      %v417 = vadd.f32 0.0, %v416
      %v418 = vpop.f32.mrb[0].mxu0
      %419 = vmatprep.mubr.bf16.mxu0 0
      %420 = vmatmul.mubr.bf16.gmra.mrb[0].mxu0 %v310
      %v421 = vpop.f32.mrb[0].mxu0
      %v422 = vadd.f32 0.0, %v421
      %v423 = vpop.f32.mrb[0].mxu0
      %v424 = vpop.f32.mrb[0].mxu0
      %v425 = vadd.f32 0.0, %v424
      %v426 = vpop.f32.mrb[0].mxu0
      %427 = vmatprep.mubr.bf16.mxu0 0
      %428 = vmatmul.mubr.bf16.gmra.mrb[0].mxu0 %v313
      %v429 = vpop.f32.mrb[0].mxu0
      %v430 = vadd.f32 0.0, %v429
      %v431 = vpop.f32.mrb[0].mxu0
      %v432 = vpop.f32.mrb[0].mxu0
      %v433 = vadd.f32 0.0, %v432
      %v434 = vpop.f32.mrb[0].mxu0
      %435 = vmatprep.mubr.bf16.mxu0 0
      %436 = vmatmul.mubr.bf16.gmra.mrb[0].mxu0 %v316
      %v437 = vpop.f32.mrb[0].mxu0
      %v438 = vadd.f32 0.0, %v437
      %v439 = vpop.f32.mrb[0].mxu0
      %v440 = vpop.f32.mrb[0].mxu0
      %v441 = vadd.f32 0.0, %v440
      %v442 = vpop.f32.mrb[0].mxu0
      %443 = vmatprep.mubr.bf16.mxu0 0
      %444 = vmatmul.mubr.bf16.gmra.mrb[0].mxu0 %v319
      %v445 = vpop.f32.mrb[0].mxu0
      %v446 = vadd.f32 0.0, %v445
      %v447 = vpop.f32.mrb[0].mxu0
      %v448 = vpop.f32.mrb[0].mxu0
      %v449 = vadd.f32 0.0, %v448
      %v450 = vpop.f32.mrb[0].mxu0
      %451 = vmatprep.mubr.bf16.mxu0 0
      %452 = vmatmul.mubr.bf16.gmra.mrb[0].mxu0 %v322
      %v453 = vpop.f32.mrb[0].mxu0
      %v454 = vadd.f32 0.0, %v453
      %v455 = vpop.f32.mrb[0].mxu0
      %v456 = vpop.f32.mrb[0].mxu0
      %v457 = vadd.f32 0.0, %v456
      %v458 = vpop.f32.mrb[0].mxu0
      %459 = vmatprep.mubr.bf16.mxu0 0
      %460 = vmatmul.mubr.bf16.gmra.mrb[0].mxu0 %v325
      %v461 = vpop.f32.mrb[0].mxu0
      %v462 = vadd.f32 0.0, %v461
      %v463 = vpop.f32.mrb[0].mxu0
      %v464 = vpop.f32.mrb[0].mxu0
      %v465 = vadd.f32 0.0, %v464
      %v466 = vpop.f32.mrb[0].mxu0
      %467 = vmatprep.mubr.bf16.mxu0 0
      %468 = vmatmul.mubr.bf16.gmra.mrb[0].mxu0 %v328
      %v469 = vpop.f32.mrb[0].mxu0
      %v470 = vadd.f32 0.0, %v469
      %v471 = vpop.f32.mrb[0].mxu0
      %v472 = vpop.f32.mrb[0].mxu0
      %v473 = vadd.f32 0.0, %v472
      %v474 = vpop.f32.mrb[0].mxu0
      %475 = vmatprep.mubr.bf16.mxu0 0
      %476 = vmatmul.mubr.bf16.gmra.mrb[0].mxu0 %v331
      %v477 = vpop.f32.mrb[0].mxu0
      %v478 = vadd.f32 0.0, %v477
      %v479 = vpop.f32.mrb[0].mxu0
      %v480 = vpop.f32.mrb[0].mxu0
      %v481 = vadd.f32 0.0, %v480
      %v482 = vpop.f32.mrb[0].mxu0
      %483 = vmatprep.mubr.bf16.mxu0 0
      %484 = vmatmul.mubr.bf16.gmra.mrb[0].mxu0 %v334
      %v485 = vpop.f32.mrb[0].mxu0
      %v486 = vadd.f32 0.0, %v485
      %v487 = vpop.f32.mrb[0].mxu0
      %v488 = vpop.f32.mrb[0].mxu0
      %v489 = vadd.f32 0.0, %v488
      %v490 = vpop.f32.mrb[0].mxu0
      %491 = vmatprep.mubr.bf16.mxu0 0
      %492 = vmatmul.mubr.bf16.gmra.mrb[0].mxu0 %v337
      %v493 = vpop.f32.mrb[0].mxu0
      %v494 = vadd.f32 0.0, %v493
      %v495 = vpop.f32.mrb[0].mxu0
      %v496 = vpop.f32.mrb[0].mxu0
      %v497 = vadd.f32 0.0, %v496
      %v498 = vpop.f32.mrb[0].mxu0
      %499 = vdwg.mxu0
      %v502 = vunpack.c.l.b16 %v145
      %v503 = vunpack.c.l.b16 %v146
      %v504 = vpack.c.b16 %v503, %v502
      %v511 = vunpack.c.l.b16 %v177
      %v512 = vunpack.c.l.b16 %v178
      %v513 = vunpack.c.l.b16 %v179
      %v514 = vunpack.c.l.b16 %v180
      %v515 = vunpack.c.l.b16 %v181
      %v516 = vunpack.c.l.b16 %v182
      %v517 = vpack.c.b16 %v512, %v511
      %v518 = vpack.c.b16 %v514, %v513
      %v519 = vpack.c.b16 %v516, %v515
      %v524 = vsel %vm290, %v504, 0
      %526 = vmatprep.subr.bf16.mxu0 0
      %527 = vmatpush1.bf16.msra.mxu0 %v517
      %528 = vmatprep.subr.bf16.mxu0 0
      %529 = vmatpush1.bf16.msra.mxu0 %v518
      %530 = vmatprep.subr.bf16.mxu0 0
      %531 = vmatpush1.bf16.msra.mxu0 %v519
      %532 = vmatprep.subr.bf16.mxu0 0
      %533 = vmatpush1.bf16.msra.mxu0 0
      %534 = vmatprep.subr.bf16.mxu0 0
      %535 = vmatpush1.bf16.msra.mxu0 0
      %536 = vmatprep.subr.bf16.mxu0 0
      %537 = vmatpush1.bf16.msra.mxu0 0
      %538 = vmatprep.subr.bf16.mxu0 0
      %539 = vmatpush1.bf16.msra.mxu0 0
      %540 = vmatprep.subr.bf16.mxu0 0
      %541 = vmatpush1.bf16.msra.mxu0 0
      %542 = vmatprep.subr.bf16.mxu0 0
      %543 = vmatpush1.bf16.msra.mxu0 0
      %544 = vmatprep.subr.bf16.mxu0 0
      %545 = vmatpush1.bf16.msra.mxu0 0
      %546 = vmatprep.subr.bf16.mxu0 0
      %547 = vmatpush1.bf16.msra.mxu0 0
      %548 = vmatprep.subr.bf16.mxu0 0
      %549 = vmatpush1.bf16.msra.mxu0 0
      %550 = vmatprep.subr.bf16.mxu0 0
      %551 = vmatpush1.bf16.msra.mxu0 0
      %552 = vmatprep.subr.bf16.mxu0 0
      %553 = vmatpush1.bf16.msra.mxu0 0
      %554 = vmatprep.subr.bf16.mxu0 0
      %555 = vmatpush1.bf16.msra.mxu0 0
      %556 = vmatprep.subr.bf16.mxu0 0
      %557 = vmatpush1.bf16.msra.mxu0 0
      %558 = vmatprep.mubr.bf16.mxu0 0
      %559 = vmatmul.mubr.bf16.gmra.mrb[0].mxu0 %v524
      %v560 = vpop.f32.mrb[0].mxu0
      %v561 = vadd.f32 %v374, %v560
      %v562 = vpop.f32.mrb[0].mxu0
      %v563 = vpop.f32.mrb[0].mxu0
      %v564 = vadd.f32 %v377, %v563
      %v565 = vpop.f32.mrb[0].mxu0
      %566 = vmatprep.mubr.bf16.mxu0 0
      %567 = vmatmul.mubr.bf16.gmra.mrb[0].mxu0 %v292
      %v568 = vpop.f32.mrb[0].mxu0
      %v569 = vadd.f32 %v382, %v568
      %v570 = vpop.f32.mrb[0].mxu0
      %v571 = vpop.f32.mrb[0].mxu0
      %v572 = vadd.f32 %v385, %v571
      %v573 = vpop.f32.mrb[0].mxu0
      %574 = vmatprep.mubr.bf16.mxu0 0
      %575 = vmatmul.mubr.bf16.gmra.mrb[0].mxu0 %v295
      %v576 = vpop.f32.mrb[0].mxu0
      %v577 = vadd.f32 %v390, %v576
      %v578 = vpop.f32.mrb[0].mxu0
      %v579 = vpop.f32.mrb[0].mxu0
      %v580 = vadd.f32 %v393, %v579
      %v581 = vpop.f32.mrb[0].mxu0
      %582 = vmatprep.mubr.bf16.mxu0 0
      %583 = vmatmul.mubr.bf16.gmra.mrb[0].mxu0 %v298
      %v584 = vpop.f32.mrb[0].mxu0
      %v585 = vadd.f32 %v398, %v584
      %v586 = vpop.f32.mrb[0].mxu0
      %v587 = vpop.f32.mrb[0].mxu0
      %v588 = vadd.f32 %v401, %v587
      %v589 = vpop.f32.mrb[0].mxu0
      %590 = vmatprep.mubr.bf16.mxu0 0
      %591 = vmatmul.mubr.bf16.gmra.mrb[0].mxu0 %v301
      %v592 = vpop.f32.mrb[0].mxu0
      %v593 = vadd.f32 %v406, %v592
      %v594 = vpop.f32.mrb[0].mxu0
      %v595 = vpop.f32.mrb[0].mxu0
      %v596 = vadd.f32 %v409, %v595
      %v597 = vpop.f32.mrb[0].mxu0
      %598 = vmatprep.mubr.bf16.mxu0 0
      %599 = vmatmul.mubr.bf16.gmra.mrb[0].mxu0 %v304
      %v600 = vpop.f32.mrb[0].mxu0
      %v601 = vadd.f32 %v414, %v600
      %v602 = vpop.f32.mrb[0].mxu0
      %v603 = vpop.f32.mrb[0].mxu0
      %v604 = vadd.f32 %v417, %v603
      %v605 = vpop.f32.mrb[0].mxu0
      %606 = vmatprep.mubr.bf16.mxu0 0
      %607 = vmatmul.mubr.bf16.gmra.mrb[0].mxu0 %v307
      %v608 = vpop.f32.mrb[0].mxu0
      %v609 = vadd.f32 %v422, %v608
      %v610 = vpop.f32.mrb[0].mxu0
      %v611 = vpop.f32.mrb[0].mxu0
      %v612 = vadd.f32 %v425, %v611
      %v613 = vpop.f32.mrb[0].mxu0
      %614 = vmatprep.mubr.bf16.mxu0 0
      %615 = vmatmul.mubr.bf16.gmra.mrb[0].mxu0 %v310
      %v616 = vpop.f32.mrb[0].mxu0
      %v617 = vadd.f32 %v430, %v616
      %v618 = vpop.f32.mrb[0].mxu0
      %v619 = vpop.f32.mrb[0].mxu0
      %v620 = vadd.f32 %v433, %v619
      %v621 = vpop.f32.mrb[0].mxu0
      %622 = vmatprep.mubr.bf16.mxu0 0
      %623 = vmatmul.mubr.bf16.gmra.mrb[0].mxu0 %v313
      %v624 = vpop.f32.mrb[0].mxu0
      %v625 = vadd.f32 %v438, %v624
      %v626 = vpop.f32.mrb[0].mxu0
      %v627 = vpop.f32.mrb[0].mxu0
      %v628 = vadd.f32 %v441, %v627
      %v629 = vpop.f32.mrb[0].mxu0
      %630 = vmatprep.mubr.bf16.mxu0 0
      %631 = vmatmul.mubr.bf16.gmra.mrb[0].mxu0 %v316
      %v632 = vpop.f32.mrb[0].mxu0
      %v633 = vadd.f32 %v446, %v632
      %v634 = vpop.f32.mrb[0].mxu0
      %v635 = vpop.f32.mrb[0].mxu0
      %v636 = vadd.f32 %v449, %v635
      %v637 = vpop.f32.mrb[0].mxu0
      %638 = vmatprep.mubr.bf16.mxu0 0
      %639 = vmatmul.mubr.bf16.gmra.mrb[0].mxu0 %v319
      %v640 = vpop.f32.mrb[0].mxu0
      %v641 = vadd.f32 %v454, %v640
      %v642 = vpop.f32.mrb[0].mxu0
      %v643 = vpop.f32.mrb[0].mxu0
      %v644 = vadd.f32 %v457, %v643
      %v645 = vpop.f32.mrb[0].mxu0
      %646 = vmatprep.mubr.bf16.mxu0 0
      %647 = vmatmul.mubr.bf16.gmra.mrb[0].mxu0 %v322
      %v648 = vpop.f32.mrb[0].mxu0
      %v649 = vadd.f32 %v462, %v648
      %v650 = vpop.f32.mrb[0].mxu0
      %v651 = vpop.f32.mrb[0].mxu0
      %v652 = vadd.f32 %v465, %v651
      %v653 = vpop.f32.mrb[0].mxu0
      %654 = vmatprep.mubr.bf16.mxu0 0
      %655 = vmatmul.mubr.bf16.gmra.mrb[0].mxu0 %v325
      %v656 = vpop.f32.mrb[0].mxu0
      %v657 = vadd.f32 %v470, %v656
      %v658 = vpop.f32.mrb[0].mxu0
      %v659 = vpop.f32.mrb[0].mxu0
      %v660 = vadd.f32 %v473, %v659
      %v661 = vpop.f32.mrb[0].mxu0
      %662 = vmatprep.mubr.bf16.mxu0 0
      %663 = vmatmul.mubr.bf16.gmra.mrb[0].mxu0 %v328
      %v664 = vpop.f32.mrb[0].mxu0
      %v665 = vadd.f32 %v478, %v664
      %v666 = vpop.f32.mrb[0].mxu0
      %v667 = vpop.f32.mrb[0].mxu0
      %v668 = vadd.f32 %v481, %v667
      %v669 = vpop.f32.mrb[0].mxu0
      %670 = vmatprep.mubr.bf16.mxu0 0
      %671 = vmatmul.mubr.bf16.gmra.mrb[0].mxu0 %v331
      %v672 = vpop.f32.mrb[0].mxu0
      %v673 = vadd.f32 %v486, %v672
      %v674 = vpop.f32.mrb[0].mxu0
      %v675 = vpop.f32.mrb[0].mxu0
      %v676 = vadd.f32 %v489, %v675
      %v677 = vpop.f32.mrb[0].mxu0
      %678 = vmatprep.mubr.bf16.mxu0 0
      %679 = vmatmul.mubr.bf16.gmra.mrb[0].mxu0 %v334
      %v680 = vpop.f32.mrb[0].mxu0
      %v681 = vadd.f32 %v494, %v680
      %v682 = vpop.f32.mrb[0].mxu0
      %v683 = vpop.f32.mrb[0].mxu0
      %v684 = vadd.f32 %v497, %v683
      %v685 = vpop.f32.mrb[0].mxu0
      %686 = vdwg.mxu0
      %v687 = vld [vmem:[%s138 + $0x10] sm:$0xf]
      %v688 = vld [vmem:[%s138 + $0x14] sm:$0xf]
      %v689 = vld [vmem:[%s138 + $0x18] sm:$0xf]
      %v690 = vld [vmem:[%s138 + $0x1c] sm:$0xf]
      %v691 = vld [vmem:[%s138 + $0x20] sm:$0xf]
      %v692 = vld [vmem:[%s138 + $0x24] sm:$0xf]
      %v693 = vld [vmem:[%s138 + $0x28] sm:$0xf]
      %v694 = vld [vmem:[%s138 + $0x2c] sm:$0xf]
      %v695 = vld [vmem:[%s138 + $0x30] sm:$0xf]
      %v696 = vld [vmem:[%s138 + $0x34] sm:$0xf]
      %v697 = vld [vmem:[%s138 + $0x38] sm:$0xf]
      %v698 = vld [vmem:[%s138 + $0x3c] sm:$0xf]
      %v699 = vld [vmem:[%s138 + $0x40] sm:$0xf]
      %v700 = vld [vmem:[%s138 + $0x44] sm:$0xf]
      %v701 = vld [vmem:[%s138 + $0x48] sm:$0xf]
      %v702 = vld [vmem:[%s138 + $0x4c] sm:$0xf]
      %v703 = vld [vmem:[%s138 + $0x50] sm:$0xf]
      %v704 = vld [vmem:[%s138 + $0x54] sm:$0xf]
      %v705 = vld [vmem:[%s138 + $0x58] sm:$0xf]
      %v706 = vld [vmem:[%s138 + $0x5c] sm:$0xf]
      %v707 = vld [vmem:[%s138 + $0x60] sm:$0xf]
      %v708 = vld [vmem:[%s138 + $0x64] sm:$0xf]
      %v709 = vld [vmem:[%s138 + $0x68] sm:$0xf]
      %v710 = vld [vmem:[%s138 + $0x6c] sm:$0xf]
      %v711 = vld [vmem:[%s138 + $0x70] sm:$0xf]
      %v712 = vld [vmem:[%s138 + $0x74] sm:$0xf]
      %v713 = vld [vmem:[%s138 + $0x78] sm:$0xf]
      %v714 = vld [vmem:[%s138 + $0x7c] sm:$0xf]
      %v715 = vld [vmem:[%s138 + $0x80] sm:$0xf]
      %v716 = vld [vmem:[%s138 + $0x84] sm:$0xf]
      %v717 = vld [vmem:[%s138 + $0x88] sm:$0xf]
      %v718 = vld [vmem:[%s138 + $0x8c] sm:$0xf]
      %s719 = scalar_lea.vmem %s1, 48
      %v720 = vld [vmem:[%s719] sm:$0xf]
      %v721 = vld [vmem:[%s719 + $0x4] sm:$0xf]
      %v722 = vld [vmem:[%s719 + $0x8] sm:$0xf]
      %v723 = vld [vmem:[%s719 + $0xc] sm:$0xf]
      %v724 = vld [vmem:[%s719 + $0x10] sm:$0xf]
      %v725 = vld [vmem:[%s719 + $0x14] sm:$0xf]
      %v758 = vunpack.c.l.b16 %v687
      %v759 = vunpack.c.l.b16 %v688
      %v760 = vunpack.c.l.b16 %v689
      %v761 = vunpack.c.l.b16 %v690
      %v762 = vunpack.c.l.b16 %v691
      %v763 = vunpack.c.l.b16 %v692
      %v764 = vunpack.c.l.b16 %v693
      %v765 = vunpack.c.l.b16 %v694
      %v766 = vunpack.c.l.b16 %v695
      %v767 = vunpack.c.l.b16 %v696
      %v768 = vunpack.c.l.b16 %v697
      %v769 = vunpack.c.l.b16 %v698
      %v770 = vunpack.c.l.b16 %v699
      %v771 = vunpack.c.l.b16 %v700
      %v772 = vunpack.c.l.b16 %v701
      %v773 = vunpack.c.l.b16 %v702
      %v774 = vunpack.c.l.b16 %v703
      %v775 = vunpack.c.l.b16 %v704
      %v776 = vunpack.c.l.b16 %v705
      %v777 = vunpack.c.l.b16 %v706
      %v778 = vunpack.c.l.b16 %v707
      %v779 = vunpack.c.l.b16 %v708
      %v780 = vunpack.c.l.b16 %v709
      %v781 = vunpack.c.l.b16 %v710
      %v782 = vunpack.c.l.b16 %v711
      %v783 = vunpack.c.l.b16 %v712
      %v784 = vunpack.c.l.b16 %v713
      %v785 = vunpack.c.l.b16 %v714
      %v786 = vunpack.c.l.b16 %v715
      %v787 = vunpack.c.l.b16 %v716
      %v788 = vunpack.c.l.b16 %v717
      %v789 = vunpack.c.l.b16 %v718
      %v790 = vpack.c.b16 %v759, %v758
      %v791 = vpack.c.b16 %v761, %v760
      %v792 = vpack.c.b16 %v763, %v762
      %v793 = vpack.c.b16 %v765, %v764
      %v794 = vpack.c.b16 %v767, %v766
      %v795 = vpack.c.b16 %v769, %v768
      %v796 = vpack.c.b16 %v771, %v770
      %v797 = vpack.c.b16 %v773, %v772
      %v798 = vpack.c.b16 %v775, %v774
      %v799 = vpack.c.b16 %v777, %v776
      %v800 = vpack.c.b16 %v779, %v778
      %v801 = vpack.c.b16 %v781, %v780
      %v802 = vpack.c.b16 %v783, %v782
      %v803 = vpack.c.b16 %v785, %v784
      %v804 = vpack.c.b16 %v787, %v786
      %v805 = vpack.c.b16 %v789, %v788
      %v812 = vunpack.c.l.b16 %v720
      %v813 = vunpack.c.l.b16 %v721
      %v814 = vunpack.c.l.b16 %v722
      %v815 = vunpack.c.l.b16 %v723
      %v816 = vunpack.c.l.b16 %v724
      %v817 = vunpack.c.l.b16 %v725
      %v818 = vpack.c.b16 %v813, %v812
      %v819 = vpack.c.b16 %v815, %v814
      %v820 = vpack.c.b16 %v817, %v816
      %v825 = vsel %vm290, %v790, 0
      %v828 = vsel %vm290, %v791, 0
      %v831 = vsel %vm290, %v792, 0
      %v834 = vsel %vm290, %v793, 0
      %v837 = vsel %vm290, %v794, 0
      %v840 = vsel %vm290, %v795, 0
      %v843 = vsel %vm290, %v796, 0
      %v846 = vsel %vm290, %v797, 0
      %v849 = vsel %vm290, %v798, 0
      %v852 = vsel %vm290, %v799, 0
      %v855 = vsel %vm290, %v800, 0
      %v858 = vsel %vm290, %v801, 0
      %v861 = vsel %vm290, %v802, 0
      %v864 = vsel %vm290, %v803, 0
      %v867 = vsel %vm290, %v804, 0
      %v870 = vsel %vm290, %v805, 0
      %872 = vmatprep.subr.bf16.mxu0 0
      %873 = vmatpush1.bf16.msra.mxu0 %v818
      %874 = vmatprep.subr.bf16.mxu0 0
      %875 = vmatpush1.bf16.msra.mxu0 %v819
      %876 = vmatprep.subr.bf16.mxu0 0
      %877 = vmatpush1.bf16.msra.mxu0 %v820
      %878 = vmatprep.subr.bf16.mxu0 0
      %879 = vmatpush1.bf16.msra.mxu0 0
      %880 = vmatprep.subr.bf16.mxu0 0
      %881 = vmatpush1.bf16.msra.mxu0 0
      %882 = vmatprep.subr.bf16.mxu0 0
      %883 = vmatpush1.bf16.msra.mxu0 0
      %884 = vmatprep.subr.bf16.mxu0 0
      %885 = vmatpush1.bf16.msra.mxu0 0
      %886 = vmatprep.subr.bf16.mxu0 0
      %887 = vmatpush1.bf16.msra.mxu0 0
      %888 = vmatprep.subr.bf16.mxu0 0
      %889 = vmatpush1.bf16.msra.mxu0 0
      %890 = vmatprep.subr.bf16.mxu0 0
      %891 = vmatpush1.bf16.msra.mxu0 0
      %892 = vmatprep.subr.bf16.mxu0 0
      %893 = vmatpush1.bf16.msra.mxu0 0
      %894 = vmatprep.subr.bf16.mxu0 0
      %895 = vmatpush1.bf16.msra.mxu0 0
      %896 = vmatprep.subr.bf16.mxu0 0
      %897 = vmatpush1.bf16.msra.mxu0 0
      %898 = vmatprep.subr.bf16.mxu0 0
      %899 = vmatpush1.bf16.msra.mxu0 0
      %900 = vmatprep.subr.bf16.mxu0 0
      %901 = vmatpush1.bf16.msra.mxu0 0
      %902 = vmatprep.subr.bf16.mxu0 0
      %903 = vmatpush1.bf16.msra.mxu0 0
      %904 = vmatprep.mubr.bf16.mxu0 0
      %905 = vmatmul.mubr.bf16.gmra.mrb[0].mxu0 %v825
      %v906 = vpop.f32.mrb[0].mxu0
      %v907 = vadd.f32 0.0, %v906
      %v908 = vpop.f32.mrb[0].mxu0
      %v909 = vpop.f32.mrb[0].mxu0
      %v910 = vadd.f32 0.0, %v909
      %v911 = vpop.f32.mrb[0].mxu0
      %912 = vmatprep.mubr.bf16.mxu0 0
      %913 = vmatmul.mubr.bf16.gmra.mrb[0].mxu0 %v828
      %v914 = vpop.f32.mrb[0].mxu0
      %v915 = vadd.f32 0.0, %v914
      %v916 = vpop.f32.mrb[0].mxu0
      %v917 = vpop.f32.mrb[0].mxu0
      %v918 = vadd.f32 0.0, %v917
      %v919 = vpop.f32.mrb[0].mxu0
      %920 = vmatprep.mubr.bf16.mxu0 0
      %921 = vmatmul.mubr.bf16.gmra.mrb[0].mxu0 %v831
      %v922 = vpop.f32.mrb[0].mxu0
      %v923 = vadd.f32 0.0, %v922
      %v924 = vpop.f32.mrb[0].mxu0
      %v925 = vpop.f32.mrb[0].mxu0
      %v926 = vadd.f32 0.0, %v925
      %v927 = vpop.f32.mrb[0].mxu0
      %928 = vmatprep.mubr.bf16.mxu0 0
      %929 = vmatmul.mubr.bf16.gmra.mrb[0].mxu0 %v834
      %v930 = vpop.f32.mrb[0].mxu0
      %v931 = vadd.f32 0.0, %v930
      %v932 = vpop.f32.mrb[0].mxu0
      %v933 = vpop.f32.mrb[0].mxu0
      %v934 = vadd.f32 0.0, %v933
      %v935 = vpop.f32.mrb[0].mxu0
      %936 = vmatprep.mubr.bf16.mxu0 0
      %937 = vmatmul.mubr.bf16.gmra.mrb[0].mxu0 %v837
      %v938 = vpop.f32.mrb[0].mxu0
      %v939 = vadd.f32 0.0, %v938
      %v940 = vpop.f32.mrb[0].mxu0
      %v941 = vpop.f32.mrb[0].mxu0
      %v942 = vadd.f32 0.0, %v941
      %v943 = vpop.f32.mrb[0].mxu0
      %944 = vmatprep.mubr.bf16.mxu0 0
      %945 = vmatmul.mubr.bf16.gmra.mrb[0].mxu0 %v840
      %v946 = vpop.f32.mrb[0].mxu0
      %v947 = vadd.f32 0.0, %v946
      %v948 = vpop.f32.mrb[0].mxu0
      %v949 = vpop.f32.mrb[0].mxu0
      %v950 = vadd.f32 0.0, %v949
      %v951 = vpop.f32.mrb[0].mxu0
      %952 = vmatprep.mubr.bf16.mxu0 0
      %953 = vmatmul.mubr.bf16.gmra.mrb[0].mxu0 %v843
      %v954 = vpop.f32.mrb[0].mxu0
      %v955 = vadd.f32 0.0, %v954
      %v956 = vpop.f32.mrb[0].mxu0
      %v957 = vpop.f32.mrb[0].mxu0
      %v958 = vadd.f32 0.0, %v957
      %v959 = vpop.f32.mrb[0].mxu0
      %960 = vmatprep.mubr.bf16.mxu0 0
      %961 = vmatmul.mubr.bf16.gmra.mrb[0].mxu0 %v846
      %v962 = vpop.f32.mrb[0].mxu0
      %v963 = vadd.f32 0.0, %v962
      %v964 = vpop.f32.mrb[0].mxu0
      %v965 = vpop.f32.mrb[0].mxu0
      %v966 = vadd.f32 0.0, %v965
      %v967 = vpop.f32.mrb[0].mxu0
      %968 = vmatprep.mubr.bf16.mxu0 0
      %969 = vmatmul.mubr.bf16.gmra.mrb[0].mxu0 %v849
      %v970 = vpop.f32.mrb[0].mxu0
      %v971 = vadd.f32 0.0, %v970
      %v972 = vpop.f32.mrb[0].mxu0
      %v973 = vpop.f32.mrb[0].mxu0
      %v974 = vadd.f32 0.0, %v973
      %v975 = vpop.f32.mrb[0].mxu0
      %976 = vmatprep.mubr.bf16.mxu0 0
      %977 = vmatmul.mubr.bf16.gmra.mrb[0].mxu0 %v852
      %v978 = vpop.f32.mrb[0].mxu0
      %v979 = vadd.f32 0.0, %v978
      %v980 = vpop.f32.mrb[0].mxu0
      %v981 = vpop.f32.mrb[0].mxu0
      %v982 = vadd.f32 0.0, %v981
      %v983 = vpop.f32.mrb[0].mxu0
      %984 = vmatprep.mubr.bf16.mxu0 0
      %985 = vmatmul.mubr.bf16.gmra.mrb[0].mxu0 %v855
      %v986 = vpop.f32.mrb[0].mxu0
      %v987 = vadd.f32 0.0, %v986
      %v988 = vpop.f32.mrb[0].mxu0
      %v989 = vpop.f32.mrb[0].mxu0
      %v990 = vadd.f32 0.0, %v989
      %v991 = vpop.f32.mrb[0].mxu0
      %992 = vmatprep.mubr.bf16.mxu0 0
      %993 = vmatmul.mubr.bf16.gmra.mrb[0].mxu0 %v858
      %v994 = vpop.f32.mrb[0].mxu0
      %v995 = vadd.f32 0.0, %v994
      %v996 = vpop.f32.mrb[0].mxu0
      %v997 = vpop.f32.mrb[0].mxu0
      %v998 = vadd.f32 0.0, %v997
      %v999 = vpop.f32.mrb[0].mxu0
      %1000 = vmatprep.mubr.bf16.mxu0 0
      %1001 = vmatmul.mubr.bf16.gmra.mrb[0].mxu0 %v861
      %v1002 = vpop.f32.mrb[0].mxu0
      %v1003 = vadd.f32 0.0, %v1002
      %v1004 = vpop.f32.mrb[0].mxu0
      %v1005 = vpop.f32.mrb[0].mxu0
      %v1006 = vadd.f32 0.0, %v1005
      %v1007 = vpop.f32.mrb[0].mxu0
      %1008 = vmatprep.mubr.bf16.mxu0 0
      %1009 = vmatmul.mubr.bf16.gmra.mrb[0].mxu0 %v864
      %v1010 = vpop.f32.mrb[0].mxu0
      %v1011 = vadd.f32 0.0, %v1010
      %v1012 = vpop.f32.mrb[0].mxu0
      %v1013 = vpop.f32.mrb[0].mxu0
      %v1014 = vadd.f32 0.0, %v1013
      %v1015 = vpop.f32.mrb[0].mxu0
      %1016 = vmatprep.mubr.bf16.mxu0 0
      %1017 = vmatmul.mubr.bf16.gmra.mrb[0].mxu0 %v867
      %v1018 = vpop.f32.mrb[0].mxu0
      %v1019 = vadd.f32 0.0, %v1018
      %v1020 = vpop.f32.mrb[0].mxu0
      %v1021 = vpop.f32.mrb[0].mxu0
      %v1022 = vadd.f32 0.0, %v1021
      %v1023 = vpop.f32.mrb[0].mxu0
      %1024 = vmatprep.mubr.bf16.mxu0 0
      %1025 = vmatmul.mubr.bf16.gmra.mrb[0].mxu0 %v870
      %v1026 = vpop.f32.mrb[0].mxu0
      %v1027 = vadd.f32 0.0, %v1026
      %v1028 = vpop.f32.mrb[0].mxu0
      %v1029 = vpop.f32.mrb[0].mxu0
      %v1030 = vadd.f32 0.0, %v1029
      %v1031 = vpop.f32.mrb[0].mxu0
      %1032 = vdwg.mxu0
      %v1033 = vadd.f32 %v561, %v907
      %v1034 = vadd.f32 %v564, %v910
      %v1035 = vadd.f32 %v569, %v915
      %v1036 = vadd.f32 %v572, %v918
      %v1037 = vadd.f32 %v577, %v923
      %v1038 = vadd.f32 %v580, %v926
      %v1039 = vadd.f32 %v585, %v931
      %v1040 = vadd.f32 %v588, %v934
      %v1041 = vadd.f32 %v593, %v939
      %v1042 = vadd.f32 %v596, %v942
      %v1043 = vadd.f32 %v601, %v947
      %v1044 = vadd.f32 %v604, %v950
      %v1045 = vadd.f32 %v609, %v955
      %v1046 = vadd.f32 %v612, %v958
      %v1047 = vadd.f32 %v617, %v963
      %v1048 = vadd.f32 %v620, %v966
      %v1049 = vadd.f32 %v625, %v971
      %v1050 = vadd.f32 %v628, %v974
      %v1051 = vadd.f32 %v633, %v979
      %v1052 = vadd.f32 %v636, %v982
      %v1053 = vadd.f32 %v641, %v987
      %v1054 = vadd.f32 %v644, %v990
      %v1055 = vadd.f32 %v649, %v995
      %v1056 = vadd.f32 %v652, %v998
      %v1057 = vadd.f32 %v657, %v1003
      %v1058 = vadd.f32 %v660, %v1006
      %v1059 = vadd.f32 %v665, %v1011
      %v1060 = vadd.f32 %v668, %v1014
      %v1061 = vadd.f32 %v673, %v1019
      %v1062 = vadd.f32 %v676, %v1022
      %v1063 = vadd.f32 %v681, %v1027
      %v1064 = vadd.f32 %v684, %v1030
      %v1065 = vmax.f32 %v1033, 0.0
      %v1066 = vmax.f32 %v1034, 0.0
      %v1067 = vmax.f32 %v1035, 0.0
      %v1068 = vmax.f32 %v1036, 0.0
      %v1069 = vmax.f32 %v1037, 0.0
      %v1070 = vmax.f32 %v1038, 0.0
      %v1071 = vmax.f32 %v1039, 0.0
      %v1072 = vmax.f32 %v1040, 0.0
      %v1073 = vmax.f32 %v1041, 0.0
      %v1074 = vmax.f32 %v1042, 0.0
      %v1075 = vmax.f32 %v1043, 0.0
      %v1076 = vmax.f32 %v1044, 0.0
      %v1077 = vmax.f32 %v1045, 0.0
      %v1078 = vmax.f32 %v1046, 0.0
      %v1079 = vmax.f32 %v1047, 0.0
      %v1080 = vmax.f32 %v1048, 0.0
      %v1081 = vmax.f32 %v1049, 0.0
      %v1082 = vmax.f32 %v1050, 0.0
      %v1083 = vmax.f32 %v1051, 0.0
      %v1084 = vmax.f32 %v1052, 0.0
      %v1085 = vmax.f32 %v1053, 0.0
      %v1086 = vmax.f32 %v1054, 0.0
      %v1087 = vmax.f32 %v1055, 0.0
      %v1088 = vmax.f32 %v1056, 0.0
      %v1089 = vmax.f32 %v1057, 0.0
      %v1090 = vmax.f32 %v1058, 0.0
      %v1091 = vmax.f32 %v1059, 0.0
      %v1092 = vmax.f32 %v1060, 0.0
      %v1093 = vmax.f32 %v1061, 0.0
      %v1094 = vmax.f32 %v1062, 0.0
      %v1095 = vmax.f32 %v1063, 0.0
      %v1096 = vmax.f32 %v1064, 0.0
      %v1097 = vpack.c.bf16 %v1066, %v1065
      %v1098 = vpack.c.bf16 %v1068, %v1067
      %v1099 = vpack.c.bf16 %v1070, %v1069
      %v1100 = vpack.c.bf16 %v1072, %v1071
      %v1101 = vpack.c.bf16 %v1074, %v1073
      %v1102 = vpack.c.bf16 %v1076, %v1075
      %v1103 = vpack.c.bf16 %v1078, %v1077
      %v1104 = vpack.c.bf16 %v1080, %v1079
      %v1105 = vpack.c.bf16 %v1082, %v1081
      %v1106 = vpack.c.bf16 %v1084, %v1083
      %v1107 = vpack.c.bf16 %v1086, %v1085
      %v1108 = vpack.c.bf16 %v1088, %v1087
      %v1109 = vpack.c.bf16 %v1090, %v1089
      %v1110 = vpack.c.bf16 %v1092, %v1091
      %v1111 = vpack.c.bf16 %v1094, %v1093
      %v1112 = vpack.c.bf16 %v1096, %v1095
      %v1129 = vunpack.c.l.b16 %v1097
      %v1130 = vunpack.c.h.b16 %v1097
      %v1131 = vunpack.c.l.b16 %v1098
      %v1132 = vunpack.c.h.b16 %v1098
      %v1133 = vunpack.c.l.b16 %v1099
      %v1134 = vunpack.c.h.b16 %v1099
      %v1135 = vunpack.c.l.b16 %v1100
      %v1136 = vunpack.c.h.b16 %v1100
      %v1137 = vunpack.c.l.b16 %v1101
      %v1138 = vunpack.c.h.b16 %v1101
      %v1139 = vunpack.c.l.b16 %v1102
      %v1140 = vunpack.c.h.b16 %v1102
      %v1141 = vunpack.c.l.b16 %v1103
      %v1142 = vunpack.c.h.b16 %v1103
      %v1143 = vunpack.c.l.b16 %v1104
      %v1144 = vunpack.c.h.b16 %v1104
      %v1145 = vunpack.c.l.b16 %v1105
      %v1146 = vunpack.c.h.b16 %v1105
      %v1147 = vunpack.c.l.b16 %v1106
      %v1148 = vunpack.c.h.b16 %v1106
      %v1149 = vunpack.c.l.b16 %v1107
      %v1150 = vunpack.c.h.b16 %v1107
      %v1151 = vunpack.c.l.b16 %v1108
      %v1152 = vunpack.c.h.b16 %v1108
      %v1153 = vunpack.c.l.b16 %v1109
      %v1154 = vunpack.c.h.b16 %v1109
      %v1155 = vunpack.c.l.b16 %v1110
      %v1156 = vunpack.c.h.b16 %v1110
      %v1157 = vunpack.c.l.b16 %v1111
      %v1158 = vunpack.c.h.b16 %v1111
      %v1159 = vunpack.c.l.b16 %v1112
      %v1160 = vunpack.c.h.b16 %v1112
      %v1161 = vpack.c.b16 %v1129, %v1129
      %v1162 = vpack.c.b16 %v1130, %v1130
      %v1163 = vpack.c.b16 %v1131, %v1131
      %v1164 = vpack.c.b16 %v1132, %v1132
      %v1165 = vpack.c.b16 %v1133, %v1133
      %v1166 = vpack.c.b16 %v1134, %v1134
      %v1167 = vpack.c.b16 %v1135, %v1135
      %v1168 = vpack.c.b16 %v1136, %v1136
      %v1169 = vpack.c.b16 %v1137, %v1137
      %v1170 = vpack.c.b16 %v1138, %v1138
      %v1171 = vpack.c.b16 %v1139, %v1139
      %v1172 = vpack.c.b16 %v1140, %v1140
      %v1173 = vpack.c.b16 %v1141, %v1141
      %v1174 = vpack.c.b16 %v1142, %v1142
      %v1175 = vpack.c.b16 %v1143, %v1143
      %v1176 = vpack.c.b16 %v1144, %v1144
      %v1177 = vpack.c.b16 %v1145, %v1145
      %v1178 = vpack.c.b16 %v1146, %v1146
      %v1179 = vpack.c.b16 %v1147, %v1147
      %v1180 = vpack.c.b16 %v1148, %v1148
      %v1181 = vpack.c.b16 %v1149, %v1149
      %v1182 = vpack.c.b16 %v1150, %v1150
      %v1183 = vpack.c.b16 %v1151, %v1151
      %v1184 = vpack.c.b16 %v1152, %v1152
      %v1185 = vpack.c.b16 %v1153, %v1153
      %v1186 = vpack.c.b16 %v1154, %v1154
      %v1187 = vpack.c.b16 %v1155, %v1155
      %v1188 = vpack.c.b16 %v1156, %v1156
      %v1189 = vpack.c.b16 %v1157, %v1157
      %v1190 = vpack.c.b16 %v1158, %v1158
      %v1191 = vpack.c.b16 %v1159, %v1159
      %v1192 = vpack.c.b16 %v1160, %v1160
      %vm1225 = vcmask 125952
      %1226 = vst.msk [vmem:[%s143] sm:$0xf] %vm1225, %v1161
      %1227 = vst.msk [vmem:[%s143 + $0x4] sm:$0xf] %vm1225, %v1162
      %1228 = vst.msk [vmem:[%s143 + $0x8] sm:$0xf] %vm1225, %v1163
      %1229 = vst.msk [vmem:[%s143 + $0xc] sm:$0xf] %vm1225, %v1164
      %1230 = vst.msk [vmem:[%s143 + $0x10] sm:$0xf] %vm1225, %v1165
      %1231 = vst.msk [vmem:[%s143 + $0x14] sm:$0xf] %vm1225, %v1166
      %1232 = vst.msk [vmem:[%s143 + $0x18] sm:$0xf] %vm1225, %v1167
      %1233 = vst.msk [vmem:[%s143 + $0x1c] sm:$0xf] %vm1225, %v1168
      %1234 = vst.msk [vmem:[%s143 + $0x20] sm:$0xf] %vm1225, %v1169
      %1235 = vst.msk [vmem:[%s143 + $0x24] sm:$0xf] %vm1225, %v1170
      %1236 = vst.msk [vmem:[%s143 + $0x28] sm:$0xf] %vm1225, %v1171
      %1237 = vst.msk [vmem:[%s143 + $0x2c] sm:$0xf] %vm1225, %v1172
      %1238 = vst.msk [vmem:[%s143 + $0x30] sm:$0xf] %vm1225, %v1173
      %1239 = vst.msk [vmem:[%s143 + $0x34] sm:$0xf] %vm1225, %v1174
      %1240 = vst.msk [vmem:[%s143 + $0x38] sm:$0xf] %vm1225, %v1175
      %1241 = vst.msk [vmem:[%s143 + $0x3c] sm:$0xf] %vm1225, %v1176
      %1242 = vst.msk [vmem:[%s143 + $0x40] sm:$0xf] %vm1225, %v1177
      %1243 = vst.msk [vmem:[%s143 + $0x44] sm:$0xf] %vm1225, %v1178
      %1244 = vst.msk [vmem:[%s143 + $0x48] sm:$0xf] %vm1225, %v1179
      %1245 = vst.msk [vmem:[%s143 + $0x4c] sm:$0xf] %vm1225, %v1180
      %1246 = vst.msk [vmem:[%s143 + $0x50] sm:$0xf] %vm1225, %v1181
      %1247 = vst.msk [vmem:[%s143 + $0x54] sm:$0xf] %vm1225, %v1182
      %1248 = vst.msk [vmem:[%s143 + $0x58] sm:$0xf] %vm1225, %v1183
      %1249 = vst.msk [vmem:[%s143 + $0x5c] sm:$0xf] %vm1225, %v1184
      %1250 = vst.msk [vmem:[%s143 + $0x60] sm:$0xf] %vm1225, %v1185
      %1251 = vst.msk [vmem:[%s143 + $0x64] sm:$0xf] %vm1225, %v1186
      %1252 = vst.msk [vmem:[%s143 + $0x68] sm:$0xf] %vm1225, %v1187
      %1253 = vst.msk [vmem:[%s143 + $0x6c] sm:$0xf] %vm1225, %v1188
      %1254 = vst.msk [vmem:[%s143 + $0x70] sm:$0xf] %vm1225, %v1189
      %1255 = vst.msk [vmem:[%s143 + $0x74] sm:$0xf] %vm1225, %v1190
      %1256 = vst.msk [vmem:[%s143 + $0x78] sm:$0xf] %vm1225, %v1191
      %1257 = vst.msk [vmem:[%s143 + $0x7c] sm:$0xf] %vm1225, %v1192
      %p1258 = scmp.lt.s32.totalorder %s13, 1
      %s1259 = scalar_select %p1258, %s13, 1
      %s1260 = smul.addr %s1259, 32
      %s1261 = smul.addr %s1260, 4
      %s1262 = scalar_lea.vmem %s2, %s1261
      // Predicated region
      $region29: #{self_attention_forward.15} parent=27 // pred_check
        %p1263 = pneg %p78
      $region30: #{self_attention_forward.15} parent=27 // pred_check_branch
        %1265 = sbr.rel (%p1263) target = $region32
      $region31: #{self_attention_forward.15} parent=27 // pred_region
        _
      $region32: #{self_attention_forward.15} parent=27 // pred_fallthru
        _
    $region28: #{self_attention_forward.15} parent=5 // pred_fallthru
      _
    %p1266 = scmp.le.s32.totalorder 2, %s8
    // Predicated region
    $region33: #{self_attention_forward.15} parent=5 // pred_check
      %p1267 = pneg %p1266
    $region34: #{self_attention_forward.15} parent=5 // pred_check_branch
      %1269 = sbr.rel (%p1267) target = $region36
    $region35: #{self_attention_forward.15} parent=5 // pred_region
      %s1270 = ssub.s32 %s8, 2
      // Predicated region
      $region37: #{self_attention_forward.15} parent=35 // pred_check
        %p1271 = pneg %p84
      $region38: #{self_attention_forward.15} parent=35 // pred_check_branch
        %1273 = sbr.rel (%p1271) target = $region40
      $region39: #{self_attention_forward.15} parent=35 // pred_region
        %p1274 = scmp.lt.s32.totalorder %s14, 1
        %s1275 = scalar_select %p1274, %s14, 1
        %s1276 = smul.addr %s1275, 32
        %s1277 = smul.addr %s1276, 4
        %s1278 = scalar_lea.vmem %s2, %s1277
      $region40: #{self_attention_forward.15} parent=35 // pred_fallthru
        _
    $region36: #{self_attention_forward.15} parent=5 // pred_fallthru
      _
  $region6: #{self_attention_forward.15} parent=0 // loop_footer
    %s12 = sadd.s32 1, %s8
  $region7: #{self_attention_forward.15} parent=0 // loop_footer_branch
    %7 = sbr.rel target = $region3
  $region8: #{self_attention_forward.15} parent=0 // loop_exit
    _

// kernel: self_attention_forward.18
$region0: #{self_attention_forward.18}
  #allocation0 [shape = 'u32[]', space=smem, size = 0x4, offset = 0x4, fixed_abs, tag = 'smem constant byte address 0x4 - core index']
  #allocation1 [shape = 'u32[144,128]{1,0:T(1,128)}', space=vmem, size = 0x12000, scoped, tag = 'internal scratch']
  %s0 = inlined_call_operand.vmem [shape: bf16[2,56,40], index: 0, kind: input, shape index: {}]
  %s1 = inlined_call_operand.vmem [shape: bf16[1,40,8], index: 1, kind: input, shape index: {}]
  %s2 = inlined_call_operand.vmem [shape: bf16[2,56,8], index: 2, kind: output, shape index: {}]
  %s3 = sld [smem:[#allocation0]]
  $region41: #{self_attention_forward.18} parent=0
    _
  %s5 = ssub.s32 1, %s3
  %s6 = scalar_select 0, %s5, %s3
  loop: start=0, step=1, limit=4
  $region2: #{self_attention_forward.18} parent=0 // loop_pre_header
    _
  $region3: #{self_attention_forward.18} parent=0 // loop_header
    %s8 = sphi 0, %s12
    %p9 = scmp.ge.s32.totalorder %s8, 4
    %s18 = sphi 0, %s20
    %s21 = sphi 0, %s18
    %s22 = sphi 0, %s21
    %s38 = sphi 0, %s22
    %s42 = sphi 0, %s42
    %s44 = sphi 0, %s42
    %s45 = sphi 0, %s44
    %s59 = sphi 0, %s45
    %s65 = sphi 0, %s67
    %s68 = sphi 0, %s65
    %s69 = sphi 0, %s68
    %s85 = sphi 0, %s69
  $region4: #{self_attention_forward.18} parent=0 // loop_header_branch
    %11 = sbr.rel (%p9) target = $region8
  $region5: #{self_attention_forward.18} parent=0 // loop_body
    %s13 = ssub.s32 %s8, 1
    %s14 = ssub.s32 %s8, 2
    %s15 = sadd.s32 %s8, 1
    %s16 = ssub.s32 %s8, %s15
    %p17 = scmp.eq.s32.totalorder %s16, 0
    %s19 = sadd.s32 %s18, 1
    %s20 = scalar_select %p17, %s18, %s19
    %p23 = pneg %p17
    %p24 = scmp.eq.s32.totalorder %s8, 1
    %p25 = por %p23, %p24
    %p26 = scmp.ne.s32.totalorder %s18, %s21
    %p27 = scmp.eq.s32.totalorder %s8, 0
    %p28 = por %p26, %p27
    %p29 = scmp.ne.s32.totalorder %s18, %s21
    %p30 = scmp.eq.s32.totalorder %s13, 1
    %p31 = por %p29, %p30
    %p32 = scmp.ne.s32.totalorder %s21, %s22
    %p33 = scmp.eq.s32.totalorder %s13, 0
    %p34 = por %p32, %p33
    %p35 = scmp.ne.s32.totalorder %s21, %s22
    %p36 = scmp.eq.s32.totalorder %s14, 1
    %p37 = por %p35, %p36
    %p39 = scmp.ne.s32.totalorder %s22, %s38
    %p40 = scmp.eq.s32.totalorder %s14, 0
    %p41 = por %p39, %p40
    %s43 = sadd.s32 %s42, 1
    %p46 = scmp.eq.s32.totalorder %s8, 1
    %p47 = scmp.ne.s32.totalorder %s42, %s44
    %p48 = scmp.eq.s32.totalorder %s8, 0
    %p49 = por %p47, %p48
    %p50 = scmp.ne.s32.totalorder %s42, %s44
    %p51 = scmp.eq.s32.totalorder %s13, 1
    %p52 = por %p50, %p51
    %p53 = scmp.ne.s32.totalorder %s44, %s45
    %p54 = scmp.eq.s32.totalorder %s13, 0
    %p55 = por %p53, %p54
    %p56 = scmp.ne.s32.totalorder %s44, %s45
    %p57 = scmp.eq.s32.totalorder %s14, 1
    %p58 = por %p56, %p57
    %p60 = scmp.ne.s32.totalorder %s45, %s59
    %p61 = scmp.eq.s32.totalorder %s14, 0
    %p62 = por %p60, %p61
    %s63 = ssub.s32 %s8, %s15
    %p64 = scmp.eq.s32.totalorder %s63, 0
    %s66 = sadd.s32 %s65, 1
    %s67 = scalar_select %p64, %s65, %s66
    %p70 = pneg %p64
    %p71 = scmp.eq.s32.totalorder %s8, 1
    %p72 = por %p70, %p71
    %p73 = scmp.ne.s32.totalorder %s65, %s68
    %p74 = scmp.eq.s32.totalorder %s8, 0
    %p75 = por %p73, %p74
    %p76 = scmp.ne.s32.totalorder %s65, %s68
    %p77 = scmp.eq.s32.totalorder %s13, 1
    %p78 = por %p76, %p77
    %p79 = scmp.ne.s32.totalorder %s68, %s69
    %p80 = scmp.eq.s32.totalorder %s13, 0
    %p81 = por %p79, %p80
    %p82 = scmp.ne.s32.totalorder %s68, %s69
    %p83 = scmp.eq.s32.totalorder %s14, 1
    %p84 = por %p82, %p83
    %p86 = scmp.ne.s32.totalorder %s69, %s85
    %p87 = scmp.eq.s32.totalorder %s14, 0
    %p88 = por %p86, %p87
    %p89 = scmp.le.s32.totalorder 1, %s8
    %p90 = scmp.lt.s32.totalorder %s8, 3
    %p91 = pnand %p89, %p90
    %p92 = pneg %p91
    // Predicated region
    $region9: #{self_attention_forward.18} parent=5 // pred_check
      _
    $region10: #{self_attention_forward.18} parent=5 // pred_check_branch
      %94 = sbr.rel (%p91) target = $region12
    $region11: #{self_attention_forward.18} parent=5 // pred_region
      %s95 = ssub.s32 %s8, 1
      // Predicated region
      $region13: #{self_attention_forward.18} parent=11 // pred_check
        %p96 = pneg %p55
      $region14: #{self_attention_forward.18} parent=11 // pred_check_branch
        %98 = sbr.rel (%p96) target = $region16
      $region15: #{self_attention_forward.18} parent=11 // pred_region
        _
      $region16: #{self_attention_forward.18} parent=11 // pred_fallthru
        _
    $region12: #{self_attention_forward.18} parent=5 // pred_fallthru
      _
    %p99 = scmp.lt.s32.totalorder %s8, 2
    // Predicated region
    $region17: #{self_attention_forward.18} parent=5 // pred_check
      %p100 = pneg %p99
    $region18: #{self_attention_forward.18} parent=5 // pred_check_branch
      %102 = sbr.rel (%p100) target = $region20
    $region19: #{self_attention_forward.18} parent=5 // pred_region
      // Predicated region
      $region21: #{self_attention_forward.18} parent=19 // pred_check
        %p103 = pneg %p28
      $region22: #{self_attention_forward.18} parent=19 // pred_check_branch
        %105 = sbr.rel (%p103) target = $region24
      $region23: #{self_attention_forward.18} parent=19 // pred_region
        %p106 = scmp.lt.s32.totalorder %s8, 1
        %s107 = scalar_select %p106, %s8, 1
        %s108 = smul.addr %s107, 7
        %s109 = smul.addr %s108, 4
        %s110 = scalar_lea.vmem %s0, %s109
      $region24: #{self_attention_forward.18} parent=19 // pred_fallthru
        _
    $region20: #{self_attention_forward.18} parent=5 // pred_fallthru
      _
    %p111 = scmp.le.s32.totalorder 1, %s8
    %p112 = scmp.lt.s32.totalorder %s8, 3
    %p113 = pnand %p111, %p112
    %p114 = pneg %p113
    // Predicated region
    $region25: #{self_attention_forward.18} parent=5 // pred_check
      _
    $region26: #{self_attention_forward.18} parent=5 // pred_check_branch
      %116 = sbr.rel (%p113) target = $region28
    $region27: #{self_attention_forward.18} parent=5 // pred_region
      %s117 = ssub.s32 %s8, 1
      %p118 = scmp.lt.s32.totalorder %s13, 1
      %s119 = scalar_select %p118, %s13, 1
      %s120 = smul.addr %s119, 7
      %s121 = smul.addr %s120, 4
      %s122 = scalar_lea.vmem %s0, %s121
      %p123 = pneg %p34
      %p124 = pneg %p31
      %p125 = pneg %p55
      %p126 = pneg %p52
      %p127 = pneg %p81
      %p128 = pneg %p78
      %p129 = scmp.lt.s32.totalorder %s13, 1
      %s130 = scalar_select %p129, %s13, 1
      %s131 = smul.addr %s130, 7
      %s132 = smul.addr %s131, 4
      %s133 = scalar_lea.vmem %s2, %s132
      %p134 = scmp.lt.s32.totalorder %s13, 1
      %s135 = scalar_select %p134, %s13, 1
      %s136 = smul.addr %s135, 7
      %s137 = smul.addr %s136, 4
      %s138 = scalar_lea.vmem %s0, %s137
      %p139 = scmp.lt.s32.totalorder %s13, 1
      %s140 = scalar_select %p139, %s13, 1
      %s141 = smul.addr %s140, 7
      %s142 = smul.addr %s141, 4
      %s143 = scalar_lea.vmem %s2, %s142
      %v145 = vld [vmem:[%s138] sm:$0xf]
      %v146 = vld [vmem:[%s138 + $0x4] sm:$0xf]
      %v147 = vld [vmem:[%s138 + $0x8] sm:$0xf]
      %v148 = vld [vmem:[%s138 + $0xc] sm:$0xf]
      %v149 = vld [vmem:[%s138 + $0x10] sm:$0xf]
      %v150 = vld [vmem:[%s138 + $0x14] sm:$0xf]
      %v151 = vld [vmem:[%s138 + $0x18] sm:$0xf]
      %v152 = vld [vmem:[%s1] sm:$0xf]
      %v153 = vld [vmem:[%s1 + $0x4] sm:$0xf]
      %v154 = vld [vmem:[%s1 + $0x8] sm:$0xf]
      %v155 = vld [vmem:[%s1 + $0xc] sm:$0xf]
      %v156 = vld [vmem:[%s1 + $0x10] sm:$0xf]
      %v164 = vunpack.c.l.b16 %v145
      %v165 = vunpack.c.l.b16 %v146
      %v166 = vunpack.c.l.b16 %v147
      %v167 = vunpack.c.l.b16 %v148
      %v168 = vunpack.c.l.b16 %v149
      %v169 = vunpack.c.l.b16 %v150
      %v170 = vunpack.c.l.b16 %v151
      %v171 = vpack.c.b16 %v165, %v164
      %v172 = vpack.c.b16 %v167, %v166
      %v173 = vpack.c.b16 %v169, %v168
      %v174 = vpack.c.b16 %v170, %v170
      %v180 = vunpack.c.l.b16 %v152
      %v181 = vunpack.c.l.b16 %v153
      %v182 = vunpack.c.l.b16 %v154
      %v183 = vunpack.c.l.b16 %v155
      %v184 = vunpack.c.l.b16 %v156
      %v185 = vpack.c.b16 %v181, %v180
      %v186 = vpack.c.b16 %v183, %v182
      %v187 = vpack.c.b16 %v184, %v184
      %vm190 = vcmask 326656
      %v192 = vsel %vm190, %v171, 0
      %v195 = vsel %vm190, %v172, 0
      %v198 = vsel %vm190, %v173, 0
      %v201 = vsel %vm190, %v174, 0
      %vm203 = vcmask 1043456
      %v205 = vsel %vm203, %v187, 0
      %207 = vmatprep.subr.bf16.mxu0 0
      %208 = vmatpush1.bf16.msra.mxu0 %v185
      %209 = vmatprep.subr.bf16.mxu0 0
      %210 = vmatpush1.bf16.msra.mxu0 %v186
      %211 = vmatprep.subr.bf16.mxu0 0
      %212 = vmatpush1.bf16.msra.mxu0 %v205
      %213 = vmatprep.subr.bf16.mxu0 0
      %214 = vmatpush1.bf16.msra.mxu0 0
      %215 = vmatprep.subr.bf16.mxu0 0
      %216 = vmatpush1.bf16.msra.mxu0 0
      %217 = vmatprep.subr.bf16.mxu0 0
      %218 = vmatpush1.bf16.msra.mxu0 0
      %219 = vmatprep.subr.bf16.mxu0 0
      %220 = vmatpush1.bf16.msra.mxu0 0
      %221 = vmatprep.subr.bf16.mxu0 0
      %222 = vmatpush1.bf16.msra.mxu0 0
      %223 = vmatprep.subr.bf16.mxu0 0
      %224 = vmatpush1.bf16.msra.mxu0 0
      %225 = vmatprep.subr.bf16.mxu0 0
      %226 = vmatpush1.bf16.msra.mxu0 0
      %227 = vmatprep.subr.bf16.mxu0 0
      %228 = vmatpush1.bf16.msra.mxu0 0
      %229 = vmatprep.subr.bf16.mxu0 0
      %230 = vmatpush1.bf16.msra.mxu0 0
      %231 = vmatprep.subr.bf16.mxu0 0
      %232 = vmatpush1.bf16.msra.mxu0 0
      %233 = vmatprep.subr.bf16.mxu0 0
      %234 = vmatpush1.bf16.msra.mxu0 0
      %235 = vmatprep.subr.bf16.mxu0 0
      %236 = vmatpush1.bf16.msra.mxu0 0
      %237 = vmatprep.subr.bf16.mxu0 0
      %238 = vmatpush1.bf16.msra.mxu0 0
      %239 = vmatprep.mubr.bf16.mxu0 0
      %240 = vmatmul.mubr.bf16.gmra.mrb[0].mxu0 %v192
      %v241 = vpop.f32.mrb[0].mxu0
      %v242 = vadd.f32 0.0, %v241
      %v243 = vpop.f32.mrb[0].mxu0
      %v244 = vpop.f32.mrb[0].mxu0
      %v245 = vadd.f32 0.0, %v244
      %v246 = vpop.f32.mrb[0].mxu0
      %247 = vmatprep.mubr.bf16.mxu0 0
      %248 = vmatmul.mubr.bf16.gmra.mrb[0].mxu0 %v195
      %v249 = vpop.f32.mrb[0].mxu0
      %v250 = vadd.f32 0.0, %v249
      %v251 = vpop.f32.mrb[0].mxu0
      %v252 = vpop.f32.mrb[0].mxu0
      %v253 = vadd.f32 0.0, %v252
      %v254 = vpop.f32.mrb[0].mxu0
      %255 = vmatprep.mubr.bf16.mxu0 0
      %256 = vmatmul.mubr.bf16.gmra.mrb[0].mxu0 %v198
      %v257 = vpop.f32.mrb[0].mxu0
      %v258 = vadd.f32 0.0, %v257
      %v259 = vpop.f32.mrb[0].mxu0
      %v260 = vpop.f32.mrb[0].mxu0
      %v261 = vadd.f32 0.0, %v260
      %v262 = vpop.f32.mrb[0].mxu0
      %263 = vmatprep.mubr.bf16.mxu0 0
      %264 = vmatmul.mubr.bf16.gmra.mrb[0].mxu0 %v201
      %v265 = vpop.f32.mrb[0].mxu0
      %v266 = vadd.f32 0.0, %v265
      %v267 = vpop.f32.mrb[0].mxu0
      %v268 = vpop.f32.mrb[0].mxu0
      %v269 = vpop.f32.mrb[0].mxu0
      %270 = vdwg.mxu0
      %v271 = vmax.f32 %v242, 0.0
      %v272 = vmax.f32 %v245, 0.0
      %v273 = vmax.f32 %v250, 0.0
      %v274 = vmax.f32 %v253, 0.0
      %v275 = vmax.f32 %v258, 0.0
      %v276 = vmax.f32 %v261, 0.0
      %v277 = vmax.f32 %v266, 0.0
      %v278 = vpack.c.bf16 %v272, %v271
      %v279 = vpack.c.bf16 %v274, %v273
      %v280 = vpack.c.bf16 %v276, %v275
      %v281 = vpack.c.bf16 %v277, %v277
      %v286 = vunpack.c.l.b16 %v278
      %v287 = vunpack.c.h.b16 %v278
      %v288 = vunpack.c.l.b16 %v279
      %v289 = vunpack.c.h.b16 %v279
      %v290 = vunpack.c.l.b16 %v280
      %v291 = vunpack.c.h.b16 %v280
      %v292 = vunpack.c.l.b16 %v281
      %v293 = vpack.c.b16 %v286, %v286
      %v294 = vpack.c.b16 %v287, %v287
      %v295 = vpack.c.b16 %v288, %v288
      %v296 = vpack.c.b16 %v289, %v289
      %v297 = vpack.c.b16 %v290, %v290
      %v298 = vpack.c.b16 %v291, %v291
      %v299 = vpack.c.b16 %v292, %v292
      %vm307 = vcmask 60416
      %308 = vst.msk [vmem:[%s143] sm:$0xf] %vm307, %v293
      %309 = vst.msk [vmem:[%s143 + $0x4] sm:$0xf] %vm307, %v294
      %310 = vst.msk [vmem:[%s143 + $0x8] sm:$0xf] %vm307, %v295
      %311 = vst.msk [vmem:[%s143 + $0xc] sm:$0xf] %vm307, %v296
      %312 = vst.msk [vmem:[%s143 + $0x10] sm:$0xf] %vm307, %v297
      %313 = vst.msk [vmem:[%s143 + $0x14] sm:$0xf] %vm307, %v298
      %314 = vst.msk [vmem:[%s143 + $0x18] sm:$0xf] %vm307, %v299
      %p315 = scmp.lt.s32.totalorder %s13, 1
      %s316 = scalar_select %p315, %s13, 1
      %s317 = smul.addr %s316, 7
      %s318 = smul.addr %s317, 4
      %s319 = scalar_lea.vmem %s2, %s318
      // Predicated region
      $region29: #{self_attention_forward.18} parent=27 // pred_check
        %p320 = pneg %p78
      $region30: #{self_attention_forward.18} parent=27 // pred_check_branch
        %322 = sbr.rel (%p320) target = $region32
      $region31: #{self_attention_forward.18} parent=27 // pred_region
        _
      $region32: #{self_attention_forward.18} parent=27 // pred_fallthru
        _
    $region28: #{self_attention_forward.18} parent=5 // pred_fallthru
      _
    %p323 = scmp.le.s32.totalorder 2, %s8
    // Predicated region
    $region33: #{self_attention_forward.18} parent=5 // pred_check
      %p324 = pneg %p323
    $region34: #{self_attention_forward.18} parent=5 // pred_check_branch
      %326 = sbr.rel (%p324) target = $region36
    $region35: #{self_attention_forward.18} parent=5 // pred_region
      %s327 = ssub.s32 %s8, 2
      // Predicated region
      $region37: #{self_attention_forward.18} parent=35 // pred_check
        %p328 = pneg %p84
      $region38: #{self_attention_forward.18} parent=35 // pred_check_branch
        %330 = sbr.rel (%p328) target = $region40
      $region39: #{self_attention_forward.18} parent=35 // pred_region
        %p331 = scmp.lt.s32.totalorder %s14, 1
        %s332 = scalar_select %p331, %s14, 1
        %s333 = smul.addr %s332, 7
        %s334 = smul.addr %s333, 4
        %s335 = scalar_lea.vmem %s2, %s334
      $region40: #{self_attention_forward.18} parent=35 // pred_fallthru
        _
    $region36: #{self_attention_forward.18} parent=5 // pred_fallthru
      _
  $region6: #{self_attention_forward.18} parent=0 // loop_footer
    %s12 = sadd.s32 1, %s8
  $region7: #{self_attention_forward.18} parent=0 // loop_footer_branch
    %7 = sbr.rel target = $region3
  $region8: #{self_attention_forward.18} parent=0 // loop_exit
    _

// kernel: self_attention_forward.19
$region0: #{self_attention_forward.19}
  #allocation0 [shape = 'u32[]', space=smem, size = 0x4, offset = 0x4, fixed_abs, tag = 'smem constant byte address 0x4 - core index']
  #allocation1 [shape = 'u32[144,128]{1,0:T(1,128)}', space=vmem, size = 0x12000, scoped, tag = 'internal scratch']
  %s0 = inlined_call_operand.vmem [shape: bf16[2,12,40], index: 0, kind: input, shape index: {}]
  %s1 = inlined_call_operand.vmem [shape: bf16[1,40,8], index: 1, kind: input, shape index: {}]
  %s2 = inlined_call_operand.vmem [shape: bf16[8,8], index: 2, kind: input, shape index: {}]
  %s3 = inlined_call_operand.vmem [shape: bf16[2,12,8], index: 3, kind: output, shape index: {}]
  %s4 = sld [smem:[#allocation0]]
  $region45: #{self_attention_forward.19} parent=0
    _
  %s6 = ssub.s32 1, %s4
  %s7 = scalar_select 0, %s6, %s4
  loop: start=0, step=1, limit=4
  $region2: #{self_attention_forward.19} parent=0 // loop_pre_header
    _
  $region3: #{self_attention_forward.19} parent=0 // loop_header
    %s9 = sphi 0, %s13
    %p10 = scmp.ge.s32.totalorder %s9, 4
    %s19 = sphi 0, %s21
    %s22 = sphi 0, %s19
    %s23 = sphi 0, %s22
    %s39 = sphi 0, %s23
    %s43 = sphi 0, %s43
    %s45 = sphi 0, %s43
    %s46 = sphi 0, %s45
    %s60 = sphi 0, %s46
    %s64 = sphi 0, %s64
    %s66 = sphi 0, %s64
    %s67 = sphi 0, %s66
    %s81 = sphi 0, %s67
    %s87 = sphi 0, %s89
    %s90 = sphi 0, %s87
    %s91 = sphi 0, %s90
    %s107 = sphi 0, %s91
  $region4: #{self_attention_forward.19} parent=0 // loop_header_branch
    %12 = sbr.rel (%p10) target = $region8
  $region5: #{self_attention_forward.19} parent=0 // loop_body
    %s14 = ssub.s32 %s9, 1
    %s15 = ssub.s32 %s9, 2
    %s16 = sadd.s32 %s9, 1
    %s17 = ssub.s32 %s9, %s16
    %p18 = scmp.eq.s32.totalorder %s17, 0
    %s20 = sadd.s32 %s19, 1
    %s21 = scalar_select %p18, %s19, %s20
    %p24 = pneg %p18
    %p25 = scmp.eq.s32.totalorder %s9, 1
    %p26 = por %p24, %p25
    %p27 = scmp.ne.s32.totalorder %s19, %s22
    %p28 = scmp.eq.s32.totalorder %s9, 0
    %p29 = por %p27, %p28
    %p30 = scmp.ne.s32.totalorder %s19, %s22
    %p31 = scmp.eq.s32.totalorder %s14, 1
    %p32 = por %p30, %p31
    %p33 = scmp.ne.s32.totalorder %s22, %s23
    %p34 = scmp.eq.s32.totalorder %s14, 0
    %p35 = por %p33, %p34
    %p36 = scmp.ne.s32.totalorder %s22, %s23
    %p37 = scmp.eq.s32.totalorder %s15, 1
    %p38 = por %p36, %p37
    %p40 = scmp.ne.s32.totalorder %s23, %s39
    %p41 = scmp.eq.s32.totalorder %s15, 0
    %p42 = por %p40, %p41
    %s44 = sadd.s32 %s43, 1
    %p47 = scmp.eq.s32.totalorder %s9, 1
    %p48 = scmp.ne.s32.totalorder %s43, %s45
    %p49 = scmp.eq.s32.totalorder %s9, 0
    %p50 = por %p48, %p49
    %p51 = scmp.ne.s32.totalorder %s43, %s45
    %p52 = scmp.eq.s32.totalorder %s14, 1
    %p53 = por %p51, %p52
    %p54 = scmp.ne.s32.totalorder %s45, %s46
    %p55 = scmp.eq.s32.totalorder %s14, 0
    %p56 = por %p54, %p55
    %p57 = scmp.ne.s32.totalorder %s45, %s46
    %p58 = scmp.eq.s32.totalorder %s15, 1
    %p59 = por %p57, %p58
    %p61 = scmp.ne.s32.totalorder %s46, %s60
    %p62 = scmp.eq.s32.totalorder %s15, 0
    %p63 = por %p61, %p62
    %s65 = sadd.s32 %s64, 1
    %p68 = scmp.eq.s32.totalorder %s9, 1
    %p69 = scmp.ne.s32.totalorder %s64, %s66
    %p70 = scmp.eq.s32.totalorder %s9, 0
    %p71 = por %p69, %p70
    %p72 = scmp.ne.s32.totalorder %s64, %s66
    %p73 = scmp.eq.s32.totalorder %s14, 1
    %p74 = por %p72, %p73
    %p75 = scmp.ne.s32.totalorder %s66, %s67
    %p76 = scmp.eq.s32.totalorder %s14, 0
    %p77 = por %p75, %p76
    %p78 = scmp.ne.s32.totalorder %s66, %s67
    %p79 = scmp.eq.s32.totalorder %s15, 1
    %p80 = por %p78, %p79
    %p82 = scmp.ne.s32.totalorder %s67, %s81
    %p83 = scmp.eq.s32.totalorder %s15, 0
    %p84 = por %p82, %p83
    %s85 = ssub.s32 %s9, %s16
    %p86 = scmp.eq.s32.totalorder %s85, 0
    %s88 = sadd.s32 %s87, 1
    %s89 = scalar_select %p86, %s87, %s88
    %p92 = pneg %p86
    %p93 = scmp.eq.s32.totalorder %s9, 1
    %p94 = por %p92, %p93
    %p95 = scmp.ne.s32.totalorder %s87, %s90
    %p96 = scmp.eq.s32.totalorder %s9, 0
    %p97 = por %p95, %p96
    %p98 = scmp.ne.s32.totalorder %s87, %s90
    %p99 = scmp.eq.s32.totalorder %s14, 1
    %p100 = por %p98, %p99
    %p101 = scmp.ne.s32.totalorder %s90, %s91
    %p102 = scmp.eq.s32.totalorder %s14, 0
    %p103 = por %p101, %p102
    %p104 = scmp.ne.s32.totalorder %s90, %s91
    %p105 = scmp.eq.s32.totalorder %s15, 1
    %p106 = por %p104, %p105
    %p108 = scmp.ne.s32.totalorder %s91, %s107
    %p109 = scmp.eq.s32.totalorder %s15, 0
    %p110 = por %p108, %p109
    %p111 = scmp.le.s32.totalorder 1, %s9
    %p112 = scmp.lt.s32.totalorder %s9, 3
    %p113 = pnand %p111, %p112
    %p114 = pneg %p113
    // Predicated region
    $region9: #{self_attention_forward.19} parent=5 // pred_check
      _
    $region10: #{self_attention_forward.19} parent=5 // pred_check_branch
      %116 = sbr.rel (%p113) target = $region12
    $region11: #{self_attention_forward.19} parent=5 // pred_region
      %s117 = ssub.s32 %s9, 1
      // Predicated region
      $region13: #{self_attention_forward.19} parent=11 // pred_check
        %p118 = pneg %p56
      $region14: #{self_attention_forward.19} parent=11 // pred_check_branch
        %120 = sbr.rel (%p118) target = $region16
      $region15: #{self_attention_forward.19} parent=11 // pred_region
        _
      $region16: #{self_attention_forward.19} parent=11 // pred_fallthru
        _
      // Predicated region
      $region17: #{self_attention_forward.19} parent=11 // pred_check
        %p121 = pneg %p77
      $region18: #{self_attention_forward.19} parent=11 // pred_check_branch
        %123 = sbr.rel (%p121) target = $region20
      $region19: #{self_attention_forward.19} parent=11 // pred_region
        _
      $region20: #{self_attention_forward.19} parent=11 // pred_fallthru
        _
    $region12: #{self_attention_forward.19} parent=5 // pred_fallthru
      _
    %p124 = scmp.lt.s32.totalorder %s9, 2
    // Predicated region
    $region21: #{self_attention_forward.19} parent=5 // pred_check
      %p125 = pneg %p124
    $region22: #{self_attention_forward.19} parent=5 // pred_check_branch
      %127 = sbr.rel (%p125) target = $region24
    $region23: #{self_attention_forward.19} parent=5 // pred_region
      // Predicated region
      $region25: #{self_attention_forward.19} parent=23 // pred_check
        %p128 = pneg %p29
      $region26: #{self_attention_forward.19} parent=23 // pred_check_branch
        %130 = sbr.rel (%p128) target = $region28
      $region27: #{self_attention_forward.19} parent=23 // pred_region
        %p131 = scmp.lt.s32.totalorder %s9, 1
        %s132 = scalar_select %p131, %s9, 1
        %s133 = smul.addr %s132, 2
        %s134 = smul.addr %s133, 4
        %s135 = scalar_lea.vmem %s0, %s134
      $region28: #{self_attention_forward.19} parent=23 // pred_fallthru
        _
    $region24: #{self_attention_forward.19} parent=5 // pred_fallthru
      _
    %p136 = scmp.le.s32.totalorder 1, %s9
    %p137 = scmp.lt.s32.totalorder %s9, 3
    %p138 = pnand %p136, %p137
    %p139 = pneg %p138
    // Predicated region
    $region29: #{self_attention_forward.19} parent=5 // pred_check
      _
    $region30: #{self_attention_forward.19} parent=5 // pred_check_branch
      %141 = sbr.rel (%p138) target = $region32
    $region31: #{self_attention_forward.19} parent=5 // pred_region
      %s142 = ssub.s32 %s9, 1
      %p143 = scmp.lt.s32.totalorder %s14, 1
      %s144 = scalar_select %p143, %s14, 1
      %s145 = smul.addr %s144, 2
      %s146 = smul.addr %s145, 4
      %s147 = scalar_lea.vmem %s0, %s146
      %p148 = pneg %p35
      %p149 = pneg %p32
      %p150 = pneg %p56
      %p151 = pneg %p53
      %p152 = pneg %p77
      %p153 = pneg %p74
      %p154 = pneg %p103
      %p155 = pneg %p100
      %p156 = scmp.lt.s32.totalorder %s14, 1
      %s157 = scalar_select %p156, %s14, 1
      %s158 = smul.addr %s157, 2
      %s159 = smul.addr %s158, 4
      %s160 = scalar_lea.vmem %s3, %s159
      %p161 = scmp.lt.s32.totalorder %s14, 1
      %s162 = scalar_select %p161, %s14, 1
      %s163 = smul.addr %s162, 2
      %s164 = smul.addr %s163, 4
      %s165 = scalar_lea.vmem %s0, %s164
      %p166 = scmp.lt.s32.totalorder %s14, 1
      %s167 = scalar_select %p166, %s14, 1
      %s168 = smul.addr %s167, 2
      %s169 = smul.addr %s168, 4
      %s170 = scalar_lea.vmem %s3, %s169
      %v172 = vld [vmem:[%s165] sm:$0xf]
      %v173 = vld [vmem:[%s165 + $0x4] sm:$0x3]
      %v174 = vld [vmem:[%s1] sm:$0xf]
      %v175 = vld [vmem:[%s1 + $0x4] sm:$0xf]
      %v176 = vld [vmem:[%s1 + $0x8] sm:$0xf]
      %v177 = vld [vmem:[%s1 + $0xc] sm:$0xf]
      %v178 = vld [vmem:[%s1 + $0x10] sm:$0xf]
      %v181 = vunpack.c.l.b16 %v172
      %v182 = vunpack.c.l.b16 %v173
      %v183 = vpack.c.b16 %v182, %v181
      %v189 = vunpack.c.l.b16 %v174
      %v190 = vunpack.c.l.b16 %v175
      %v191 = vunpack.c.l.b16 %v176
      %v192 = vunpack.c.l.b16 %v177
      %v193 = vunpack.c.l.b16 %v178
      %v194 = vpack.c.b16 %v190, %v189
      %v195 = vpack.c.b16 %v192, %v191
      %v196 = vpack.c.b16 %v193, %v193
      %vm199 = vcmask 326656
      %v201 = vsel %vm199, %v183, 0
      %vm203 = vcmask 1043456
      %v205 = vsel %vm203, %v196, 0
      %207 = vmatprep.subr.bf16.mxu0 0
      %208 = vmatpush1.bf16.msra.mxu0 %v194
      %209 = vmatprep.subr.bf16.mxu0 0
      %210 = vmatpush1.bf16.msra.mxu0 %v195
      %211 = vmatprep.subr.bf16.mxu0 0
      %212 = vmatpush1.bf16.msra.mxu0 %v205
      %213 = vmatprep.subr.bf16.mxu0 0
      %214 = vmatpush1.bf16.msra.mxu0 0
      %215 = vmatprep.subr.bf16.mxu0 0
      %216 = vmatpush1.bf16.msra.mxu0 0
      %217 = vmatprep.subr.bf16.mxu0 0
      %218 = vmatpush1.bf16.msra.mxu0 0
      %219 = vmatprep.subr.bf16.mxu0 0
      %220 = vmatpush1.bf16.msra.mxu0 0
      %221 = vmatprep.subr.bf16.mxu0 0
      %222 = vmatpush1.bf16.msra.mxu0 0
      %223 = vmatprep.subr.bf16.mxu0 0
      %224 = vmatpush1.bf16.msra.mxu0 0
      %225 = vmatprep.subr.bf16.mxu0 0
      %226 = vmatpush1.bf16.msra.mxu0 0
      %227 = vmatprep.subr.bf16.mxu0 0
      %228 = vmatpush1.bf16.msra.mxu0 0
      %229 = vmatprep.subr.bf16.mxu0 0
      %230 = vmatpush1.bf16.msra.mxu0 0
      %231 = vmatprep.subr.bf16.mxu0 0
      %232 = vmatpush1.bf16.msra.mxu0 0
      %233 = vmatprep.subr.bf16.mxu0 0
      %234 = vmatpush1.bf16.msra.mxu0 0
      %235 = vmatprep.subr.bf16.mxu0 0
      %236 = vmatpush1.bf16.msra.mxu0 0
      %237 = vmatprep.subr.bf16.mxu0 0
      %238 = vmatpush1.bf16.msra.mxu0 0
      %239 = vmatprep.mubr.bf16.mxu0 0
      %240 = vmatmul.mubr.bf16.gmra.mrb[0].mxu0 %v201
      %v241 = vpop.f32.mrb[0].mxu0
      %v242 = vadd.f32 0.0, %v241
      %v243 = vpop.f32.mrb[0].mxu0
      %v244 = vpop.f32.mrb[0].mxu0
      %v245 = vadd.f32 0.0, %v244
      %v246 = vpop.f32.mrb[0].mxu0
      %247 = vdwg.mxu0
      %v248 = vmax.f32 %v242, 0.0
      %v249 = vmax.f32 %v245, 0.0
      %v250 = vpack.c.bf16 %v249, %v248
      %v251 = vld [vmem:[%s2] sm:$0xf]
      %vm252 = vcmask 64512
      %v254 = vsel %vm252, %v250, 0
      %v257 = vsel %vm203, %v251, 0
      %259 = vmatprep.subr.bf16.mxu0 0
      %260 = vmatpush1.bf16.msra.mxu0 %v257
      %261 = vmatprep.subr.bf16.mxu0 0
      %262 = vmatpush1.bf16.msra.mxu0 0
      %263 = vmatprep.subr.bf16.mxu0 0
      %264 = vmatpush1.bf16.msra.mxu0 0
      %265 = vmatprep.subr.bf16.mxu0 0
      %266 = vmatpush1.bf16.msra.mxu0 0
      %267 = vmatprep.subr.bf16.mxu0 0
      %268 = vmatpush1.bf16.msra.mxu0 0
      %269 = vmatprep.subr.bf16.mxu0 0
      %270 = vmatpush1.bf16.msra.mxu0 0
      %271 = vmatprep.subr.bf16.mxu0 0
      %272 = vmatpush1.bf16.msra.mxu0 0
      %273 = vmatprep.subr.bf16.mxu0 0
      %274 = vmatpush1.bf16.msra.mxu0 0
      %275 = vmatprep.subr.bf16.mxu0 0
      %276 = vmatpush1.bf16.msra.mxu0 0
      %277 = vmatprep.subr.bf16.mxu0 0
      %278 = vmatpush1.bf16.msra.mxu0 0
      %279 = vmatprep.subr.bf16.mxu0 0
      %280 = vmatpush1.bf16.msra.mxu0 0
      %281 = vmatprep.subr.bf16.mxu0 0
      %282 = vmatpush1.bf16.msra.mxu0 0
      %283 = vmatprep.subr.bf16.mxu0 0
      %284 = vmatpush1.bf16.msra.mxu0 0
      %285 = vmatprep.subr.bf16.mxu0 0
      %286 = vmatpush1.bf16.msra.mxu0 0
      %287 = vmatprep.subr.bf16.mxu0 0
      %288 = vmatpush1.bf16.msra.mxu0 0
      %289 = vmatprep.subr.bf16.mxu0 0
      %290 = vmatpush1.bf16.msra.mxu0 0
      %291 = vmatprep.mubr.bf16.mxu0 0
      %292 = vmatmul.mubr.bf16.gmra.mrb[0].mxu0 %v254
      %v293 = vpop.f32.mrb[0].mxu0
      %v294 = vadd.f32 0.0, %v293
      %v295 = vpop.f32.mrb[0].mxu0
      %v296 = vpop.f32.mrb[0].mxu0
      %v297 = vadd.f32 0.0, %v296
      %v298 = vpop.f32.mrb[0].mxu0
      %299 = vdwg.mxu0
      %v300 = vmax.f32 %v294, 0.0
      %v301 = vmax.f32 %v297, 0.0
      %v302 = vpack.c.bf16 %v301, %v300
      %v304 = vunpack.c.l.b16 %v302
      %v305 = vunpack.c.h.b16 %v302
      %v306 = vpack.c.b16 %v304, %v304
      %v307 = vpack.c.b16 %v305, %v305
      %vm310 = vcmask 60416
      %311 = vst.msk [vmem:[%s170] sm:$0xf] %vm310, %v306
      %vm312 = vcmask 58368
      %313 = vst.msk [vmem:[%s170 + $0x4] sm:$0x3] %vm312, %v307
      %p314 = scmp.lt.s32.totalorder %s14, 1
      %s315 = scalar_select %p314, %s14, 1
      %s316 = smul.addr %s315, 2
      %s317 = smul.addr %s316, 4
      %s318 = scalar_lea.vmem %s3, %s317
      // Predicated region
      $region33: #{self_attention_forward.19} parent=31 // pred_check
        %p319 = pneg %p100
      $region34: #{self_attention_forward.19} parent=31 // pred_check_branch
        %321 = sbr.rel (%p319) target = $region36
      $region35: #{self_attention_forward.19} parent=31 // pred_region
        _
      $region36: #{self_attention_forward.19} parent=31 // pred_fallthru
        _
    $region32: #{self_attention_forward.19} parent=5 // pred_fallthru
      _
    %p322 = scmp.le.s32.totalorder 2, %s9
    // Predicated region
    $region37: #{self_attention_forward.19} parent=5 // pred_check
      %p323 = pneg %p322
    $region38: #{self_attention_forward.19} parent=5 // pred_check_branch
      %325 = sbr.rel (%p323) target = $region40
    $region39: #{self_attention_forward.19} parent=5 // pred_region
      %s326 = ssub.s32 %s9, 2
      // Predicated region
      $region41: #{self_attention_forward.19} parent=39 // pred_check
        %p327 = pneg %p106
      $region42: #{self_attention_forward.19} parent=39 // pred_check_branch
        %329 = sbr.rel (%p327) target = $region44
      $region43: #{self_attention_forward.19} parent=39 // pred_region
        %p330 = scmp.lt.s32.totalorder %s15, 1
        %s331 = scalar_select %p330, %s15, 1
        %s332 = smul.addr %s331, 2
        %s333 = smul.addr %s332, 4
        %s334 = scalar_lea.vmem %s3, %s333
      $region44: #{self_attention_forward.19} parent=39 // pred_fallthru
        _
    $region40: #{self_attention_forward.19} parent=5 // pred_fallthru
      _
  $region6: #{self_attention_forward.19} parent=0 // loop_footer
    %s13 = sadd.s32 1, %s9
  $region7: #{self_attention_forward.19} parent=0 // loop_footer_branch
    %8 = sbr.rel target = $region3
  $region8: #{self_attention_forward.19} parent=0 // loop_exit
    _

// kernel: self_attention_forward.16
$region0: #{self_attention_forward.16}
  #allocation0 [shape = 'u32[]', space=smem, size = 0x4, offset = 0x4, fixed_abs, tag = 'smem constant byte address 0x4 - core index']
  #allocation1 [shape = 'u32[144,128]{1,0:T(1,128)}', space=vmem, size = 0x12000, scoped, tag = 'internal scratch']
  %s0 = inlined_call_operand.vmem [shape: bf16[2,64,24], index: 0, kind: input, shape index: {}]
  %s1 = inlined_call_operand.vmem [shape: bf16[1,24,8], index: 1, kind: input, shape index: {}]
  %s2 = inlined_call_operand.vmem [shape: bf16[2,64,8], index: 2, kind: output, shape index: {}]
  %s3 = sld [smem:[#allocation0]]
  $region41: #{self_attention_forward.16} parent=0
    _
  %s5 = ssub.s32 1, %s3
  %s6 = scalar_select 0, %s5, %s3
  loop: start=0, step=1, limit=4
  $region2: #{self_attention_forward.16} parent=0 // loop_pre_header
    _
  $region3: #{self_attention_forward.16} parent=0 // loop_header
    %s8 = sphi 0, %s12
    %p9 = scmp.ge.s32.totalorder %s8, 4
    %s18 = sphi 0, %s20
    %s21 = sphi 0, %s18
    %s22 = sphi 0, %s21
    %s38 = sphi 0, %s22
    %s42 = sphi 0, %s42
    %s44 = sphi 0, %s42
    %s45 = sphi 0, %s44
    %s59 = sphi 0, %s45
    %s65 = sphi 0, %s67
    %s68 = sphi 0, %s65
    %s69 = sphi 0, %s68
    %s85 = sphi 0, %s69
  $region4: #{self_attention_forward.16} parent=0 // loop_header_branch
    %11 = sbr.rel (%p9) target = $region8
  $region5: #{self_attention_forward.16} parent=0 // loop_body
    %s13 = ssub.s32 %s8, 1
    %s14 = ssub.s32 %s8, 2
    %s15 = sadd.s32 %s8, 1
    %s16 = ssub.s32 %s8, %s15
    %p17 = scmp.eq.s32.totalorder %s16, 0
    %s19 = sadd.s32 %s18, 1
    %s20 = scalar_select %p17, %s18, %s19
    %p23 = pneg %p17
    %p24 = scmp.eq.s32.totalorder %s8, 1
    %p25 = por %p23, %p24
    %p26 = scmp.ne.s32.totalorder %s18, %s21
    %p27 = scmp.eq.s32.totalorder %s8, 0
    %p28 = por %p26, %p27
    %p29 = scmp.ne.s32.totalorder %s18, %s21
    %p30 = scmp.eq.s32.totalorder %s13, 1
    %p31 = por %p29, %p30
    %p32 = scmp.ne.s32.totalorder %s21, %s22
    %p33 = scmp.eq.s32.totalorder %s13, 0
    %p34 = por %p32, %p33
    %p35 = scmp.ne.s32.totalorder %s21, %s22
    %p36 = scmp.eq.s32.totalorder %s14, 1
    %p37 = por %p35, %p36
    %p39 = scmp.ne.s32.totalorder %s22, %s38
    %p40 = scmp.eq.s32.totalorder %s14, 0
    %p41 = por %p39, %p40
    %s43 = sadd.s32 %s42, 1
    %p46 = scmp.eq.s32.totalorder %s8, 1
    %p47 = scmp.ne.s32.totalorder %s42, %s44
    %p48 = scmp.eq.s32.totalorder %s8, 0
    %p49 = por %p47, %p48
    %p50 = scmp.ne.s32.totalorder %s42, %s44
    %p51 = scmp.eq.s32.totalorder %s13, 1
    %p52 = por %p50, %p51
    %p53 = scmp.ne.s32.totalorder %s44, %s45
    %p54 = scmp.eq.s32.totalorder %s13, 0
    %p55 = por %p53, %p54
    %p56 = scmp.ne.s32.totalorder %s44, %s45
    %p57 = scmp.eq.s32.totalorder %s14, 1
    %p58 = por %p56, %p57
    %p60 = scmp.ne.s32.totalorder %s45, %s59
    %p61 = scmp.eq.s32.totalorder %s14, 0
    %p62 = por %p60, %p61
    %s63 = ssub.s32 %s8, %s15
    %p64 = scmp.eq.s32.totalorder %s63, 0
    %s66 = sadd.s32 %s65, 1
    %s67 = scalar_select %p64, %s65, %s66
    %p70 = pneg %p64
    %p71 = scmp.eq.s32.totalorder %s8, 1
    %p72 = por %p70, %p71
    %p73 = scmp.ne.s32.totalorder %s65, %s68
    %p74 = scmp.eq.s32.totalorder %s8, 0
    %p75 = por %p73, %p74
    %p76 = scmp.ne.s32.totalorder %s65, %s68
    %p77 = scmp.eq.s32.totalorder %s13, 1
    %p78 = por %p76, %p77
    %p79 = scmp.ne.s32.totalorder %s68, %s69
    %p80 = scmp.eq.s32.totalorder %s13, 0
    %p81 = por %p79, %p80
    %p82 = scmp.ne.s32.totalorder %s68, %s69
    %p83 = scmp.eq.s32.totalorder %s14, 1
    %p84 = por %p82, %p83
    %p86 = scmp.ne.s32.totalorder %s69, %s85
    %p87 = scmp.eq.s32.totalorder %s14, 0
    %p88 = por %p86, %p87
    %p89 = scmp.le.s32.totalorder 1, %s8
    %p90 = scmp.lt.s32.totalorder %s8, 3
    %p91 = pnand %p89, %p90
    %p92 = pneg %p91
    // Predicated region
    $region9: #{self_attention_forward.16} parent=5 // pred_check
      _
    $region10: #{self_attention_forward.16} parent=5 // pred_check_branch
      %94 = sbr.rel (%p91) target = $region12
    $region11: #{self_attention_forward.16} parent=5 // pred_region
      %s95 = ssub.s32 %s8, 1
      // Predicated region
      $region13: #{self_attention_forward.16} parent=11 // pred_check
        %p96 = pneg %p55
      $region14: #{self_attention_forward.16} parent=11 // pred_check_branch
        %98 = sbr.rel (%p96) target = $region16
      $region15: #{self_attention_forward.16} parent=11 // pred_region
        _
      $region16: #{self_attention_forward.16} parent=11 // pred_fallthru
        _
    $region12: #{self_attention_forward.16} parent=5 // pred_fallthru
      _
    %p99 = scmp.lt.s32.totalorder %s8, 2
    // Predicated region
    $region17: #{self_attention_forward.16} parent=5 // pred_check
      %p100 = pneg %p99
    $region18: #{self_attention_forward.16} parent=5 // pred_check_branch
      %102 = sbr.rel (%p100) target = $region20
    $region19: #{self_attention_forward.16} parent=5 // pred_region
      // Predicated region
      $region21: #{self_attention_forward.16} parent=19 // pred_check
        %p103 = pneg %p28
      $region22: #{self_attention_forward.16} parent=19 // pred_check_branch
        %105 = sbr.rel (%p103) target = $region24
      $region23: #{self_attention_forward.16} parent=19 // pred_region
        %p106 = scmp.lt.s32.totalorder %s8, 1
        %s107 = scalar_select %p106, %s8, 1
        %s108 = smul.addr %s107, 8
        %s109 = smul.addr %s108, 4
        %s110 = scalar_lea.vmem %s0, %s109
      $region24: #{self_attention_forward.16} parent=19 // pred_fallthru
        _
    $region20: #{self_attention_forward.16} parent=5 // pred_fallthru
      _
    %p111 = scmp.le.s32.totalorder 1, %s8
    %p112 = scmp.lt.s32.totalorder %s8, 3
    %p113 = pnand %p111, %p112
    %p114 = pneg %p113
    // Predicated region
    $region25: #{self_attention_forward.16} parent=5 // pred_check
      _
    $region26: #{self_attention_forward.16} parent=5 // pred_check_branch
      %116 = sbr.rel (%p113) target = $region28
    $region27: #{self_attention_forward.16} parent=5 // pred_region
      %s117 = ssub.s32 %s8, 1
      %p118 = scmp.lt.s32.totalorder %s13, 1
      %s119 = scalar_select %p118, %s13, 1
      %s120 = smul.addr %s119, 8
      %s121 = smul.addr %s120, 4
      %s122 = scalar_lea.vmem %s0, %s121
      %p123 = pneg %p34
      %p124 = pneg %p31
      %p125 = pneg %p55
      %p126 = pneg %p52
      %p127 = pneg %p81
      %p128 = pneg %p78
      %p129 = scmp.lt.s32.totalorder %s13, 1
      %s130 = scalar_select %p129, %s13, 1
      %s131 = smul.addr %s130, 8
      %s132 = smul.addr %s131, 4
      %s133 = scalar_lea.vmem %s2, %s132
      %p134 = scmp.lt.s32.totalorder %s13, 1
      %s135 = scalar_select %p134, %s13, 1
      %s136 = smul.addr %s135, 8
      %s137 = smul.addr %s136, 4
      %s138 = scalar_lea.vmem %s0, %s137
      %p139 = scmp.lt.s32.totalorder %s13, 1
      %s140 = scalar_select %p139, %s13, 1
      %s141 = smul.addr %s140, 8
      %s142 = smul.addr %s141, 4
      %s143 = scalar_lea.vmem %s2, %s142
      %v145 = vld [vmem:[%s138] sm:$0xf]
      %v146 = vld [vmem:[%s138 + $0x4] sm:$0xf]
      %v147 = vld [vmem:[%s138 + $0x8] sm:$0xf]
      %v148 = vld [vmem:[%s138 + $0xc] sm:$0xf]
      %v149 = vld [vmem:[%s138 + $0x10] sm:$0xf]
      %v150 = vld [vmem:[%s138 + $0x14] sm:$0xf]
      %v151 = vld [vmem:[%s138 + $0x18] sm:$0xf]
      %v152 = vld [vmem:[%s138 + $0x1c] sm:$0xf]
      %v153 = vld [vmem:[%s1] sm:$0xf]
      %v154 = vld [vmem:[%s1 + $0x4] sm:$0xf]
      %v155 = vld [vmem:[%s1 + $0x8] sm:$0xf]
      %v164 = vunpack.c.l.b16 %v145
      %v165 = vunpack.c.l.b16 %v146
      %v166 = vunpack.c.l.b16 %v147
      %v167 = vunpack.c.l.b16 %v148
      %v168 = vunpack.c.l.b16 %v149
      %v169 = vunpack.c.l.b16 %v150
      %v170 = vunpack.c.l.b16 %v151
      %v171 = vunpack.c.l.b16 %v152
      %v172 = vpack.c.b16 %v165, %v164
      %v173 = vpack.c.b16 %v167, %v166
      %v174 = vpack.c.b16 %v169, %v168
      %v175 = vpack.c.b16 %v171, %v170
      %v179 = vunpack.c.l.b16 %v153
      %v180 = vunpack.c.l.b16 %v154
      %v181 = vunpack.c.l.b16 %v155
      %v182 = vpack.c.b16 %v180, %v179
      %v183 = vpack.c.b16 %v181, %v181
      %vm185 = vcmask 195584
      %v187 = vsel %vm185, %v172, 0
      %v190 = vsel %vm185, %v173, 0
      %v193 = vsel %vm185, %v174, 0
      %v196 = vsel %vm185, %v175, 0
      %vm198 = vcmask 1043456
      %v200 = vsel %vm198, %v183, 0
      %202 = vmatprep.subr.bf16.mxu0 0
      %203 = vmatpush1.bf16.msra.mxu0 %v182
      %204 = vmatprep.subr.bf16.mxu0 0
      %205 = vmatpush1.bf16.msra.mxu0 %v200
      %206 = vmatprep.subr.bf16.mxu0 0
      %207 = vmatpush1.bf16.msra.mxu0 0
      %208 = vmatprep.subr.bf16.mxu0 0
      %209 = vmatpush1.bf16.msra.mxu0 0
      %210 = vmatprep.subr.bf16.mxu0 0
      %211 = vmatpush1.bf16.msra.mxu0 0
      %212 = vmatprep.subr.bf16.mxu0 0
      %213 = vmatpush1.bf16.msra.mxu0 0
      %214 = vmatprep.subr.bf16.mxu0 0
      %215 = vmatpush1.bf16.msra.mxu0 0
      %216 = vmatprep.subr.bf16.mxu0 0
      %217 = vmatpush1.bf16.msra.mxu0 0
      %218 = vmatprep.subr.bf16.mxu0 0
      %219 = vmatpush1.bf16.msra.mxu0 0
      %220 = vmatprep.subr.bf16.mxu0 0
      %221 = vmatpush1.bf16.msra.mxu0 0
      %222 = vmatprep.subr.bf16.mxu0 0
      %223 = vmatpush1.bf16.msra.mxu0 0
      %224 = vmatprep.subr.bf16.mxu0 0
      %225 = vmatpush1.bf16.msra.mxu0 0
      %226 = vmatprep.subr.bf16.mxu0 0
      %227 = vmatpush1.bf16.msra.mxu0 0
      %228 = vmatprep.subr.bf16.mxu0 0
      %229 = vmatpush1.bf16.msra.mxu0 0
      %230 = vmatprep.subr.bf16.mxu0 0
      %231 = vmatpush1.bf16.msra.mxu0 0
      %232 = vmatprep.subr.bf16.mxu0 0
      %233 = vmatpush1.bf16.msra.mxu0 0
      %234 = vmatprep.mubr.bf16.mxu0 0
      %235 = vmatmul.mubr.bf16.gmra.mrb[0].mxu0 %v187
      %v236 = vpop.f32.mrb[0].mxu0
      %v237 = vadd.f32 0.0, %v236
      %v238 = vpop.f32.mrb[0].mxu0
      %v239 = vpop.f32.mrb[0].mxu0
      %v240 = vadd.f32 0.0, %v239
      %v241 = vpop.f32.mrb[0].mxu0
      %242 = vmatprep.mubr.bf16.mxu0 0
      %243 = vmatmul.mubr.bf16.gmra.mrb[0].mxu0 %v190
      %v244 = vpop.f32.mrb[0].mxu0
      %v245 = vadd.f32 0.0, %v244
      %v246 = vpop.f32.mrb[0].mxu0
      %v247 = vpop.f32.mrb[0].mxu0
      %v248 = vadd.f32 0.0, %v247
      %v249 = vpop.f32.mrb[0].mxu0
      %250 = vmatprep.mubr.bf16.mxu0 0
      %251 = vmatmul.mubr.bf16.gmra.mrb[0].mxu0 %v193
      %v252 = vpop.f32.mrb[0].mxu0
      %v253 = vadd.f32 0.0, %v252
      %v254 = vpop.f32.mrb[0].mxu0
      %v255 = vpop.f32.mrb[0].mxu0
      %v256 = vadd.f32 0.0, %v255
      %v257 = vpop.f32.mrb[0].mxu0
      %258 = vmatprep.mubr.bf16.mxu0 0
      %259 = vmatmul.mubr.bf16.gmra.mrb[0].mxu0 %v196
      %v260 = vpop.f32.mrb[0].mxu0
      %v261 = vadd.f32 0.0, %v260
      %v262 = vpop.f32.mrb[0].mxu0
      %v263 = vpop.f32.mrb[0].mxu0
      %v264 = vadd.f32 0.0, %v263
      %v265 = vpop.f32.mrb[0].mxu0
      %266 = vdwg.mxu0
      %v267 = vmax.f32 %v237, 0.0
      %v268 = vmax.f32 %v240, 0.0
      %v269 = vmax.f32 %v245, 0.0
      %v270 = vmax.f32 %v248, 0.0
      %v271 = vmax.f32 %v253, 0.0
      %v272 = vmax.f32 %v256, 0.0
      %v273 = vmax.f32 %v261, 0.0
      %v274 = vmax.f32 %v264, 0.0
      %v275 = vpack.c.bf16 %v268, %v267
      %v276 = vpack.c.bf16 %v270, %v269
      %v277 = vpack.c.bf16 %v272, %v271
      %v278 = vpack.c.bf16 %v274, %v273
      %v283 = vunpack.c.l.b16 %v275
      %v284 = vunpack.c.h.b16 %v275
      %v285 = vunpack.c.l.b16 %v276
      %v286 = vunpack.c.h.b16 %v276
      %v287 = vunpack.c.l.b16 %v277
      %v288 = vunpack.c.h.b16 %v277
      %v289 = vunpack.c.l.b16 %v278
      %v290 = vunpack.c.h.b16 %v278
      %v291 = vpack.c.b16 %v283, %v283
      %v292 = vpack.c.b16 %v284, %v284
      %v293 = vpack.c.b16 %v285, %v285
      %v294 = vpack.c.b16 %v286, %v286
      %v295 = vpack.c.b16 %v287, %v287
      %v296 = vpack.c.b16 %v288, %v288
      %v297 = vpack.c.b16 %v289, %v289
      %v298 = vpack.c.b16 %v290, %v290
      %vm307 = vcmask 60416
      %308 = vst.msk [vmem:[%s143] sm:$0xf] %vm307, %v291
      %309 = vst.msk [vmem:[%s143 + $0x4] sm:$0xf] %vm307, %v292
      %310 = vst.msk [vmem:[%s143 + $0x8] sm:$0xf] %vm307, %v293
      %311 = vst.msk [vmem:[%s143 + $0xc] sm:$0xf] %vm307, %v294
      %312 = vst.msk [vmem:[%s143 + $0x10] sm:$0xf] %vm307, %v295
      %313 = vst.msk [vmem:[%s143 + $0x14] sm:$0xf] %vm307, %v296
      %314 = vst.msk [vmem:[%s143 + $0x18] sm:$0xf] %vm307, %v297
      %315 = vst.msk [vmem:[%s143 + $0x1c] sm:$0xf] %vm307, %v298
      %p316 = scmp.lt.s32.totalorder %s13, 1
      %s317 = scalar_select %p316, %s13, 1
      %s318 = smul.addr %s317, 8
      %s319 = smul.addr %s318, 4
      %s320 = scalar_lea.vmem %s2, %s319
      // Predicated region
      $region29: #{self_attention_forward.16} parent=27 // pred_check
        %p321 = pneg %p78
      $region30: #{self_attention_forward.16} parent=27 // pred_check_branch
        %323 = sbr.rel (%p321) target = $region32
      $region31: #{self_attention_forward.16} parent=27 // pred_region
        _
      $region32: #{self_attention_forward.16} parent=27 // pred_fallthru
        _
    $region28: #{self_attention_forward.16} parent=5 // pred_fallthru
      _
    %p324 = scmp.le.s32.totalorder 2, %s8
    // Predicated region
    $region33: #{self_attention_forward.16} parent=5 // pred_check
      %p325 = pneg %p324
    $region34: #{self_attention_forward.16} parent=5 // pred_check_branch
      %327 = sbr.rel (%p325) target = $region36
    $region35: #{self_attention_forward.16} parent=5 // pred_region
      %s328 = ssub.s32 %s8, 2
      // Predicated region
      $region37: #{self_attention_forward.16} parent=35 // pred_check
        %p329 = pneg %p84
      $region38: #{self_attention_forward.16} parent=35 // pred_check_branch
        %331 = sbr.rel (%p329) target = $region40
      $region39: #{self_attention_forward.16} parent=35 // pred_region
        %p332 = scmp.lt.s32.totalorder %s14, 1
        %s333 = scalar_select %p332, %s14, 1
        %s334 = smul.addr %s333, 8
        %s335 = smul.addr %s334, 4
        %s336 = scalar_lea.vmem %s2, %s335
      $region40: #{self_attention_forward.16} parent=35 // pred_fallthru
        _
    $region36: #{self_attention_forward.16} parent=5 // pred_fallthru
      _
  $region6: #{self_attention_forward.16} parent=0 // loop_footer
    %s12 = sadd.s32 1, %s8
  $region7: #{self_attention_forward.16} parent=0 // loop_footer_branch
    %7 = sbr.rel target = $region3
  $region8: #{self_attention_forward.16} parent=0 // loop_exit
    _

// kernel: self_attention_forward.17
$region0: #{self_attention_forward.17}
  #allocation0 [shape = 'u32[]', space=smem, size = 0x4, offset = 0x4, fixed_abs, tag = 'smem constant byte address 0x4 - core index']
  #allocation1 [shape = 'u32[144,128]{1,0:T(1,128)}', space=vmem, size = 0x12000, scoped, tag = 'internal scratch']
  %s0 = inlined_call_operand.vmem [shape: bf16[2,16,24], index: 0, kind: input, shape index: {}]
  %s1 = inlined_call_operand.vmem [shape: bf16[1,24,8], index: 1, kind: input, shape index: {}]
  %s2 = inlined_call_operand.vmem [shape: bf16[8,8], index: 2, kind: input, shape index: {}]
  %s3 = inlined_call_operand.vmem [shape: bf16[2,16,8], index: 3, kind: output, shape index: {}]
  %s4 = sld [smem:[#allocation0]]
  $region45: #{self_attention_forward.17} parent=0
    _
  %s6 = ssub.s32 1, %s4
  %s7 = scalar_select 0, %s6, %s4
  loop: start=0, step=1, limit=4
  $region2: #{self_attention_forward.17} parent=0 // loop_pre_header
    _
  $region3: #{self_attention_forward.17} parent=0 // loop_header
    %s9 = sphi 0, %s13
    %p10 = scmp.ge.s32.totalorder %s9, 4
    %s19 = sphi 0, %s21
    %s22 = sphi 0, %s19
    %s23 = sphi 0, %s22
    %s39 = sphi 0, %s23
    %s43 = sphi 0, %s43
    %s45 = sphi 0, %s43
    %s46 = sphi 0, %s45
    %s60 = sphi 0, %s46
    %s64 = sphi 0, %s64
    %s66 = sphi 0, %s64
    %s67 = sphi 0, %s66
    %s81 = sphi 0, %s67
    %s87 = sphi 0, %s89
    %s90 = sphi 0, %s87
    %s91 = sphi 0, %s90
    %s107 = sphi 0, %s91
  $region4: #{self_attention_forward.17} parent=0 // loop_header_branch
    %12 = sbr.rel (%p10) target = $region8
  $region5: #{self_attention_forward.17} parent=0 // loop_body
    %s14 = ssub.s32 %s9, 1
    %s15 = ssub.s32 %s9, 2
    %s16 = sadd.s32 %s9, 1
    %s17 = ssub.s32 %s9, %s16
    %p18 = scmp.eq.s32.totalorder %s17, 0
    %s20 = sadd.s32 %s19, 1
    %s21 = scalar_select %p18, %s19, %s20
    %p24 = pneg %p18
    %p25 = scmp.eq.s32.totalorder %s9, 1
    %p26 = por %p24, %p25
    %p27 = scmp.ne.s32.totalorder %s19, %s22
    %p28 = scmp.eq.s32.totalorder %s9, 0
    %p29 = por %p27, %p28
    %p30 = scmp.ne.s32.totalorder %s19, %s22
    %p31 = scmp.eq.s32.totalorder %s14, 1
    %p32 = por %p30, %p31
    %p33 = scmp.ne.s32.totalorder %s22, %s23
    %p34 = scmp.eq.s32.totalorder %s14, 0
    %p35 = por %p33, %p34
    %p36 = scmp.ne.s32.totalorder %s22, %s23
    %p37 = scmp.eq.s32.totalorder %s15, 1
    %p38 = por %p36, %p37
    %p40 = scmp.ne.s32.totalorder %s23, %s39
    %p41 = scmp.eq.s32.totalorder %s15, 0
    %p42 = por %p40, %p41
    %s44 = sadd.s32 %s43, 1
    %p47 = scmp.eq.s32.totalorder %s9, 1
    %p48 = scmp.ne.s32.totalorder %s43, %s45
    %p49 = scmp.eq.s32.totalorder %s9, 0
    %p50 = por %p48, %p49
    %p51 = scmp.ne.s32.totalorder %s43, %s45
    %p52 = scmp.eq.s32.totalorder %s14, 1
    %p53 = por %p51, %p52
    %p54 = scmp.ne.s32.totalorder %s45, %s46
    %p55 = scmp.eq.s32.totalorder %s14, 0
    %p56 = por %p54, %p55
    %p57 = scmp.ne.s32.totalorder %s45, %s46
    %p58 = scmp.eq.s32.totalorder %s15, 1
    %p59 = por %p57, %p58
    %p61 = scmp.ne.s32.totalorder %s46, %s60
    %p62 = scmp.eq.s32.totalorder %s15, 0
    %p63 = por %p61, %p62
    %s65 = sadd.s32 %s64, 1
    %p68 = scmp.eq.s32.totalorder %s9, 1
    %p69 = scmp.ne.s32.totalorder %s64, %s66
    %p70 = scmp.eq.s32.totalorder %s9, 0
    %p71 = por %p69, %p70
    %p72 = scmp.ne.s32.totalorder %s64, %s66
    %p73 = scmp.eq.s32.totalorder %s14, 1
    %p74 = por %p72, %p73
    %p75 = scmp.ne.s32.totalorder %s66, %s67
    %p76 = scmp.eq.s32.totalorder %s14, 0
    %p77 = por %p75, %p76
    %p78 = scmp.ne.s32.totalorder %s66, %s67
    %p79 = scmp.eq.s32.totalorder %s15, 1
    %p80 = por %p78, %p79
    %p82 = scmp.ne.s32.totalorder %s67, %s81
    %p83 = scmp.eq.s32.totalorder %s15, 0
    %p84 = por %p82, %p83
    %s85 = ssub.s32 %s9, %s16
    %p86 = scmp.eq.s32.totalorder %s85, 0
    %s88 = sadd.s32 %s87, 1
    %s89 = scalar_select %p86, %s87, %s88
    %p92 = pneg %p86
    %p93 = scmp.eq.s32.totalorder %s9, 1
    %p94 = por %p92, %p93
    %p95 = scmp.ne.s32.totalorder %s87, %s90
    %p96 = scmp.eq.s32.totalorder %s9, 0
    %p97 = por %p95, %p96
    %p98 = scmp.ne.s32.totalorder %s87, %s90
    %p99 = scmp.eq.s32.totalorder %s14, 1
    %p100 = por %p98, %p99
    %p101 = scmp.ne.s32.totalorder %s90, %s91
    %p102 = scmp.eq.s32.totalorder %s14, 0
    %p103 = por %p101, %p102
    %p104 = scmp.ne.s32.totalorder %s90, %s91
    %p105 = scmp.eq.s32.totalorder %s15, 1
    %p106 = por %p104, %p105
    %p108 = scmp.ne.s32.totalorder %s91, %s107
    %p109 = scmp.eq.s32.totalorder %s15, 0
    %p110 = por %p108, %p109
    %p111 = scmp.le.s32.totalorder 1, %s9
    %p112 = scmp.lt.s32.totalorder %s9, 3
    %p113 = pnand %p111, %p112
    %p114 = pneg %p113
    // Predicated region
    $region9: #{self_attention_forward.17} parent=5 // pred_check
      _
    $region10: #{self_attention_forward.17} parent=5 // pred_check_branch
      %116 = sbr.rel (%p113) target = $region12
    $region11: #{self_attention_forward.17} parent=5 // pred_region
      %s117 = ssub.s32 %s9, 1
      // Predicated region
      $region13: #{self_attention_forward.17} parent=11 // pred_check
        %p118 = pneg %p56
      $region14: #{self_attention_forward.17} parent=11 // pred_check_branch
        %120 = sbr.rel (%p118) target = $region16
      $region15: #{self_attention_forward.17} parent=11 // pred_region
        _
      $region16: #{self_attention_forward.17} parent=11 // pred_fallthru
        _
      // Predicated region
      $region17: #{self_attention_forward.17} parent=11 // pred_check
        %p121 = pneg %p77
      $region18: #{self_attention_forward.17} parent=11 // pred_check_branch
        %123 = sbr.rel (%p121) target = $region20
      $region19: #{self_attention_forward.17} parent=11 // pred_region
        _
      $region20: #{self_attention_forward.17} parent=11 // pred_fallthru
        _
    $region12: #{self_attention_forward.17} parent=5 // pred_fallthru
      _
    %p124 = scmp.lt.s32.totalorder %s9, 2
    // Predicated region
    $region21: #{self_attention_forward.17} parent=5 // pred_check
      %p125 = pneg %p124
    $region22: #{self_attention_forward.17} parent=5 // pred_check_branch
      %127 = sbr.rel (%p125) target = $region24
    $region23: #{self_attention_forward.17} parent=5 // pred_region
      // Predicated region
      $region25: #{self_attention_forward.17} parent=23 // pred_check
        %p128 = pneg %p29
      $region26: #{self_attention_forward.17} parent=23 // pred_check_branch
        %130 = sbr.rel (%p128) target = $region28
      $region27: #{self_attention_forward.17} parent=23 // pred_region
        %p131 = scmp.lt.s32.totalorder %s9, 1
        %s132 = scalar_select %p131, %s9, 1
        %s133 = smul.addr %s132, 2
        %s134 = smul.addr %s133, 4
        %s135 = scalar_lea.vmem %s0, %s134
      $region28: #{self_attention_forward.17} parent=23 // pred_fallthru
        _
    $region24: #{self_attention_forward.17} parent=5 // pred_fallthru
      _
    %p136 = scmp.le.s32.totalorder 1, %s9
    %p137 = scmp.lt.s32.totalorder %s9, 3
    %p138 = pnand %p136, %p137
    %p139 = pneg %p138
    // Predicated region
    $region29: #{self_attention_forward.17} parent=5 // pred_check
      _
    $region30: #{self_attention_forward.17} parent=5 // pred_check_branch
      %141 = sbr.rel (%p138) target = $region32
    $region31: #{self_attention_forward.17} parent=5 // pred_region
      %s142 = ssub.s32 %s9, 1
      %p143 = scmp.lt.s32.totalorder %s14, 1
      %s144 = scalar_select %p143, %s14, 1
      %s145 = smul.addr %s144, 2
      %s146 = smul.addr %s145, 4
      %s147 = scalar_lea.vmem %s0, %s146
      %p148 = pneg %p35
      %p149 = pneg %p32
      %p150 = pneg %p56
      %p151 = pneg %p53
      %p152 = pneg %p77
      %p153 = pneg %p74
      %p154 = pneg %p103
      %p155 = pneg %p100
      %p156 = scmp.lt.s32.totalorder %s14, 1
      %s157 = scalar_select %p156, %s14, 1
      %s158 = smul.addr %s157, 2
      %s159 = smul.addr %s158, 4
      %s160 = scalar_lea.vmem %s3, %s159
      %p161 = scmp.lt.s32.totalorder %s14, 1
      %s162 = scalar_select %p161, %s14, 1
      %s163 = smul.addr %s162, 2
      %s164 = smul.addr %s163, 4
      %s165 = scalar_lea.vmem %s0, %s164
      %p166 = scmp.lt.s32.totalorder %s14, 1
      %s167 = scalar_select %p166, %s14, 1
      %s168 = smul.addr %s167, 2
      %s169 = smul.addr %s168, 4
      %s170 = scalar_lea.vmem %s3, %s169
      %v172 = vld [vmem:[%s165] sm:$0xf]
      %v173 = vld [vmem:[%s165 + $0x4] sm:$0xf]
      %v174 = vld [vmem:[%s1] sm:$0xf]
      %v175 = vld [vmem:[%s1 + $0x4] sm:$0xf]
      %v176 = vld [vmem:[%s1 + $0x8] sm:$0xf]
      %v179 = vunpack.c.l.b16 %v172
      %v180 = vunpack.c.l.b16 %v173
      %v181 = vpack.c.b16 %v180, %v179
      %v185 = vunpack.c.l.b16 %v174
      %v186 = vunpack.c.l.b16 %v175
      %v187 = vunpack.c.l.b16 %v176
      %v188 = vpack.c.b16 %v186, %v185
      %v189 = vpack.c.b16 %v187, %v187
      %vm191 = vcmask 195584
      %v193 = vsel %vm191, %v181, 0
      %vm195 = vcmask 1043456
      %v197 = vsel %vm195, %v189, 0
      %199 = vmatprep.subr.bf16.mxu0 0
      %200 = vmatpush1.bf16.msra.mxu0 %v188
      %201 = vmatprep.subr.bf16.mxu0 0
      %202 = vmatpush1.bf16.msra.mxu0 %v197
      %203 = vmatprep.subr.bf16.mxu0 0
      %204 = vmatpush1.bf16.msra.mxu0 0
      %205 = vmatprep.subr.bf16.mxu0 0
      %206 = vmatpush1.bf16.msra.mxu0 0
      %207 = vmatprep.subr.bf16.mxu0 0
      %208 = vmatpush1.bf16.msra.mxu0 0
      %209 = vmatprep.subr.bf16.mxu0 0
      %210 = vmatpush1.bf16.msra.mxu0 0
      %211 = vmatprep.subr.bf16.mxu0 0
      %212 = vmatpush1.bf16.msra.mxu0 0
      %213 = vmatprep.subr.bf16.mxu0 0
      %214 = vmatpush1.bf16.msra.mxu0 0
      %215 = vmatprep.subr.bf16.mxu0 0
      %216 = vmatpush1.bf16.msra.mxu0 0
      %217 = vmatprep.subr.bf16.mxu0 0
      %218 = vmatpush1.bf16.msra.mxu0 0
      %219 = vmatprep.subr.bf16.mxu0 0
      %220 = vmatpush1.bf16.msra.mxu0 0
      %221 = vmatprep.subr.bf16.mxu0 0
      %222 = vmatpush1.bf16.msra.mxu0 0
      %223 = vmatprep.subr.bf16.mxu0 0
      %224 = vmatpush1.bf16.msra.mxu0 0
      %225 = vmatprep.subr.bf16.mxu0 0
      %226 = vmatpush1.bf16.msra.mxu0 0
      %227 = vmatprep.subr.bf16.mxu0 0
      %228 = vmatpush1.bf16.msra.mxu0 0
      %229 = vmatprep.subr.bf16.mxu0 0
      %230 = vmatpush1.bf16.msra.mxu0 0
      %231 = vmatprep.mubr.bf16.mxu0 0
      %232 = vmatmul.mubr.bf16.gmra.mrb[0].mxu0 %v193
      %v233 = vpop.f32.mrb[0].mxu0
      %v234 = vadd.f32 0.0, %v233
      %v235 = vpop.f32.mrb[0].mxu0
      %v236 = vpop.f32.mrb[0].mxu0
      %v237 = vadd.f32 0.0, %v236
      %v238 = vpop.f32.mrb[0].mxu0
      %239 = vdwg.mxu0
      %v240 = vmax.f32 %v234, 0.0
      %v241 = vmax.f32 %v237, 0.0
      %v242 = vpack.c.bf16 %v241, %v240
      %v243 = vld [vmem:[%s2] sm:$0xf]
      %vm244 = vcmask 64512
      %v246 = vsel %vm244, %v242, 0
      %v249 = vsel %vm195, %v243, 0
      %251 = vmatprep.subr.bf16.mxu0 0
      %252 = vmatpush1.bf16.msra.mxu0 %v249
      %253 = vmatprep.subr.bf16.mxu0 0
      %254 = vmatpush1.bf16.msra.mxu0 0
      %255 = vmatprep.subr.bf16.mxu0 0
      %256 = vmatpush1.bf16.msra.mxu0 0
      %257 = vmatprep.subr.bf16.mxu0 0
      %258 = vmatpush1.bf16.msra.mxu0 0
      %259 = vmatprep.subr.bf16.mxu0 0
      %260 = vmatpush1.bf16.msra.mxu0 0
      %261 = vmatprep.subr.bf16.mxu0 0
      %262 = vmatpush1.bf16.msra.mxu0 0
      %263 = vmatprep.subr.bf16.mxu0 0
      %264 = vmatpush1.bf16.msra.mxu0 0
      %265 = vmatprep.subr.bf16.mxu0 0
      %266 = vmatpush1.bf16.msra.mxu0 0
      %267 = vmatprep.subr.bf16.mxu0 0
      %268 = vmatpush1.bf16.msra.mxu0 0
      %269 = vmatprep.subr.bf16.mxu0 0
      %270 = vmatpush1.bf16.msra.mxu0 0
      %271 = vmatprep.subr.bf16.mxu0 0
      %272 = vmatpush1.bf16.msra.mxu0 0
      %273 = vmatprep.subr.bf16.mxu0 0
      %274 = vmatpush1.bf16.msra.mxu0 0
      %275 = vmatprep.subr.bf16.mxu0 0
      %276 = vmatpush1.bf16.msra.mxu0 0
      %277 = vmatprep.subr.bf16.mxu0 0
      %278 = vmatpush1.bf16.msra.mxu0 0
      %279 = vmatprep.subr.bf16.mxu0 0
      %280 = vmatpush1.bf16.msra.mxu0 0
      %281 = vmatprep.subr.bf16.mxu0 0
      %282 = vmatpush1.bf16.msra.mxu0 0
      %283 = vmatprep.mubr.bf16.mxu0 0
      %284 = vmatmul.mubr.bf16.gmra.mrb[0].mxu0 %v246
      %v285 = vpop.f32.mrb[0].mxu0
      %v286 = vadd.f32 0.0, %v285
      %v287 = vpop.f32.mrb[0].mxu0
      %v288 = vpop.f32.mrb[0].mxu0
      %v289 = vadd.f32 0.0, %v288
      %v290 = vpop.f32.mrb[0].mxu0
      %291 = vdwg.mxu0
      %v292 = vmax.f32 %v286, 0.0
      %v293 = vmax.f32 %v289, 0.0
      %v294 = vpack.c.bf16 %v293, %v292
      %v296 = vunpack.c.l.b16 %v294
      %v297 = vunpack.c.h.b16 %v294
      %v298 = vpack.c.b16 %v296, %v296
      %v299 = vpack.c.b16 %v297, %v297
      %vm302 = vcmask 60416
      %303 = vst.msk [vmem:[%s170] sm:$0xf] %vm302, %v298
      %304 = vst.msk [vmem:[%s170 + $0x4] sm:$0xf] %vm302, %v299
      %p305 = scmp.lt.s32.totalorder %s14, 1
      %s306 = scalar_select %p305, %s14, 1
      %s307 = smul.addr %s306, 2
      %s308 = smul.addr %s307, 4
      %s309 = scalar_lea.vmem %s3, %s308
      // Predicated region
      $region33: #{self_attention_forward.17} parent=31 // pred_check
        %p310 = pneg %p100
      $region34: #{self_attention_forward.17} parent=31 // pred_check_branch
        %312 = sbr.rel (%p310) target = $region36
      $region35: #{self_attention_forward.17} parent=31 // pred_region
        _
      $region36: #{self_attention_forward.17} parent=31 // pred_fallthru
        _
    $region32: #{self_attention_forward.17} parent=5 // pred_fallthru
      _
    %p313 = scmp.le.s32.totalorder 2, %s9
    // Predicated region
    $region37: #{self_attention_forward.17} parent=5 // pred_check
      %p314 = pneg %p313
    $region38: #{self_attention_forward.17} parent=5 // pred_check_branch
      %316 = sbr.rel (%p314) target = $region40
    $region39: #{self_attention_forward.17} parent=5 // pred_region
      %s317 = ssub.s32 %s9, 2
      // Predicated region
      $region41: #{self_attention_forward.17} parent=39 // pred_check
        %p318 = pneg %p106
      $region42: #{self_attention_forward.17} parent=39 // pred_check_branch
        %320 = sbr.rel (%p318) target = $region44
      $region43: #{self_attention_forward.17} parent=39 // pred_region
        %p321 = scmp.lt.s32.totalorder %s15, 1
        %s322 = scalar_select %p321, %s15, 1
        %s323 = smul.addr %s322, 2
        %s324 = smul.addr %s323, 4
        %s325 = scalar_lea.vmem %s3, %s324
      $region44: #{self_attention_forward.17} parent=39 // pred_fallthru
        _
    $region40: #{self_attention_forward.17} parent=5 // pred_fallthru
      _
  $region6: #{self_attention_forward.17} parent=0 // loop_footer
    %s13 = sadd.s32 1, %s9
  $region7: #{self_attention_forward.17} parent=0 // loop_footer_branch
    %8 = sbr.rel target = $region3
  $region8: #{self_attention_forward.17} parent=0 // loop_exit
    _

// kernel: self_attention_forward.20
$region0: #{self_attention_forward.20}
  #allocation0 [shape = 'u32[]', space=smem, size = 0x4, offset = 0x4, fixed_abs, tag = 'smem constant byte address 0x4 - core index']
  #allocation1 [shape = 'u32[144,128]{1,0:T(1,128)}', space=vmem, size = 0x12000, scoped, tag = 'internal scratch']
  %s0 = inlined_call_operand.vmem [shape: bf16[2,256,8], index: 0, kind: input, shape index: {}]
  %s1 = inlined_call_operand.vmem [shape: bf16[2,256,8], index: 1, kind: input, shape index: {}]
  %s2 = inlined_call_operand.vmem [shape: bf16[2,256,16], index: 2, kind: input, shape index: {}]
  %s3 = inlined_call_operand.vmem [shape: bf16[1,8,16], index: 3, kind: input, shape index: {}]
  %s4 = inlined_call_operand.vmem [shape: bf16[1,8,16], index: 4, kind: input, shape index: {}]
  %s5 = inlined_call_operand.vmem [shape: bf16[1,16,16], index: 5, kind: input, shape index: {}]
  %s6 = inlined_call_operand.vmem [shape: bf16[2,256,16], index: 6, kind: output, shape index: {}]
  %s7 = sld [smem:[#allocation0]]
  $region57: #{self_attention_forward.20} parent=0
    _
  %s9 = ssub.s32 1, %s7
  %s10 = scalar_select 0, %s9, %s7
  loop: start=0, step=1, limit=4
  $region2: #{self_attention_forward.20} parent=0 // loop_pre_header
    _
  $region3: #{self_attention_forward.20} parent=0 // loop_header
    %s12 = sphi 0, %s16
    %p13 = scmp.ge.s32.totalorder %s12, 4
    %s22 = sphi 0, %s24
    %s25 = sphi 0, %s22
    %s26 = sphi 0, %s25
    %s42 = sphi 0, %s26
    %s48 = sphi 0, %s50
    %s51 = sphi 0, %s48
    %s52 = sphi 0, %s51
    %s68 = sphi 0, %s52
    %s74 = sphi 0, %s76
    %s77 = sphi 0, %s74
    %s78 = sphi 0, %s77
    %s94 = sphi 0, %s78
    %s98 = sphi 0, %s98
    %s100 = sphi 0, %s98
    %s101 = sphi 0, %s100
    %s115 = sphi 0, %s101
    %s119 = sphi 0, %s119
    %s121 = sphi 0, %s119
    %s122 = sphi 0, %s121
    %s136 = sphi 0, %s122
    %s140 = sphi 0, %s140
    %s142 = sphi 0, %s140
    %s143 = sphi 0, %s142
    %s157 = sphi 0, %s143
    %s163 = sphi 0, %s165
    %s166 = sphi 0, %s163
    %s167 = sphi 0, %s166
    %s183 = sphi 0, %s167
  $region4: #{self_attention_forward.20} parent=0 // loop_header_branch
    %15 = sbr.rel (%p13) target = $region8
  $region5: #{self_attention_forward.20} parent=0 // loop_body
    %s17 = ssub.s32 %s12, 1
    %s18 = ssub.s32 %s12, 2
    %s19 = sadd.s32 %s12, 1
    %s20 = ssub.s32 %s12, %s19
    %p21 = scmp.eq.s32.totalorder %s20, 0
    %s23 = sadd.s32 %s22, 1
    %s24 = scalar_select %p21, %s22, %s23
    %p27 = pneg %p21
    %p28 = scmp.eq.s32.totalorder %s12, 1
    %p29 = por %p27, %p28
    %p30 = scmp.ne.s32.totalorder %s22, %s25
    %p31 = scmp.eq.s32.totalorder %s12, 0
    %p32 = por %p30, %p31
    %p33 = scmp.ne.s32.totalorder %s22, %s25
    %p34 = scmp.eq.s32.totalorder %s17, 1
    %p35 = por %p33, %p34
    %p36 = scmp.ne.s32.totalorder %s25, %s26
    %p37 = scmp.eq.s32.totalorder %s17, 0
    %p38 = por %p36, %p37
    %p39 = scmp.ne.s32.totalorder %s25, %s26
    %p40 = scmp.eq.s32.totalorder %s18, 1
    %p41 = por %p39, %p40
    %p43 = scmp.ne.s32.totalorder %s26, %s42
    %p44 = scmp.eq.s32.totalorder %s18, 0
    %p45 = por %p43, %p44
    %s46 = ssub.s32 %s12, %s19
    %p47 = scmp.eq.s32.totalorder %s46, 0
    %s49 = sadd.s32 %s48, 1
    %s50 = scalar_select %p47, %s48, %s49
    %p53 = pneg %p47
    %p54 = scmp.eq.s32.totalorder %s12, 1
    %p55 = por %p53, %p54
    %p56 = scmp.ne.s32.totalorder %s48, %s51
    %p57 = scmp.eq.s32.totalorder %s12, 0
    %p58 = por %p56, %p57
    %p59 = scmp.ne.s32.totalorder %s48, %s51
    %p60 = scmp.eq.s32.totalorder %s17, 1
    %p61 = por %p59, %p60
    %p62 = scmp.ne.s32.totalorder %s51, %s52
    %p63 = scmp.eq.s32.totalorder %s17, 0
    %p64 = por %p62, %p63
    %p65 = scmp.ne.s32.totalorder %s51, %s52
    %p66 = scmp.eq.s32.totalorder %s18, 1
    %p67 = por %p65, %p66
    %p69 = scmp.ne.s32.totalorder %s52, %s68
    %p70 = scmp.eq.s32.totalorder %s18, 0
    %p71 = por %p69, %p70
    %s72 = ssub.s32 %s12, %s19
    %p73 = scmp.eq.s32.totalorder %s72, 0
    %s75 = sadd.s32 %s74, 1
    %s76 = scalar_select %p73, %s74, %s75
    %p79 = pneg %p73
    %p80 = scmp.eq.s32.totalorder %s12, 1
    %p81 = por %p79, %p80
    %p82 = scmp.ne.s32.totalorder %s74, %s77
    %p83 = scmp.eq.s32.totalorder %s12, 0
    %p84 = por %p82, %p83
    %p85 = scmp.ne.s32.totalorder %s74, %s77
    %p86 = scmp.eq.s32.totalorder %s17, 1
    %p87 = por %p85, %p86
    %p88 = scmp.ne.s32.totalorder %s77, %s78
    %p89 = scmp.eq.s32.totalorder %s17, 0
    %p90 = por %p88, %p89
    %p91 = scmp.ne.s32.totalorder %s77, %s78
    %p92 = scmp.eq.s32.totalorder %s18, 1
    %p93 = por %p91, %p92
    %p95 = scmp.ne.s32.totalorder %s78, %s94
    %p96 = scmp.eq.s32.totalorder %s18, 0
    %p97 = por %p95, %p96
    %s99 = sadd.s32 %s98, 1
    %p102 = scmp.eq.s32.totalorder %s12, 1
    %p103 = scmp.ne.s32.totalorder %s98, %s100
    %p104 = scmp.eq.s32.totalorder %s12, 0
    %p105 = por %p103, %p104
    %p106 = scmp.ne.s32.totalorder %s98, %s100
    %p107 = scmp.eq.s32.totalorder %s17, 1
    %p108 = por %p106, %p107
    %p109 = scmp.ne.s32.totalorder %s100, %s101
    %p110 = scmp.eq.s32.totalorder %s17, 0
    %p111 = por %p109, %p110
    %p112 = scmp.ne.s32.totalorder %s100, %s101
    %p113 = scmp.eq.s32.totalorder %s18, 1
    %p114 = por %p112, %p113
    %p116 = scmp.ne.s32.totalorder %s101, %s115
    %p117 = scmp.eq.s32.totalorder %s18, 0
    %p118 = por %p116, %p117
    %s120 = sadd.s32 %s119, 1
    %p123 = scmp.eq.s32.totalorder %s12, 1
    %p124 = scmp.ne.s32.totalorder %s119, %s121
    %p125 = scmp.eq.s32.totalorder %s12, 0
    %p126 = por %p124, %p125
    %p127 = scmp.ne.s32.totalorder %s119, %s121
    %p128 = scmp.eq.s32.totalorder %s17, 1
    %p129 = por %p127, %p128
    %p130 = scmp.ne.s32.totalorder %s121, %s122
    %p131 = scmp.eq.s32.totalorder %s17, 0
    %p132 = por %p130, %p131
    %p133 = scmp.ne.s32.totalorder %s121, %s122
    %p134 = scmp.eq.s32.totalorder %s18, 1
    %p135 = por %p133, %p134
    %p137 = scmp.ne.s32.totalorder %s122, %s136
    %p138 = scmp.eq.s32.totalorder %s18, 0
    %p139 = por %p137, %p138
    %s141 = sadd.s32 %s140, 1
    %p144 = scmp.eq.s32.totalorder %s12, 1
    %p145 = scmp.ne.s32.totalorder %s140, %s142
    %p146 = scmp.eq.s32.totalorder %s12, 0
    %p147 = por %p145, %p146
    %p148 = scmp.ne.s32.totalorder %s140, %s142
    %p149 = scmp.eq.s32.totalorder %s17, 1
    %p150 = por %p148, %p149
    %p151 = scmp.ne.s32.totalorder %s142, %s143
    %p152 = scmp.eq.s32.totalorder %s17, 0
    %p153 = por %p151, %p152
    %p154 = scmp.ne.s32.totalorder %s142, %s143
    %p155 = scmp.eq.s32.totalorder %s18, 1
    %p156 = por %p154, %p155
    %p158 = scmp.ne.s32.totalorder %s143, %s157
    %p159 = scmp.eq.s32.totalorder %s18, 0
    %p160 = por %p158, %p159
    %s161 = ssub.s32 %s12, %s19
    %p162 = scmp.eq.s32.totalorder %s161, 0
    %s164 = sadd.s32 %s163, 1
    %s165 = scalar_select %p162, %s163, %s164
    %p168 = pneg %p162
    %p169 = scmp.eq.s32.totalorder %s12, 1
    %p170 = por %p168, %p169
    %p171 = scmp.ne.s32.totalorder %s163, %s166
    %p172 = scmp.eq.s32.totalorder %s12, 0
    %p173 = por %p171, %p172
    %p174 = scmp.ne.s32.totalorder %s163, %s166
    %p175 = scmp.eq.s32.totalorder %s17, 1
    %p176 = por %p174, %p175
    %p177 = scmp.ne.s32.totalorder %s166, %s167
    %p178 = scmp.eq.s32.totalorder %s17, 0
    %p179 = por %p177, %p178
    %p180 = scmp.ne.s32.totalorder %s166, %s167
    %p181 = scmp.eq.s32.totalorder %s18, 1
    %p182 = por %p180, %p181
    %p184 = scmp.ne.s32.totalorder %s167, %s183
    %p185 = scmp.eq.s32.totalorder %s18, 0
    %p186 = por %p184, %p185
    %p187 = scmp.le.s32.totalorder 1, %s12
    %p188 = scmp.lt.s32.totalorder %s12, 3
    %p189 = pnand %p187, %p188
    %p190 = pneg %p189
    // Predicated region
    $region9: #{self_attention_forward.20} parent=5 // pred_check
      _
    $region10: #{self_attention_forward.20} parent=5 // pred_check_branch
      %192 = sbr.rel (%p189) target = $region12
    $region11: #{self_attention_forward.20} parent=5 // pred_region
      %s193 = ssub.s32 %s12, 1
      // Predicated region
      $region13: #{self_attention_forward.20} parent=11 // pred_check
        %p194 = pneg %p111
      $region14: #{self_attention_forward.20} parent=11 // pred_check_branch
        %196 = sbr.rel (%p194) target = $region16
      $region15: #{self_attention_forward.20} parent=11 // pred_region
        _
      $region16: #{self_attention_forward.20} parent=11 // pred_fallthru
        _
      // Predicated region
      $region17: #{self_attention_forward.20} parent=11 // pred_check
        %p197 = pneg %p132
      $region18: #{self_attention_forward.20} parent=11 // pred_check_branch
        %199 = sbr.rel (%p197) target = $region20
      $region19: #{self_attention_forward.20} parent=11 // pred_region
        _
      $region20: #{self_attention_forward.20} parent=11 // pred_fallthru
        _
      // Predicated region
      $region21: #{self_attention_forward.20} parent=11 // pred_check
        %p200 = pneg %p153
      $region22: #{self_attention_forward.20} parent=11 // pred_check_branch
        %202 = sbr.rel (%p200) target = $region24
      $region23: #{self_attention_forward.20} parent=11 // pred_region
        _
      $region24: #{self_attention_forward.20} parent=11 // pred_fallthru
        _
    $region12: #{self_attention_forward.20} parent=5 // pred_fallthru
      _
    %p203 = scmp.lt.s32.totalorder %s12, 2
    // Predicated region
    $region25: #{self_attention_forward.20} parent=5 // pred_check
      %p204 = pneg %p203
    $region26: #{self_attention_forward.20} parent=5 // pred_check_branch
      %206 = sbr.rel (%p204) target = $region28
    $region27: #{self_attention_forward.20} parent=5 // pred_region
      // Predicated region
      $region29: #{self_attention_forward.20} parent=27 // pred_check
        %p207 = pneg %p32
      $region30: #{self_attention_forward.20} parent=27 // pred_check_branch
        %209 = sbr.rel (%p207) target = $region32
      $region31: #{self_attention_forward.20} parent=27 // pred_region
        %p210 = scmp.lt.s32.totalorder %s12, 1
        %s211 = scalar_select %p210, %s12, 1
        %s212 = smul.addr %s211, 32
        %s213 = smul.addr %s212, 4
        %s214 = scalar_lea.vmem %s0, %s213
      $region32: #{self_attention_forward.20} parent=27 // pred_fallthru
        _
      // Predicated region
      $region33: #{self_attention_forward.20} parent=27 // pred_check
        %p215 = pneg %p58
      $region34: #{self_attention_forward.20} parent=27 // pred_check_branch
        %217 = sbr.rel (%p215) target = $region36
      $region35: #{self_attention_forward.20} parent=27 // pred_region
        %p218 = scmp.lt.s32.totalorder %s12, 1
        %s219 = scalar_select %p218, %s12, 1
        %s220 = smul.addr %s219, 32
        %s221 = smul.addr %s220, 4
        %s222 = scalar_lea.vmem %s1, %s221
      $region36: #{self_attention_forward.20} parent=27 // pred_fallthru
        _
      // Predicated region
      $region37: #{self_attention_forward.20} parent=27 // pred_check
        %p223 = pneg %p84
      $region38: #{self_attention_forward.20} parent=27 // pred_check_branch
        %225 = sbr.rel (%p223) target = $region40
      $region39: #{self_attention_forward.20} parent=27 // pred_region
        %p226 = scmp.lt.s32.totalorder %s12, 1
        %s227 = scalar_select %p226, %s12, 1
        %s228 = smul.addr %s227, 32
        %s229 = smul.addr %s228, 4
        %s230 = scalar_lea.vmem %s2, %s229
      $region40: #{self_attention_forward.20} parent=27 // pred_fallthru
        _
    $region28: #{self_attention_forward.20} parent=5 // pred_fallthru
      _
    %p231 = scmp.le.s32.totalorder 1, %s12
    %p232 = scmp.lt.s32.totalorder %s12, 3
    %p233 = pnand %p231, %p232
    %p234 = pneg %p233
    // Predicated region
    $region41: #{self_attention_forward.20} parent=5 // pred_check
      _
    $region42: #{self_attention_forward.20} parent=5 // pred_check_branch
      %236 = sbr.rel (%p233) target = $region44
    $region43: #{self_attention_forward.20} parent=5 // pred_region
      %s237 = ssub.s32 %s12, 1
      %p238 = scmp.lt.s32.totalorder %s17, 1
      %s239 = scalar_select %p238, %s17, 1
      %s240 = smul.addr %s239, 32
      %s241 = smul.addr %s240, 4
      %s242 = scalar_lea.vmem %s0, %s241
      %p243 = pneg %p38
      %p244 = pneg %p35
      %p245 = scmp.lt.s32.totalorder %s17, 1
      %s246 = scalar_select %p245, %s17, 1
      %s247 = smul.addr %s246, 32
      %s248 = smul.addr %s247, 4
      %s249 = scalar_lea.vmem %s1, %s248
      %p250 = pneg %p64
      %p251 = pneg %p61
      %p252 = scmp.lt.s32.totalorder %s17, 1
      %s253 = scalar_select %p252, %s17, 1
      %s254 = smul.addr %s253, 32
      %s255 = smul.addr %s254, 4
      %s256 = scalar_lea.vmem %s2, %s255
      %p257 = pneg %p90
      %p258 = pneg %p87
      %p259 = pneg %p111
      %p260 = pneg %p108
      %p261 = pneg %p132
      %p262 = pneg %p129
      %p263 = pneg %p153
      %p264 = pneg %p150
      %p265 = pneg %p179
      %p266 = pneg %p176
      %p267 = scmp.lt.s32.totalorder %s17, 1
      %s268 = scalar_select %p267, %s17, 1
      %s269 = smul.addr %s268, 32
      %s270 = smul.addr %s269, 4
      %s271 = scalar_lea.vmem %s6, %s270
      %p272 = scmp.lt.s32.totalorder %s17, 1
      %s273 = scalar_select %p272, %s17, 1
      %s274 = smul.addr %s273, 32
      %s275 = smul.addr %s274, 4
      %s276 = scalar_lea.vmem %s0, %s275
      %p277 = scmp.lt.s32.totalorder %s17, 1
      %s278 = scalar_select %p277, %s17, 1
      %s279 = smul.addr %s278, 32
      %s280 = smul.addr %s279, 4
      %s281 = scalar_lea.vmem %s1, %s280
      %p282 = scmp.lt.s32.totalorder %s17, 1
      %s283 = scalar_select %p282, %s17, 1
      %s284 = smul.addr %s283, 32
      %s285 = smul.addr %s284, 4
      %s286 = scalar_lea.vmem %s2, %s285
      %p287 = scmp.lt.s32.totalorder %s17, 1
      %s288 = scalar_select %p287, %s17, 1
      %s289 = smul.addr %s288, 32
      %s290 = smul.addr %s289, 4
      %s291 = scalar_lea.vmem %s6, %s290
      %v293 = vld [vmem:[%s276] sm:$0xf]
      %v294 = vld [vmem:[%s276 + $0x4] sm:$0xf]
      %v295 = vld [vmem:[%s276 + $0x8] sm:$0xf]
      %v296 = vld [vmem:[%s276 + $0xc] sm:$0xf]
      %v297 = vld [vmem:[%s276 + $0x10] sm:$0xf]
      %v298 = vld [vmem:[%s276 + $0x14] sm:$0xf]
      %v299 = vld [vmem:[%s276 + $0x18] sm:$0xf]
      %v300 = vld [vmem:[%s276 + $0x1c] sm:$0xf]
      %v301 = vld [vmem:[%s276 + $0x20] sm:$0xf]
      %v302 = vld [vmem:[%s276 + $0x24] sm:$0xf]
      %v303 = vld [vmem:[%s276 + $0x28] sm:$0xf]
      %v304 = vld [vmem:[%s276 + $0x2c] sm:$0xf]
      %v305 = vld [vmem:[%s276 + $0x30] sm:$0xf]
      %v306 = vld [vmem:[%s276 + $0x34] sm:$0xf]
      %v307 = vld [vmem:[%s276 + $0x38] sm:$0xf]
      %v308 = vld [vmem:[%s276 + $0x3c] sm:$0xf]
      %v309 = vld [vmem:[%s276 + $0x40] sm:$0xf]
      %v310 = vld [vmem:[%s276 + $0x44] sm:$0xf]
      %v311 = vld [vmem:[%s276 + $0x48] sm:$0xf]
      %v312 = vld [vmem:[%s276 + $0x4c] sm:$0xf]
      %v313 = vld [vmem:[%s276 + $0x50] sm:$0xf]
      %v314 = vld [vmem:[%s276 + $0x54] sm:$0xf]
      %v315 = vld [vmem:[%s276 + $0x58] sm:$0xf]
      %v316 = vld [vmem:[%s276 + $0x5c] sm:$0xf]
      %v317 = vld [vmem:[%s276 + $0x60] sm:$0xf]
      %v318 = vld [vmem:[%s276 + $0x64] sm:$0xf]
      %v319 = vld [vmem:[%s276 + $0x68] sm:$0xf]
      %v320 = vld [vmem:[%s276 + $0x6c] sm:$0xf]
      %v321 = vld [vmem:[%s276 + $0x70] sm:$0xf]
      %v322 = vld [vmem:[%s276 + $0x74] sm:$0xf]
      %v323 = vld [vmem:[%s276 + $0x78] sm:$0xf]
      %v324 = vld [vmem:[%s276 + $0x7c] sm:$0xf]
      %v325 = vld [vmem:[%s3] sm:$0xf]
      %v326 = vld [vmem:[%s281] sm:$0xf]
      %v327 = vld [vmem:[%s281 + $0x4] sm:$0xf]
      %v328 = vld [vmem:[%s281 + $0x8] sm:$0xf]
      %v329 = vld [vmem:[%s281 + $0xc] sm:$0xf]
      %v330 = vld [vmem:[%s281 + $0x10] sm:$0xf]
      %v331 = vld [vmem:[%s281 + $0x14] sm:$0xf]
      %v332 = vld [vmem:[%s281 + $0x18] sm:$0xf]
      %v333 = vld [vmem:[%s281 + $0x1c] sm:$0xf]
      %v334 = vld [vmem:[%s281 + $0x20] sm:$0xf]
      %v335 = vld [vmem:[%s281 + $0x24] sm:$0xf]
      %v336 = vld [vmem:[%s281 + $0x28] sm:$0xf]
      %v337 = vld [vmem:[%s281 + $0x2c] sm:$0xf]
      %v338 = vld [vmem:[%s281 + $0x30] sm:$0xf]
      %v339 = vld [vmem:[%s281 + $0x34] sm:$0xf]
      %v340 = vld [vmem:[%s281 + $0x38] sm:$0xf]
      %v341 = vld [vmem:[%s281 + $0x3c] sm:$0xf]
      %v342 = vld [vmem:[%s281 + $0x40] sm:$0xf]
      %v343 = vld [vmem:[%s281 + $0x44] sm:$0xf]
      %v344 = vld [vmem:[%s281 + $0x48] sm:$0xf]
      %v345 = vld [vmem:[%s281 + $0x4c] sm:$0xf]
      %v346 = vld [vmem:[%s281 + $0x50] sm:$0xf]
      %v347 = vld [vmem:[%s281 + $0x54] sm:$0xf]
      %v348 = vld [vmem:[%s281 + $0x58] sm:$0xf]
      %v349 = vld [vmem:[%s281 + $0x5c] sm:$0xf]
      %v350 = vld [vmem:[%s281 + $0x60] sm:$0xf]
      %v351 = vld [vmem:[%s281 + $0x64] sm:$0xf]
      %v352 = vld [vmem:[%s281 + $0x68] sm:$0xf]
      %v353 = vld [vmem:[%s281 + $0x6c] sm:$0xf]
      %v354 = vld [vmem:[%s281 + $0x70] sm:$0xf]
      %v355 = vld [vmem:[%s281 + $0x74] sm:$0xf]
      %v356 = vld [vmem:[%s281 + $0x78] sm:$0xf]
      %v357 = vld [vmem:[%s281 + $0x7c] sm:$0xf]
      %v358 = vld [vmem:[%s4] sm:$0xf]
      %v391 = vunpack.c.l.b16 %v326
      %v392 = vunpack.c.l.b16 %v327
      %v393 = vunpack.c.l.b16 %v328
      %v394 = vunpack.c.l.b16 %v329
      %v395 = vunpack.c.l.b16 %v330
      %v396 = vunpack.c.l.b16 %v331
      %v397 = vunpack.c.l.b16 %v332
      %v398 = vunpack.c.l.b16 %v333
      %v399 = vunpack.c.l.b16 %v334
      %v400 = vunpack.c.l.b16 %v335
      %v401 = vunpack.c.l.b16 %v336
      %v402 = vunpack.c.l.b16 %v337
      %v403 = vunpack.c.l.b16 %v338
      %v404 = vunpack.c.l.b16 %v339
      %v405 = vunpack.c.l.b16 %v340
      %v406 = vunpack.c.l.b16 %v341
      %v407 = vunpack.c.l.b16 %v342
      %v408 = vunpack.c.l.b16 %v343
      %v409 = vunpack.c.l.b16 %v344
      %v410 = vunpack.c.l.b16 %v345
      %v411 = vunpack.c.l.b16 %v346
      %v412 = vunpack.c.l.b16 %v347
      %v413 = vunpack.c.l.b16 %v348
      %v414 = vunpack.c.l.b16 %v349
      %v415 = vunpack.c.l.b16 %v350
      %v416 = vunpack.c.l.b16 %v351
      %v417 = vunpack.c.l.b16 %v352
      %v418 = vunpack.c.l.b16 %v353
      %v419 = vunpack.c.l.b16 %v354
      %v420 = vunpack.c.l.b16 %v355
      %v421 = vunpack.c.l.b16 %v356
      %v422 = vunpack.c.l.b16 %v357
      %v423 = vpack.c.b16 %v392, %v391
      %v424 = vpack.c.b16 %v394, %v393
      %v425 = vpack.c.b16 %v396, %v395
      %v426 = vpack.c.b16 %v398, %v397
      %v427 = vpack.c.b16 %v400, %v399
      %v428 = vpack.c.b16 %v402, %v401
      %v429 = vpack.c.b16 %v404, %v403
      %v430 = vpack.c.b16 %v406, %v405
      %v431 = vpack.c.b16 %v408, %v407
      %v432 = vpack.c.b16 %v410, %v409
      %v433 = vpack.c.b16 %v412, %v411
      %v434 = vpack.c.b16 %v414, %v413
      %v435 = vpack.c.b16 %v416, %v415
      %v436 = vpack.c.b16 %v418, %v417
      %v437 = vpack.c.b16 %v420, %v419
      %v438 = vpack.c.b16 %v422, %v421
      %vm439 = vcmask 64512
      %v441 = vsel %vm439, %v423, 0
      %v444 = vsel %vm439, %v424, 0
      %v447 = vsel %vm439, %v425, 0
      %v450 = vsel %vm439, %v426, 0
      %v453 = vsel %vm439, %v427, 0
      %v456 = vsel %vm439, %v428, 0
      %v459 = vsel %vm439, %v429, 0
      %v462 = vsel %vm439, %v430, 0
      %v465 = vsel %vm439, %v431, 0
      %v468 = vsel %vm439, %v432, 0
      %v471 = vsel %vm439, %v433, 0
      %v474 = vsel %vm439, %v434, 0
      %v477 = vsel %vm439, %v435, 0
      %v480 = vsel %vm439, %v436, 0
      %v483 = vsel %vm439, %v437, 0
      %v486 = vsel %vm439, %v438, 0
      %vm488 = vcmask 1043456
      %v490 = vsel %vm488, %v358, 0
      %492 = vmatprep.subr.bf16.mxu0 0
      %493 = vmatpush1.bf16.msra.mxu0 %v490
      %494 = vmatprep.subr.bf16.mxu0 0
      %495 = vmatpush1.bf16.msra.mxu0 0
      %496 = vmatprep.subr.bf16.mxu0 0
      %497 = vmatpush1.bf16.msra.mxu0 0
      %498 = vmatprep.subr.bf16.mxu0 0
      %499 = vmatpush1.bf16.msra.mxu0 0
      %500 = vmatprep.subr.bf16.mxu0 0
      %501 = vmatpush1.bf16.msra.mxu0 0
      %502 = vmatprep.subr.bf16.mxu0 0
      %503 = vmatpush1.bf16.msra.mxu0 0
      %504 = vmatprep.subr.bf16.mxu0 0
      %505 = vmatpush1.bf16.msra.mxu0 0
      %506 = vmatprep.subr.bf16.mxu0 0
      %507 = vmatpush1.bf16.msra.mxu0 0
      %508 = vmatprep.subr.bf16.mxu0 0
      %509 = vmatpush1.bf16.msra.mxu0 0
      %510 = vmatprep.subr.bf16.mxu0 0
      %511 = vmatpush1.bf16.msra.mxu0 0
      %512 = vmatprep.subr.bf16.mxu0 0
      %513 = vmatpush1.bf16.msra.mxu0 0
      %514 = vmatprep.subr.bf16.mxu0 0
      %515 = vmatpush1.bf16.msra.mxu0 0
      %516 = vmatprep.subr.bf16.mxu0 0
      %517 = vmatpush1.bf16.msra.mxu0 0
      %518 = vmatprep.subr.bf16.mxu0 0
      %519 = vmatpush1.bf16.msra.mxu0 0
      %520 = vmatprep.subr.bf16.mxu0 0
      %521 = vmatpush1.bf16.msra.mxu0 0
      %522 = vmatprep.subr.bf16.mxu0 0
      %523 = vmatpush1.bf16.msra.mxu0 0
      %524 = vmatprep.mubr.bf16.mxu0 0
      %525 = vmatmul.mubr.bf16.gmra.mrb[0].mxu0 %v441
      %v526 = vpop.f32.mrb[0].mxu0
      %v527 = vadd.f32 0.0, %v526
      %v528 = vpop.f32.mrb[0].mxu0
      %v529 = vpop.f32.mrb[0].mxu0
      %v530 = vadd.f32 0.0, %v529
      %v531 = vpop.f32.mrb[0].mxu0
      %532 = vmatprep.mubr.bf16.mxu0 0
      %533 = vmatmul.mubr.bf16.gmra.mrb[0].mxu0 %v444
      %v534 = vpop.f32.mrb[0].mxu0
      %v535 = vadd.f32 0.0, %v534
      %v536 = vpop.f32.mrb[0].mxu0
      %v537 = vpop.f32.mrb[0].mxu0
      %v538 = vadd.f32 0.0, %v537
      %v539 = vpop.f32.mrb[0].mxu0
      %540 = vmatprep.mubr.bf16.mxu0 0
      %541 = vmatmul.mubr.bf16.gmra.mrb[0].mxu0 %v447
      %v542 = vpop.f32.mrb[0].mxu0
      %v543 = vadd.f32 0.0, %v542
      %v544 = vpop.f32.mrb[0].mxu0
      %v545 = vpop.f32.mrb[0].mxu0
      %v546 = vadd.f32 0.0, %v545
      %v547 = vpop.f32.mrb[0].mxu0
      %548 = vmatprep.mubr.bf16.mxu0 0
      %549 = vmatmul.mubr.bf16.gmra.mrb[0].mxu0 %v450
      %v550 = vpop.f32.mrb[0].mxu0
      %v551 = vadd.f32 0.0, %v550
      %v552 = vpop.f32.mrb[0].mxu0
      %v553 = vpop.f32.mrb[0].mxu0
      %v554 = vadd.f32 0.0, %v553
      %v555 = vpop.f32.mrb[0].mxu0
      %556 = vmatprep.mubr.bf16.mxu0 0
      %557 = vmatmul.mubr.bf16.gmra.mrb[0].mxu0 %v453
      %v558 = vpop.f32.mrb[0].mxu0
      %v559 = vadd.f32 0.0, %v558
      %v560 = vpop.f32.mrb[0].mxu0
      %v561 = vpop.f32.mrb[0].mxu0
      %v562 = vadd.f32 0.0, %v561
      %v563 = vpop.f32.mrb[0].mxu0
      %564 = vmatprep.mubr.bf16.mxu0 0
      %565 = vmatmul.mubr.bf16.gmra.mrb[0].mxu0 %v456
      %v566 = vpop.f32.mrb[0].mxu0
      %v567 = vadd.f32 0.0, %v566
      %v568 = vpop.f32.mrb[0].mxu0
      %v569 = vpop.f32.mrb[0].mxu0
      %v570 = vadd.f32 0.0, %v569
      %v571 = vpop.f32.mrb[0].mxu0
      %572 = vmatprep.mubr.bf16.mxu0 0
      %573 = vmatmul.mubr.bf16.gmra.mrb[0].mxu0 %v459
      %v574 = vpop.f32.mrb[0].mxu0
      %v575 = vadd.f32 0.0, %v574
      %v576 = vpop.f32.mrb[0].mxu0
      %v577 = vpop.f32.mrb[0].mxu0
      %v578 = vadd.f32 0.0, %v577
      %v579 = vpop.f32.mrb[0].mxu0
      %580 = vmatprep.mubr.bf16.mxu0 0
      %581 = vmatmul.mubr.bf16.gmra.mrb[0].mxu0 %v462
      %v582 = vpop.f32.mrb[0].mxu0
      %v583 = vadd.f32 0.0, %v582
      %v584 = vpop.f32.mrb[0].mxu0
      %v585 = vpop.f32.mrb[0].mxu0
      %v586 = vadd.f32 0.0, %v585
      %v587 = vpop.f32.mrb[0].mxu0
      %588 = vmatprep.mubr.bf16.mxu0 0
      %589 = vmatmul.mubr.bf16.gmra.mrb[0].mxu0 %v465
      %v590 = vpop.f32.mrb[0].mxu0
      %v591 = vadd.f32 0.0, %v590
      %v592 = vpop.f32.mrb[0].mxu0
      %v593 = vpop.f32.mrb[0].mxu0
      %v594 = vadd.f32 0.0, %v593
      %v595 = vpop.f32.mrb[0].mxu0
      %596 = vmatprep.mubr.bf16.mxu0 0
      %597 = vmatmul.mubr.bf16.gmra.mrb[0].mxu0 %v468
      %v598 = vpop.f32.mrb[0].mxu0
      %v599 = vadd.f32 0.0, %v598
      %v600 = vpop.f32.mrb[0].mxu0
      %v601 = vpop.f32.mrb[0].mxu0
      %v602 = vadd.f32 0.0, %v601
      %v603 = vpop.f32.mrb[0].mxu0
      %604 = vmatprep.mubr.bf16.mxu0 0
      %605 = vmatmul.mubr.bf16.gmra.mrb[0].mxu0 %v471
      %v606 = vpop.f32.mrb[0].mxu0
      %v607 = vadd.f32 0.0, %v606
      %v608 = vpop.f32.mrb[0].mxu0
      %v609 = vpop.f32.mrb[0].mxu0
      %v610 = vadd.f32 0.0, %v609
      %v611 = vpop.f32.mrb[0].mxu0
      %612 = vmatprep.mubr.bf16.mxu0 0
      %613 = vmatmul.mubr.bf16.gmra.mrb[0].mxu0 %v474
      %v614 = vpop.f32.mrb[0].mxu0
      %v615 = vadd.f32 0.0, %v614
      %v616 = vpop.f32.mrb[0].mxu0
      %v617 = vpop.f32.mrb[0].mxu0
      %v618 = vadd.f32 0.0, %v617
      %v619 = vpop.f32.mrb[0].mxu0
      %620 = vmatprep.mubr.bf16.mxu0 0
      %621 = vmatmul.mubr.bf16.gmra.mrb[0].mxu0 %v477
      %v622 = vpop.f32.mrb[0].mxu0
      %v623 = vadd.f32 0.0, %v622
      %v624 = vpop.f32.mrb[0].mxu0
      %v625 = vpop.f32.mrb[0].mxu0
      %v626 = vadd.f32 0.0, %v625
      %v627 = vpop.f32.mrb[0].mxu0
      %628 = vmatprep.mubr.bf16.mxu0 0
      %629 = vmatmul.mubr.bf16.gmra.mrb[0].mxu0 %v480
      %v630 = vpop.f32.mrb[0].mxu0
      %v631 = vadd.f32 0.0, %v630
      %v632 = vpop.f32.mrb[0].mxu0
      %v633 = vpop.f32.mrb[0].mxu0
      %v634 = vadd.f32 0.0, %v633
      %v635 = vpop.f32.mrb[0].mxu0
      %636 = vmatprep.mubr.bf16.mxu0 0
      %637 = vmatmul.mubr.bf16.gmra.mrb[0].mxu0 %v483
      %v638 = vpop.f32.mrb[0].mxu0
      %v639 = vadd.f32 0.0, %v638
      %v640 = vpop.f32.mrb[0].mxu0
      %v641 = vpop.f32.mrb[0].mxu0
      %v642 = vadd.f32 0.0, %v641
      %v643 = vpop.f32.mrb[0].mxu0
      %644 = vmatprep.mubr.bf16.mxu0 0
      %645 = vmatmul.mubr.bf16.gmra.mrb[0].mxu0 %v486
      %v646 = vpop.f32.mrb[0].mxu0
      %v647 = vadd.f32 0.0, %v646
      %v648 = vpop.f32.mrb[0].mxu0
      %v649 = vpop.f32.mrb[0].mxu0
      %v650 = vadd.f32 0.0, %v649
      %v651 = vpop.f32.mrb[0].mxu0
      %652 = vdwg.mxu0
      %v685 = vunpack.c.l.b16 %v293
      %v686 = vunpack.c.l.b16 %v294
      %v687 = vunpack.c.l.b16 %v295
      %v688 = vunpack.c.l.b16 %v296
      %v689 = vunpack.c.l.b16 %v297
      %v690 = vunpack.c.l.b16 %v298
      %v691 = vunpack.c.l.b16 %v299
      %v692 = vunpack.c.l.b16 %v300
      %v693 = vunpack.c.l.b16 %v301
      %v694 = vunpack.c.l.b16 %v302
      %v695 = vunpack.c.l.b16 %v303
      %v696 = vunpack.c.l.b16 %v304
      %v697 = vunpack.c.l.b16 %v305
      %v698 = vunpack.c.l.b16 %v306
      %v699 = vunpack.c.l.b16 %v307
      %v700 = vunpack.c.l.b16 %v308
      %v701 = vunpack.c.l.b16 %v309
      %v702 = vunpack.c.l.b16 %v310
      %v703 = vunpack.c.l.b16 %v311
      %v704 = vunpack.c.l.b16 %v312
      %v705 = vunpack.c.l.b16 %v313
      %v706 = vunpack.c.l.b16 %v314
      %v707 = vunpack.c.l.b16 %v315
      %v708 = vunpack.c.l.b16 %v316
      %v709 = vunpack.c.l.b16 %v317
      %v710 = vunpack.c.l.b16 %v318
      %v711 = vunpack.c.l.b16 %v319
      %v712 = vunpack.c.l.b16 %v320
      %v713 = vunpack.c.l.b16 %v321
      %v714 = vunpack.c.l.b16 %v322
      %v715 = vunpack.c.l.b16 %v323
      %v716 = vunpack.c.l.b16 %v324
      %v717 = vpack.c.b16 %v686, %v685
      %v718 = vpack.c.b16 %v688, %v687
      %v719 = vpack.c.b16 %v690, %v689
      %v720 = vpack.c.b16 %v692, %v691
      %v721 = vpack.c.b16 %v694, %v693
      %v722 = vpack.c.b16 %v696, %v695
      %v723 = vpack.c.b16 %v698, %v697
      %v724 = vpack.c.b16 %v700, %v699
      %v725 = vpack.c.b16 %v702, %v701
      %v726 = vpack.c.b16 %v704, %v703
      %v727 = vpack.c.b16 %v706, %v705
      %v728 = vpack.c.b16 %v708, %v707
      %v729 = vpack.c.b16 %v710, %v709
      %v730 = vpack.c.b16 %v712, %v711
      %v731 = vpack.c.b16 %v714, %v713
      %v732 = vpack.c.b16 %v716, %v715
      %v734 = vsel %vm439, %v717, 0
      %v737 = vsel %vm439, %v718, 0
      %v740 = vsel %vm439, %v719, 0
      %v743 = vsel %vm439, %v720, 0
      %v746 = vsel %vm439, %v721, 0
      %v749 = vsel %vm439, %v722, 0
      %v752 = vsel %vm439, %v723, 0
      %v755 = vsel %vm439, %v724, 0
      %v758 = vsel %vm439, %v725, 0
      %v761 = vsel %vm439, %v726, 0
      %v764 = vsel %vm439, %v727, 0
      %v767 = vsel %vm439, %v728, 0
      %v770 = vsel %vm439, %v729, 0
      %v773 = vsel %vm439, %v730, 0
      %v776 = vsel %vm439, %v731, 0
      %v779 = vsel %vm439, %v732, 0
      %v782 = vsel %vm488, %v325, 0
      %784 = vmatprep.subr.bf16.mxu0 0
      %785 = vmatpush1.bf16.msra.mxu0 %v782
      %786 = vmatprep.subr.bf16.mxu0 0
      %787 = vmatpush1.bf16.msra.mxu0 0
      %788 = vmatprep.subr.bf16.mxu0 0
      %789 = vmatpush1.bf16.msra.mxu0 0
      %790 = vmatprep.subr.bf16.mxu0 0
      %791 = vmatpush1.bf16.msra.mxu0 0
      %792 = vmatprep.subr.bf16.mxu0 0
      %793 = vmatpush1.bf16.msra.mxu0 0
      %794 = vmatprep.subr.bf16.mxu0 0
      %795 = vmatpush1.bf16.msra.mxu0 0
      %796 = vmatprep.subr.bf16.mxu0 0
      %797 = vmatpush1.bf16.msra.mxu0 0
      %798 = vmatprep.subr.bf16.mxu0 0
      %799 = vmatpush1.bf16.msra.mxu0 0
      %800 = vmatprep.subr.bf16.mxu0 0
      %801 = vmatpush1.bf16.msra.mxu0 0
      %802 = vmatprep.subr.bf16.mxu0 0
      %803 = vmatpush1.bf16.msra.mxu0 0
      %804 = vmatprep.subr.bf16.mxu0 0
      %805 = vmatpush1.bf16.msra.mxu0 0
      %806 = vmatprep.subr.bf16.mxu0 0
      %807 = vmatpush1.bf16.msra.mxu0 0
      %808 = vmatprep.subr.bf16.mxu0 0
      %809 = vmatpush1.bf16.msra.mxu0 0
      %810 = vmatprep.subr.bf16.mxu0 0
      %811 = vmatpush1.bf16.msra.mxu0 0
      %812 = vmatprep.subr.bf16.mxu0 0
      %813 = vmatpush1.bf16.msra.mxu0 0
      %814 = vmatprep.subr.bf16.mxu0 0
      %815 = vmatpush1.bf16.msra.mxu0 0
      %816 = vmatprep.mubr.bf16.mxu0 0
      %817 = vmatmul.mubr.bf16.gmra.mrb[0].mxu0 %v734
      %v818 = vpop.f32.mrb[0].mxu0
      %v819 = vadd.f32 %v527, %v818
      %v820 = vpop.f32.mrb[0].mxu0
      %v821 = vpop.f32.mrb[0].mxu0
      %v822 = vadd.f32 %v530, %v821
      %v823 = vpop.f32.mrb[0].mxu0
      %824 = vmatprep.mubr.bf16.mxu0 0
      %825 = vmatmul.mubr.bf16.gmra.mrb[0].mxu0 %v737
      %v826 = vpop.f32.mrb[0].mxu0
      %v827 = vadd.f32 %v535, %v826
      %v828 = vpop.f32.mrb[0].mxu0
      %v829 = vpop.f32.mrb[0].mxu0
      %v830 = vadd.f32 %v538, %v829
      %v831 = vpop.f32.mrb[0].mxu0
      %832 = vmatprep.mubr.bf16.mxu0 0
      %833 = vmatmul.mubr.bf16.gmra.mrb[0].mxu0 %v740
      %v834 = vpop.f32.mrb[0].mxu0
      %v835 = vadd.f32 %v543, %v834
      %v836 = vpop.f32.mrb[0].mxu0
      %v837 = vpop.f32.mrb[0].mxu0
      %v838 = vadd.f32 %v546, %v837
      %v839 = vpop.f32.mrb[0].mxu0
      %840 = vmatprep.mubr.bf16.mxu0 0
      %841 = vmatmul.mubr.bf16.gmra.mrb[0].mxu0 %v743
      %v842 = vpop.f32.mrb[0].mxu0
      %v843 = vadd.f32 %v551, %v842
      %v844 = vpop.f32.mrb[0].mxu0
      %v845 = vpop.f32.mrb[0].mxu0
      %v846 = vadd.f32 %v554, %v845
      %v847 = vpop.f32.mrb[0].mxu0
      %848 = vmatprep.mubr.bf16.mxu0 0
      %849 = vmatmul.mubr.bf16.gmra.mrb[0].mxu0 %v746
      %v850 = vpop.f32.mrb[0].mxu0
      %v851 = vadd.f32 %v559, %v850
      %v852 = vpop.f32.mrb[0].mxu0
      %v853 = vpop.f32.mrb[0].mxu0
      %v854 = vadd.f32 %v562, %v853
      %v855 = vpop.f32.mrb[0].mxu0
      %856 = vmatprep.mubr.bf16.mxu0 0
      %857 = vmatmul.mubr.bf16.gmra.mrb[0].mxu0 %v749
      %v858 = vpop.f32.mrb[0].mxu0
      %v859 = vadd.f32 %v567, %v858
      %v860 = vpop.f32.mrb[0].mxu0
      %v861 = vpop.f32.mrb[0].mxu0
      %v862 = vadd.f32 %v570, %v861
      %v863 = vpop.f32.mrb[0].mxu0
      %864 = vmatprep.mubr.bf16.mxu0 0
      %865 = vmatmul.mubr.bf16.gmra.mrb[0].mxu0 %v752
      %v866 = vpop.f32.mrb[0].mxu0
      %v867 = vadd.f32 %v575, %v866
      %v868 = vpop.f32.mrb[0].mxu0
      %v869 = vpop.f32.mrb[0].mxu0
      %v870 = vadd.f32 %v578, %v869
      %v871 = vpop.f32.mrb[0].mxu0
      %872 = vmatprep.mubr.bf16.mxu0 0
      %873 = vmatmul.mubr.bf16.gmra.mrb[0].mxu0 %v755
      %v874 = vpop.f32.mrb[0].mxu0
      %v875 = vadd.f32 %v583, %v874
      %v876 = vpop.f32.mrb[0].mxu0
      %v877 = vpop.f32.mrb[0].mxu0
      %v878 = vadd.f32 %v586, %v877
      %v879 = vpop.f32.mrb[0].mxu0
      %880 = vmatprep.mubr.bf16.mxu0 0
      %881 = vmatmul.mubr.bf16.gmra.mrb[0].mxu0 %v758
      %v882 = vpop.f32.mrb[0].mxu0
      %v883 = vadd.f32 %v591, %v882
      %v884 = vpop.f32.mrb[0].mxu0
      %v885 = vpop.f32.mrb[0].mxu0
      %v886 = vadd.f32 %v594, %v885
      %v887 = vpop.f32.mrb[0].mxu0
      %888 = vmatprep.mubr.bf16.mxu0 0
      %889 = vmatmul.mubr.bf16.gmra.mrb[0].mxu0 %v761
      %v890 = vpop.f32.mrb[0].mxu0
      %v891 = vadd.f32 %v599, %v890
      %v892 = vpop.f32.mrb[0].mxu0
      %v893 = vpop.f32.mrb[0].mxu0
      %v894 = vadd.f32 %v602, %v893
      %v895 = vpop.f32.mrb[0].mxu0
      %896 = vmatprep.mubr.bf16.mxu0 0
      %897 = vmatmul.mubr.bf16.gmra.mrb[0].mxu0 %v764
      %v898 = vpop.f32.mrb[0].mxu0
      %v899 = vadd.f32 %v607, %v898
      %v900 = vpop.f32.mrb[0].mxu0
      %v901 = vpop.f32.mrb[0].mxu0
      %v902 = vadd.f32 %v610, %v901
      %v903 = vpop.f32.mrb[0].mxu0
      %904 = vmatprep.mubr.bf16.mxu0 0
      %905 = vmatmul.mubr.bf16.gmra.mrb[0].mxu0 %v767
      %v906 = vpop.f32.mrb[0].mxu0
      %v907 = vadd.f32 %v615, %v906
      %v908 = vpop.f32.mrb[0].mxu0
      %v909 = vpop.f32.mrb[0].mxu0
      %v910 = vadd.f32 %v618, %v909
      %v911 = vpop.f32.mrb[0].mxu0
      %912 = vmatprep.mubr.bf16.mxu0 0
      %913 = vmatmul.mubr.bf16.gmra.mrb[0].mxu0 %v770
      %v914 = vpop.f32.mrb[0].mxu0
      %v915 = vadd.f32 %v623, %v914
      %v916 = vpop.f32.mrb[0].mxu0
      %v917 = vpop.f32.mrb[0].mxu0
      %v918 = vadd.f32 %v626, %v917
      %v919 = vpop.f32.mrb[0].mxu0
      %920 = vmatprep.mubr.bf16.mxu0 0
      %921 = vmatmul.mubr.bf16.gmra.mrb[0].mxu0 %v773
      %v922 = vpop.f32.mrb[0].mxu0
      %v923 = vadd.f32 %v631, %v922
      %v924 = vpop.f32.mrb[0].mxu0
      %v925 = vpop.f32.mrb[0].mxu0
      %v926 = vadd.f32 %v634, %v925
      %v927 = vpop.f32.mrb[0].mxu0
      %928 = vmatprep.mubr.bf16.mxu0 0
      %929 = vmatmul.mubr.bf16.gmra.mrb[0].mxu0 %v776
      %v930 = vpop.f32.mrb[0].mxu0
      %v931 = vadd.f32 %v639, %v930
      %v932 = vpop.f32.mrb[0].mxu0
      %v933 = vpop.f32.mrb[0].mxu0
      %v934 = vadd.f32 %v642, %v933
      %v935 = vpop.f32.mrb[0].mxu0
      %936 = vmatprep.mubr.bf16.mxu0 0
      %937 = vmatmul.mubr.bf16.gmra.mrb[0].mxu0 %v779
      %v938 = vpop.f32.mrb[0].mxu0
      %v939 = vadd.f32 %v647, %v938
      %v940 = vpop.f32.mrb[0].mxu0
      %v941 = vpop.f32.mrb[0].mxu0
      %v942 = vadd.f32 %v650, %v941
      %v943 = vpop.f32.mrb[0].mxu0
      %944 = vdwg.mxu0
      %v945 = vld [vmem:[%s286] sm:$0xf]
      %v946 = vld [vmem:[%s286 + $0x4] sm:$0xf]
      %v947 = vld [vmem:[%s286 + $0x8] sm:$0xf]
      %v948 = vld [vmem:[%s286 + $0xc] sm:$0xf]
      %v949 = vld [vmem:[%s286 + $0x10] sm:$0xf]
      %v950 = vld [vmem:[%s286 + $0x14] sm:$0xf]
      %v951 = vld [vmem:[%s286 + $0x18] sm:$0xf]
      %v952 = vld [vmem:[%s286 + $0x1c] sm:$0xf]
      %v953 = vld [vmem:[%s286 + $0x20] sm:$0xf]
      %v954 = vld [vmem:[%s286 + $0x24] sm:$0xf]
      %v955 = vld [vmem:[%s286 + $0x28] sm:$0xf]
      %v956 = vld [vmem:[%s286 + $0x2c] sm:$0xf]
      %v957 = vld [vmem:[%s286 + $0x30] sm:$0xf]
      %v958 = vld [vmem:[%s286 + $0x34] sm:$0xf]
      %v959 = vld [vmem:[%s286 + $0x38] sm:$0xf]
      %v960 = vld [vmem:[%s286 + $0x3c] sm:$0xf]
      %v961 = vld [vmem:[%s286 + $0x40] sm:$0xf]
      %v962 = vld [vmem:[%s286 + $0x44] sm:$0xf]
      %v963 = vld [vmem:[%s286 + $0x48] sm:$0xf]
      %v964 = vld [vmem:[%s286 + $0x4c] sm:$0xf]
      %v965 = vld [vmem:[%s286 + $0x50] sm:$0xf]
      %v966 = vld [vmem:[%s286 + $0x54] sm:$0xf]
      %v967 = vld [vmem:[%s286 + $0x58] sm:$0xf]
      %v968 = vld [vmem:[%s286 + $0x5c] sm:$0xf]
      %v969 = vld [vmem:[%s286 + $0x60] sm:$0xf]
      %v970 = vld [vmem:[%s286 + $0x64] sm:$0xf]
      %v971 = vld [vmem:[%s286 + $0x68] sm:$0xf]
      %v972 = vld [vmem:[%s286 + $0x6c] sm:$0xf]
      %v973 = vld [vmem:[%s286 + $0x70] sm:$0xf]
      %v974 = vld [vmem:[%s286 + $0x74] sm:$0xf]
      %v975 = vld [vmem:[%s286 + $0x78] sm:$0xf]
      %v976 = vld [vmem:[%s286 + $0x7c] sm:$0xf]
      %v977 = vld [vmem:[%s5] sm:$0xf]
      %v978 = vld [vmem:[%s5 + $0x4] sm:$0xf]
      %v1011 = vunpack.c.l.b16 %v945
      %v1012 = vunpack.c.l.b16 %v946
      %v1013 = vunpack.c.l.b16 %v947
      %v1014 = vunpack.c.l.b16 %v948
      %v1015 = vunpack.c.l.b16 %v949
      %v1016 = vunpack.c.l.b16 %v950
      %v1017 = vunpack.c.l.b16 %v951
      %v1018 = vunpack.c.l.b16 %v952
      %v1019 = vunpack.c.l.b16 %v953
      %v1020 = vunpack.c.l.b16 %v954
      %v1021 = vunpack.c.l.b16 %v955
      %v1022 = vunpack.c.l.b16 %v956
      %v1023 = vunpack.c.l.b16 %v957
      %v1024 = vunpack.c.l.b16 %v958
      %v1025 = vunpack.c.l.b16 %v959
      %v1026 = vunpack.c.l.b16 %v960
      %v1027 = vunpack.c.l.b16 %v961
      %v1028 = vunpack.c.l.b16 %v962
      %v1029 = vunpack.c.l.b16 %v963
      %v1030 = vunpack.c.l.b16 %v964
      %v1031 = vunpack.c.l.b16 %v965
      %v1032 = vunpack.c.l.b16 %v966
      %v1033 = vunpack.c.l.b16 %v967
      %v1034 = vunpack.c.l.b16 %v968
      %v1035 = vunpack.c.l.b16 %v969
      %v1036 = vunpack.c.l.b16 %v970
      %v1037 = vunpack.c.l.b16 %v971
      %v1038 = vunpack.c.l.b16 %v972
      %v1039 = vunpack.c.l.b16 %v973
      %v1040 = vunpack.c.l.b16 %v974
      %v1041 = vunpack.c.l.b16 %v975
      %v1042 = vunpack.c.l.b16 %v976
      %v1043 = vpack.c.b16 %v1012, %v1011
      %v1044 = vpack.c.b16 %v1014, %v1013
      %v1045 = vpack.c.b16 %v1016, %v1015
      %v1046 = vpack.c.b16 %v1018, %v1017
      %v1047 = vpack.c.b16 %v1020, %v1019
      %v1048 = vpack.c.b16 %v1022, %v1021
      %v1049 = vpack.c.b16 %v1024, %v1023
      %v1050 = vpack.c.b16 %v1026, %v1025
      %v1051 = vpack.c.b16 %v1028, %v1027
      %v1052 = vpack.c.b16 %v1030, %v1029
      %v1053 = vpack.c.b16 %v1032, %v1031
      %v1054 = vpack.c.b16 %v1034, %v1033
      %v1055 = vpack.c.b16 %v1036, %v1035
      %v1056 = vpack.c.b16 %v1038, %v1037
      %v1057 = vpack.c.b16 %v1040, %v1039
      %v1058 = vpack.c.b16 %v1042, %v1041
      %v1061 = vunpack.c.l.b16 %v977
      %v1062 = vunpack.c.l.b16 %v978
      %v1063 = vpack.c.b16 %v1062, %v1061
      %vm1065 = vcmask 130048
      %v1067 = vsel %vm1065, %v1043, 0
      %v1070 = vsel %vm1065, %v1044, 0
      %v1073 = vsel %vm1065, %v1045, 0
      %v1076 = vsel %vm1065, %v1046, 0
      %v1079 = vsel %vm1065, %v1047, 0
      %v1082 = vsel %vm1065, %v1048, 0
      %v1085 = vsel %vm1065, %v1049, 0
      %v1088 = vsel %vm1065, %v1050, 0
      %v1091 = vsel %vm1065, %v1051, 0
      %v1094 = vsel %vm1065, %v1052, 0
      %v1097 = vsel %vm1065, %v1053, 0
      %v1100 = vsel %vm1065, %v1054, 0
      %v1103 = vsel %vm1065, %v1055, 0
      %v1106 = vsel %vm1065, %v1056, 0
      %v1109 = vsel %vm1065, %v1057, 0
      %v1112 = vsel %vm1065, %v1058, 0
      %1114 = vmatprep.subr.bf16.mxu0 0
      %1115 = vmatpush1.bf16.msra.mxu0 %v1063
      %1116 = vmatprep.subr.bf16.mxu0 0
      %1117 = vmatpush1.bf16.msra.mxu0 0
      %1118 = vmatprep.subr.bf16.mxu0 0
      %1119 = vmatpush1.bf16.msra.mxu0 0
      %1120 = vmatprep.subr.bf16.mxu0 0
      %1121 = vmatpush1.bf16.msra.mxu0 0
      %1122 = vmatprep.subr.bf16.mxu0 0
      %1123 = vmatpush1.bf16.msra.mxu0 0
      %1124 = vmatprep.subr.bf16.mxu0 0
      %1125 = vmatpush1.bf16.msra.mxu0 0
      %1126 = vmatprep.subr.bf16.mxu0 0
      %1127 = vmatpush1.bf16.msra.mxu0 0
      %1128 = vmatprep.subr.bf16.mxu0 0
      %1129 = vmatpush1.bf16.msra.mxu0 0
      %1130 = vmatprep.subr.bf16.mxu0 0
      %1131 = vmatpush1.bf16.msra.mxu0 0
      %1132 = vmatprep.subr.bf16.mxu0 0
      %1133 = vmatpush1.bf16.msra.mxu0 0
      %1134 = vmatprep.subr.bf16.mxu0 0
      %1135 = vmatpush1.bf16.msra.mxu0 0
      %1136 = vmatprep.subr.bf16.mxu0 0
      %1137 = vmatpush1.bf16.msra.mxu0 0
      %1138 = vmatprep.subr.bf16.mxu0 0
      %1139 = vmatpush1.bf16.msra.mxu0 0
      %1140 = vmatprep.subr.bf16.mxu0 0
      %1141 = vmatpush1.bf16.msra.mxu0 0
      %1142 = vmatprep.subr.bf16.mxu0 0
      %1143 = vmatpush1.bf16.msra.mxu0 0
      %1144 = vmatprep.subr.bf16.mxu0 0
      %1145 = vmatpush1.bf16.msra.mxu0 0
      %1146 = vmatprep.mubr.bf16.mxu0 0
      %1147 = vmatmul.mubr.bf16.gmra.mrb[0].mxu0 %v1067
      %v1148 = vpop.f32.mrb[0].mxu0
      %v1149 = vadd.f32 0.0, %v1148
      %v1150 = vpop.f32.mrb[0].mxu0
      %v1151 = vpop.f32.mrb[0].mxu0
      %v1152 = vadd.f32 0.0, %v1151
      %v1153 = vpop.f32.mrb[0].mxu0
      %1154 = vmatprep.mubr.bf16.mxu0 0
      %1155 = vmatmul.mubr.bf16.gmra.mrb[0].mxu0 %v1070
      %v1156 = vpop.f32.mrb[0].mxu0
      %v1157 = vadd.f32 0.0, %v1156
      %v1158 = vpop.f32.mrb[0].mxu0
      %v1159 = vpop.f32.mrb[0].mxu0
      %v1160 = vadd.f32 0.0, %v1159
      %v1161 = vpop.f32.mrb[0].mxu0
      %1162 = vmatprep.mubr.bf16.mxu0 0
      %1163 = vmatmul.mubr.bf16.gmra.mrb[0].mxu0 %v1073
      %v1164 = vpop.f32.mrb[0].mxu0
      %v1165 = vadd.f32 0.0, %v1164
      %v1166 = vpop.f32.mrb[0].mxu0
      %v1167 = vpop.f32.mrb[0].mxu0
      %v1168 = vadd.f32 0.0, %v1167
      %v1169 = vpop.f32.mrb[0].mxu0
      %1170 = vmatprep.mubr.bf16.mxu0 0
      %1171 = vmatmul.mubr.bf16.gmra.mrb[0].mxu0 %v1076
      %v1172 = vpop.f32.mrb[0].mxu0
      %v1173 = vadd.f32 0.0, %v1172
      %v1174 = vpop.f32.mrb[0].mxu0
      %v1175 = vpop.f32.mrb[0].mxu0
      %v1176 = vadd.f32 0.0, %v1175
      %v1177 = vpop.f32.mrb[0].mxu0
      %1178 = vmatprep.mubr.bf16.mxu0 0
      %1179 = vmatmul.mubr.bf16.gmra.mrb[0].mxu0 %v1079
      %v1180 = vpop.f32.mrb[0].mxu0
      %v1181 = vadd.f32 0.0, %v1180
      %v1182 = vpop.f32.mrb[0].mxu0
      %v1183 = vpop.f32.mrb[0].mxu0
      %v1184 = vadd.f32 0.0, %v1183
      %v1185 = vpop.f32.mrb[0].mxu0
      %1186 = vmatprep.mubr.bf16.mxu0 0
      %1187 = vmatmul.mubr.bf16.gmra.mrb[0].mxu0 %v1082
      %v1188 = vpop.f32.mrb[0].mxu0
      %v1189 = vadd.f32 0.0, %v1188
      %v1190 = vpop.f32.mrb[0].mxu0
      %v1191 = vpop.f32.mrb[0].mxu0
      %v1192 = vadd.f32 0.0, %v1191
      %v1193 = vpop.f32.mrb[0].mxu0
      %1194 = vmatprep.mubr.bf16.mxu0 0
      %1195 = vmatmul.mubr.bf16.gmra.mrb[0].mxu0 %v1085
      %v1196 = vpop.f32.mrb[0].mxu0
      %v1197 = vadd.f32 0.0, %v1196
      %v1198 = vpop.f32.mrb[0].mxu0
      %v1199 = vpop.f32.mrb[0].mxu0
      %v1200 = vadd.f32 0.0, %v1199
      %v1201 = vpop.f32.mrb[0].mxu0
      %1202 = vmatprep.mubr.bf16.mxu0 0
      %1203 = vmatmul.mubr.bf16.gmra.mrb[0].mxu0 %v1088
      %v1204 = vpop.f32.mrb[0].mxu0
      %v1205 = vadd.f32 0.0, %v1204
      %v1206 = vpop.f32.mrb[0].mxu0
      %v1207 = vpop.f32.mrb[0].mxu0
      %v1208 = vadd.f32 0.0, %v1207
      %v1209 = vpop.f32.mrb[0].mxu0
      %1210 = vmatprep.mubr.bf16.mxu0 0
      %1211 = vmatmul.mubr.bf16.gmra.mrb[0].mxu0 %v1091
      %v1212 = vpop.f32.mrb[0].mxu0
      %v1213 = vadd.f32 0.0, %v1212
      %v1214 = vpop.f32.mrb[0].mxu0
      %v1215 = vpop.f32.mrb[0].mxu0
      %v1216 = vadd.f32 0.0, %v1215
      %v1217 = vpop.f32.mrb[0].mxu0
      %1218 = vmatprep.mubr.bf16.mxu0 0
      %1219 = vmatmul.mubr.bf16.gmra.mrb[0].mxu0 %v1094
      %v1220 = vpop.f32.mrb[0].mxu0
      %v1221 = vadd.f32 0.0, %v1220
      %v1222 = vpop.f32.mrb[0].mxu0
      %v1223 = vpop.f32.mrb[0].mxu0
      %v1224 = vadd.f32 0.0, %v1223
      %v1225 = vpop.f32.mrb[0].mxu0
      %1226 = vmatprep.mubr.bf16.mxu0 0
      %1227 = vmatmul.mubr.bf16.gmra.mrb[0].mxu0 %v1097
      %v1228 = vpop.f32.mrb[0].mxu0
      %v1229 = vadd.f32 0.0, %v1228
      %v1230 = vpop.f32.mrb[0].mxu0
      %v1231 = vpop.f32.mrb[0].mxu0
      %v1232 = vadd.f32 0.0, %v1231
      %v1233 = vpop.f32.mrb[0].mxu0
      %1234 = vmatprep.mubr.bf16.mxu0 0
      %1235 = vmatmul.mubr.bf16.gmra.mrb[0].mxu0 %v1100
      %v1236 = vpop.f32.mrb[0].mxu0
      %v1237 = vadd.f32 0.0, %v1236
      %v1238 = vpop.f32.mrb[0].mxu0
      %v1239 = vpop.f32.mrb[0].mxu0
      %v1240 = vadd.f32 0.0, %v1239
      %v1241 = vpop.f32.mrb[0].mxu0
      %1242 = vmatprep.mubr.bf16.mxu0 0
      %1243 = vmatmul.mubr.bf16.gmra.mrb[0].mxu0 %v1103
      %v1244 = vpop.f32.mrb[0].mxu0
      %v1245 = vadd.f32 0.0, %v1244
      %v1246 = vpop.f32.mrb[0].mxu0
      %v1247 = vpop.f32.mrb[0].mxu0
      %v1248 = vadd.f32 0.0, %v1247
      %v1249 = vpop.f32.mrb[0].mxu0
      %1250 = vmatprep.mubr.bf16.mxu0 0
      %1251 = vmatmul.mubr.bf16.gmra.mrb[0].mxu0 %v1106
      %v1252 = vpop.f32.mrb[0].mxu0
      %v1253 = vadd.f32 0.0, %v1252
      %v1254 = vpop.f32.mrb[0].mxu0
      %v1255 = vpop.f32.mrb[0].mxu0
      %v1256 = vadd.f32 0.0, %v1255
      %v1257 = vpop.f32.mrb[0].mxu0
      %1258 = vmatprep.mubr.bf16.mxu0 0
      %1259 = vmatmul.mubr.bf16.gmra.mrb[0].mxu0 %v1109
      %v1260 = vpop.f32.mrb[0].mxu0
      %v1261 = vadd.f32 0.0, %v1260
      %v1262 = vpop.f32.mrb[0].mxu0
      %v1263 = vpop.f32.mrb[0].mxu0
      %v1264 = vadd.f32 0.0, %v1263
      %v1265 = vpop.f32.mrb[0].mxu0
      %1266 = vmatprep.mubr.bf16.mxu0 0
      %1267 = vmatmul.mubr.bf16.gmra.mrb[0].mxu0 %v1112
      %v1268 = vpop.f32.mrb[0].mxu0
      %v1269 = vadd.f32 0.0, %v1268
      %v1270 = vpop.f32.mrb[0].mxu0
      %v1271 = vpop.f32.mrb[0].mxu0
      %v1272 = vadd.f32 0.0, %v1271
      %v1273 = vpop.f32.mrb[0].mxu0
      %1274 = vdwg.mxu0
      %v1275 = vadd.f32 %v819, %v1149
      %v1276 = vadd.f32 %v822, %v1152
      %v1277 = vadd.f32 %v827, %v1157
      %v1278 = vadd.f32 %v830, %v1160
      %v1279 = vadd.f32 %v835, %v1165
      %v1280 = vadd.f32 %v838, %v1168
      %v1281 = vadd.f32 %v843, %v1173
      %v1282 = vadd.f32 %v846, %v1176
      %v1283 = vadd.f32 %v851, %v1181
      %v1284 = vadd.f32 %v854, %v1184
      %v1285 = vadd.f32 %v859, %v1189
      %v1286 = vadd.f32 %v862, %v1192
      %v1287 = vadd.f32 %v867, %v1197
      %v1288 = vadd.f32 %v870, %v1200
      %v1289 = vadd.f32 %v875, %v1205
      %v1290 = vadd.f32 %v878, %v1208
      %v1291 = vadd.f32 %v883, %v1213
      %v1292 = vadd.f32 %v886, %v1216
      %v1293 = vadd.f32 %v891, %v1221
      %v1294 = vadd.f32 %v894, %v1224
      %v1295 = vadd.f32 %v899, %v1229
      %v1296 = vadd.f32 %v902, %v1232
      %v1297 = vadd.f32 %v907, %v1237
      %v1298 = vadd.f32 %v910, %v1240
      %v1299 = vadd.f32 %v915, %v1245
      %v1300 = vadd.f32 %v918, %v1248
      %v1301 = vadd.f32 %v923, %v1253
      %v1302 = vadd.f32 %v926, %v1256
      %v1303 = vadd.f32 %v931, %v1261
      %v1304 = vadd.f32 %v934, %v1264
      %v1305 = vadd.f32 %v939, %v1269
      %v1306 = vadd.f32 %v942, %v1272
      %v1307 = vmax.f32 %v1275, 0.0
      %v1308 = vmax.f32 %v1276, 0.0
      %v1309 = vmax.f32 %v1277, 0.0
      %v1310 = vmax.f32 %v1278, 0.0
      %v1311 = vmax.f32 %v1279, 0.0
      %v1312 = vmax.f32 %v1280, 0.0
      %v1313 = vmax.f32 %v1281, 0.0
      %v1314 = vmax.f32 %v1282, 0.0
      %v1315 = vmax.f32 %v1283, 0.0
      %v1316 = vmax.f32 %v1284, 0.0
      %v1317 = vmax.f32 %v1285, 0.0
      %v1318 = vmax.f32 %v1286, 0.0
      %v1319 = vmax.f32 %v1287, 0.0
      %v1320 = vmax.f32 %v1288, 0.0
      %v1321 = vmax.f32 %v1289, 0.0
      %v1322 = vmax.f32 %v1290, 0.0
      %v1323 = vmax.f32 %v1291, 0.0
      %v1324 = vmax.f32 %v1292, 0.0
      %v1325 = vmax.f32 %v1293, 0.0
      %v1326 = vmax.f32 %v1294, 0.0
      %v1327 = vmax.f32 %v1295, 0.0
      %v1328 = vmax.f32 %v1296, 0.0
      %v1329 = vmax.f32 %v1297, 0.0
      %v1330 = vmax.f32 %v1298, 0.0
      %v1331 = vmax.f32 %v1299, 0.0
      %v1332 = vmax.f32 %v1300, 0.0
      %v1333 = vmax.f32 %v1301, 0.0
      %v1334 = vmax.f32 %v1302, 0.0
      %v1335 = vmax.f32 %v1303, 0.0
      %v1336 = vmax.f32 %v1304, 0.0
      %v1337 = vmax.f32 %v1305, 0.0
      %v1338 = vmax.f32 %v1306, 0.0
      %v1339 = vpack.c.bf16 %v1308, %v1307
      %v1340 = vpack.c.bf16 %v1310, %v1309
      %v1341 = vpack.c.bf16 %v1312, %v1311
      %v1342 = vpack.c.bf16 %v1314, %v1313
      %v1343 = vpack.c.bf16 %v1316, %v1315
      %v1344 = vpack.c.bf16 %v1318, %v1317
      %v1345 = vpack.c.bf16 %v1320, %v1319
      %v1346 = vpack.c.bf16 %v1322, %v1321
      %v1347 = vpack.c.bf16 %v1324, %v1323
      %v1348 = vpack.c.bf16 %v1326, %v1325
      %v1349 = vpack.c.bf16 %v1328, %v1327
      %v1350 = vpack.c.bf16 %v1330, %v1329
      %v1351 = vpack.c.bf16 %v1332, %v1331
      %v1352 = vpack.c.bf16 %v1334, %v1333
      %v1353 = vpack.c.bf16 %v1336, %v1335
      %v1354 = vpack.c.bf16 %v1338, %v1337
      %v1371 = vunpack.c.l.b16 %v1339
      %v1372 = vunpack.c.h.b16 %v1339
      %v1373 = vunpack.c.l.b16 %v1340
      %v1374 = vunpack.c.h.b16 %v1340
      %v1375 = vunpack.c.l.b16 %v1341
      %v1376 = vunpack.c.h.b16 %v1341
      %v1377 = vunpack.c.l.b16 %v1342
      %v1378 = vunpack.c.h.b16 %v1342
      %v1379 = vunpack.c.l.b16 %v1343
      %v1380 = vunpack.c.h.b16 %v1343
      %v1381 = vunpack.c.l.b16 %v1344
      %v1382 = vunpack.c.h.b16 %v1344
      %v1383 = vunpack.c.l.b16 %v1345
      %v1384 = vunpack.c.h.b16 %v1345
      %v1385 = vunpack.c.l.b16 %v1346
      %v1386 = vunpack.c.h.b16 %v1346
      %v1387 = vunpack.c.l.b16 %v1347
      %v1388 = vunpack.c.h.b16 %v1347
      %v1389 = vunpack.c.l.b16 %v1348
      %v1390 = vunpack.c.h.b16 %v1348
      %v1391 = vunpack.c.l.b16 %v1349
      %v1392 = vunpack.c.h.b16 %v1349
      %v1393 = vunpack.c.l.b16 %v1350
      %v1394 = vunpack.c.h.b16 %v1350
      %v1395 = vunpack.c.l.b16 %v1351
      %v1396 = vunpack.c.h.b16 %v1351
      %v1397 = vunpack.c.l.b16 %v1352
      %v1398 = vunpack.c.h.b16 %v1352
      %v1399 = vunpack.c.l.b16 %v1353
      %v1400 = vunpack.c.h.b16 %v1353
      %v1401 = vunpack.c.l.b16 %v1354
      %v1402 = vunpack.c.h.b16 %v1354
      %v1403 = vpack.c.b16 %v1371, %v1371
      %v1404 = vpack.c.b16 %v1372, %v1372
      %v1405 = vpack.c.b16 %v1373, %v1373
      %v1406 = vpack.c.b16 %v1374, %v1374
      %v1407 = vpack.c.b16 %v1375, %v1375
      %v1408 = vpack.c.b16 %v1376, %v1376
      %v1409 = vpack.c.b16 %v1377, %v1377
      %v1410 = vpack.c.b16 %v1378, %v1378
      %v1411 = vpack.c.b16 %v1379, %v1379
      %v1412 = vpack.c.b16 %v1380, %v1380
      %v1413 = vpack.c.b16 %v1381, %v1381
      %v1414 = vpack.c.b16 %v1382, %v1382
      %v1415 = vpack.c.b16 %v1383, %v1383
      %v1416 = vpack.c.b16 %v1384, %v1384
      %v1417 = vpack.c.b16 %v1385, %v1385
      %v1418 = vpack.c.b16 %v1386, %v1386
      %v1419 = vpack.c.b16 %v1387, %v1387
      %v1420 = vpack.c.b16 %v1388, %v1388
      %v1421 = vpack.c.b16 %v1389, %v1389
      %v1422 = vpack.c.b16 %v1390, %v1390
      %v1423 = vpack.c.b16 %v1391, %v1391
      %v1424 = vpack.c.b16 %v1392, %v1392
      %v1425 = vpack.c.b16 %v1393, %v1393
      %v1426 = vpack.c.b16 %v1394, %v1394
      %v1427 = vpack.c.b16 %v1395, %v1395
      %v1428 = vpack.c.b16 %v1396, %v1396
      %v1429 = vpack.c.b16 %v1397, %v1397
      %v1430 = vpack.c.b16 %v1398, %v1398
      %v1431 = vpack.c.b16 %v1399, %v1399
      %v1432 = vpack.c.b16 %v1400, %v1400
      %v1433 = vpack.c.b16 %v1401, %v1401
      %v1434 = vpack.c.b16 %v1402, %v1402
      %vm1467 = vcmask 125952
      %1468 = vst.msk [vmem:[%s291] sm:$0xf] %vm1467, %v1403
      %1469 = vst.msk [vmem:[%s291 + $0x4] sm:$0xf] %vm1467, %v1404
      %1470 = vst.msk [vmem:[%s291 + $0x8] sm:$0xf] %vm1467, %v1405
      %1471 = vst.msk [vmem:[%s291 + $0xc] sm:$0xf] %vm1467, %v1406
      %1472 = vst.msk [vmem:[%s291 + $0x10] sm:$0xf] %vm1467, %v1407
      %1473 = vst.msk [vmem:[%s291 + $0x14] sm:$0xf] %vm1467, %v1408
      %1474 = vst.msk [vmem:[%s291 + $0x18] sm:$0xf] %vm1467, %v1409
      %1475 = vst.msk [vmem:[%s291 + $0x1c] sm:$0xf] %vm1467, %v1410
      %1476 = vst.msk [vmem:[%s291 + $0x20] sm:$0xf] %vm1467, %v1411
      %1477 = vst.msk [vmem:[%s291 + $0x24] sm:$0xf] %vm1467, %v1412
      %1478 = vst.msk [vmem:[%s291 + $0x28] sm:$0xf] %vm1467, %v1413
      %1479 = vst.msk [vmem:[%s291 + $0x2c] sm:$0xf] %vm1467, %v1414
      %1480 = vst.msk [vmem:[%s291 + $0x30] sm:$0xf] %vm1467, %v1415
      %1481 = vst.msk [vmem:[%s291 + $0x34] sm:$0xf] %vm1467, %v1416
      %1482 = vst.msk [vmem:[%s291 + $0x38] sm:$0xf] %vm1467, %v1417
      %1483 = vst.msk [vmem:[%s291 + $0x3c] sm:$0xf] %vm1467, %v1418
      %1484 = vst.msk [vmem:[%s291 + $0x40] sm:$0xf] %vm1467, %v1419
      %1485 = vst.msk [vmem:[%s291 + $0x44] sm:$0xf] %vm1467, %v1420
      %1486 = vst.msk [vmem:[%s291 + $0x48] sm:$0xf] %vm1467, %v1421
      %1487 = vst.msk [vmem:[%s291 + $0x4c] sm:$0xf] %vm1467, %v1422
      %1488 = vst.msk [vmem:[%s291 + $0x50] sm:$0xf] %vm1467, %v1423
      %1489 = vst.msk [vmem:[%s291 + $0x54] sm:$0xf] %vm1467, %v1424
      %1490 = vst.msk [vmem:[%s291 + $0x58] sm:$0xf] %vm1467, %v1425
      %1491 = vst.msk [vmem:[%s291 + $0x5c] sm:$0xf] %vm1467, %v1426
      %1492 = vst.msk [vmem:[%s291 + $0x60] sm:$0xf] %vm1467, %v1427
      %1493 = vst.msk [vmem:[%s291 + $0x64] sm:$0xf] %vm1467, %v1428
      %1494 = vst.msk [vmem:[%s291 + $0x68] sm:$0xf] %vm1467, %v1429
      %1495 = vst.msk [vmem:[%s291 + $0x6c] sm:$0xf] %vm1467, %v1430
      %1496 = vst.msk [vmem:[%s291 + $0x70] sm:$0xf] %vm1467, %v1431
      %1497 = vst.msk [vmem:[%s291 + $0x74] sm:$0xf] %vm1467, %v1432
      %1498 = vst.msk [vmem:[%s291 + $0x78] sm:$0xf] %vm1467, %v1433
      %1499 = vst.msk [vmem:[%s291 + $0x7c] sm:$0xf] %vm1467, %v1434
      %p1500 = scmp.lt.s32.totalorder %s17, 1
      %s1501 = scalar_select %p1500, %s17, 1
      %s1502 = smul.addr %s1501, 32
      %s1503 = smul.addr %s1502, 4
      %s1504 = scalar_lea.vmem %s6, %s1503
      // Predicated region
      $region45: #{self_attention_forward.20} parent=43 // pred_check
        %p1505 = pneg %p176
      $region46: #{self_attention_forward.20} parent=43 // pred_check_branch
        %1507 = sbr.rel (%p1505) target = $region48
      $region47: #{self_attention_forward.20} parent=43 // pred_region
        _
      $region48: #{self_attention_forward.20} parent=43 // pred_fallthru
        _
    $region44: #{self_attention_forward.20} parent=5 // pred_fallthru
      _
    %p1508 = scmp.le.s32.totalorder 2, %s12
    // Predicated region
    $region49: #{self_attention_forward.20} parent=5 // pred_check
      %p1509 = pneg %p1508
    $region50: #{self_attention_forward.20} parent=5 // pred_check_branch
      %1511 = sbr.rel (%p1509) target = $region52
    $region51: #{self_attention_forward.20} parent=5 // pred_region
      %s1512 = ssub.s32 %s12, 2
      // Predicated region
      $region53: #{self_attention_forward.20} parent=51 // pred_check
        %p1513 = pneg %p182
      $region54: #{self_attention_forward.20} parent=51 // pred_check_branch
        %1515 = sbr.rel (%p1513) target = $region56
      $region55: #{self_attention_forward.20} parent=51 // pred_region
        %p1516 = scmp.lt.s32.totalorder %s18, 1
        %s1517 = scalar_select %p1516, %s18, 1
        %s1518 = smul.addr %s1517, 32
        %s1519 = smul.addr %s1518, 4
        %s1520 = scalar_lea.vmem %s6, %s1519
      $region56: #{self_attention_forward.20} parent=51 // pred_fallthru
        _
    $region52: #{self_attention_forward.20} parent=5 // pred_fallthru
      _
  $region6: #{self_attention_forward.20} parent=0 // loop_footer
    %s16 = sadd.s32 1, %s12
  $region7: #{self_attention_forward.20} parent=0 // loop_footer_branch
    %11 = sbr.rel target = $region3
  $region8: #{self_attention_forward.20} parent=0 // loop_exit
    _

// kernel: self_attention_forward.12
$region0: #{self_attention_forward.12}
  #allocation0 [shape = 'u32[]', space=smem, size = 0x4, offset = 0x4, fixed_abs, tag = 'smem constant byte address 0x4 - core index']
  #allocation1 [shape = 'u32[144,128]{1,0:T(1,128)}', space=vmem, size = 0x12000, scoped, tag = 'internal scratch']
  %s0 = inlined_call_operand.vmem [shape: bf16[2,288,48], index: 0, kind: input, shape index: {}]
  %s1 = inlined_call_operand.vmem [shape: bf16[3,48,16], index: 1, kind: input, shape index: {}]
  %s2 = inlined_call_operand.vmem [shape: bf16[16,16], index: 2, kind: input, shape index: {}]
  %s3 = inlined_call_operand.vmem [shape: bf16[2,256,16], index: 3, kind: output, shape index: {}]
  %s4 = sld [smem:[#allocation0]]
  $region45: #{self_attention_forward.12} parent=0
    _
  %s6 = ssub.s32 1, %s4
  %s7 = scalar_select 0, %s6, %s4
  loop: start=0, step=1, limit=4
  $region2: #{self_attention_forward.12} parent=0 // loop_pre_header
    _
  $region3: #{self_attention_forward.12} parent=0 // loop_header
    %s9 = sphi 0, %s13
    %p10 = scmp.ge.s32.totalorder %s9, 4
    %s19 = sphi 0, %s21
    %s22 = sphi 0, %s19
    %s23 = sphi 0, %s22
    %s39 = sphi 0, %s23
    %s43 = sphi 0, %s43
    %s45 = sphi 0, %s43
    %s46 = sphi 0, %s45
    %s60 = sphi 0, %s46
    %s64 = sphi 0, %s64
    %s66 = sphi 0, %s64
    %s67 = sphi 0, %s66
    %s81 = sphi 0, %s67
    %s87 = sphi 0, %s89
    %s90 = sphi 0, %s87
    %s91 = sphi 0, %s90
    %s107 = sphi 0, %s91
  $region4: #{self_attention_forward.12} parent=0 // loop_header_branch
    %12 = sbr.rel (%p10) target = $region8
  $region5: #{self_attention_forward.12} parent=0 // loop_body
    %s14 = ssub.s32 %s9, 1
    %s15 = ssub.s32 %s9, 2
    %s16 = sadd.s32 %s9, 1
    %s17 = ssub.s32 %s9, %s16
    %p18 = scmp.eq.s32.totalorder %s17, 0
    %s20 = sadd.s32 %s19, 1
    %s21 = scalar_select %p18, %s19, %s20
    %p24 = pneg %p18
    %p25 = scmp.eq.s32.totalorder %s9, 1
    %p26 = por %p24, %p25
    %p27 = scmp.ne.s32.totalorder %s19, %s22
    %p28 = scmp.eq.s32.totalorder %s9, 0
    %p29 = por %p27, %p28
    %p30 = scmp.ne.s32.totalorder %s19, %s22
    %p31 = scmp.eq.s32.totalorder %s14, 1
    %p32 = por %p30, %p31
    %p33 = scmp.ne.s32.totalorder %s22, %s23
    %p34 = scmp.eq.s32.totalorder %s14, 0
    %p35 = por %p33, %p34
    %p36 = scmp.ne.s32.totalorder %s22, %s23
    %p37 = scmp.eq.s32.totalorder %s15, 1
    %p38 = por %p36, %p37
    %p40 = scmp.ne.s32.totalorder %s23, %s39
    %p41 = scmp.eq.s32.totalorder %s15, 0
    %p42 = por %p40, %p41
    %s44 = sadd.s32 %s43, 1
    %p47 = scmp.eq.s32.totalorder %s9, 1
    %p48 = scmp.ne.s32.totalorder %s43, %s45
    %p49 = scmp.eq.s32.totalorder %s9, 0
    %p50 = por %p48, %p49
    %p51 = scmp.ne.s32.totalorder %s43, %s45
    %p52 = scmp.eq.s32.totalorder %s14, 1
    %p53 = por %p51, %p52
    %p54 = scmp.ne.s32.totalorder %s45, %s46
    %p55 = scmp.eq.s32.totalorder %s14, 0
    %p56 = por %p54, %p55
    %p57 = scmp.ne.s32.totalorder %s45, %s46
    %p58 = scmp.eq.s32.totalorder %s15, 1
    %p59 = por %p57, %p58
    %p61 = scmp.ne.s32.totalorder %s46, %s60
    %p62 = scmp.eq.s32.totalorder %s15, 0
    %p63 = por %p61, %p62
    %s65 = sadd.s32 %s64, 1
    %p68 = scmp.eq.s32.totalorder %s9, 1
    %p69 = scmp.ne.s32.totalorder %s64, %s66
    %p70 = scmp.eq.s32.totalorder %s9, 0
    %p71 = por %p69, %p70
    %p72 = scmp.ne.s32.totalorder %s64, %s66
    %p73 = scmp.eq.s32.totalorder %s14, 1
    %p74 = por %p72, %p73
    %p75 = scmp.ne.s32.totalorder %s66, %s67
    %p76 = scmp.eq.s32.totalorder %s14, 0
    %p77 = por %p75, %p76
    %p78 = scmp.ne.s32.totalorder %s66, %s67
    %p79 = scmp.eq.s32.totalorder %s15, 1
    %p80 = por %p78, %p79
    %p82 = scmp.ne.s32.totalorder %s67, %s81
    %p83 = scmp.eq.s32.totalorder %s15, 0
    %p84 = por %p82, %p83
    %s85 = ssub.s32 %s9, %s16
    %p86 = scmp.eq.s32.totalorder %s85, 0
    %s88 = sadd.s32 %s87, 1
    %s89 = scalar_select %p86, %s87, %s88
    %p92 = pneg %p86
    %p93 = scmp.eq.s32.totalorder %s9, 1
    %p94 = por %p92, %p93
    %p95 = scmp.ne.s32.totalorder %s87, %s90
    %p96 = scmp.eq.s32.totalorder %s9, 0
    %p97 = por %p95, %p96
    %p98 = scmp.ne.s32.totalorder %s87, %s90
    %p99 = scmp.eq.s32.totalorder %s14, 1
    %p100 = por %p98, %p99
    %p101 = scmp.ne.s32.totalorder %s90, %s91
    %p102 = scmp.eq.s32.totalorder %s14, 0
    %p103 = por %p101, %p102
    %p104 = scmp.ne.s32.totalorder %s90, %s91
    %p105 = scmp.eq.s32.totalorder %s15, 1
    %p106 = por %p104, %p105
    %p108 = scmp.ne.s32.totalorder %s91, %s107
    %p109 = scmp.eq.s32.totalorder %s15, 0
    %p110 = por %p108, %p109
    %p111 = scmp.le.s32.totalorder 1, %s9
    %p112 = scmp.lt.s32.totalorder %s9, 3
    %p113 = pnand %p111, %p112
    %p114 = pneg %p113
    // Predicated region
    $region9: #{self_attention_forward.12} parent=5 // pred_check
      _
    $region10: #{self_attention_forward.12} parent=5 // pred_check_branch
      %116 = sbr.rel (%p113) target = $region12
    $region11: #{self_attention_forward.12} parent=5 // pred_region
      %s117 = ssub.s32 %s9, 1
      // Predicated region
      $region13: #{self_attention_forward.12} parent=11 // pred_check
        %p118 = pneg %p56
      $region14: #{self_attention_forward.12} parent=11 // pred_check_branch
        %120 = sbr.rel (%p118) target = $region16
      $region15: #{self_attention_forward.12} parent=11 // pred_region
        _
      $region16: #{self_attention_forward.12} parent=11 // pred_fallthru
        _
      // Predicated region
      $region17: #{self_attention_forward.12} parent=11 // pred_check
        %p121 = pneg %p77
      $region18: #{self_attention_forward.12} parent=11 // pred_check_branch
        %123 = sbr.rel (%p121) target = $region20
      $region19: #{self_attention_forward.12} parent=11 // pred_region
        _
      $region20: #{self_attention_forward.12} parent=11 // pred_fallthru
        _
    $region12: #{self_attention_forward.12} parent=5 // pred_fallthru
      _
    %p124 = scmp.lt.s32.totalorder %s9, 2
    // Predicated region
    $region21: #{self_attention_forward.12} parent=5 // pred_check
      %p125 = pneg %p124
    $region22: #{self_attention_forward.12} parent=5 // pred_check_branch
      %127 = sbr.rel (%p125) target = $region24
    $region23: #{self_attention_forward.12} parent=5 // pred_region
      // Predicated region
      $region25: #{self_attention_forward.12} parent=23 // pred_check
        %p128 = pneg %p29
      $region26: #{self_attention_forward.12} parent=23 // pred_check_branch
        %130 = sbr.rel (%p128) target = $region28
      $region27: #{self_attention_forward.12} parent=23 // pred_region
        %p131 = scmp.lt.s32.totalorder %s9, 1
        %s132 = scalar_select %p131, %s9, 1
        %s133 = smul.addr %s132, 36
        %s134 = smul.addr %s133, 4
        %s135 = scalar_lea.vmem %s0, %s134
      $region28: #{self_attention_forward.12} parent=23 // pred_fallthru
        _
    $region24: #{self_attention_forward.12} parent=5 // pred_fallthru
      _
    %p136 = scmp.le.s32.totalorder 1, %s9
    %p137 = scmp.lt.s32.totalorder %s9, 3
    %p138 = pnand %p136, %p137
    %p139 = pneg %p138
    // Predicated region
    $region29: #{self_attention_forward.12} parent=5 // pred_check
      _
    $region30: #{self_attention_forward.12} parent=5 // pred_check_branch
      %141 = sbr.rel (%p138) target = $region32
    $region31: #{self_attention_forward.12} parent=5 // pred_region
      %s142 = ssub.s32 %s9, 1
      %p143 = scmp.lt.s32.totalorder %s14, 1
      %s144 = scalar_select %p143, %s14, 1
      %s145 = smul.addr %s144, 36
      %s146 = smul.addr %s145, 4
      %s147 = scalar_lea.vmem %s0, %s146
      %p148 = pneg %p35
      %p149 = pneg %p32
      %p150 = pneg %p56
      %p151 = pneg %p53
      %p152 = pneg %p77
      %p153 = pneg %p74
      %p154 = pneg %p103
      %p155 = pneg %p100
      %p156 = scmp.lt.s32.totalorder %s14, 1
      %s157 = scalar_select %p156, %s14, 1
      %s158 = smul.addr %s157, 32
      %s159 = smul.addr %s158, 4
      %s160 = scalar_lea.vmem %s3, %s159
      %p161 = scmp.lt.s32.totalorder %s14, 1
      %s162 = scalar_select %p161, %s14, 1
      %s163 = smul.addr %s162, 36
      %s164 = smul.addr %s163, 4
      %s165 = scalar_lea.vmem %s0, %s164
      %p166 = scmp.lt.s32.totalorder %s14, 1
      %s167 = scalar_select %p166, %s14, 1
      %s168 = smul.addr %s167, 32
      %s169 = smul.addr %s168, 4
      %s170 = scalar_lea.vmem %s3, %s169
      %v172 = vld [vmem:[%s165] sm:$0xf]
      %v173 = vld [vmem:[%s165 + $0x4] sm:$0xf]
      %v174 = vld [vmem:[%s165 + $0x8] sm:$0xf]
      %v175 = vld [vmem:[%s165 + $0xc] sm:$0xf]
      %v176 = vld [vmem:[%s165 + $0x10] sm:$0xf]
      %v177 = vld [vmem:[%s165 + $0x14] sm:$0xf]
      %v178 = vld [vmem:[%s165 + $0x18] sm:$0xf]
      %v179 = vld [vmem:[%s165 + $0x1c] sm:$0xf]
      %v180 = vld [vmem:[%s165 + $0x20] sm:$0xf]
      %v181 = vld [vmem:[%s165 + $0x24] sm:$0xf]
      %v182 = vld [vmem:[%s165 + $0x28] sm:$0xf]
      %v183 = vld [vmem:[%s165 + $0x2c] sm:$0xf]
      %v184 = vld [vmem:[%s165 + $0x30] sm:$0xf]
      %v185 = vld [vmem:[%s165 + $0x34] sm:$0xf]
      %v186 = vld [vmem:[%s165 + $0x38] sm:$0xf]
      %v187 = vld [vmem:[%s165 + $0x3c] sm:$0xf]
      %v188 = vld [vmem:[%s165 + $0x40] sm:$0xf]
      %v189 = vld [vmem:[%s165 + $0x44] sm:$0xf]
      %v190 = vld [vmem:[%s165 + $0x48] sm:$0xf]
      %v191 = vld [vmem:[%s165 + $0x4c] sm:$0xf]
      %v192 = vld [vmem:[%s165 + $0x50] sm:$0xf]
      %v193 = vld [vmem:[%s165 + $0x54] sm:$0xf]
      %v194 = vld [vmem:[%s165 + $0x58] sm:$0xf]
      %v195 = vld [vmem:[%s165 + $0x5c] sm:$0xf]
      %v196 = vld [vmem:[%s165 + $0x60] sm:$0xf]
      %v197 = vld [vmem:[%s165 + $0x64] sm:$0xf]
      %v198 = vld [vmem:[%s165 + $0x68] sm:$0xf]
      %v199 = vld [vmem:[%s165 + $0x6c] sm:$0xf]
      %v200 = vld [vmem:[%s165 + $0x70] sm:$0xf]
      %v201 = vld [vmem:[%s165 + $0x74] sm:$0xf]
      %v202 = vld [vmem:[%s165 + $0x78] sm:$0xf]
      %v203 = vld [vmem:[%s165 + $0x7c] sm:$0xf]
      %v204 = vld [vmem:[%s1] sm:$0xf]
      %v205 = vld [vmem:[%s1 + $0x4] sm:$0xf]
      %v206 = vld [vmem:[%s1 + $0x8] sm:$0xf]
      %v207 = vld [vmem:[%s1 + $0xc] sm:$0xf]
      %v208 = vld [vmem:[%s1 + $0x10] sm:$0xf]
      %v209 = vld [vmem:[%s1 + $0x14] sm:$0xf]
      %v210 = vld [vmem:[%s165 + $0x80] sm:$0xf]
      %v211 = vld [vmem:[%s165 + $0x84] sm:$0xf]
      %s212 = scalar_lea.vmem %s1, 24
      %v213 = vld [vmem:[%s212] sm:$0xf]
      %v214 = vld [vmem:[%s212 + $0x4] sm:$0xf]
      %v215 = vld [vmem:[%s212 + $0x8] sm:$0xf]
      %v216 = vld [vmem:[%s212 + $0xc] sm:$0xf]
      %v217 = vld [vmem:[%s212 + $0x10] sm:$0xf]
      %v218 = vld [vmem:[%s212 + $0x14] sm:$0xf]
      %v251 = vunpack.c.l.b16 %v174
      %v252 = vunpack.c.l.b16 %v175
      %v253 = vunpack.c.l.b16 %v176
      %v254 = vunpack.c.l.b16 %v177
      %v255 = vunpack.c.l.b16 %v178
      %v256 = vunpack.c.l.b16 %v179
      %v257 = vunpack.c.l.b16 %v180
      %v258 = vunpack.c.l.b16 %v181
      %v259 = vunpack.c.l.b16 %v182
      %v260 = vunpack.c.l.b16 %v183
      %v261 = vunpack.c.l.b16 %v184
      %v262 = vunpack.c.l.b16 %v185
      %v263 = vunpack.c.l.b16 %v186
      %v264 = vunpack.c.l.b16 %v187
      %v265 = vunpack.c.l.b16 %v188
      %v266 = vunpack.c.l.b16 %v189
      %v267 = vunpack.c.l.b16 %v190
      %v268 = vunpack.c.l.b16 %v191
      %v269 = vunpack.c.l.b16 %v192
      %v270 = vunpack.c.l.b16 %v193
      %v271 = vunpack.c.l.b16 %v194
      %v272 = vunpack.c.l.b16 %v195
      %v273 = vunpack.c.l.b16 %v196
      %v274 = vunpack.c.l.b16 %v197
      %v275 = vunpack.c.l.b16 %v198
      %v276 = vunpack.c.l.b16 %v199
      %v277 = vunpack.c.l.b16 %v200
      %v278 = vunpack.c.l.b16 %v201
      %v279 = vunpack.c.l.b16 %v202
      %v280 = vunpack.c.l.b16 %v203
      %v281 = vunpack.c.l.b16 %v210
      %v282 = vunpack.c.l.b16 %v211
      %v283 = vpack.c.b16 %v252, %v251
      %v284 = vpack.c.b16 %v254, %v253
      %v285 = vpack.c.b16 %v256, %v255
      %v286 = vpack.c.b16 %v258, %v257
      %v287 = vpack.c.b16 %v260, %v259
      %v288 = vpack.c.b16 %v262, %v261
      %v289 = vpack.c.b16 %v264, %v263
      %v290 = vpack.c.b16 %v266, %v265
      %v291 = vpack.c.b16 %v268, %v267
      %v292 = vpack.c.b16 %v270, %v269
      %v293 = vpack.c.b16 %v272, %v271
      %v294 = vpack.c.b16 %v274, %v273
      %v295 = vpack.c.b16 %v276, %v275
      %v296 = vpack.c.b16 %v278, %v277
      %v297 = vpack.c.b16 %v280, %v279
      %v298 = vpack.c.b16 %v282, %v281
      %v305 = vunpack.c.l.b16 %v213
      %v306 = vunpack.c.l.b16 %v214
      %v307 = vunpack.c.l.b16 %v215
      %v308 = vunpack.c.l.b16 %v216
      %v309 = vunpack.c.l.b16 %v217
      %v310 = vunpack.c.l.b16 %v218
      %v311 = vpack.c.b16 %v306, %v305
      %v312 = vpack.c.b16 %v308, %v307
      %v313 = vpack.c.b16 %v310, %v309
      %vm317 = vcmask 392192
      %v319 = vsel %vm317, %v283, 0
      %v322 = vsel %vm317, %v284, 0
      %v325 = vsel %vm317, %v285, 0
      %v328 = vsel %vm317, %v286, 0
      %v331 = vsel %vm317, %v287, 0
      %v334 = vsel %vm317, %v288, 0
      %v337 = vsel %vm317, %v289, 0
      %v340 = vsel %vm317, %v290, 0
      %v343 = vsel %vm317, %v291, 0
      %v346 = vsel %vm317, %v292, 0
      %v349 = vsel %vm317, %v293, 0
      %v352 = vsel %vm317, %v294, 0
      %v355 = vsel %vm317, %v295, 0
      %v358 = vsel %vm317, %v296, 0
      %v361 = vsel %vm317, %v297, 0
      %v364 = vsel %vm317, %v298, 0
      %366 = vmatprep.subr.bf16.mxu0 0
      %367 = vmatpush1.bf16.msra.mxu0 %v311
      %368 = vmatprep.subr.bf16.mxu0 0
      %369 = vmatpush1.bf16.msra.mxu0 %v312
      %370 = vmatprep.subr.bf16.mxu0 0
      %371 = vmatpush1.bf16.msra.mxu0 %v313
      %372 = vmatprep.subr.bf16.mxu0 0
      %373 = vmatpush1.bf16.msra.mxu0 0
      %374 = vmatprep.subr.bf16.mxu0 0
      %375 = vmatpush1.bf16.msra.mxu0 0
      %376 = vmatprep.subr.bf16.mxu0 0
      %377 = vmatpush1.bf16.msra.mxu0 0
      %378 = vmatprep.subr.bf16.mxu0 0
      %379 = vmatpush1.bf16.msra.mxu0 0
      %380 = vmatprep.subr.bf16.mxu0 0
      %381 = vmatpush1.bf16.msra.mxu0 0
      %382 = vmatprep.subr.bf16.mxu0 0
      %383 = vmatpush1.bf16.msra.mxu0 0
      %384 = vmatprep.subr.bf16.mxu0 0
      %385 = vmatpush1.bf16.msra.mxu0 0
      %386 = vmatprep.subr.bf16.mxu0 0
      %387 = vmatpush1.bf16.msra.mxu0 0
      %388 = vmatprep.subr.bf16.mxu0 0
      %389 = vmatpush1.bf16.msra.mxu0 0
      %390 = vmatprep.subr.bf16.mxu0 0
      %391 = vmatpush1.bf16.msra.mxu0 0
      %392 = vmatprep.subr.bf16.mxu0 0
      %393 = vmatpush1.bf16.msra.mxu0 0
      %394 = vmatprep.subr.bf16.mxu0 0
      %395 = vmatpush1.bf16.msra.mxu0 0
      %396 = vmatprep.subr.bf16.mxu0 0
      %397 = vmatpush1.bf16.msra.mxu0 0
      %398 = vmatprep.mubr.bf16.mxu0 0
      %399 = vmatmul.mubr.bf16.gmra.mrb[0].mxu0 %v319
      %v400 = vpop.f32.mrb[0].mxu0
      %v401 = vadd.f32 0.0, %v400
      %v402 = vpop.f32.mrb[0].mxu0
      %v403 = vpop.f32.mrb[0].mxu0
      %v404 = vadd.f32 0.0, %v403
      %v405 = vpop.f32.mrb[0].mxu0
      %406 = vmatprep.mubr.bf16.mxu0 0
      %407 = vmatmul.mubr.bf16.gmra.mrb[0].mxu0 %v322
      %v408 = vpop.f32.mrb[0].mxu0
      %v409 = vadd.f32 0.0, %v408
      %v410 = vpop.f32.mrb[0].mxu0
      %v411 = vpop.f32.mrb[0].mxu0
      %v412 = vadd.f32 0.0, %v411
      %v413 = vpop.f32.mrb[0].mxu0
      %414 = vmatprep.mubr.bf16.mxu0 0
      %415 = vmatmul.mubr.bf16.gmra.mrb[0].mxu0 %v325
      %v416 = vpop.f32.mrb[0].mxu0
      %v417 = vadd.f32 0.0, %v416
      %v418 = vpop.f32.mrb[0].mxu0
      %v419 = vpop.f32.mrb[0].mxu0
      %v420 = vadd.f32 0.0, %v419
      %v421 = vpop.f32.mrb[0].mxu0
      %422 = vmatprep.mubr.bf16.mxu0 0
      %423 = vmatmul.mubr.bf16.gmra.mrb[0].mxu0 %v328
      %v424 = vpop.f32.mrb[0].mxu0
      %v425 = vadd.f32 0.0, %v424
      %v426 = vpop.f32.mrb[0].mxu0
      %v427 = vpop.f32.mrb[0].mxu0
      %v428 = vadd.f32 0.0, %v427
      %v429 = vpop.f32.mrb[0].mxu0
      %430 = vmatprep.mubr.bf16.mxu0 0
      %431 = vmatmul.mubr.bf16.gmra.mrb[0].mxu0 %v331
      %v432 = vpop.f32.mrb[0].mxu0
      %v433 = vadd.f32 0.0, %v432
      %v434 = vpop.f32.mrb[0].mxu0
      %v435 = vpop.f32.mrb[0].mxu0
      %v436 = vadd.f32 0.0, %v435
      %v437 = vpop.f32.mrb[0].mxu0
      %438 = vmatprep.mubr.bf16.mxu0 0
      %439 = vmatmul.mubr.bf16.gmra.mrb[0].mxu0 %v334
      %v440 = vpop.f32.mrb[0].mxu0
      %v441 = vadd.f32 0.0, %v440
      %v442 = vpop.f32.mrb[0].mxu0
      %v443 = vpop.f32.mrb[0].mxu0
      %v444 = vadd.f32 0.0, %v443
      %v445 = vpop.f32.mrb[0].mxu0
      %446 = vmatprep.mubr.bf16.mxu0 0
      %447 = vmatmul.mubr.bf16.gmra.mrb[0].mxu0 %v337
      %v448 = vpop.f32.mrb[0].mxu0
      %v449 = vadd.f32 0.0, %v448
      %v450 = vpop.f32.mrb[0].mxu0
      %v451 = vpop.f32.mrb[0].mxu0
      %v452 = vadd.f32 0.0, %v451
      %v453 = vpop.f32.mrb[0].mxu0
      %454 = vmatprep.mubr.bf16.mxu0 0
      %455 = vmatmul.mubr.bf16.gmra.mrb[0].mxu0 %v340
      %v456 = vpop.f32.mrb[0].mxu0
      %v457 = vadd.f32 0.0, %v456
      %v458 = vpop.f32.mrb[0].mxu0
      %v459 = vpop.f32.mrb[0].mxu0
      %v460 = vadd.f32 0.0, %v459
      %v461 = vpop.f32.mrb[0].mxu0
      %462 = vmatprep.mubr.bf16.mxu0 0
      %463 = vmatmul.mubr.bf16.gmra.mrb[0].mxu0 %v343
      %v464 = vpop.f32.mrb[0].mxu0
      %v465 = vadd.f32 0.0, %v464
      %v466 = vpop.f32.mrb[0].mxu0
      %v467 = vpop.f32.mrb[0].mxu0
      %v468 = vadd.f32 0.0, %v467
      %v469 = vpop.f32.mrb[0].mxu0
      %470 = vmatprep.mubr.bf16.mxu0 0
      %471 = vmatmul.mubr.bf16.gmra.mrb[0].mxu0 %v346
      %v472 = vpop.f32.mrb[0].mxu0
      %v473 = vadd.f32 0.0, %v472
      %v474 = vpop.f32.mrb[0].mxu0
      %v475 = vpop.f32.mrb[0].mxu0
      %v476 = vadd.f32 0.0, %v475
      %v477 = vpop.f32.mrb[0].mxu0
      %478 = vmatprep.mubr.bf16.mxu0 0
      %479 = vmatmul.mubr.bf16.gmra.mrb[0].mxu0 %v349
      %v480 = vpop.f32.mrb[0].mxu0
      %v481 = vadd.f32 0.0, %v480
      %v482 = vpop.f32.mrb[0].mxu0
      %v483 = vpop.f32.mrb[0].mxu0
      %v484 = vadd.f32 0.0, %v483
      %v485 = vpop.f32.mrb[0].mxu0
      %486 = vmatprep.mubr.bf16.mxu0 0
      %487 = vmatmul.mubr.bf16.gmra.mrb[0].mxu0 %v352
      %v488 = vpop.f32.mrb[0].mxu0
      %v489 = vadd.f32 0.0, %v488
      %v490 = vpop.f32.mrb[0].mxu0
      %v491 = vpop.f32.mrb[0].mxu0
      %v492 = vadd.f32 0.0, %v491
      %v493 = vpop.f32.mrb[0].mxu0
      %494 = vmatprep.mubr.bf16.mxu0 0
      %495 = vmatmul.mubr.bf16.gmra.mrb[0].mxu0 %v355
      %v496 = vpop.f32.mrb[0].mxu0
      %v497 = vadd.f32 0.0, %v496
      %v498 = vpop.f32.mrb[0].mxu0
      %v499 = vpop.f32.mrb[0].mxu0
      %v500 = vadd.f32 0.0, %v499
      %v501 = vpop.f32.mrb[0].mxu0
      %502 = vmatprep.mubr.bf16.mxu0 0
      %503 = vmatmul.mubr.bf16.gmra.mrb[0].mxu0 %v358
      %v504 = vpop.f32.mrb[0].mxu0
      %v505 = vadd.f32 0.0, %v504
      %v506 = vpop.f32.mrb[0].mxu0
      %v507 = vpop.f32.mrb[0].mxu0
      %v508 = vadd.f32 0.0, %v507
      %v509 = vpop.f32.mrb[0].mxu0
      %510 = vmatprep.mubr.bf16.mxu0 0
      %511 = vmatmul.mubr.bf16.gmra.mrb[0].mxu0 %v361
      %v512 = vpop.f32.mrb[0].mxu0
      %v513 = vadd.f32 0.0, %v512
      %v514 = vpop.f32.mrb[0].mxu0
      %v515 = vpop.f32.mrb[0].mxu0
      %v516 = vadd.f32 0.0, %v515
      %v517 = vpop.f32.mrb[0].mxu0
      %518 = vmatprep.mubr.bf16.mxu0 0
      %519 = vmatmul.mubr.bf16.gmra.mrb[0].mxu0 %v364
      %v520 = vpop.f32.mrb[0].mxu0
      %v521 = vadd.f32 0.0, %v520
      %v522 = vpop.f32.mrb[0].mxu0
      %v523 = vpop.f32.mrb[0].mxu0
      %v524 = vadd.f32 0.0, %v523
      %v525 = vpop.f32.mrb[0].mxu0
      %526 = vdwg.mxu0
      %v529 = vunpack.c.l.b16 %v172
      %v530 = vunpack.c.l.b16 %v173
      %v531 = vpack.c.b16 %v530, %v529
      %v538 = vunpack.c.l.b16 %v204
      %v539 = vunpack.c.l.b16 %v205
      %v540 = vunpack.c.l.b16 %v206
      %v541 = vunpack.c.l.b16 %v207
      %v542 = vunpack.c.l.b16 %v208
      %v543 = vunpack.c.l.b16 %v209
      %v544 = vpack.c.b16 %v539, %v538
      %v545 = vpack.c.b16 %v541, %v540
      %v546 = vpack.c.b16 %v543, %v542
      %v551 = vsel %vm317, %v531, 0
      %553 = vmatprep.subr.bf16.mxu0 0
      %554 = vmatpush1.bf16.msra.mxu0 %v544
      %555 = vmatprep.subr.bf16.mxu0 0
      %556 = vmatpush1.bf16.msra.mxu0 %v545
      %557 = vmatprep.subr.bf16.mxu0 0
      %558 = vmatpush1.bf16.msra.mxu0 %v546
      %559 = vmatprep.subr.bf16.mxu0 0
      %560 = vmatpush1.bf16.msra.mxu0 0
      %561 = vmatprep.subr.bf16.mxu0 0
      %562 = vmatpush1.bf16.msra.mxu0 0
      %563 = vmatprep.subr.bf16.mxu0 0
      %564 = vmatpush1.bf16.msra.mxu0 0
      %565 = vmatprep.subr.bf16.mxu0 0
      %566 = vmatpush1.bf16.msra.mxu0 0
      %567 = vmatprep.subr.bf16.mxu0 0
      %568 = vmatpush1.bf16.msra.mxu0 0
      %569 = vmatprep.subr.bf16.mxu0 0
      %570 = vmatpush1.bf16.msra.mxu0 0
      %571 = vmatprep.subr.bf16.mxu0 0
      %572 = vmatpush1.bf16.msra.mxu0 0
      %573 = vmatprep.subr.bf16.mxu0 0
      %574 = vmatpush1.bf16.msra.mxu0 0
      %575 = vmatprep.subr.bf16.mxu0 0
      %576 = vmatpush1.bf16.msra.mxu0 0
      %577 = vmatprep.subr.bf16.mxu0 0
      %578 = vmatpush1.bf16.msra.mxu0 0
      %579 = vmatprep.subr.bf16.mxu0 0
      %580 = vmatpush1.bf16.msra.mxu0 0
      %581 = vmatprep.subr.bf16.mxu0 0
      %582 = vmatpush1.bf16.msra.mxu0 0
      %583 = vmatprep.subr.bf16.mxu0 0
      %584 = vmatpush1.bf16.msra.mxu0 0
      %585 = vmatprep.mubr.bf16.mxu0 0
      %586 = vmatmul.mubr.bf16.gmra.mrb[0].mxu0 %v551
      %v587 = vpop.f32.mrb[0].mxu0
      %v588 = vadd.f32 %v401, %v587
      %v589 = vpop.f32.mrb[0].mxu0
      %v590 = vpop.f32.mrb[0].mxu0
      %v591 = vadd.f32 %v404, %v590
      %v592 = vpop.f32.mrb[0].mxu0
      %593 = vmatprep.mubr.bf16.mxu0 0
      %594 = vmatmul.mubr.bf16.gmra.mrb[0].mxu0 %v319
      %v595 = vpop.f32.mrb[0].mxu0
      %v596 = vadd.f32 %v409, %v595
      %v597 = vpop.f32.mrb[0].mxu0
      %v598 = vpop.f32.mrb[0].mxu0
      %v599 = vadd.f32 %v412, %v598
      %v600 = vpop.f32.mrb[0].mxu0
      %601 = vmatprep.mubr.bf16.mxu0 0
      %602 = vmatmul.mubr.bf16.gmra.mrb[0].mxu0 %v322
      %v603 = vpop.f32.mrb[0].mxu0
      %v604 = vadd.f32 %v417, %v603
      %v605 = vpop.f32.mrb[0].mxu0
      %v606 = vpop.f32.mrb[0].mxu0
      %v607 = vadd.f32 %v420, %v606
      %v608 = vpop.f32.mrb[0].mxu0
      %609 = vmatprep.mubr.bf16.mxu0 0
      %610 = vmatmul.mubr.bf16.gmra.mrb[0].mxu0 %v325
      %v611 = vpop.f32.mrb[0].mxu0
      %v612 = vadd.f32 %v425, %v611
      %v613 = vpop.f32.mrb[0].mxu0
      %v614 = vpop.f32.mrb[0].mxu0
      %v615 = vadd.f32 %v428, %v614
      %v616 = vpop.f32.mrb[0].mxu0
      %617 = vmatprep.mubr.bf16.mxu0 0
      %618 = vmatmul.mubr.bf16.gmra.mrb[0].mxu0 %v328
      %v619 = vpop.f32.mrb[0].mxu0
      %v620 = vadd.f32 %v433, %v619
      %v621 = vpop.f32.mrb[0].mxu0
      %v622 = vpop.f32.mrb[0].mxu0
      %v623 = vadd.f32 %v436, %v622
      %v624 = vpop.f32.mrb[0].mxu0
      %625 = vmatprep.mubr.bf16.mxu0 0
      %626 = vmatmul.mubr.bf16.gmra.mrb[0].mxu0 %v331
      %v627 = vpop.f32.mrb[0].mxu0
      %v628 = vadd.f32 %v441, %v627
      %v629 = vpop.f32.mrb[0].mxu0
      %v630 = vpop.f32.mrb[0].mxu0
      %v631 = vadd.f32 %v444, %v630
      %v632 = vpop.f32.mrb[0].mxu0
      %633 = vmatprep.mubr.bf16.mxu0 0
      %634 = vmatmul.mubr.bf16.gmra.mrb[0].mxu0 %v334
      %v635 = vpop.f32.mrb[0].mxu0
      %v636 = vadd.f32 %v449, %v635
      %v637 = vpop.f32.mrb[0].mxu0
      %v638 = vpop.f32.mrb[0].mxu0
      %v639 = vadd.f32 %v452, %v638
      %v640 = vpop.f32.mrb[0].mxu0
      %641 = vmatprep.mubr.bf16.mxu0 0
      %642 = vmatmul.mubr.bf16.gmra.mrb[0].mxu0 %v337
      %v643 = vpop.f32.mrb[0].mxu0
      %v644 = vadd.f32 %v457, %v643
      %v645 = vpop.f32.mrb[0].mxu0
      %v646 = vpop.f32.mrb[0].mxu0
      %v647 = vadd.f32 %v460, %v646
      %v648 = vpop.f32.mrb[0].mxu0
      %649 = vmatprep.mubr.bf16.mxu0 0
      %650 = vmatmul.mubr.bf16.gmra.mrb[0].mxu0 %v340
      %v651 = vpop.f32.mrb[0].mxu0
      %v652 = vadd.f32 %v465, %v651
      %v653 = vpop.f32.mrb[0].mxu0
      %v654 = vpop.f32.mrb[0].mxu0
      %v655 = vadd.f32 %v468, %v654
      %v656 = vpop.f32.mrb[0].mxu0
      %657 = vmatprep.mubr.bf16.mxu0 0
      %658 = vmatmul.mubr.bf16.gmra.mrb[0].mxu0 %v343
      %v659 = vpop.f32.mrb[0].mxu0
      %v660 = vadd.f32 %v473, %v659
      %v661 = vpop.f32.mrb[0].mxu0
      %v662 = vpop.f32.mrb[0].mxu0
      %v663 = vadd.f32 %v476, %v662
      %v664 = vpop.f32.mrb[0].mxu0
      %665 = vmatprep.mubr.bf16.mxu0 0
      %666 = vmatmul.mubr.bf16.gmra.mrb[0].mxu0 %v346
      %v667 = vpop.f32.mrb[0].mxu0
      %v668 = vadd.f32 %v481, %v667
      %v669 = vpop.f32.mrb[0].mxu0
      %v670 = vpop.f32.mrb[0].mxu0
      %v671 = vadd.f32 %v484, %v670
      %v672 = vpop.f32.mrb[0].mxu0
      %673 = vmatprep.mubr.bf16.mxu0 0
      %674 = vmatmul.mubr.bf16.gmra.mrb[0].mxu0 %v349
      %v675 = vpop.f32.mrb[0].mxu0
      %v676 = vadd.f32 %v489, %v675
      %v677 = vpop.f32.mrb[0].mxu0
      %v678 = vpop.f32.mrb[0].mxu0
      %v679 = vadd.f32 %v492, %v678
      %v680 = vpop.f32.mrb[0].mxu0
      %681 = vmatprep.mubr.bf16.mxu0 0
      %682 = vmatmul.mubr.bf16.gmra.mrb[0].mxu0 %v352
      %v683 = vpop.f32.mrb[0].mxu0
      %v684 = vadd.f32 %v497, %v683
      %v685 = vpop.f32.mrb[0].mxu0
      %v686 = vpop.f32.mrb[0].mxu0
      %v687 = vadd.f32 %v500, %v686
      %v688 = vpop.f32.mrb[0].mxu0
      %689 = vmatprep.mubr.bf16.mxu0 0
      %690 = vmatmul.mubr.bf16.gmra.mrb[0].mxu0 %v355
      %v691 = vpop.f32.mrb[0].mxu0
      %v692 = vadd.f32 %v505, %v691
      %v693 = vpop.f32.mrb[0].mxu0
      %v694 = vpop.f32.mrb[0].mxu0
      %v695 = vadd.f32 %v508, %v694
      %v696 = vpop.f32.mrb[0].mxu0
      %697 = vmatprep.mubr.bf16.mxu0 0
      %698 = vmatmul.mubr.bf16.gmra.mrb[0].mxu0 %v358
      %v699 = vpop.f32.mrb[0].mxu0
      %v700 = vadd.f32 %v513, %v699
      %v701 = vpop.f32.mrb[0].mxu0
      %v702 = vpop.f32.mrb[0].mxu0
      %v703 = vadd.f32 %v516, %v702
      %v704 = vpop.f32.mrb[0].mxu0
      %705 = vmatprep.mubr.bf16.mxu0 0
      %706 = vmatmul.mubr.bf16.gmra.mrb[0].mxu0 %v361
      %v707 = vpop.f32.mrb[0].mxu0
      %v708 = vadd.f32 %v521, %v707
      %v709 = vpop.f32.mrb[0].mxu0
      %v710 = vpop.f32.mrb[0].mxu0
      %v711 = vadd.f32 %v524, %v710
      %v712 = vpop.f32.mrb[0].mxu0
      %713 = vdwg.mxu0
      %v714 = vld [vmem:[%s165 + $0x10] sm:$0xf]
      %v715 = vld [vmem:[%s165 + $0x14] sm:$0xf]
      %v716 = vld [vmem:[%s165 + $0x18] sm:$0xf]
      %v717 = vld [vmem:[%s165 + $0x1c] sm:$0xf]
      %v718 = vld [vmem:[%s165 + $0x20] sm:$0xf]
      %v719 = vld [vmem:[%s165 + $0x24] sm:$0xf]
      %v720 = vld [vmem:[%s165 + $0x28] sm:$0xf]
      %v721 = vld [vmem:[%s165 + $0x2c] sm:$0xf]
      %v722 = vld [vmem:[%s165 + $0x30] sm:$0xf]
      %v723 = vld [vmem:[%s165 + $0x34] sm:$0xf]
      %v724 = vld [vmem:[%s165 + $0x38] sm:$0xf]
      %v725 = vld [vmem:[%s165 + $0x3c] sm:$0xf]
      %v726 = vld [vmem:[%s165 + $0x40] sm:$0xf]
      %v727 = vld [vmem:[%s165 + $0x44] sm:$0xf]
      %v728 = vld [vmem:[%s165 + $0x48] sm:$0xf]
      %v729 = vld [vmem:[%s165 + $0x4c] sm:$0xf]
      %v730 = vld [vmem:[%s165 + $0x50] sm:$0xf]
      %v731 = vld [vmem:[%s165 + $0x54] sm:$0xf]
      %v732 = vld [vmem:[%s165 + $0x58] sm:$0xf]
      %v733 = vld [vmem:[%s165 + $0x5c] sm:$0xf]
      %v734 = vld [vmem:[%s165 + $0x60] sm:$0xf]
      %v735 = vld [vmem:[%s165 + $0x64] sm:$0xf]
      %v736 = vld [vmem:[%s165 + $0x68] sm:$0xf]
      %v737 = vld [vmem:[%s165 + $0x6c] sm:$0xf]
      %v738 = vld [vmem:[%s165 + $0x70] sm:$0xf]
      %v739 = vld [vmem:[%s165 + $0x74] sm:$0xf]
      %v740 = vld [vmem:[%s165 + $0x78] sm:$0xf]
      %v741 = vld [vmem:[%s165 + $0x7c] sm:$0xf]
      %v742 = vld [vmem:[%s165 + $0x80] sm:$0xf]
      %v743 = vld [vmem:[%s165 + $0x84] sm:$0xf]
      %v744 = vld [vmem:[%s165 + $0x88] sm:$0xf]
      %v745 = vld [vmem:[%s165 + $0x8c] sm:$0xf]
      %s746 = scalar_lea.vmem %s1, 48
      %v747 = vld [vmem:[%s746] sm:$0xf]
      %v748 = vld [vmem:[%s746 + $0x4] sm:$0xf]
      %v749 = vld [vmem:[%s746 + $0x8] sm:$0xf]
      %v750 = vld [vmem:[%s746 + $0xc] sm:$0xf]
      %v751 = vld [vmem:[%s746 + $0x10] sm:$0xf]
      %v752 = vld [vmem:[%s746 + $0x14] sm:$0xf]
      %v785 = vunpack.c.l.b16 %v714
      %v786 = vunpack.c.l.b16 %v715
      %v787 = vunpack.c.l.b16 %v716
      %v788 = vunpack.c.l.b16 %v717
      %v789 = vunpack.c.l.b16 %v718
      %v790 = vunpack.c.l.b16 %v719
      %v791 = vunpack.c.l.b16 %v720
      %v792 = vunpack.c.l.b16 %v721
      %v793 = vunpack.c.l.b16 %v722
      %v794 = vunpack.c.l.b16 %v723
      %v795 = vunpack.c.l.b16 %v724
      %v796 = vunpack.c.l.b16 %v725
      %v797 = vunpack.c.l.b16 %v726
      %v798 = vunpack.c.l.b16 %v727
      %v799 = vunpack.c.l.b16 %v728
      %v800 = vunpack.c.l.b16 %v729
      %v801 = vunpack.c.l.b16 %v730
      %v802 = vunpack.c.l.b16 %v731
      %v803 = vunpack.c.l.b16 %v732
      %v804 = vunpack.c.l.b16 %v733
      %v805 = vunpack.c.l.b16 %v734
      %v806 = vunpack.c.l.b16 %v735
      %v807 = vunpack.c.l.b16 %v736
      %v808 = vunpack.c.l.b16 %v737
      %v809 = vunpack.c.l.b16 %v738
      %v810 = vunpack.c.l.b16 %v739
      %v811 = vunpack.c.l.b16 %v740
      %v812 = vunpack.c.l.b16 %v741
      %v813 = vunpack.c.l.b16 %v742
      %v814 = vunpack.c.l.b16 %v743
      %v815 = vunpack.c.l.b16 %v744
      %v816 = vunpack.c.l.b16 %v745
      %v817 = vpack.c.b16 %v786, %v785
      %v818 = vpack.c.b16 %v788, %v787
      %v819 = vpack.c.b16 %v790, %v789
      %v820 = vpack.c.b16 %v792, %v791
      %v821 = vpack.c.b16 %v794, %v793
      %v822 = vpack.c.b16 %v796, %v795
      %v823 = vpack.c.b16 %v798, %v797
      %v824 = vpack.c.b16 %v800, %v799
      %v825 = vpack.c.b16 %v802, %v801
      %v826 = vpack.c.b16 %v804, %v803
      %v827 = vpack.c.b16 %v806, %v805
      %v828 = vpack.c.b16 %v808, %v807
      %v829 = vpack.c.b16 %v810, %v809
      %v830 = vpack.c.b16 %v812, %v811
      %v831 = vpack.c.b16 %v814, %v813
      %v832 = vpack.c.b16 %v816, %v815
      %v839 = vunpack.c.l.b16 %v747
      %v840 = vunpack.c.l.b16 %v748
      %v841 = vunpack.c.l.b16 %v749
      %v842 = vunpack.c.l.b16 %v750
      %v843 = vunpack.c.l.b16 %v751
      %v844 = vunpack.c.l.b16 %v752
      %v845 = vpack.c.b16 %v840, %v839
      %v846 = vpack.c.b16 %v842, %v841
      %v847 = vpack.c.b16 %v844, %v843
      %v852 = vsel %vm317, %v817, 0
      %v855 = vsel %vm317, %v818, 0
      %v858 = vsel %vm317, %v819, 0
      %v861 = vsel %vm317, %v820, 0
      %v864 = vsel %vm317, %v821, 0
      %v867 = vsel %vm317, %v822, 0
      %v870 = vsel %vm317, %v823, 0
      %v873 = vsel %vm317, %v824, 0
      %v876 = vsel %vm317, %v825, 0
      %v879 = vsel %vm317, %v826, 0
      %v882 = vsel %vm317, %v827, 0
      %v885 = vsel %vm317, %v828, 0
      %v888 = vsel %vm317, %v829, 0
      %v891 = vsel %vm317, %v830, 0
      %v894 = vsel %vm317, %v831, 0
      %v897 = vsel %vm317, %v832, 0
      %899 = vmatprep.subr.bf16.mxu0 0
      %900 = vmatpush1.bf16.msra.mxu0 %v845
      %901 = vmatprep.subr.bf16.mxu0 0
      %902 = vmatpush1.bf16.msra.mxu0 %v846
      %903 = vmatprep.subr.bf16.mxu0 0
      %904 = vmatpush1.bf16.msra.mxu0 %v847
      %905 = vmatprep.subr.bf16.mxu0 0
      %906 = vmatpush1.bf16.msra.mxu0 0
      %907 = vmatprep.subr.bf16.mxu0 0
      %908 = vmatpush1.bf16.msra.mxu0 0
      %909 = vmatprep.subr.bf16.mxu0 0
      %910 = vmatpush1.bf16.msra.mxu0 0
      %911 = vmatprep.subr.bf16.mxu0 0
      %912 = vmatpush1.bf16.msra.mxu0 0
      %913 = vmatprep.subr.bf16.mxu0 0
      %914 = vmatpush1.bf16.msra.mxu0 0
      %915 = vmatprep.subr.bf16.mxu0 0
      %916 = vmatpush1.bf16.msra.mxu0 0
      %917 = vmatprep.subr.bf16.mxu0 0
      %918 = vmatpush1.bf16.msra.mxu0 0
      %919 = vmatprep.subr.bf16.mxu0 0
      %920 = vmatpush1.bf16.msra.mxu0 0
      %921 = vmatprep.subr.bf16.mxu0 0
      %922 = vmatpush1.bf16.msra.mxu0 0
      %923 = vmatprep.subr.bf16.mxu0 0
      %924 = vmatpush1.bf16.msra.mxu0 0
      %925 = vmatprep.subr.bf16.mxu0 0
      %926 = vmatpush1.bf16.msra.mxu0 0
      %927 = vmatprep.subr.bf16.mxu0 0
      %928 = vmatpush1.bf16.msra.mxu0 0
      %929 = vmatprep.subr.bf16.mxu0 0
      %930 = vmatpush1.bf16.msra.mxu0 0
      %931 = vmatprep.mubr.bf16.mxu0 0
      %932 = vmatmul.mubr.bf16.gmra.mrb[0].mxu0 %v852
      %v933 = vpop.f32.mrb[0].mxu0
      %v934 = vadd.f32 0.0, %v933
      %v935 = vpop.f32.mrb[0].mxu0
      %v936 = vpop.f32.mrb[0].mxu0
      %v937 = vadd.f32 0.0, %v936
      %v938 = vpop.f32.mrb[0].mxu0
      %939 = vmatprep.mubr.bf16.mxu0 0
      %940 = vmatmul.mubr.bf16.gmra.mrb[0].mxu0 %v855
      %v941 = vpop.f32.mrb[0].mxu0
      %v942 = vadd.f32 0.0, %v941
      %v943 = vpop.f32.mrb[0].mxu0
      %v944 = vpop.f32.mrb[0].mxu0
      %v945 = vadd.f32 0.0, %v944
      %v946 = vpop.f32.mrb[0].mxu0
      %947 = vmatprep.mubr.bf16.mxu0 0
      %948 = vmatmul.mubr.bf16.gmra.mrb[0].mxu0 %v858
      %v949 = vpop.f32.mrb[0].mxu0
      %v950 = vadd.f32 0.0, %v949
      %v951 = vpop.f32.mrb[0].mxu0
      %v952 = vpop.f32.mrb[0].mxu0
      %v953 = vadd.f32 0.0, %v952
      %v954 = vpop.f32.mrb[0].mxu0
      %955 = vmatprep.mubr.bf16.mxu0 0
      %956 = vmatmul.mubr.bf16.gmra.mrb[0].mxu0 %v861
      %v957 = vpop.f32.mrb[0].mxu0
      %v958 = vadd.f32 0.0, %v957
      %v959 = vpop.f32.mrb[0].mxu0
      %v960 = vpop.f32.mrb[0].mxu0
      %v961 = vadd.f32 0.0, %v960
      %v962 = vpop.f32.mrb[0].mxu0
      %963 = vmatprep.mubr.bf16.mxu0 0
      %964 = vmatmul.mubr.bf16.gmra.mrb[0].mxu0 %v864
      %v965 = vpop.f32.mrb[0].mxu0
      %v966 = vadd.f32 0.0, %v965
      %v967 = vpop.f32.mrb[0].mxu0
      %v968 = vpop.f32.mrb[0].mxu0
      %v969 = vadd.f32 0.0, %v968
      %v970 = vpop.f32.mrb[0].mxu0
      %971 = vmatprep.mubr.bf16.mxu0 0
      %972 = vmatmul.mubr.bf16.gmra.mrb[0].mxu0 %v867
      %v973 = vpop.f32.mrb[0].mxu0
      %v974 = vadd.f32 0.0, %v973
      %v975 = vpop.f32.mrb[0].mxu0
      %v976 = vpop.f32.mrb[0].mxu0
      %v977 = vadd.f32 0.0, %v976
      %v978 = vpop.f32.mrb[0].mxu0
      %979 = vmatprep.mubr.bf16.mxu0 0
      %980 = vmatmul.mubr.bf16.gmra.mrb[0].mxu0 %v870
      %v981 = vpop.f32.mrb[0].mxu0
      %v982 = vadd.f32 0.0, %v981
      %v983 = vpop.f32.mrb[0].mxu0
      %v984 = vpop.f32.mrb[0].mxu0
      %v985 = vadd.f32 0.0, %v984
      %v986 = vpop.f32.mrb[0].mxu0
      %987 = vmatprep.mubr.bf16.mxu0 0
      %988 = vmatmul.mubr.bf16.gmra.mrb[0].mxu0 %v873
      %v989 = vpop.f32.mrb[0].mxu0
      %v990 = vadd.f32 0.0, %v989
      %v991 = vpop.f32.mrb[0].mxu0
      %v992 = vpop.f32.mrb[0].mxu0
      %v993 = vadd.f32 0.0, %v992
      %v994 = vpop.f32.mrb[0].mxu0
      %995 = vmatprep.mubr.bf16.mxu0 0
      %996 = vmatmul.mubr.bf16.gmra.mrb[0].mxu0 %v876
      %v997 = vpop.f32.mrb[0].mxu0
      %v998 = vadd.f32 0.0, %v997
      %v999 = vpop.f32.mrb[0].mxu0
      %v1000 = vpop.f32.mrb[0].mxu0
      %v1001 = vadd.f32 0.0, %v1000
      %v1002 = vpop.f32.mrb[0].mxu0
      %1003 = vmatprep.mubr.bf16.mxu0 0
      %1004 = vmatmul.mubr.bf16.gmra.mrb[0].mxu0 %v879
      %v1005 = vpop.f32.mrb[0].mxu0
      %v1006 = vadd.f32 0.0, %v1005
      %v1007 = vpop.f32.mrb[0].mxu0
      %v1008 = vpop.f32.mrb[0].mxu0
      %v1009 = vadd.f32 0.0, %v1008
      %v1010 = vpop.f32.mrb[0].mxu0
      %1011 = vmatprep.mubr.bf16.mxu0 0
      %1012 = vmatmul.mubr.bf16.gmra.mrb[0].mxu0 %v882
      %v1013 = vpop.f32.mrb[0].mxu0
      %v1014 = vadd.f32 0.0, %v1013
      %v1015 = vpop.f32.mrb[0].mxu0
      %v1016 = vpop.f32.mrb[0].mxu0
      %v1017 = vadd.f32 0.0, %v1016
      %v1018 = vpop.f32.mrb[0].mxu0
      %1019 = vmatprep.mubr.bf16.mxu0 0
      %1020 = vmatmul.mubr.bf16.gmra.mrb[0].mxu0 %v885
      %v1021 = vpop.f32.mrb[0].mxu0
      %v1022 = vadd.f32 0.0, %v1021
      %v1023 = vpop.f32.mrb[0].mxu0
      %v1024 = vpop.f32.mrb[0].mxu0
      %v1025 = vadd.f32 0.0, %v1024
      %v1026 = vpop.f32.mrb[0].mxu0
      %1027 = vmatprep.mubr.bf16.mxu0 0
      %1028 = vmatmul.mubr.bf16.gmra.mrb[0].mxu0 %v888
      %v1029 = vpop.f32.mrb[0].mxu0
      %v1030 = vadd.f32 0.0, %v1029
      %v1031 = vpop.f32.mrb[0].mxu0
      %v1032 = vpop.f32.mrb[0].mxu0
      %v1033 = vadd.f32 0.0, %v1032
      %v1034 = vpop.f32.mrb[0].mxu0
      %1035 = vmatprep.mubr.bf16.mxu0 0
      %1036 = vmatmul.mubr.bf16.gmra.mrb[0].mxu0 %v891
      %v1037 = vpop.f32.mrb[0].mxu0
      %v1038 = vadd.f32 0.0, %v1037
      %v1039 = vpop.f32.mrb[0].mxu0
      %v1040 = vpop.f32.mrb[0].mxu0
      %v1041 = vadd.f32 0.0, %v1040
      %v1042 = vpop.f32.mrb[0].mxu0
      %1043 = vmatprep.mubr.bf16.mxu0 0
      %1044 = vmatmul.mubr.bf16.gmra.mrb[0].mxu0 %v894
      %v1045 = vpop.f32.mrb[0].mxu0
      %v1046 = vadd.f32 0.0, %v1045
      %v1047 = vpop.f32.mrb[0].mxu0
      %v1048 = vpop.f32.mrb[0].mxu0
      %v1049 = vadd.f32 0.0, %v1048
      %v1050 = vpop.f32.mrb[0].mxu0
      %1051 = vmatprep.mubr.bf16.mxu0 0
      %1052 = vmatmul.mubr.bf16.gmra.mrb[0].mxu0 %v897
      %v1053 = vpop.f32.mrb[0].mxu0
      %v1054 = vadd.f32 0.0, %v1053
      %v1055 = vpop.f32.mrb[0].mxu0
      %v1056 = vpop.f32.mrb[0].mxu0
      %v1057 = vadd.f32 0.0, %v1056
      %v1058 = vpop.f32.mrb[0].mxu0
      %1059 = vdwg.mxu0
      %v1060 = vadd.f32 %v588, %v934
      %v1061 = vadd.f32 %v591, %v937
      %v1062 = vadd.f32 %v596, %v942
      %v1063 = vadd.f32 %v599, %v945
      %v1064 = vadd.f32 %v604, %v950
      %v1065 = vadd.f32 %v607, %v953
      %v1066 = vadd.f32 %v612, %v958
      %v1067 = vadd.f32 %v615, %v961
      %v1068 = vadd.f32 %v620, %v966
      %v1069 = vadd.f32 %v623, %v969
      %v1070 = vadd.f32 %v628, %v974
      %v1071 = vadd.f32 %v631, %v977
      %v1072 = vadd.f32 %v636, %v982
      %v1073 = vadd.f32 %v639, %v985
      %v1074 = vadd.f32 %v644, %v990
      %v1075 = vadd.f32 %v647, %v993
      %v1076 = vadd.f32 %v652, %v998
      %v1077 = vadd.f32 %v655, %v1001
      %v1078 = vadd.f32 %v660, %v1006
      %v1079 = vadd.f32 %v663, %v1009
      %v1080 = vadd.f32 %v668, %v1014
      %v1081 = vadd.f32 %v671, %v1017
      %v1082 = vadd.f32 %v676, %v1022
      %v1083 = vadd.f32 %v679, %v1025
      %v1084 = vadd.f32 %v684, %v1030
      %v1085 = vadd.f32 %v687, %v1033
      %v1086 = vadd.f32 %v692, %v1038
      %v1087 = vadd.f32 %v695, %v1041
      %v1088 = vadd.f32 %v700, %v1046
      %v1089 = vadd.f32 %v703, %v1049
      %v1090 = vadd.f32 %v708, %v1054
      %v1091 = vadd.f32 %v711, %v1057
      %v1092 = vmax.f32 %v1060, 0.0
      %v1093 = vmax.f32 %v1061, 0.0
      %v1094 = vmax.f32 %v1062, 0.0
      %v1095 = vmax.f32 %v1063, 0.0
      %v1096 = vmax.f32 %v1064, 0.0
      %v1097 = vmax.f32 %v1065, 0.0
      %v1098 = vmax.f32 %v1066, 0.0
      %v1099 = vmax.f32 %v1067, 0.0
      %v1100 = vmax.f32 %v1068, 0.0
      %v1101 = vmax.f32 %v1069, 0.0
      %v1102 = vmax.f32 %v1070, 0.0
      %v1103 = vmax.f32 %v1071, 0.0
      %v1104 = vmax.f32 %v1072, 0.0
      %v1105 = vmax.f32 %v1073, 0.0
      %v1106 = vmax.f32 %v1074, 0.0
      %v1107 = vmax.f32 %v1075, 0.0
      %v1108 = vmax.f32 %v1076, 0.0
      %v1109 = vmax.f32 %v1077, 0.0
      %v1110 = vmax.f32 %v1078, 0.0
      %v1111 = vmax.f32 %v1079, 0.0
      %v1112 = vmax.f32 %v1080, 0.0
      %v1113 = vmax.f32 %v1081, 0.0
      %v1114 = vmax.f32 %v1082, 0.0
      %v1115 = vmax.f32 %v1083, 0.0
      %v1116 = vmax.f32 %v1084, 0.0
      %v1117 = vmax.f32 %v1085, 0.0
      %v1118 = vmax.f32 %v1086, 0.0
      %v1119 = vmax.f32 %v1087, 0.0
      %v1120 = vmax.f32 %v1088, 0.0
      %v1121 = vmax.f32 %v1089, 0.0
      %v1122 = vmax.f32 %v1090, 0.0
      %v1123 = vmax.f32 %v1091, 0.0
      %v1124 = vpack.c.bf16 %v1093, %v1092
      %v1125 = vpack.c.bf16 %v1095, %v1094
      %v1126 = vpack.c.bf16 %v1097, %v1096
      %v1127 = vpack.c.bf16 %v1099, %v1098
      %v1128 = vpack.c.bf16 %v1101, %v1100
      %v1129 = vpack.c.bf16 %v1103, %v1102
      %v1130 = vpack.c.bf16 %v1105, %v1104
      %v1131 = vpack.c.bf16 %v1107, %v1106
      %v1132 = vpack.c.bf16 %v1109, %v1108
      %v1133 = vpack.c.bf16 %v1111, %v1110
      %v1134 = vpack.c.bf16 %v1113, %v1112
      %v1135 = vpack.c.bf16 %v1115, %v1114
      %v1136 = vpack.c.bf16 %v1117, %v1116
      %v1137 = vpack.c.bf16 %v1119, %v1118
      %v1138 = vpack.c.bf16 %v1121, %v1120
      %v1139 = vpack.c.bf16 %v1123, %v1122
      %v1140 = vld [vmem:[%s2] sm:$0xf]
      %v1141 = vld [vmem:[%s2 + $0x4] sm:$0xf]
      %v1144 = vunpack.c.l.b16 %v1140
      %v1145 = vunpack.c.l.b16 %v1141
      %v1146 = vpack.c.b16 %v1145, %v1144
      %vm1148 = vcmask 130048
      %v1150 = vsel %vm1148, %v1124, 0
      %v1153 = vsel %vm1148, %v1125, 0
      %v1156 = vsel %vm1148, %v1126, 0
      %v1159 = vsel %vm1148, %v1127, 0
      %v1162 = vsel %vm1148, %v1128, 0
      %v1165 = vsel %vm1148, %v1129, 0
      %v1168 = vsel %vm1148, %v1130, 0
      %v1171 = vsel %vm1148, %v1131, 0
      %v1174 = vsel %vm1148, %v1132, 0
      %v1177 = vsel %vm1148, %v1133, 0
      %v1180 = vsel %vm1148, %v1134, 0
      %v1183 = vsel %vm1148, %v1135, 0
      %v1186 = vsel %vm1148, %v1136, 0
      %v1189 = vsel %vm1148, %v1137, 0
      %v1192 = vsel %vm1148, %v1138, 0
      %v1195 = vsel %vm1148, %v1139, 0
      %1197 = vmatprep.subr.bf16.mxu0 0
      %1198 = vmatpush1.bf16.msra.mxu0 %v1146
      %1199 = vmatprep.subr.bf16.mxu0 0
      %1200 = vmatpush1.bf16.msra.mxu0 0
      %1201 = vmatprep.subr.bf16.mxu0 0
      %1202 = vmatpush1.bf16.msra.mxu0 0
      %1203 = vmatprep.subr.bf16.mxu0 0
      %1204 = vmatpush1.bf16.msra.mxu0 0
      %1205 = vmatprep.subr.bf16.mxu0 0
      %1206 = vmatpush1.bf16.msra.mxu0 0
      %1207 = vmatprep.subr.bf16.mxu0 0
      %1208 = vmatpush1.bf16.msra.mxu0 0
      %1209 = vmatprep.subr.bf16.mxu0 0
      %1210 = vmatpush1.bf16.msra.mxu0 0
      %1211 = vmatprep.subr.bf16.mxu0 0
      %1212 = vmatpush1.bf16.msra.mxu0 0
      %1213 = vmatprep.subr.bf16.mxu0 0
      %1214 = vmatpush1.bf16.msra.mxu0 0
      %1215 = vmatprep.subr.bf16.mxu0 0
      %1216 = vmatpush1.bf16.msra.mxu0 0
      %1217 = vmatprep.subr.bf16.mxu0 0
      %1218 = vmatpush1.bf16.msra.mxu0 0
      %1219 = vmatprep.subr.bf16.mxu0 0
      %1220 = vmatpush1.bf16.msra.mxu0 0
      %1221 = vmatprep.subr.bf16.mxu0 0
      %1222 = vmatpush1.bf16.msra.mxu0 0
      %1223 = vmatprep.subr.bf16.mxu0 0
      %1224 = vmatpush1.bf16.msra.mxu0 0
      %1225 = vmatprep.subr.bf16.mxu0 0
      %1226 = vmatpush1.bf16.msra.mxu0 0
      %1227 = vmatprep.subr.bf16.mxu0 0
      %1228 = vmatpush1.bf16.msra.mxu0 0
      %1229 = vmatprep.mubr.bf16.mxu0 0
      %1230 = vmatmul.mubr.bf16.gmra.mrb[0].mxu0 %v1150
      %v1231 = vpop.f32.mrb[0].mxu0
      %v1232 = vadd.f32 0.0, %v1231
      %v1233 = vpop.f32.mrb[0].mxu0
      %v1234 = vpop.f32.mrb[0].mxu0
      %v1235 = vadd.f32 0.0, %v1234
      %v1236 = vpop.f32.mrb[0].mxu0
      %1237 = vmatprep.mubr.bf16.mxu0 0
      %1238 = vmatmul.mubr.bf16.gmra.mrb[0].mxu0 %v1153
      %v1239 = vpop.f32.mrb[0].mxu0
      %v1240 = vadd.f32 0.0, %v1239
      %v1241 = vpop.f32.mrb[0].mxu0
      %v1242 = vpop.f32.mrb[0].mxu0
      %v1243 = vadd.f32 0.0, %v1242
      %v1244 = vpop.f32.mrb[0].mxu0
      %1245 = vmatprep.mubr.bf16.mxu0 0
      %1246 = vmatmul.mubr.bf16.gmra.mrb[0].mxu0 %v1156
      %v1247 = vpop.f32.mrb[0].mxu0
      %v1248 = vadd.f32 0.0, %v1247
      %v1249 = vpop.f32.mrb[0].mxu0
      %v1250 = vpop.f32.mrb[0].mxu0
      %v1251 = vadd.f32 0.0, %v1250
      %v1252 = vpop.f32.mrb[0].mxu0
      %1253 = vmatprep.mubr.bf16.mxu0 0
      %1254 = vmatmul.mubr.bf16.gmra.mrb[0].mxu0 %v1159
      %v1255 = vpop.f32.mrb[0].mxu0
      %v1256 = vadd.f32 0.0, %v1255
      %v1257 = vpop.f32.mrb[0].mxu0
      %v1258 = vpop.f32.mrb[0].mxu0
      %v1259 = vadd.f32 0.0, %v1258
      %v1260 = vpop.f32.mrb[0].mxu0
      %1261 = vmatprep.mubr.bf16.mxu0 0
      %1262 = vmatmul.mubr.bf16.gmra.mrb[0].mxu0 %v1162
      %v1263 = vpop.f32.mrb[0].mxu0
      %v1264 = vadd.f32 0.0, %v1263
      %v1265 = vpop.f32.mrb[0].mxu0
      %v1266 = vpop.f32.mrb[0].mxu0
      %v1267 = vadd.f32 0.0, %v1266
      %v1268 = vpop.f32.mrb[0].mxu0
      %1269 = vmatprep.mubr.bf16.mxu0 0
      %1270 = vmatmul.mubr.bf16.gmra.mrb[0].mxu0 %v1165
      %v1271 = vpop.f32.mrb[0].mxu0
      %v1272 = vadd.f32 0.0, %v1271
      %v1273 = vpop.f32.mrb[0].mxu0
      %v1274 = vpop.f32.mrb[0].mxu0
      %v1275 = vadd.f32 0.0, %v1274
      %v1276 = vpop.f32.mrb[0].mxu0
      %1277 = vmatprep.mubr.bf16.mxu0 0
      %1278 = vmatmul.mubr.bf16.gmra.mrb[0].mxu0 %v1168
      %v1279 = vpop.f32.mrb[0].mxu0
      %v1280 = vadd.f32 0.0, %v1279
      %v1281 = vpop.f32.mrb[0].mxu0
      %v1282 = vpop.f32.mrb[0].mxu0
      %v1283 = vadd.f32 0.0, %v1282
      %v1284 = vpop.f32.mrb[0].mxu0
      %1285 = vmatprep.mubr.bf16.mxu0 0
      %1286 = vmatmul.mubr.bf16.gmra.mrb[0].mxu0 %v1171
      %v1287 = vpop.f32.mrb[0].mxu0
      %v1288 = vadd.f32 0.0, %v1287
      %v1289 = vpop.f32.mrb[0].mxu0
      %v1290 = vpop.f32.mrb[0].mxu0
      %v1291 = vadd.f32 0.0, %v1290
      %v1292 = vpop.f32.mrb[0].mxu0
      %1293 = vmatprep.mubr.bf16.mxu0 0
      %1294 = vmatmul.mubr.bf16.gmra.mrb[0].mxu0 %v1174
      %v1295 = vpop.f32.mrb[0].mxu0
      %v1296 = vadd.f32 0.0, %v1295
      %v1297 = vpop.f32.mrb[0].mxu0
      %v1298 = vpop.f32.mrb[0].mxu0
      %v1299 = vadd.f32 0.0, %v1298
      %v1300 = vpop.f32.mrb[0].mxu0
      %1301 = vmatprep.mubr.bf16.mxu0 0
      %1302 = vmatmul.mubr.bf16.gmra.mrb[0].mxu0 %v1177
      %v1303 = vpop.f32.mrb[0].mxu0
      %v1304 = vadd.f32 0.0, %v1303
      %v1305 = vpop.f32.mrb[0].mxu0
      %v1306 = vpop.f32.mrb[0].mxu0
      %v1307 = vadd.f32 0.0, %v1306
      %v1308 = vpop.f32.mrb[0].mxu0
      %1309 = vmatprep.mubr.bf16.mxu0 0
      %1310 = vmatmul.mubr.bf16.gmra.mrb[0].mxu0 %v1180
      %v1311 = vpop.f32.mrb[0].mxu0
      %v1312 = vadd.f32 0.0, %v1311
      %v1313 = vpop.f32.mrb[0].mxu0
      %v1314 = vpop.f32.mrb[0].mxu0
      %v1315 = vadd.f32 0.0, %v1314
      %v1316 = vpop.f32.mrb[0].mxu0
      %1317 = vmatprep.mubr.bf16.mxu0 0
      %1318 = vmatmul.mubr.bf16.gmra.mrb[0].mxu0 %v1183
      %v1319 = vpop.f32.mrb[0].mxu0
      %v1320 = vadd.f32 0.0, %v1319
      %v1321 = vpop.f32.mrb[0].mxu0
      %v1322 = vpop.f32.mrb[0].mxu0
      %v1323 = vadd.f32 0.0, %v1322
      %v1324 = vpop.f32.mrb[0].mxu0
      %1325 = vmatprep.mubr.bf16.mxu0 0
      %1326 = vmatmul.mubr.bf16.gmra.mrb[0].mxu0 %v1186
      %v1327 = vpop.f32.mrb[0].mxu0
      %v1328 = vadd.f32 0.0, %v1327
      %v1329 = vpop.f32.mrb[0].mxu0
      %v1330 = vpop.f32.mrb[0].mxu0
      %v1331 = vadd.f32 0.0, %v1330
      %v1332 = vpop.f32.mrb[0].mxu0
      %1333 = vmatprep.mubr.bf16.mxu0 0
      %1334 = vmatmul.mubr.bf16.gmra.mrb[0].mxu0 %v1189
      %v1335 = vpop.f32.mrb[0].mxu0
      %v1336 = vadd.f32 0.0, %v1335
      %v1337 = vpop.f32.mrb[0].mxu0
      %v1338 = vpop.f32.mrb[0].mxu0
      %v1339 = vadd.f32 0.0, %v1338
      %v1340 = vpop.f32.mrb[0].mxu0
      %1341 = vmatprep.mubr.bf16.mxu0 0
      %1342 = vmatmul.mubr.bf16.gmra.mrb[0].mxu0 %v1192
      %v1343 = vpop.f32.mrb[0].mxu0
      %v1344 = vadd.f32 0.0, %v1343
      %v1345 = vpop.f32.mrb[0].mxu0
      %v1346 = vpop.f32.mrb[0].mxu0
      %v1347 = vadd.f32 0.0, %v1346
      %v1348 = vpop.f32.mrb[0].mxu0
      %1349 = vmatprep.mubr.bf16.mxu0 0
      %1350 = vmatmul.mubr.bf16.gmra.mrb[0].mxu0 %v1195
      %v1351 = vpop.f32.mrb[0].mxu0
      %v1352 = vadd.f32 0.0, %v1351
      %v1353 = vpop.f32.mrb[0].mxu0
      %v1354 = vpop.f32.mrb[0].mxu0
      %v1355 = vadd.f32 0.0, %v1354
      %v1356 = vpop.f32.mrb[0].mxu0
      %1357 = vdwg.mxu0
      %v1358 = vmax.f32 %v1232, 0.0
      %v1359 = vmax.f32 %v1235, 0.0
      %v1360 = vmax.f32 %v1240, 0.0
      %v1361 = vmax.f32 %v1243, 0.0
      %v1362 = vmax.f32 %v1248, 0.0
      %v1363 = vmax.f32 %v1251, 0.0
      %v1364 = vmax.f32 %v1256, 0.0
      %v1365 = vmax.f32 %v1259, 0.0
      %v1366 = vmax.f32 %v1264, 0.0
      %v1367 = vmax.f32 %v1267, 0.0
      %v1368 = vmax.f32 %v1272, 0.0
      %v1369 = vmax.f32 %v1275, 0.0
      %v1370 = vmax.f32 %v1280, 0.0
      %v1371 = vmax.f32 %v1283, 0.0
      %v1372 = vmax.f32 %v1288, 0.0
      %v1373 = vmax.f32 %v1291, 0.0
      %v1374 = vmax.f32 %v1296, 0.0
      %v1375 = vmax.f32 %v1299, 0.0
      %v1376 = vmax.f32 %v1304, 0.0
      %v1377 = vmax.f32 %v1307, 0.0
      %v1378 = vmax.f32 %v1312, 0.0
      %v1379 = vmax.f32 %v1315, 0.0
      %v1380 = vmax.f32 %v1320, 0.0
      %v1381 = vmax.f32 %v1323, 0.0
      %v1382 = vmax.f32 %v1328, 0.0
      %v1383 = vmax.f32 %v1331, 0.0
      %v1384 = vmax.f32 %v1336, 0.0
      %v1385 = vmax.f32 %v1339, 0.0
      %v1386 = vmax.f32 %v1344, 0.0
      %v1387 = vmax.f32 %v1347, 0.0
      %v1388 = vmax.f32 %v1352, 0.0
      %v1389 = vmax.f32 %v1355, 0.0
      %v1390 = vpack.c.bf16 %v1359, %v1358
      %v1391 = vpack.c.bf16 %v1361, %v1360
      %v1392 = vpack.c.bf16 %v1363, %v1362
      %v1393 = vpack.c.bf16 %v1365, %v1364
      %v1394 = vpack.c.bf16 %v1367, %v1366
      %v1395 = vpack.c.bf16 %v1369, %v1368
      %v1396 = vpack.c.bf16 %v1371, %v1370
      %v1397 = vpack.c.bf16 %v1373, %v1372
      %v1398 = vpack.c.bf16 %v1375, %v1374
      %v1399 = vpack.c.bf16 %v1377, %v1376
      %v1400 = vpack.c.bf16 %v1379, %v1378
      %v1401 = vpack.c.bf16 %v1381, %v1380
      %v1402 = vpack.c.bf16 %v1383, %v1382
      %v1403 = vpack.c.bf16 %v1385, %v1384
      %v1404 = vpack.c.bf16 %v1387, %v1386
      %v1405 = vpack.c.bf16 %v1389, %v1388
      %v1422 = vunpack.c.l.b16 %v1390
      %v1423 = vunpack.c.h.b16 %v1390
      %v1424 = vunpack.c.l.b16 %v1391
      %v1425 = vunpack.c.h.b16 %v1391
      %v1426 = vunpack.c.l.b16 %v1392
      %v1427 = vunpack.c.h.b16 %v1392
      %v1428 = vunpack.c.l.b16 %v1393
      %v1429 = vunpack.c.h.b16 %v1393
      %v1430 = vunpack.c.l.b16 %v1394
      %v1431 = vunpack.c.h.b16 %v1394
      %v1432 = vunpack.c.l.b16 %v1395
      %v1433 = vunpack.c.h.b16 %v1395
      %v1434 = vunpack.c.l.b16 %v1396
      %v1435 = vunpack.c.h.b16 %v1396
      %v1436 = vunpack.c.l.b16 %v1397
      %v1437 = vunpack.c.h.b16 %v1397
      %v1438 = vunpack.c.l.b16 %v1398
      %v1439 = vunpack.c.h.b16 %v1398
      %v1440 = vunpack.c.l.b16 %v1399
      %v1441 = vunpack.c.h.b16 %v1399
      %v1442 = vunpack.c.l.b16 %v1400
      %v1443 = vunpack.c.h.b16 %v1400
      %v1444 = vunpack.c.l.b16 %v1401
      %v1445 = vunpack.c.h.b16 %v1401
      %v1446 = vunpack.c.l.b16 %v1402
      %v1447 = vunpack.c.h.b16 %v1402
      %v1448 = vunpack.c.l.b16 %v1403
      %v1449 = vunpack.c.h.b16 %v1403
      %v1450 = vunpack.c.l.b16 %v1404
      %v1451 = vunpack.c.h.b16 %v1404
      %v1452 = vunpack.c.l.b16 %v1405
      %v1453 = vunpack.c.h.b16 %v1405
      %v1454 = vpack.c.b16 %v1422, %v1422
      %v1455 = vpack.c.b16 %v1423, %v1423
      %v1456 = vpack.c.b16 %v1424, %v1424
      %v1457 = vpack.c.b16 %v1425, %v1425
      %v1458 = vpack.c.b16 %v1426, %v1426
      %v1459 = vpack.c.b16 %v1427, %v1427
      %v1460 = vpack.c.b16 %v1428, %v1428
      %v1461 = vpack.c.b16 %v1429, %v1429
      %v1462 = vpack.c.b16 %v1430, %v1430
      %v1463 = vpack.c.b16 %v1431, %v1431
      %v1464 = vpack.c.b16 %v1432, %v1432
      %v1465 = vpack.c.b16 %v1433, %v1433
      %v1466 = vpack.c.b16 %v1434, %v1434
      %v1467 = vpack.c.b16 %v1435, %v1435
      %v1468 = vpack.c.b16 %v1436, %v1436
      %v1469 = vpack.c.b16 %v1437, %v1437
      %v1470 = vpack.c.b16 %v1438, %v1438
      %v1471 = vpack.c.b16 %v1439, %v1439
      %v1472 = vpack.c.b16 %v1440, %v1440
      %v1473 = vpack.c.b16 %v1441, %v1441
      %v1474 = vpack.c.b16 %v1442, %v1442
      %v1475 = vpack.c.b16 %v1443, %v1443
      %v1476 = vpack.c.b16 %v1444, %v1444
      %v1477 = vpack.c.b16 %v1445, %v1445
      %v1478 = vpack.c.b16 %v1446, %v1446
      %v1479 = vpack.c.b16 %v1447, %v1447
      %v1480 = vpack.c.b16 %v1448, %v1448
      %v1481 = vpack.c.b16 %v1449, %v1449
      %v1482 = vpack.c.b16 %v1450, %v1450
      %v1483 = vpack.c.b16 %v1451, %v1451
      %v1484 = vpack.c.b16 %v1452, %v1452
      %v1485 = vpack.c.b16 %v1453, %v1453
      %vm1518 = vcmask 125952
      %1519 = vst.msk [vmem:[%s170] sm:$0xf] %vm1518, %v1454
      %1520 = vst.msk [vmem:[%s170 + $0x4] sm:$0xf] %vm1518, %v1455
      %1521 = vst.msk [vmem:[%s170 + $0x8] sm:$0xf] %vm1518, %v1456
      %1522 = vst.msk [vmem:[%s170 + $0xc] sm:$0xf] %vm1518, %v1457
      %1523 = vst.msk [vmem:[%s170 + $0x10] sm:$0xf] %vm1518, %v1458
      %1524 = vst.msk [vmem:[%s170 + $0x14] sm:$0xf] %vm1518, %v1459
      %1525 = vst.msk [vmem:[%s170 + $0x18] sm:$0xf] %vm1518, %v1460
      %1526 = vst.msk [vmem:[%s170 + $0x1c] sm:$0xf] %vm1518, %v1461
      %1527 = vst.msk [vmem:[%s170 + $0x20] sm:$0xf] %vm1518, %v1462
      %1528 = vst.msk [vmem:[%s170 + $0x24] sm:$0xf] %vm1518, %v1463
      %1529 = vst.msk [vmem:[%s170 + $0x28] sm:$0xf] %vm1518, %v1464
      %1530 = vst.msk [vmem:[%s170 + $0x2c] sm:$0xf] %vm1518, %v1465
      %1531 = vst.msk [vmem:[%s170 + $0x30] sm:$0xf] %vm1518, %v1466
      %1532 = vst.msk [vmem:[%s170 + $0x34] sm:$0xf] %vm1518, %v1467
      %1533 = vst.msk [vmem:[%s170 + $0x38] sm:$0xf] %vm1518, %v1468
      %1534 = vst.msk [vmem:[%s170 + $0x3c] sm:$0xf] %vm1518, %v1469
      %1535 = vst.msk [vmem:[%s170 + $0x40] sm:$0xf] %vm1518, %v1470
      %1536 = vst.msk [vmem:[%s170 + $0x44] sm:$0xf] %vm1518, %v1471
      %1537 = vst.msk [vmem:[%s170 + $0x48] sm:$0xf] %vm1518, %v1472
      %1538 = vst.msk [vmem:[%s170 + $0x4c] sm:$0xf] %vm1518, %v1473
      %1539 = vst.msk [vmem:[%s170 + $0x50] sm:$0xf] %vm1518, %v1474
      %1540 = vst.msk [vmem:[%s170 + $0x54] sm:$0xf] %vm1518, %v1475
      %1541 = vst.msk [vmem:[%s170 + $0x58] sm:$0xf] %vm1518, %v1476
      %1542 = vst.msk [vmem:[%s170 + $0x5c] sm:$0xf] %vm1518, %v1477
      %1543 = vst.msk [vmem:[%s170 + $0x60] sm:$0xf] %vm1518, %v1478
      %1544 = vst.msk [vmem:[%s170 + $0x64] sm:$0xf] %vm1518, %v1479
      %1545 = vst.msk [vmem:[%s170 + $0x68] sm:$0xf] %vm1518, %v1480
      %1546 = vst.msk [vmem:[%s170 + $0x6c] sm:$0xf] %vm1518, %v1481
      %1547 = vst.msk [vmem:[%s170 + $0x70] sm:$0xf] %vm1518, %v1482
      %1548 = vst.msk [vmem:[%s170 + $0x74] sm:$0xf] %vm1518, %v1483
      %1549 = vst.msk [vmem:[%s170 + $0x78] sm:$0xf] %vm1518, %v1484
      %1550 = vst.msk [vmem:[%s170 + $0x7c] sm:$0xf] %vm1518, %v1485
      %p1551 = scmp.lt.s32.totalorder %s14, 1
      %s1552 = scalar_select %p1551, %s14, 1
      %s1553 = smul.addr %s1552, 32
      %s1554 = smul.addr %s1553, 4
      %s1555 = scalar_lea.vmem %s3, %s1554
      // Predicated region
      $region33: #{self_attention_forward.12} parent=31 // pred_check
        %p1556 = pneg %p100
      $region34: #{self_attention_forward.12} parent=31 // pred_check_branch
        %1558 = sbr.rel (%p1556) target = $region36
      $region35: #{self_attention_forward.12} parent=31 // pred_region
        _
      $region36: #{self_attention_forward.12} parent=31 // pred_fallthru
        _
    $region32: #{self_attention_forward.12} parent=5 // pred_fallthru
      _
    %p1559 = scmp.le.s32.totalorder 2, %s9
    // Predicated region
    $region37: #{self_attention_forward.12} parent=5 // pred_check
      %p1560 = pneg %p1559
    $region38: #{self_attention_forward.12} parent=5 // pred_check_branch
      %1562 = sbr.rel (%p1560) target = $region40
    $region39: #{self_attention_forward.12} parent=5 // pred_region
      %s1563 = ssub.s32 %s9, 2
      // Predicated region
      $region41: #{self_attention_forward.12} parent=39 // pred_check
        %p1564 = pneg %p106
      $region42: #{self_attention_forward.12} parent=39 // pred_check_branch
        %1566 = sbr.rel (%p1564) target = $region44
      $region43: #{self_attention_forward.12} parent=39 // pred_region
        %p1567 = scmp.lt.s32.totalorder %s15, 1
        %s1568 = scalar_select %p1567, %s15, 1
        %s1569 = smul.addr %s1568, 32
        %s1570 = smul.addr %s1569, 4
        %s1571 = scalar_lea.vmem %s3, %s1570
      $region44: #{self_attention_forward.12} parent=39 // pred_fallthru
        _
    $region40: #{self_attention_forward.12} parent=5 // pred_fallthru
      _
  $region6: #{self_attention_forward.12} parent=0 // loop_footer
    %s13 = sadd.s32 1, %s9
  $region7: #{self_attention_forward.12} parent=0 // loop_footer_branch
    %8 = sbr.rel target = $region3
  $region8: #{self_attention_forward.12} parent=0 // loop_exit
    _

// kernel: self_attention_forward.21
$region0: #{self_attention_forward.21}
  #allocation0 [shape = 'u32[]', space=smem, size = 0x4, offset = 0x4, fixed_abs, tag = 'smem constant byte address 0x4 - core index']
  #allocation1 [shape = 'u32[144,128]{1,0:T(1,128)}', space=vmem, size = 0x12000, scoped, tag = 'internal scratch']
  %s0 = inlined_call_operand.vmem [shape: bf16[2,288,48], index: 0, kind: input, shape index: {}]
  %s1 = inlined_call_operand.vmem [shape: bf16[2,288,48], index: 1, kind: input, shape index: {}]
  %s2 = inlined_call_operand.vmem [shape: bf16[3,48,16], index: 2, kind: input, shape index: {}]
  %s3 = inlined_call_operand.vmem [shape: bf16[3,48,16], index: 3, kind: input, shape index: {}]
  %s4 = inlined_call_operand.vmem [shape: f32[2,256,16], index: 4, kind: output, shape index: {}]
  %s5 = sld [smem:[#allocation0]]
  $region49: #{self_attention_forward.21} parent=0
    _
  %s7 = ssub.s32 1, %s5
  %s8 = scalar_select 0, %s7, %s5
  loop: start=0, step=1, limit=4
  $region2: #{self_attention_forward.21} parent=0 // loop_pre_header
    _
  $region3: #{self_attention_forward.21} parent=0 // loop_header
    %s10 = sphi 0, %s14
    %p11 = scmp.ge.s32.totalorder %s10, 4
    %s20 = sphi 0, %s22
    %s23 = sphi 0, %s20
    %s24 = sphi 0, %s23
    %s40 = sphi 0, %s24
    %s46 = sphi 0, %s48
    %s49 = sphi 0, %s46
    %s50 = sphi 0, %s49
    %s66 = sphi 0, %s50
    %s70 = sphi 0, %s70
    %s72 = sphi 0, %s70
    %s73 = sphi 0, %s72
    %s87 = sphi 0, %s73
    %s91 = sphi 0, %s91
    %s93 = sphi 0, %s91
    %s94 = sphi 0, %s93
    %s108 = sphi 0, %s94
    %s114 = sphi 0, %s116
    %s117 = sphi 0, %s114
    %s118 = sphi 0, %s117
    %s134 = sphi 0, %s118
  $region4: #{self_attention_forward.21} parent=0 // loop_header_branch
    %13 = sbr.rel (%p11) target = $region8
  $region5: #{self_attention_forward.21} parent=0 // loop_body
    %s15 = ssub.s32 %s10, 1
    %s16 = ssub.s32 %s10, 2
    %s17 = sadd.s32 %s10, 1
    %s18 = ssub.s32 %s10, %s17
    %p19 = scmp.eq.s32.totalorder %s18, 0
    %s21 = sadd.s32 %s20, 1
    %s22 = scalar_select %p19, %s20, %s21
    %p25 = pneg %p19
    %p26 = scmp.eq.s32.totalorder %s10, 1
    %p27 = por %p25, %p26
    %p28 = scmp.ne.s32.totalorder %s20, %s23
    %p29 = scmp.eq.s32.totalorder %s10, 0
    %p30 = por %p28, %p29
    %p31 = scmp.ne.s32.totalorder %s20, %s23
    %p32 = scmp.eq.s32.totalorder %s15, 1
    %p33 = por %p31, %p32
    %p34 = scmp.ne.s32.totalorder %s23, %s24
    %p35 = scmp.eq.s32.totalorder %s15, 0
    %p36 = por %p34, %p35
    %p37 = scmp.ne.s32.totalorder %s23, %s24
    %p38 = scmp.eq.s32.totalorder %s16, 1
    %p39 = por %p37, %p38
    %p41 = scmp.ne.s32.totalorder %s24, %s40
    %p42 = scmp.eq.s32.totalorder %s16, 0
    %p43 = por %p41, %p42
    %s44 = ssub.s32 %s10, %s17
    %p45 = scmp.eq.s32.totalorder %s44, 0
    %s47 = sadd.s32 %s46, 1
    %s48 = scalar_select %p45, %s46, %s47
    %p51 = pneg %p45
    %p52 = scmp.eq.s32.totalorder %s10, 1
    %p53 = por %p51, %p52
    %p54 = scmp.ne.s32.totalorder %s46, %s49
    %p55 = scmp.eq.s32.totalorder %s10, 0
    %p56 = por %p54, %p55
    %p57 = scmp.ne.s32.totalorder %s46, %s49
    %p58 = scmp.eq.s32.totalorder %s15, 1
    %p59 = por %p57, %p58
    %p60 = scmp.ne.s32.totalorder %s49, %s50
    %p61 = scmp.eq.s32.totalorder %s15, 0
    %p62 = por %p60, %p61
    %p63 = scmp.ne.s32.totalorder %s49, %s50
    %p64 = scmp.eq.s32.totalorder %s16, 1
    %p65 = por %p63, %p64
    %p67 = scmp.ne.s32.totalorder %s50, %s66
    %p68 = scmp.eq.s32.totalorder %s16, 0
    %p69 = por %p67, %p68
    %s71 = sadd.s32 %s70, 1
    %p74 = scmp.eq.s32.totalorder %s10, 1
    %p75 = scmp.ne.s32.totalorder %s70, %s72
    %p76 = scmp.eq.s32.totalorder %s10, 0
    %p77 = por %p75, %p76
    %p78 = scmp.ne.s32.totalorder %s70, %s72
    %p79 = scmp.eq.s32.totalorder %s15, 1
    %p80 = por %p78, %p79
    %p81 = scmp.ne.s32.totalorder %s72, %s73
    %p82 = scmp.eq.s32.totalorder %s15, 0
    %p83 = por %p81, %p82
    %p84 = scmp.ne.s32.totalorder %s72, %s73
    %p85 = scmp.eq.s32.totalorder %s16, 1
    %p86 = por %p84, %p85
    %p88 = scmp.ne.s32.totalorder %s73, %s87
    %p89 = scmp.eq.s32.totalorder %s16, 0
    %p90 = por %p88, %p89
    %s92 = sadd.s32 %s91, 1
    %p95 = scmp.eq.s32.totalorder %s10, 1
    %p96 = scmp.ne.s32.totalorder %s91, %s93
    %p97 = scmp.eq.s32.totalorder %s10, 0
    %p98 = por %p96, %p97
    %p99 = scmp.ne.s32.totalorder %s91, %s93
    %p100 = scmp.eq.s32.totalorder %s15, 1
    %p101 = por %p99, %p100
    %p102 = scmp.ne.s32.totalorder %s93, %s94
    %p103 = scmp.eq.s32.totalorder %s15, 0
    %p104 = por %p102, %p103
    %p105 = scmp.ne.s32.totalorder %s93, %s94
    %p106 = scmp.eq.s32.totalorder %s16, 1
    %p107 = por %p105, %p106
    %p109 = scmp.ne.s32.totalorder %s94, %s108
    %p110 = scmp.eq.s32.totalorder %s16, 0
    %p111 = por %p109, %p110
    %s112 = ssub.s32 %s10, %s17
    %p113 = scmp.eq.s32.totalorder %s112, 0
    %s115 = sadd.s32 %s114, 1
    %s116 = scalar_select %p113, %s114, %s115
    %p119 = pneg %p113
    %p120 = scmp.eq.s32.totalorder %s10, 1
    %p121 = por %p119, %p120
    %p122 = scmp.ne.s32.totalorder %s114, %s117
    %p123 = scmp.eq.s32.totalorder %s10, 0
    %p124 = por %p122, %p123
    %p125 = scmp.ne.s32.totalorder %s114, %s117
    %p126 = scmp.eq.s32.totalorder %s15, 1
    %p127 = por %p125, %p126
    %p128 = scmp.ne.s32.totalorder %s117, %s118
    %p129 = scmp.eq.s32.totalorder %s15, 0
    %p130 = por %p128, %p129
    %p131 = scmp.ne.s32.totalorder %s117, %s118
    %p132 = scmp.eq.s32.totalorder %s16, 1
    %p133 = por %p131, %p132
    %p135 = scmp.ne.s32.totalorder %s118, %s134
    %p136 = scmp.eq.s32.totalorder %s16, 0
    %p137 = por %p135, %p136
    %p138 = scmp.le.s32.totalorder 1, %s10
    %p139 = scmp.lt.s32.totalorder %s10, 3
    %p140 = pnand %p138, %p139
    %p141 = pneg %p140
    // Predicated region
    $region9: #{self_attention_forward.21} parent=5 // pred_check
      _
    $region10: #{self_attention_forward.21} parent=5 // pred_check_branch
      %143 = sbr.rel (%p140) target = $region12
    $region11: #{self_attention_forward.21} parent=5 // pred_region
      %s144 = ssub.s32 %s10, 1
      // Predicated region
      $region13: #{self_attention_forward.21} parent=11 // pred_check
        %p145 = pneg %p83
      $region14: #{self_attention_forward.21} parent=11 // pred_check_branch
        %147 = sbr.rel (%p145) target = $region16
      $region15: #{self_attention_forward.21} parent=11 // pred_region
        _
      $region16: #{self_attention_forward.21} parent=11 // pred_fallthru
        _
      // Predicated region
      $region17: #{self_attention_forward.21} parent=11 // pred_check
        %p148 = pneg %p104
      $region18: #{self_attention_forward.21} parent=11 // pred_check_branch
        %150 = sbr.rel (%p148) target = $region20
      $region19: #{self_attention_forward.21} parent=11 // pred_region
        _
      $region20: #{self_attention_forward.21} parent=11 // pred_fallthru
        _
    $region12: #{self_attention_forward.21} parent=5 // pred_fallthru
      _
    %p151 = scmp.lt.s32.totalorder %s10, 2
    // Predicated region
    $region21: #{self_attention_forward.21} parent=5 // pred_check
      %p152 = pneg %p151
    $region22: #{self_attention_forward.21} parent=5 // pred_check_branch
      %154 = sbr.rel (%p152) target = $region24
    $region23: #{self_attention_forward.21} parent=5 // pred_region
      // Predicated region
      $region25: #{self_attention_forward.21} parent=23 // pred_check
        %p155 = pneg %p30
      $region26: #{self_attention_forward.21} parent=23 // pred_check_branch
        %157 = sbr.rel (%p155) target = $region28
      $region27: #{self_attention_forward.21} parent=23 // pred_region
        %p158 = scmp.lt.s32.totalorder %s10, 1
        %s159 = scalar_select %p158, %s10, 1
        %s160 = smul.addr %s159, 36
        %s161 = smul.addr %s160, 4
        %s162 = scalar_lea.vmem %s0, %s161
      $region28: #{self_attention_forward.21} parent=23 // pred_fallthru
        _
      // Predicated region
      $region29: #{self_attention_forward.21} parent=23 // pred_check
        %p163 = pneg %p56
      $region30: #{self_attention_forward.21} parent=23 // pred_check_branch
        %165 = sbr.rel (%p163) target = $region32
      $region31: #{self_attention_forward.21} parent=23 // pred_region
        %p166 = scmp.lt.s32.totalorder %s10, 1
        %s167 = scalar_select %p166, %s10, 1
        %s168 = smul.addr %s167, 36
        %s169 = smul.addr %s168, 4
        %s170 = scalar_lea.vmem %s1, %s169
      $region32: #{self_attention_forward.21} parent=23 // pred_fallthru
        _
    $region24: #{self_attention_forward.21} parent=5 // pred_fallthru
      _
    %p171 = scmp.le.s32.totalorder 1, %s10
    %p172 = scmp.lt.s32.totalorder %s10, 3
    %p173 = pnand %p171, %p172
    %p174 = pneg %p173
    // Predicated region
    $region33: #{self_attention_forward.21} parent=5 // pred_check
      _
    $region34: #{self_attention_forward.21} parent=5 // pred_check_branch
      %176 = sbr.rel (%p173) target = $region36
    $region35: #{self_attention_forward.21} parent=5 // pred_region
      %s177 = ssub.s32 %s10, 1
      %p178 = scmp.lt.s32.totalorder %s15, 1
      %s179 = scalar_select %p178, %s15, 1
      %s180 = smul.addr %s179, 36
      %s181 = smul.addr %s180, 4
      %s182 = scalar_lea.vmem %s0, %s181
      %p183 = pneg %p36
      %p184 = pneg %p33
      %p185 = scmp.lt.s32.totalorder %s15, 1
      %s186 = scalar_select %p185, %s15, 1
      %s187 = smul.addr %s186, 36
      %s188 = smul.addr %s187, 4
      %s189 = scalar_lea.vmem %s1, %s188
      %p190 = pneg %p62
      %p191 = pneg %p59
      %p192 = pneg %p83
      %p193 = pneg %p80
      %p194 = pneg %p104
      %p195 = pneg %p101
      %p196 = pneg %p130
      %p197 = pneg %p127
      %p198 = scmp.lt.s32.totalorder %s15, 1
      %s199 = scalar_select %p198, %s15, 1
      %s200 = smul.addr %s199, 32
      %s201 = smul.addr %s200, 8
      %s202 = scalar_lea.vmem %s4, %s201
      %p203 = scmp.lt.s32.totalorder %s15, 1
      %s204 = scalar_select %p203, %s15, 1
      %s205 = smul.addr %s204, 36
      %s206 = smul.addr %s205, 4
      %s207 = scalar_lea.vmem %s0, %s206
      %p208 = scmp.lt.s32.totalorder %s15, 1
      %s209 = scalar_select %p208, %s15, 1
      %s210 = smul.addr %s209, 36
      %s211 = smul.addr %s210, 4
      %s212 = scalar_lea.vmem %s1, %s211
      %p213 = scmp.lt.s32.totalorder %s15, 1
      %s214 = scalar_select %p213, %s15, 1
      %s215 = smul.addr %s214, 32
      %s216 = smul.addr %s215, 8
      %s217 = scalar_lea.vmem %s4, %s216
      %v219 = vld [vmem:[%s207] sm:$0xf]
      %v220 = vld [vmem:[%s207 + $0x4] sm:$0xf]
      %v221 = vld [vmem:[%s207 + $0x8] sm:$0xf]
      %v222 = vld [vmem:[%s207 + $0xc] sm:$0xf]
      %v223 = vld [vmem:[%s207 + $0x10] sm:$0xf]
      %v224 = vld [vmem:[%s207 + $0x14] sm:$0xf]
      %v225 = vld [vmem:[%s207 + $0x18] sm:$0xf]
      %v226 = vld [vmem:[%s207 + $0x1c] sm:$0xf]
      %v227 = vld [vmem:[%s207 + $0x20] sm:$0xf]
      %v228 = vld [vmem:[%s207 + $0x24] sm:$0xf]
      %v229 = vld [vmem:[%s207 + $0x28] sm:$0xf]
      %v230 = vld [vmem:[%s207 + $0x2c] sm:$0xf]
      %v231 = vld [vmem:[%s207 + $0x30] sm:$0xf]
      %v232 = vld [vmem:[%s207 + $0x34] sm:$0xf]
      %v233 = vld [vmem:[%s207 + $0x38] sm:$0xf]
      %v234 = vld [vmem:[%s207 + $0x3c] sm:$0xf]
      %v235 = vld [vmem:[%s207 + $0x40] sm:$0xf]
      %v236 = vld [vmem:[%s207 + $0x44] sm:$0xf]
      %v237 = vld [vmem:[%s207 + $0x48] sm:$0xf]
      %v238 = vld [vmem:[%s207 + $0x4c] sm:$0xf]
      %v239 = vld [vmem:[%s207 + $0x50] sm:$0xf]
      %v240 = vld [vmem:[%s207 + $0x54] sm:$0xf]
      %v241 = vld [vmem:[%s207 + $0x58] sm:$0xf]
      %v242 = vld [vmem:[%s207 + $0x5c] sm:$0xf]
      %v243 = vld [vmem:[%s207 + $0x60] sm:$0xf]
      %v244 = vld [vmem:[%s207 + $0x64] sm:$0xf]
      %v245 = vld [vmem:[%s207 + $0x68] sm:$0xf]
      %v246 = vld [vmem:[%s207 + $0x6c] sm:$0xf]
      %v247 = vld [vmem:[%s207 + $0x70] sm:$0xf]
      %v248 = vld [vmem:[%s207 + $0x74] sm:$0xf]
      %v249 = vld [vmem:[%s207 + $0x78] sm:$0xf]
      %v250 = vld [vmem:[%s207 + $0x7c] sm:$0xf]
      %v251 = vld [vmem:[%s2] sm:$0xf]
      %v252 = vld [vmem:[%s2 + $0x4] sm:$0xf]
      %v253 = vld [vmem:[%s2 + $0x8] sm:$0xf]
      %v254 = vld [vmem:[%s2 + $0xc] sm:$0xf]
      %v255 = vld [vmem:[%s2 + $0x10] sm:$0xf]
      %v256 = vld [vmem:[%s2 + $0x14] sm:$0xf]
      %v257 = vld [vmem:[%s207 + $0x80] sm:$0xf]
      %v258 = vld [vmem:[%s207 + $0x84] sm:$0xf]
      %s259 = scalar_lea.vmem %s2, 24
      %v260 = vld [vmem:[%s259] sm:$0xf]
      %v261 = vld [vmem:[%s259 + $0x4] sm:$0xf]
      %v262 = vld [vmem:[%s259 + $0x8] sm:$0xf]
      %v263 = vld [vmem:[%s259 + $0xc] sm:$0xf]
      %v264 = vld [vmem:[%s259 + $0x10] sm:$0xf]
      %v265 = vld [vmem:[%s259 + $0x14] sm:$0xf]
      %v298 = vunpack.c.l.b16 %v221
      %v299 = vunpack.c.l.b16 %v222
      %v300 = vunpack.c.l.b16 %v223
      %v301 = vunpack.c.l.b16 %v224
      %v302 = vunpack.c.l.b16 %v225
      %v303 = vunpack.c.l.b16 %v226
      %v304 = vunpack.c.l.b16 %v227
      %v305 = vunpack.c.l.b16 %v228
      %v306 = vunpack.c.l.b16 %v229
      %v307 = vunpack.c.l.b16 %v230
      %v308 = vunpack.c.l.b16 %v231
      %v309 = vunpack.c.l.b16 %v232
      %v310 = vunpack.c.l.b16 %v233
      %v311 = vunpack.c.l.b16 %v234
      %v312 = vunpack.c.l.b16 %v235
      %v313 = vunpack.c.l.b16 %v236
      %v314 = vunpack.c.l.b16 %v237
      %v315 = vunpack.c.l.b16 %v238
      %v316 = vunpack.c.l.b16 %v239
      %v317 = vunpack.c.l.b16 %v240
      %v318 = vunpack.c.l.b16 %v241
      %v319 = vunpack.c.l.b16 %v242
      %v320 = vunpack.c.l.b16 %v243
      %v321 = vunpack.c.l.b16 %v244
      %v322 = vunpack.c.l.b16 %v245
      %v323 = vunpack.c.l.b16 %v246
      %v324 = vunpack.c.l.b16 %v247
      %v325 = vunpack.c.l.b16 %v248
      %v326 = vunpack.c.l.b16 %v249
      %v327 = vunpack.c.l.b16 %v250
      %v328 = vunpack.c.l.b16 %v257
      %v329 = vunpack.c.l.b16 %v258
      %v330 = vpack.c.b16 %v299, %v298
      %v331 = vpack.c.b16 %v301, %v300
      %v332 = vpack.c.b16 %v303, %v302
      %v333 = vpack.c.b16 %v305, %v304
      %v334 = vpack.c.b16 %v307, %v306
      %v335 = vpack.c.b16 %v309, %v308
      %v336 = vpack.c.b16 %v311, %v310
      %v337 = vpack.c.b16 %v313, %v312
      %v338 = vpack.c.b16 %v315, %v314
      %v339 = vpack.c.b16 %v317, %v316
      %v340 = vpack.c.b16 %v319, %v318
      %v341 = vpack.c.b16 %v321, %v320
      %v342 = vpack.c.b16 %v323, %v322
      %v343 = vpack.c.b16 %v325, %v324
      %v344 = vpack.c.b16 %v327, %v326
      %v345 = vpack.c.b16 %v329, %v328
      %v352 = vunpack.c.l.b16 %v260
      %v353 = vunpack.c.l.b16 %v261
      %v354 = vunpack.c.l.b16 %v262
      %v355 = vunpack.c.l.b16 %v263
      %v356 = vunpack.c.l.b16 %v264
      %v357 = vunpack.c.l.b16 %v265
      %v358 = vpack.c.b16 %v353, %v352
      %v359 = vpack.c.b16 %v355, %v354
      %v360 = vpack.c.b16 %v357, %v356
      %vm364 = vcmask 392192
      %v366 = vsel %vm364, %v330, 0
      %v369 = vsel %vm364, %v331, 0
      %v372 = vsel %vm364, %v332, 0
      %v375 = vsel %vm364, %v333, 0
      %v378 = vsel %vm364, %v334, 0
      %v381 = vsel %vm364, %v335, 0
      %v384 = vsel %vm364, %v336, 0
      %v387 = vsel %vm364, %v337, 0
      %v390 = vsel %vm364, %v338, 0
      %v393 = vsel %vm364, %v339, 0
      %v396 = vsel %vm364, %v340, 0
      %v399 = vsel %vm364, %v341, 0
      %v402 = vsel %vm364, %v342, 0
      %v405 = vsel %vm364, %v343, 0
      %v408 = vsel %vm364, %v344, 0
      %v411 = vsel %vm364, %v345, 0
      %413 = vmatprep.subr.bf16.mxu0 0
      %414 = vmatpush1.bf16.msra.mxu0 %v358
      %415 = vmatprep.subr.bf16.mxu0 0
      %416 = vmatpush1.bf16.msra.mxu0 %v359
      %417 = vmatprep.subr.bf16.mxu0 0
      %418 = vmatpush1.bf16.msra.mxu0 %v360
      %419 = vmatprep.subr.bf16.mxu0 0
      %420 = vmatpush1.bf16.msra.mxu0 0
      %421 = vmatprep.subr.bf16.mxu0 0
      %422 = vmatpush1.bf16.msra.mxu0 0
      %423 = vmatprep.subr.bf16.mxu0 0
      %424 = vmatpush1.bf16.msra.mxu0 0
      %425 = vmatprep.subr.bf16.mxu0 0
      %426 = vmatpush1.bf16.msra.mxu0 0
      %427 = vmatprep.subr.bf16.mxu0 0
      %428 = vmatpush1.bf16.msra.mxu0 0
      %429 = vmatprep.subr.bf16.mxu0 0
      %430 = vmatpush1.bf16.msra.mxu0 0
      %431 = vmatprep.subr.bf16.mxu0 0
      %432 = vmatpush1.bf16.msra.mxu0 0
      %433 = vmatprep.subr.bf16.mxu0 0
      %434 = vmatpush1.bf16.msra.mxu0 0
      %435 = vmatprep.subr.bf16.mxu0 0
      %436 = vmatpush1.bf16.msra.mxu0 0
      %437 = vmatprep.subr.bf16.mxu0 0
      %438 = vmatpush1.bf16.msra.mxu0 0
      %439 = vmatprep.subr.bf16.mxu0 0
      %440 = vmatpush1.bf16.msra.mxu0 0
      %441 = vmatprep.subr.bf16.mxu0 0
      %442 = vmatpush1.bf16.msra.mxu0 0
      %443 = vmatprep.subr.bf16.mxu0 0
      %444 = vmatpush1.bf16.msra.mxu0 0
      %445 = vmatprep.mubr.bf16.mxu0 0
      %446 = vmatmul.mubr.bf16.gmra.mrb[0].mxu0 %v366
      %v447 = vpop.f32.mrb[0].mxu0
      %v448 = vadd.f32 0.0, %v447
      %v449 = vpop.f32.mrb[0].mxu0
      %v450 = vpop.f32.mrb[0].mxu0
      %v451 = vadd.f32 0.0, %v450
      %v452 = vpop.f32.mrb[0].mxu0
      %453 = vmatprep.mubr.bf16.mxu0 0
      %454 = vmatmul.mubr.bf16.gmra.mrb[0].mxu0 %v369
      %v455 = vpop.f32.mrb[0].mxu0
      %v456 = vadd.f32 0.0, %v455
      %v457 = vpop.f32.mrb[0].mxu0
      %v458 = vpop.f32.mrb[0].mxu0
      %v459 = vadd.f32 0.0, %v458
      %v460 = vpop.f32.mrb[0].mxu0
      %461 = vmatprep.mubr.bf16.mxu0 0
      %462 = vmatmul.mubr.bf16.gmra.mrb[0].mxu0 %v372
      %v463 = vpop.f32.mrb[0].mxu0
      %v464 = vadd.f32 0.0, %v463
      %v465 = vpop.f32.mrb[0].mxu0
      %v466 = vpop.f32.mrb[0].mxu0
      %v467 = vadd.f32 0.0, %v466
      %v468 = vpop.f32.mrb[0].mxu0
      %469 = vmatprep.mubr.bf16.mxu0 0
      %470 = vmatmul.mubr.bf16.gmra.mrb[0].mxu0 %v375
      %v471 = vpop.f32.mrb[0].mxu0
      %v472 = vadd.f32 0.0, %v471
      %v473 = vpop.f32.mrb[0].mxu0
      %v474 = vpop.f32.mrb[0].mxu0
      %v475 = vadd.f32 0.0, %v474
      %v476 = vpop.f32.mrb[0].mxu0
      %477 = vmatprep.mubr.bf16.mxu0 0
      %478 = vmatmul.mubr.bf16.gmra.mrb[0].mxu0 %v378
      %v479 = vpop.f32.mrb[0].mxu0
      %v480 = vadd.f32 0.0, %v479
      %v481 = vpop.f32.mrb[0].mxu0
      %v482 = vpop.f32.mrb[0].mxu0
      %v483 = vadd.f32 0.0, %v482
      %v484 = vpop.f32.mrb[0].mxu0
      %485 = vmatprep.mubr.bf16.mxu0 0
      %486 = vmatmul.mubr.bf16.gmra.mrb[0].mxu0 %v381
      %v487 = vpop.f32.mrb[0].mxu0
      %v488 = vadd.f32 0.0, %v487
      %v489 = vpop.f32.mrb[0].mxu0
      %v490 = vpop.f32.mrb[0].mxu0
      %v491 = vadd.f32 0.0, %v490
      %v492 = vpop.f32.mrb[0].mxu0
      %493 = vmatprep.mubr.bf16.mxu0 0
      %494 = vmatmul.mubr.bf16.gmra.mrb[0].mxu0 %v384
      %v495 = vpop.f32.mrb[0].mxu0
      %v496 = vadd.f32 0.0, %v495
      %v497 = vpop.f32.mrb[0].mxu0
      %v498 = vpop.f32.mrb[0].mxu0
      %v499 = vadd.f32 0.0, %v498
      %v500 = vpop.f32.mrb[0].mxu0
      %501 = vmatprep.mubr.bf16.mxu0 0
      %502 = vmatmul.mubr.bf16.gmra.mrb[0].mxu0 %v387
      %v503 = vpop.f32.mrb[0].mxu0
      %v504 = vadd.f32 0.0, %v503
      %v505 = vpop.f32.mrb[0].mxu0
      %v506 = vpop.f32.mrb[0].mxu0
      %v507 = vadd.f32 0.0, %v506
      %v508 = vpop.f32.mrb[0].mxu0
      %509 = vmatprep.mubr.bf16.mxu0 0
      %510 = vmatmul.mubr.bf16.gmra.mrb[0].mxu0 %v390
      %v511 = vpop.f32.mrb[0].mxu0
      %v512 = vadd.f32 0.0, %v511
      %v513 = vpop.f32.mrb[0].mxu0
      %v514 = vpop.f32.mrb[0].mxu0
      %v515 = vadd.f32 0.0, %v514
      %v516 = vpop.f32.mrb[0].mxu0
      %517 = vmatprep.mubr.bf16.mxu0 0
      %518 = vmatmul.mubr.bf16.gmra.mrb[0].mxu0 %v393
      %v519 = vpop.f32.mrb[0].mxu0
      %v520 = vadd.f32 0.0, %v519
      %v521 = vpop.f32.mrb[0].mxu0
      %v522 = vpop.f32.mrb[0].mxu0
      %v523 = vadd.f32 0.0, %v522
      %v524 = vpop.f32.mrb[0].mxu0
      %525 = vmatprep.mubr.bf16.mxu0 0
      %526 = vmatmul.mubr.bf16.gmra.mrb[0].mxu0 %v396
      %v527 = vpop.f32.mrb[0].mxu0
      %v528 = vadd.f32 0.0, %v527
      %v529 = vpop.f32.mrb[0].mxu0
      %v530 = vpop.f32.mrb[0].mxu0
      %v531 = vadd.f32 0.0, %v530
      %v532 = vpop.f32.mrb[0].mxu0
      %533 = vmatprep.mubr.bf16.mxu0 0
      %534 = vmatmul.mubr.bf16.gmra.mrb[0].mxu0 %v399
      %v535 = vpop.f32.mrb[0].mxu0
      %v536 = vadd.f32 0.0, %v535
      %v537 = vpop.f32.mrb[0].mxu0
      %v538 = vpop.f32.mrb[0].mxu0
      %v539 = vadd.f32 0.0, %v538
      %v540 = vpop.f32.mrb[0].mxu0
      %541 = vmatprep.mubr.bf16.mxu0 0
      %542 = vmatmul.mubr.bf16.gmra.mrb[0].mxu0 %v402
      %v543 = vpop.f32.mrb[0].mxu0
      %v544 = vadd.f32 0.0, %v543
      %v545 = vpop.f32.mrb[0].mxu0
      %v546 = vpop.f32.mrb[0].mxu0
      %v547 = vadd.f32 0.0, %v546
      %v548 = vpop.f32.mrb[0].mxu0
      %549 = vmatprep.mubr.bf16.mxu0 0
      %550 = vmatmul.mubr.bf16.gmra.mrb[0].mxu0 %v405
      %v551 = vpop.f32.mrb[0].mxu0
      %v552 = vadd.f32 0.0, %v551
      %v553 = vpop.f32.mrb[0].mxu0
      %v554 = vpop.f32.mrb[0].mxu0
      %v555 = vadd.f32 0.0, %v554
      %v556 = vpop.f32.mrb[0].mxu0
      %557 = vmatprep.mubr.bf16.mxu0 0
      %558 = vmatmul.mubr.bf16.gmra.mrb[0].mxu0 %v408
      %v559 = vpop.f32.mrb[0].mxu0
      %v560 = vadd.f32 0.0, %v559
      %v561 = vpop.f32.mrb[0].mxu0
      %v562 = vpop.f32.mrb[0].mxu0
      %v563 = vadd.f32 0.0, %v562
      %v564 = vpop.f32.mrb[0].mxu0
      %565 = vmatprep.mubr.bf16.mxu0 0
      %566 = vmatmul.mubr.bf16.gmra.mrb[0].mxu0 %v411
      %v567 = vpop.f32.mrb[0].mxu0
      %v568 = vadd.f32 0.0, %v567
      %v569 = vpop.f32.mrb[0].mxu0
      %v570 = vpop.f32.mrb[0].mxu0
      %v571 = vadd.f32 0.0, %v570
      %v572 = vpop.f32.mrb[0].mxu0
      %573 = vdwg.mxu0
      %v576 = vunpack.c.l.b16 %v219
      %v577 = vunpack.c.l.b16 %v220
      %v578 = vpack.c.b16 %v577, %v576
      %v585 = vunpack.c.l.b16 %v251
      %v586 = vunpack.c.l.b16 %v252
      %v587 = vunpack.c.l.b16 %v253
      %v588 = vunpack.c.l.b16 %v254
      %v589 = vunpack.c.l.b16 %v255
      %v590 = vunpack.c.l.b16 %v256
      %v591 = vpack.c.b16 %v586, %v585
      %v592 = vpack.c.b16 %v588, %v587
      %v593 = vpack.c.b16 %v590, %v589
      %v598 = vsel %vm364, %v578, 0
      %600 = vmatprep.subr.bf16.mxu0 0
      %601 = vmatpush1.bf16.msra.mxu0 %v591
      %602 = vmatprep.subr.bf16.mxu0 0
      %603 = vmatpush1.bf16.msra.mxu0 %v592
      %604 = vmatprep.subr.bf16.mxu0 0
      %605 = vmatpush1.bf16.msra.mxu0 %v593
      %606 = vmatprep.subr.bf16.mxu0 0
      %607 = vmatpush1.bf16.msra.mxu0 0
      %608 = vmatprep.subr.bf16.mxu0 0
      %609 = vmatpush1.bf16.msra.mxu0 0
      %610 = vmatprep.subr.bf16.mxu0 0
      %611 = vmatpush1.bf16.msra.mxu0 0
      %612 = vmatprep.subr.bf16.mxu0 0
      %613 = vmatpush1.bf16.msra.mxu0 0
      %614 = vmatprep.subr.bf16.mxu0 0
      %615 = vmatpush1.bf16.msra.mxu0 0
      %616 = vmatprep.subr.bf16.mxu0 0
      %617 = vmatpush1.bf16.msra.mxu0 0
      %618 = vmatprep.subr.bf16.mxu0 0
      %619 = vmatpush1.bf16.msra.mxu0 0
      %620 = vmatprep.subr.bf16.mxu0 0
      %621 = vmatpush1.bf16.msra.mxu0 0
      %622 = vmatprep.subr.bf16.mxu0 0
      %623 = vmatpush1.bf16.msra.mxu0 0
      %624 = vmatprep.subr.bf16.mxu0 0
      %625 = vmatpush1.bf16.msra.mxu0 0
      %626 = vmatprep.subr.bf16.mxu0 0
      %627 = vmatpush1.bf16.msra.mxu0 0
      %628 = vmatprep.subr.bf16.mxu0 0
      %629 = vmatpush1.bf16.msra.mxu0 0
      %630 = vmatprep.subr.bf16.mxu0 0
      %631 = vmatpush1.bf16.msra.mxu0 0
      %632 = vmatprep.mubr.bf16.mxu0 0
      %633 = vmatmul.mubr.bf16.gmra.mrb[0].mxu0 %v598
      %v634 = vpop.f32.mrb[0].mxu0
      %v635 = vadd.f32 %v448, %v634
      %v636 = vpop.f32.mrb[0].mxu0
      %v637 = vpop.f32.mrb[0].mxu0
      %v638 = vadd.f32 %v451, %v637
      %v639 = vpop.f32.mrb[0].mxu0
      %640 = vmatprep.mubr.bf16.mxu0 0
      %641 = vmatmul.mubr.bf16.gmra.mrb[0].mxu0 %v366
      %v642 = vpop.f32.mrb[0].mxu0
      %v643 = vadd.f32 %v456, %v642
      %v644 = vpop.f32.mrb[0].mxu0
      %v645 = vpop.f32.mrb[0].mxu0
      %v646 = vadd.f32 %v459, %v645
      %v647 = vpop.f32.mrb[0].mxu0
      %648 = vmatprep.mubr.bf16.mxu0 0
      %649 = vmatmul.mubr.bf16.gmra.mrb[0].mxu0 %v369
      %v650 = vpop.f32.mrb[0].mxu0
      %v651 = vadd.f32 %v464, %v650
      %v652 = vpop.f32.mrb[0].mxu0
      %v653 = vpop.f32.mrb[0].mxu0
      %v654 = vadd.f32 %v467, %v653
      %v655 = vpop.f32.mrb[0].mxu0
      %656 = vmatprep.mubr.bf16.mxu0 0
      %657 = vmatmul.mubr.bf16.gmra.mrb[0].mxu0 %v372
      %v658 = vpop.f32.mrb[0].mxu0
      %v659 = vadd.f32 %v472, %v658
      %v660 = vpop.f32.mrb[0].mxu0
      %v661 = vpop.f32.mrb[0].mxu0
      %v662 = vadd.f32 %v475, %v661
      %v663 = vpop.f32.mrb[0].mxu0
      %664 = vmatprep.mubr.bf16.mxu0 0
      %665 = vmatmul.mubr.bf16.gmra.mrb[0].mxu0 %v375
      %v666 = vpop.f32.mrb[0].mxu0
      %v667 = vadd.f32 %v480, %v666
      %v668 = vpop.f32.mrb[0].mxu0
      %v669 = vpop.f32.mrb[0].mxu0
      %v670 = vadd.f32 %v483, %v669
      %v671 = vpop.f32.mrb[0].mxu0
      %672 = vmatprep.mubr.bf16.mxu0 0
      %673 = vmatmul.mubr.bf16.gmra.mrb[0].mxu0 %v378
      %v674 = vpop.f32.mrb[0].mxu0
      %v675 = vadd.f32 %v488, %v674
      %v676 = vpop.f32.mrb[0].mxu0
      %v677 = vpop.f32.mrb[0].mxu0
      %v678 = vadd.f32 %v491, %v677
      %v679 = vpop.f32.mrb[0].mxu0
      %680 = vmatprep.mubr.bf16.mxu0 0
      %681 = vmatmul.mubr.bf16.gmra.mrb[0].mxu0 %v381
      %v682 = vpop.f32.mrb[0].mxu0
      %v683 = vadd.f32 %v496, %v682
      %v684 = vpop.f32.mrb[0].mxu0
      %v685 = vpop.f32.mrb[0].mxu0
      %v686 = vadd.f32 %v499, %v685
      %v687 = vpop.f32.mrb[0].mxu0
      %688 = vmatprep.mubr.bf16.mxu0 0
      %689 = vmatmul.mubr.bf16.gmra.mrb[0].mxu0 %v384
      %v690 = vpop.f32.mrb[0].mxu0
      %v691 = vadd.f32 %v504, %v690
      %v692 = vpop.f32.mrb[0].mxu0
      %v693 = vpop.f32.mrb[0].mxu0
      %v694 = vadd.f32 %v507, %v693
      %v695 = vpop.f32.mrb[0].mxu0
      %696 = vmatprep.mubr.bf16.mxu0 0
      %697 = vmatmul.mubr.bf16.gmra.mrb[0].mxu0 %v387
      %v698 = vpop.f32.mrb[0].mxu0
      %v699 = vadd.f32 %v512, %v698
      %v700 = vpop.f32.mrb[0].mxu0
      %v701 = vpop.f32.mrb[0].mxu0
      %v702 = vadd.f32 %v515, %v701
      %v703 = vpop.f32.mrb[0].mxu0
      %704 = vmatprep.mubr.bf16.mxu0 0
      %705 = vmatmul.mubr.bf16.gmra.mrb[0].mxu0 %v390
      %v706 = vpop.f32.mrb[0].mxu0
      %v707 = vadd.f32 %v520, %v706
      %v708 = vpop.f32.mrb[0].mxu0
      %v709 = vpop.f32.mrb[0].mxu0
      %v710 = vadd.f32 %v523, %v709
      %v711 = vpop.f32.mrb[0].mxu0
      %712 = vmatprep.mubr.bf16.mxu0 0
      %713 = vmatmul.mubr.bf16.gmra.mrb[0].mxu0 %v393
      %v714 = vpop.f32.mrb[0].mxu0
      %v715 = vadd.f32 %v528, %v714
      %v716 = vpop.f32.mrb[0].mxu0
      %v717 = vpop.f32.mrb[0].mxu0
      %v718 = vadd.f32 %v531, %v717
      %v719 = vpop.f32.mrb[0].mxu0
      %720 = vmatprep.mubr.bf16.mxu0 0
      %721 = vmatmul.mubr.bf16.gmra.mrb[0].mxu0 %v396
      %v722 = vpop.f32.mrb[0].mxu0
      %v723 = vadd.f32 %v536, %v722
      %v724 = vpop.f32.mrb[0].mxu0
      %v725 = vpop.f32.mrb[0].mxu0
      %v726 = vadd.f32 %v539, %v725
      %v727 = vpop.f32.mrb[0].mxu0
      %728 = vmatprep.mubr.bf16.mxu0 0
      %729 = vmatmul.mubr.bf16.gmra.mrb[0].mxu0 %v399
      %v730 = vpop.f32.mrb[0].mxu0
      %v731 = vadd.f32 %v544, %v730
      %v732 = vpop.f32.mrb[0].mxu0
      %v733 = vpop.f32.mrb[0].mxu0
      %v734 = vadd.f32 %v547, %v733
      %v735 = vpop.f32.mrb[0].mxu0
      %736 = vmatprep.mubr.bf16.mxu0 0
      %737 = vmatmul.mubr.bf16.gmra.mrb[0].mxu0 %v402
      %v738 = vpop.f32.mrb[0].mxu0
      %v739 = vadd.f32 %v552, %v738
      %v740 = vpop.f32.mrb[0].mxu0
      %v741 = vpop.f32.mrb[0].mxu0
      %v742 = vadd.f32 %v555, %v741
      %v743 = vpop.f32.mrb[0].mxu0
      %744 = vmatprep.mubr.bf16.mxu0 0
      %745 = vmatmul.mubr.bf16.gmra.mrb[0].mxu0 %v405
      %v746 = vpop.f32.mrb[0].mxu0
      %v747 = vadd.f32 %v560, %v746
      %v748 = vpop.f32.mrb[0].mxu0
      %v749 = vpop.f32.mrb[0].mxu0
      %v750 = vadd.f32 %v563, %v749
      %v751 = vpop.f32.mrb[0].mxu0
      %752 = vmatprep.mubr.bf16.mxu0 0
      %753 = vmatmul.mubr.bf16.gmra.mrb[0].mxu0 %v408
      %v754 = vpop.f32.mrb[0].mxu0
      %v755 = vadd.f32 %v568, %v754
      %v756 = vpop.f32.mrb[0].mxu0
      %v757 = vpop.f32.mrb[0].mxu0
      %v758 = vadd.f32 %v571, %v757
      %v759 = vpop.f32.mrb[0].mxu0
      %760 = vdwg.mxu0
      %v761 = vld [vmem:[%s207 + $0x10] sm:$0xf]
      %v762 = vld [vmem:[%s207 + $0x14] sm:$0xf]
      %v763 = vld [vmem:[%s207 + $0x18] sm:$0xf]
      %v764 = vld [vmem:[%s207 + $0x1c] sm:$0xf]
      %v765 = vld [vmem:[%s207 + $0x20] sm:$0xf]
      %v766 = vld [vmem:[%s207 + $0x24] sm:$0xf]
      %v767 = vld [vmem:[%s207 + $0x28] sm:$0xf]
      %v768 = vld [vmem:[%s207 + $0x2c] sm:$0xf]
      %v769 = vld [vmem:[%s207 + $0x30] sm:$0xf]
      %v770 = vld [vmem:[%s207 + $0x34] sm:$0xf]
      %v771 = vld [vmem:[%s207 + $0x38] sm:$0xf]
      %v772 = vld [vmem:[%s207 + $0x3c] sm:$0xf]
      %v773 = vld [vmem:[%s207 + $0x40] sm:$0xf]
      %v774 = vld [vmem:[%s207 + $0x44] sm:$0xf]
      %v775 = vld [vmem:[%s207 + $0x48] sm:$0xf]
      %v776 = vld [vmem:[%s207 + $0x4c] sm:$0xf]
      %v777 = vld [vmem:[%s207 + $0x50] sm:$0xf]
      %v778 = vld [vmem:[%s207 + $0x54] sm:$0xf]
      %v779 = vld [vmem:[%s207 + $0x58] sm:$0xf]
      %v780 = vld [vmem:[%s207 + $0x5c] sm:$0xf]
      %v781 = vld [vmem:[%s207 + $0x60] sm:$0xf]
      %v782 = vld [vmem:[%s207 + $0x64] sm:$0xf]
      %v783 = vld [vmem:[%s207 + $0x68] sm:$0xf]
      %v784 = vld [vmem:[%s207 + $0x6c] sm:$0xf]
      %v785 = vld [vmem:[%s207 + $0x70] sm:$0xf]
      %v786 = vld [vmem:[%s207 + $0x74] sm:$0xf]
      %v787 = vld [vmem:[%s207 + $0x78] sm:$0xf]
      %v788 = vld [vmem:[%s207 + $0x7c] sm:$0xf]
      %v789 = vld [vmem:[%s207 + $0x80] sm:$0xf]
      %v790 = vld [vmem:[%s207 + $0x84] sm:$0xf]
      %v791 = vld [vmem:[%s207 + $0x88] sm:$0xf]
      %v792 = vld [vmem:[%s207 + $0x8c] sm:$0xf]
      %s793 = scalar_lea.vmem %s2, 48
      %v794 = vld [vmem:[%s793] sm:$0xf]
      %v795 = vld [vmem:[%s793 + $0x4] sm:$0xf]
      %v796 = vld [vmem:[%s793 + $0x8] sm:$0xf]
      %v797 = vld [vmem:[%s793 + $0xc] sm:$0xf]
      %v798 = vld [vmem:[%s793 + $0x10] sm:$0xf]
      %v799 = vld [vmem:[%s793 + $0x14] sm:$0xf]
      %v832 = vunpack.c.l.b16 %v761
      %v833 = vunpack.c.l.b16 %v762
      %v834 = vunpack.c.l.b16 %v763
      %v835 = vunpack.c.l.b16 %v764
      %v836 = vunpack.c.l.b16 %v765
      %v837 = vunpack.c.l.b16 %v766
      %v838 = vunpack.c.l.b16 %v767
      %v839 = vunpack.c.l.b16 %v768
      %v840 = vunpack.c.l.b16 %v769
      %v841 = vunpack.c.l.b16 %v770
      %v842 = vunpack.c.l.b16 %v771
      %v843 = vunpack.c.l.b16 %v772
      %v844 = vunpack.c.l.b16 %v773
      %v845 = vunpack.c.l.b16 %v774
      %v846 = vunpack.c.l.b16 %v775
      %v847 = vunpack.c.l.b16 %v776
      %v848 = vunpack.c.l.b16 %v777
      %v849 = vunpack.c.l.b16 %v778
      %v850 = vunpack.c.l.b16 %v779
      %v851 = vunpack.c.l.b16 %v780
      %v852 = vunpack.c.l.b16 %v781
      %v853 = vunpack.c.l.b16 %v782
      %v854 = vunpack.c.l.b16 %v783
      %v855 = vunpack.c.l.b16 %v784
      %v856 = vunpack.c.l.b16 %v785
      %v857 = vunpack.c.l.b16 %v786
      %v858 = vunpack.c.l.b16 %v787
      %v859 = vunpack.c.l.b16 %v788
      %v860 = vunpack.c.l.b16 %v789
      %v861 = vunpack.c.l.b16 %v790
      %v862 = vunpack.c.l.b16 %v791
      %v863 = vunpack.c.l.b16 %v792
      %v864 = vpack.c.b16 %v833, %v832
      %v865 = vpack.c.b16 %v835, %v834
      %v866 = vpack.c.b16 %v837, %v836
      %v867 = vpack.c.b16 %v839, %v838
      %v868 = vpack.c.b16 %v841, %v840
      %v869 = vpack.c.b16 %v843, %v842
      %v870 = vpack.c.b16 %v845, %v844
      %v871 = vpack.c.b16 %v847, %v846
      %v872 = vpack.c.b16 %v849, %v848
      %v873 = vpack.c.b16 %v851, %v850
      %v874 = vpack.c.b16 %v853, %v852
      %v875 = vpack.c.b16 %v855, %v854
      %v876 = vpack.c.b16 %v857, %v856
      %v877 = vpack.c.b16 %v859, %v858
      %v878 = vpack.c.b16 %v861, %v860
      %v879 = vpack.c.b16 %v863, %v862
      %v886 = vunpack.c.l.b16 %v794
      %v887 = vunpack.c.l.b16 %v795
      %v888 = vunpack.c.l.b16 %v796
      %v889 = vunpack.c.l.b16 %v797
      %v890 = vunpack.c.l.b16 %v798
      %v891 = vunpack.c.l.b16 %v799
      %v892 = vpack.c.b16 %v887, %v886
      %v893 = vpack.c.b16 %v889, %v888
      %v894 = vpack.c.b16 %v891, %v890
      %v899 = vsel %vm364, %v864, 0
      %v902 = vsel %vm364, %v865, 0
      %v905 = vsel %vm364, %v866, 0
      %v908 = vsel %vm364, %v867, 0
      %v911 = vsel %vm364, %v868, 0
      %v914 = vsel %vm364, %v869, 0
      %v917 = vsel %vm364, %v870, 0
      %v920 = vsel %vm364, %v871, 0
      %v923 = vsel %vm364, %v872, 0
      %v926 = vsel %vm364, %v873, 0
      %v929 = vsel %vm364, %v874, 0
      %v932 = vsel %vm364, %v875, 0
      %v935 = vsel %vm364, %v876, 0
      %v938 = vsel %vm364, %v877, 0
      %v941 = vsel %vm364, %v878, 0
      %v944 = vsel %vm364, %v879, 0
      %946 = vmatprep.subr.bf16.mxu0 0
      %947 = vmatpush1.bf16.msra.mxu0 %v892
      %948 = vmatprep.subr.bf16.mxu0 0
      %949 = vmatpush1.bf16.msra.mxu0 %v893
      %950 = vmatprep.subr.bf16.mxu0 0
      %951 = vmatpush1.bf16.msra.mxu0 %v894
      %952 = vmatprep.subr.bf16.mxu0 0
      %953 = vmatpush1.bf16.msra.mxu0 0
      %954 = vmatprep.subr.bf16.mxu0 0
      %955 = vmatpush1.bf16.msra.mxu0 0
      %956 = vmatprep.subr.bf16.mxu0 0
      %957 = vmatpush1.bf16.msra.mxu0 0
      %958 = vmatprep.subr.bf16.mxu0 0
      %959 = vmatpush1.bf16.msra.mxu0 0
      %960 = vmatprep.subr.bf16.mxu0 0
      %961 = vmatpush1.bf16.msra.mxu0 0
      %962 = vmatprep.subr.bf16.mxu0 0
      %963 = vmatpush1.bf16.msra.mxu0 0
      %964 = vmatprep.subr.bf16.mxu0 0
      %965 = vmatpush1.bf16.msra.mxu0 0
      %966 = vmatprep.subr.bf16.mxu0 0
      %967 = vmatpush1.bf16.msra.mxu0 0
      %968 = vmatprep.subr.bf16.mxu0 0
      %969 = vmatpush1.bf16.msra.mxu0 0
      %970 = vmatprep.subr.bf16.mxu0 0
      %971 = vmatpush1.bf16.msra.mxu0 0
      %972 = vmatprep.subr.bf16.mxu0 0
      %973 = vmatpush1.bf16.msra.mxu0 0
      %974 = vmatprep.subr.bf16.mxu0 0
      %975 = vmatpush1.bf16.msra.mxu0 0
      %976 = vmatprep.subr.bf16.mxu0 0
      %977 = vmatpush1.bf16.msra.mxu0 0
      %978 = vmatprep.mubr.bf16.mxu0 0
      %979 = vmatmul.mubr.bf16.gmra.mrb[0].mxu0 %v899
      %v980 = vpop.f32.mrb[0].mxu0
      %v981 = vadd.f32 0.0, %v980
      %v982 = vpop.f32.mrb[0].mxu0
      %v983 = vpop.f32.mrb[0].mxu0
      %v984 = vadd.f32 0.0, %v983
      %v985 = vpop.f32.mrb[0].mxu0
      %986 = vmatprep.mubr.bf16.mxu0 0
      %987 = vmatmul.mubr.bf16.gmra.mrb[0].mxu0 %v902
      %v988 = vpop.f32.mrb[0].mxu0
      %v989 = vadd.f32 0.0, %v988
      %v990 = vpop.f32.mrb[0].mxu0
      %v991 = vpop.f32.mrb[0].mxu0
      %v992 = vadd.f32 0.0, %v991
      %v993 = vpop.f32.mrb[0].mxu0
      %994 = vmatprep.mubr.bf16.mxu0 0
      %995 = vmatmul.mubr.bf16.gmra.mrb[0].mxu0 %v905
      %v996 = vpop.f32.mrb[0].mxu0
      %v997 = vadd.f32 0.0, %v996
      %v998 = vpop.f32.mrb[0].mxu0
      %v999 = vpop.f32.mrb[0].mxu0
      %v1000 = vadd.f32 0.0, %v999
      %v1001 = vpop.f32.mrb[0].mxu0
      %1002 = vmatprep.mubr.bf16.mxu0 0
      %1003 = vmatmul.mubr.bf16.gmra.mrb[0].mxu0 %v908
      %v1004 = vpop.f32.mrb[0].mxu0
      %v1005 = vadd.f32 0.0, %v1004
      %v1006 = vpop.f32.mrb[0].mxu0
      %v1007 = vpop.f32.mrb[0].mxu0
      %v1008 = vadd.f32 0.0, %v1007
      %v1009 = vpop.f32.mrb[0].mxu0
      %1010 = vmatprep.mubr.bf16.mxu0 0
      %1011 = vmatmul.mubr.bf16.gmra.mrb[0].mxu0 %v911
      %v1012 = vpop.f32.mrb[0].mxu0
      %v1013 = vadd.f32 0.0, %v1012
      %v1014 = vpop.f32.mrb[0].mxu0
      %v1015 = vpop.f32.mrb[0].mxu0
      %v1016 = vadd.f32 0.0, %v1015
      %v1017 = vpop.f32.mrb[0].mxu0
      %1018 = vmatprep.mubr.bf16.mxu0 0
      %1019 = vmatmul.mubr.bf16.gmra.mrb[0].mxu0 %v914
      %v1020 = vpop.f32.mrb[0].mxu0
      %v1021 = vadd.f32 0.0, %v1020
      %v1022 = vpop.f32.mrb[0].mxu0
      %v1023 = vpop.f32.mrb[0].mxu0
      %v1024 = vadd.f32 0.0, %v1023
      %v1025 = vpop.f32.mrb[0].mxu0
      %1026 = vmatprep.mubr.bf16.mxu0 0
      %1027 = vmatmul.mubr.bf16.gmra.mrb[0].mxu0 %v917
      %v1028 = vpop.f32.mrb[0].mxu0
      %v1029 = vadd.f32 0.0, %v1028
      %v1030 = vpop.f32.mrb[0].mxu0
      %v1031 = vpop.f32.mrb[0].mxu0
      %v1032 = vadd.f32 0.0, %v1031
      %v1033 = vpop.f32.mrb[0].mxu0
      %1034 = vmatprep.mubr.bf16.mxu0 0
      %1035 = vmatmul.mubr.bf16.gmra.mrb[0].mxu0 %v920
      %v1036 = vpop.f32.mrb[0].mxu0
      %v1037 = vadd.f32 0.0, %v1036
      %v1038 = vpop.f32.mrb[0].mxu0
      %v1039 = vpop.f32.mrb[0].mxu0
      %v1040 = vadd.f32 0.0, %v1039
      %v1041 = vpop.f32.mrb[0].mxu0
      %1042 = vmatprep.mubr.bf16.mxu0 0
      %1043 = vmatmul.mubr.bf16.gmra.mrb[0].mxu0 %v923
      %v1044 = vpop.f32.mrb[0].mxu0
      %v1045 = vadd.f32 0.0, %v1044
      %v1046 = vpop.f32.mrb[0].mxu0
      %v1047 = vpop.f32.mrb[0].mxu0
      %v1048 = vadd.f32 0.0, %v1047
      %v1049 = vpop.f32.mrb[0].mxu0
      %1050 = vmatprep.mubr.bf16.mxu0 0
      %1051 = vmatmul.mubr.bf16.gmra.mrb[0].mxu0 %v926
      %v1052 = vpop.f32.mrb[0].mxu0
      %v1053 = vadd.f32 0.0, %v1052
      %v1054 = vpop.f32.mrb[0].mxu0
      %v1055 = vpop.f32.mrb[0].mxu0
      %v1056 = vadd.f32 0.0, %v1055
      %v1057 = vpop.f32.mrb[0].mxu0
      %1058 = vmatprep.mubr.bf16.mxu0 0
      %1059 = vmatmul.mubr.bf16.gmra.mrb[0].mxu0 %v929
      %v1060 = vpop.f32.mrb[0].mxu0
      %v1061 = vadd.f32 0.0, %v1060
      %v1062 = vpop.f32.mrb[0].mxu0
      %v1063 = vpop.f32.mrb[0].mxu0
      %v1064 = vadd.f32 0.0, %v1063
      %v1065 = vpop.f32.mrb[0].mxu0
      %1066 = vmatprep.mubr.bf16.mxu0 0
      %1067 = vmatmul.mubr.bf16.gmra.mrb[0].mxu0 %v932
      %v1068 = vpop.f32.mrb[0].mxu0
      %v1069 = vadd.f32 0.0, %v1068
      %v1070 = vpop.f32.mrb[0].mxu0
      %v1071 = vpop.f32.mrb[0].mxu0
      %v1072 = vadd.f32 0.0, %v1071
      %v1073 = vpop.f32.mrb[0].mxu0
      %1074 = vmatprep.mubr.bf16.mxu0 0
      %1075 = vmatmul.mubr.bf16.gmra.mrb[0].mxu0 %v935
      %v1076 = vpop.f32.mrb[0].mxu0
      %v1077 = vadd.f32 0.0, %v1076
      %v1078 = vpop.f32.mrb[0].mxu0
      %v1079 = vpop.f32.mrb[0].mxu0
      %v1080 = vadd.f32 0.0, %v1079
      %v1081 = vpop.f32.mrb[0].mxu0
      %1082 = vmatprep.mubr.bf16.mxu0 0
      %1083 = vmatmul.mubr.bf16.gmra.mrb[0].mxu0 %v938
      %v1084 = vpop.f32.mrb[0].mxu0
      %v1085 = vadd.f32 0.0, %v1084
      %v1086 = vpop.f32.mrb[0].mxu0
      %v1087 = vpop.f32.mrb[0].mxu0
      %v1088 = vadd.f32 0.0, %v1087
      %v1089 = vpop.f32.mrb[0].mxu0
      %1090 = vmatprep.mubr.bf16.mxu0 0
      %1091 = vmatmul.mubr.bf16.gmra.mrb[0].mxu0 %v941
      %v1092 = vpop.f32.mrb[0].mxu0
      %v1093 = vadd.f32 0.0, %v1092
      %v1094 = vpop.f32.mrb[0].mxu0
      %v1095 = vpop.f32.mrb[0].mxu0
      %v1096 = vadd.f32 0.0, %v1095
      %v1097 = vpop.f32.mrb[0].mxu0
      %1098 = vmatprep.mubr.bf16.mxu0 0
      %1099 = vmatmul.mubr.bf16.gmra.mrb[0].mxu0 %v944
      %v1100 = vpop.f32.mrb[0].mxu0
      %v1101 = vadd.f32 0.0, %v1100
      %v1102 = vpop.f32.mrb[0].mxu0
      %v1103 = vpop.f32.mrb[0].mxu0
      %v1104 = vadd.f32 0.0, %v1103
      %v1105 = vpop.f32.mrb[0].mxu0
      %1106 = vdwg.mxu0
      %v1107 = vadd.f32 %v635, %v981
      %v1108 = vadd.f32 %v638, %v984
      %v1109 = vadd.f32 %v643, %v989
      %v1110 = vadd.f32 %v646, %v992
      %v1111 = vadd.f32 %v651, %v997
      %v1112 = vadd.f32 %v654, %v1000
      %v1113 = vadd.f32 %v659, %v1005
      %v1114 = vadd.f32 %v662, %v1008
      %v1115 = vadd.f32 %v667, %v1013
      %v1116 = vadd.f32 %v670, %v1016
      %v1117 = vadd.f32 %v675, %v1021
      %v1118 = vadd.f32 %v678, %v1024
      %v1119 = vadd.f32 %v683, %v1029
      %v1120 = vadd.f32 %v686, %v1032
      %v1121 = vadd.f32 %v691, %v1037
      %v1122 = vadd.f32 %v694, %v1040
      %v1123 = vadd.f32 %v699, %v1045
      %v1124 = vadd.f32 %v702, %v1048
      %v1125 = vadd.f32 %v707, %v1053
      %v1126 = vadd.f32 %v710, %v1056
      %v1127 = vadd.f32 %v715, %v1061
      %v1128 = vadd.f32 %v718, %v1064
      %v1129 = vadd.f32 %v723, %v1069
      %v1130 = vadd.f32 %v726, %v1072
      %v1131 = vadd.f32 %v731, %v1077
      %v1132 = vadd.f32 %v734, %v1080
      %v1133 = vadd.f32 %v739, %v1085
      %v1134 = vadd.f32 %v742, %v1088
      %v1135 = vadd.f32 %v747, %v1093
      %v1136 = vadd.f32 %v750, %v1096
      %v1137 = vadd.f32 %v755, %v1101
      %v1138 = vadd.f32 %v758, %v1104
      %v1139 = vld [vmem:[%s212] sm:$0xf]
      %v1140 = vld [vmem:[%s212 + $0x4] sm:$0xf]
      %v1141 = vld [vmem:[%s212 + $0x8] sm:$0xf]
      %v1142 = vld [vmem:[%s212 + $0xc] sm:$0xf]
      %v1143 = vld [vmem:[%s212 + $0x10] sm:$0xf]
      %v1144 = vld [vmem:[%s212 + $0x14] sm:$0xf]
      %v1145 = vld [vmem:[%s212 + $0x18] sm:$0xf]
      %v1146 = vld [vmem:[%s212 + $0x1c] sm:$0xf]
      %v1147 = vld [vmem:[%s212 + $0x20] sm:$0xf]
      %v1148 = vld [vmem:[%s212 + $0x24] sm:$0xf]
      %v1149 = vld [vmem:[%s212 + $0x28] sm:$0xf]
      %v1150 = vld [vmem:[%s212 + $0x2c] sm:$0xf]
      %v1151 = vld [vmem:[%s212 + $0x30] sm:$0xf]
      %v1152 = vld [vmem:[%s212 + $0x34] sm:$0xf]
      %v1153 = vld [vmem:[%s212 + $0x38] sm:$0xf]
      %v1154 = vld [vmem:[%s212 + $0x3c] sm:$0xf]
      %v1155 = vld [vmem:[%s212 + $0x40] sm:$0xf]
      %v1156 = vld [vmem:[%s212 + $0x44] sm:$0xf]
      %v1157 = vld [vmem:[%s212 + $0x48] sm:$0xf]
      %v1158 = vld [vmem:[%s212 + $0x4c] sm:$0xf]
      %v1159 = vld [vmem:[%s212 + $0x50] sm:$0xf]
      %v1160 = vld [vmem:[%s212 + $0x54] sm:$0xf]
      %v1161 = vld [vmem:[%s212 + $0x58] sm:$0xf]
      %v1162 = vld [vmem:[%s212 + $0x5c] sm:$0xf]
      %v1163 = vld [vmem:[%s212 + $0x60] sm:$0xf]
      %v1164 = vld [vmem:[%s212 + $0x64] sm:$0xf]
      %v1165 = vld [vmem:[%s212 + $0x68] sm:$0xf]
      %v1166 = vld [vmem:[%s212 + $0x6c] sm:$0xf]
      %v1167 = vld [vmem:[%s212 + $0x70] sm:$0xf]
      %v1168 = vld [vmem:[%s212 + $0x74] sm:$0xf]
      %v1169 = vld [vmem:[%s212 + $0x78] sm:$0xf]
      %v1170 = vld [vmem:[%s212 + $0x7c] sm:$0xf]
      %v1171 = vld [vmem:[%s3] sm:$0xf]
      %v1172 = vld [vmem:[%s3 + $0x4] sm:$0xf]
      %v1173 = vld [vmem:[%s3 + $0x8] sm:$0xf]
      %v1174 = vld [vmem:[%s3 + $0xc] sm:$0xf]
      %v1175 = vld [vmem:[%s3 + $0x10] sm:$0xf]
      %v1176 = vld [vmem:[%s3 + $0x14] sm:$0xf]
      %v1209 = vunpack.c.l.b16 %v1139
      %v1210 = vunpack.c.l.b16 %v1140
      %v1211 = vunpack.c.l.b16 %v1141
      %v1212 = vunpack.c.l.b16 %v1142
      %v1213 = vunpack.c.l.b16 %v1143
      %v1214 = vunpack.c.l.b16 %v1144
      %v1215 = vunpack.c.l.b16 %v1145
      %v1216 = vunpack.c.l.b16 %v1146
      %v1217 = vunpack.c.l.b16 %v1147
      %v1218 = vunpack.c.l.b16 %v1148
      %v1219 = vunpack.c.l.b16 %v1149
      %v1220 = vunpack.c.l.b16 %v1150
      %v1221 = vunpack.c.l.b16 %v1151
      %v1222 = vunpack.c.l.b16 %v1152
      %v1223 = vunpack.c.l.b16 %v1153
      %v1224 = vunpack.c.l.b16 %v1154
      %v1225 = vunpack.c.l.b16 %v1155
      %v1226 = vunpack.c.l.b16 %v1156
      %v1227 = vunpack.c.l.b16 %v1157
      %v1228 = vunpack.c.l.b16 %v1158
      %v1229 = vunpack.c.l.b16 %v1159
      %v1230 = vunpack.c.l.b16 %v1160
      %v1231 = vunpack.c.l.b16 %v1161
      %v1232 = vunpack.c.l.b16 %v1162
      %v1233 = vunpack.c.l.b16 %v1163
      %v1234 = vunpack.c.l.b16 %v1164
      %v1235 = vunpack.c.l.b16 %v1165
      %v1236 = vunpack.c.l.b16 %v1166
      %v1237 = vunpack.c.l.b16 %v1167
      %v1238 = vunpack.c.l.b16 %v1168
      %v1239 = vunpack.c.l.b16 %v1169
      %v1240 = vunpack.c.l.b16 %v1170
      %v1241 = vpack.c.b16 %v1210, %v1209
      %v1242 = vpack.c.b16 %v1212, %v1211
      %v1243 = vpack.c.b16 %v1214, %v1213
      %v1244 = vpack.c.b16 %v1216, %v1215
      %v1245 = vpack.c.b16 %v1218, %v1217
      %v1246 = vpack.c.b16 %v1220, %v1219
      %v1247 = vpack.c.b16 %v1222, %v1221
      %v1248 = vpack.c.b16 %v1224, %v1223
      %v1249 = vpack.c.b16 %v1226, %v1225
      %v1250 = vpack.c.b16 %v1228, %v1227
      %v1251 = vpack.c.b16 %v1230, %v1229
      %v1252 = vpack.c.b16 %v1232, %v1231
      %v1253 = vpack.c.b16 %v1234, %v1233
      %v1254 = vpack.c.b16 %v1236, %v1235
      %v1255 = vpack.c.b16 %v1238, %v1237
      %v1256 = vpack.c.b16 %v1240, %v1239
      %v1263 = vunpack.c.l.b16 %v1171
      %v1264 = vunpack.c.l.b16 %v1172
      %v1265 = vunpack.c.l.b16 %v1173
      %v1266 = vunpack.c.l.b16 %v1174
      %v1267 = vunpack.c.l.b16 %v1175
      %v1268 = vunpack.c.l.b16 %v1176
      %v1269 = vpack.c.b16 %v1264, %v1263
      %v1270 = vpack.c.b16 %v1266, %v1265
      %v1271 = vpack.c.b16 %v1268, %v1267
      %v1276 = vsel %vm364, %v1241, 0
      %v1279 = vsel %vm364, %v1242, 0
      %v1282 = vsel %vm364, %v1243, 0
      %v1285 = vsel %vm364, %v1244, 0
      %v1288 = vsel %vm364, %v1245, 0
      %v1291 = vsel %vm364, %v1246, 0
      %v1294 = vsel %vm364, %v1247, 0
      %v1297 = vsel %vm364, %v1248, 0
      %v1300 = vsel %vm364, %v1249, 0
      %v1303 = vsel %vm364, %v1250, 0
      %v1306 = vsel %vm364, %v1251, 0
      %v1309 = vsel %vm364, %v1252, 0
      %v1312 = vsel %vm364, %v1253, 0
      %v1315 = vsel %vm364, %v1254, 0
      %v1318 = vsel %vm364, %v1255, 0
      %v1321 = vsel %vm364, %v1256, 0
      %1323 = vmatprep.subr.bf16.mxu0 0
      %1324 = vmatpush1.bf16.msra.mxu0 %v1269
      %1325 = vmatprep.subr.bf16.mxu0 0
      %1326 = vmatpush1.bf16.msra.mxu0 %v1270
      %1327 = vmatprep.subr.bf16.mxu0 0
      %1328 = vmatpush1.bf16.msra.mxu0 %v1271
      %1329 = vmatprep.subr.bf16.mxu0 0
      %1330 = vmatpush1.bf16.msra.mxu0 0
      %1331 = vmatprep.subr.bf16.mxu0 0
      %1332 = vmatpush1.bf16.msra.mxu0 0
      %1333 = vmatprep.subr.bf16.mxu0 0
      %1334 = vmatpush1.bf16.msra.mxu0 0
      %1335 = vmatprep.subr.bf16.mxu0 0
      %1336 = vmatpush1.bf16.msra.mxu0 0
      %1337 = vmatprep.subr.bf16.mxu0 0
      %1338 = vmatpush1.bf16.msra.mxu0 0
      %1339 = vmatprep.subr.bf16.mxu0 0
      %1340 = vmatpush1.bf16.msra.mxu0 0
      %1341 = vmatprep.subr.bf16.mxu0 0
      %1342 = vmatpush1.bf16.msra.mxu0 0
      %1343 = vmatprep.subr.bf16.mxu0 0
      %1344 = vmatpush1.bf16.msra.mxu0 0
      %1345 = vmatprep.subr.bf16.mxu0 0
      %1346 = vmatpush1.bf16.msra.mxu0 0
      %1347 = vmatprep.subr.bf16.mxu0 0
      %1348 = vmatpush1.bf16.msra.mxu0 0
      %1349 = vmatprep.subr.bf16.mxu0 0
      %1350 = vmatpush1.bf16.msra.mxu0 0
      %1351 = vmatprep.subr.bf16.mxu0 0
      %1352 = vmatpush1.bf16.msra.mxu0 0
      %1353 = vmatprep.subr.bf16.mxu0 0
      %1354 = vmatpush1.bf16.msra.mxu0 0
      %1355 = vmatprep.mubr.bf16.mxu0 0
      %1356 = vmatmul.mubr.bf16.gmra.mrb[0].mxu0 %v1276
      %v1357 = vpop.f32.mrb[0].mxu0
      %v1358 = vadd.f32 0.0, %v1357
      %v1359 = vpop.f32.mrb[0].mxu0
      %v1360 = vpop.f32.mrb[0].mxu0
      %v1361 = vadd.f32 0.0, %v1360
      %v1362 = vpop.f32.mrb[0].mxu0
      %1363 = vmatprep.mubr.bf16.mxu0 0
      %1364 = vmatmul.mubr.bf16.gmra.mrb[0].mxu0 %v1279
      %v1365 = vpop.f32.mrb[0].mxu0
      %v1366 = vadd.f32 0.0, %v1365
      %v1367 = vpop.f32.mrb[0].mxu0
      %v1368 = vpop.f32.mrb[0].mxu0
      %v1369 = vadd.f32 0.0, %v1368
      %v1370 = vpop.f32.mrb[0].mxu0
      %1371 = vmatprep.mubr.bf16.mxu0 0
      %1372 = vmatmul.mubr.bf16.gmra.mrb[0].mxu0 %v1282
      %v1373 = vpop.f32.mrb[0].mxu0
      %v1374 = vadd.f32 0.0, %v1373
      %v1375 = vpop.f32.mrb[0].mxu0
      %v1376 = vpop.f32.mrb[0].mxu0
      %v1377 = vadd.f32 0.0, %v1376
      %v1378 = vpop.f32.mrb[0].mxu0
      %1379 = vmatprep.mubr.bf16.mxu0 0
      %1380 = vmatmul.mubr.bf16.gmra.mrb[0].mxu0 %v1285
      %v1381 = vpop.f32.mrb[0].mxu0
      %v1382 = vadd.f32 0.0, %v1381
      %v1383 = vpop.f32.mrb[0].mxu0
      %v1384 = vpop.f32.mrb[0].mxu0
      %v1385 = vadd.f32 0.0, %v1384
      %v1386 = vpop.f32.mrb[0].mxu0
      %1387 = vmatprep.mubr.bf16.mxu0 0
      %1388 = vmatmul.mubr.bf16.gmra.mrb[0].mxu0 %v1288
      %v1389 = vpop.f32.mrb[0].mxu0
      %v1390 = vadd.f32 0.0, %v1389
      %v1391 = vpop.f32.mrb[0].mxu0
      %v1392 = vpop.f32.mrb[0].mxu0
      %v1393 = vadd.f32 0.0, %v1392
      %v1394 = vpop.f32.mrb[0].mxu0
      %1395 = vmatprep.mubr.bf16.mxu0 0
      %1396 = vmatmul.mubr.bf16.gmra.mrb[0].mxu0 %v1291
      %v1397 = vpop.f32.mrb[0].mxu0
      %v1398 = vadd.f32 0.0, %v1397
      %v1399 = vpop.f32.mrb[0].mxu0
      %v1400 = vpop.f32.mrb[0].mxu0
      %v1401 = vadd.f32 0.0, %v1400
      %v1402 = vpop.f32.mrb[0].mxu0
      %1403 = vmatprep.mubr.bf16.mxu0 0
      %1404 = vmatmul.mubr.bf16.gmra.mrb[0].mxu0 %v1294
      %v1405 = vpop.f32.mrb[0].mxu0
      %v1406 = vadd.f32 0.0, %v1405
      %v1407 = vpop.f32.mrb[0].mxu0
      %v1408 = vpop.f32.mrb[0].mxu0
      %v1409 = vadd.f32 0.0, %v1408
      %v1410 = vpop.f32.mrb[0].mxu0
      %1411 = vmatprep.mubr.bf16.mxu0 0
      %1412 = vmatmul.mubr.bf16.gmra.mrb[0].mxu0 %v1297
      %v1413 = vpop.f32.mrb[0].mxu0
      %v1414 = vadd.f32 0.0, %v1413
      %v1415 = vpop.f32.mrb[0].mxu0
      %v1416 = vpop.f32.mrb[0].mxu0
      %v1417 = vadd.f32 0.0, %v1416
      %v1418 = vpop.f32.mrb[0].mxu0
      %1419 = vmatprep.mubr.bf16.mxu0 0
      %1420 = vmatmul.mubr.bf16.gmra.mrb[0].mxu0 %v1300
      %v1421 = vpop.f32.mrb[0].mxu0
      %v1422 = vadd.f32 0.0, %v1421
      %v1423 = vpop.f32.mrb[0].mxu0
      %v1424 = vpop.f32.mrb[0].mxu0
      %v1425 = vadd.f32 0.0, %v1424
      %v1426 = vpop.f32.mrb[0].mxu0
      %1427 = vmatprep.mubr.bf16.mxu0 0
      %1428 = vmatmul.mubr.bf16.gmra.mrb[0].mxu0 %v1303
      %v1429 = vpop.f32.mrb[0].mxu0
      %v1430 = vadd.f32 0.0, %v1429
      %v1431 = vpop.f32.mrb[0].mxu0
      %v1432 = vpop.f32.mrb[0].mxu0
      %v1433 = vadd.f32 0.0, %v1432
      %v1434 = vpop.f32.mrb[0].mxu0
      %1435 = vmatprep.mubr.bf16.mxu0 0
      %1436 = vmatmul.mubr.bf16.gmra.mrb[0].mxu0 %v1306
      %v1437 = vpop.f32.mrb[0].mxu0
      %v1438 = vadd.f32 0.0, %v1437
      %v1439 = vpop.f32.mrb[0].mxu0
      %v1440 = vpop.f32.mrb[0].mxu0
      %v1441 = vadd.f32 0.0, %v1440
      %v1442 = vpop.f32.mrb[0].mxu0
      %1443 = vmatprep.mubr.bf16.mxu0 0
      %1444 = vmatmul.mubr.bf16.gmra.mrb[0].mxu0 %v1309
      %v1445 = vpop.f32.mrb[0].mxu0
      %v1446 = vadd.f32 0.0, %v1445
      %v1447 = vpop.f32.mrb[0].mxu0
      %v1448 = vpop.f32.mrb[0].mxu0
      %v1449 = vadd.f32 0.0, %v1448
      %v1450 = vpop.f32.mrb[0].mxu0
      %1451 = vmatprep.mubr.bf16.mxu0 0
      %1452 = vmatmul.mubr.bf16.gmra.mrb[0].mxu0 %v1312
      %v1453 = vpop.f32.mrb[0].mxu0
      %v1454 = vadd.f32 0.0, %v1453
      %v1455 = vpop.f32.mrb[0].mxu0
      %v1456 = vpop.f32.mrb[0].mxu0
      %v1457 = vadd.f32 0.0, %v1456
      %v1458 = vpop.f32.mrb[0].mxu0
      %1459 = vmatprep.mubr.bf16.mxu0 0
      %1460 = vmatmul.mubr.bf16.gmra.mrb[0].mxu0 %v1315
      %v1461 = vpop.f32.mrb[0].mxu0
      %v1462 = vadd.f32 0.0, %v1461
      %v1463 = vpop.f32.mrb[0].mxu0
      %v1464 = vpop.f32.mrb[0].mxu0
      %v1465 = vadd.f32 0.0, %v1464
      %v1466 = vpop.f32.mrb[0].mxu0
      %1467 = vmatprep.mubr.bf16.mxu0 0
      %1468 = vmatmul.mubr.bf16.gmra.mrb[0].mxu0 %v1318
      %v1469 = vpop.f32.mrb[0].mxu0
      %v1470 = vadd.f32 0.0, %v1469
      %v1471 = vpop.f32.mrb[0].mxu0
      %v1472 = vpop.f32.mrb[0].mxu0
      %v1473 = vadd.f32 0.0, %v1472
      %v1474 = vpop.f32.mrb[0].mxu0
      %1475 = vmatprep.mubr.bf16.mxu0 0
      %1476 = vmatmul.mubr.bf16.gmra.mrb[0].mxu0 %v1321
      %v1477 = vpop.f32.mrb[0].mxu0
      %v1478 = vadd.f32 0.0, %v1477
      %v1479 = vpop.f32.mrb[0].mxu0
      %v1480 = vpop.f32.mrb[0].mxu0
      %v1481 = vadd.f32 0.0, %v1480
      %v1482 = vpop.f32.mrb[0].mxu0
      %1483 = vdwg.mxu0
      %v1484 = vadd.f32 %v1107, %v1358
      %v1485 = vadd.f32 %v1108, %v1361
      %v1486 = vadd.f32 %v1109, %v1366
      %v1487 = vadd.f32 %v1110, %v1369
      %v1488 = vadd.f32 %v1111, %v1374
      %v1489 = vadd.f32 %v1112, %v1377
      %v1490 = vadd.f32 %v1113, %v1382
      %v1491 = vadd.f32 %v1114, %v1385
      %v1492 = vadd.f32 %v1115, %v1390
      %v1493 = vadd.f32 %v1116, %v1393
      %v1494 = vadd.f32 %v1117, %v1398
      %v1495 = vadd.f32 %v1118, %v1401
      %v1496 = vadd.f32 %v1119, %v1406
      %v1497 = vadd.f32 %v1120, %v1409
      %v1498 = vadd.f32 %v1121, %v1414
      %v1499 = vadd.f32 %v1122, %v1417
      %v1500 = vadd.f32 %v1123, %v1422
      %v1501 = vadd.f32 %v1124, %v1425
      %v1502 = vadd.f32 %v1125, %v1430
      %v1503 = vadd.f32 %v1126, %v1433
      %v1504 = vadd.f32 %v1127, %v1438
      %v1505 = vadd.f32 %v1128, %v1441
      %v1506 = vadd.f32 %v1129, %v1446
      %v1507 = vadd.f32 %v1130, %v1449
      %v1508 = vadd.f32 %v1131, %v1454
      %v1509 = vadd.f32 %v1132, %v1457
      %v1510 = vadd.f32 %v1133, %v1462
      %v1511 = vadd.f32 %v1134, %v1465
      %v1512 = vadd.f32 %v1135, %v1470
      %v1513 = vadd.f32 %v1136, %v1473
      %v1514 = vadd.f32 %v1137, %v1478
      %v1515 = vadd.f32 %v1138, %v1481
      %v1516 = vld [vmem:[%s212 + $0x8] sm:$0xf]
      %v1517 = vld [vmem:[%s212 + $0xc] sm:$0xf]
      %v1518 = vld [vmem:[%s212 + $0x10] sm:$0xf]
      %v1519 = vld [vmem:[%s212 + $0x14] sm:$0xf]
      %v1520 = vld [vmem:[%s212 + $0x18] sm:$0xf]
      %v1521 = vld [vmem:[%s212 + $0x1c] sm:$0xf]
      %v1522 = vld [vmem:[%s212 + $0x20] sm:$0xf]
      %v1523 = vld [vmem:[%s212 + $0x24] sm:$0xf]
      %v1524 = vld [vmem:[%s212 + $0x28] sm:$0xf]
      %v1525 = vld [vmem:[%s212 + $0x2c] sm:$0xf]
      %v1526 = vld [vmem:[%s212 + $0x30] sm:$0xf]
      %v1527 = vld [vmem:[%s212 + $0x34] sm:$0xf]
      %v1528 = vld [vmem:[%s212 + $0x38] sm:$0xf]
      %v1529 = vld [vmem:[%s212 + $0x3c] sm:$0xf]
      %v1530 = vld [vmem:[%s212 + $0x40] sm:$0xf]
      %v1531 = vld [vmem:[%s212 + $0x44] sm:$0xf]
      %v1532 = vld [vmem:[%s212 + $0x48] sm:$0xf]
      %v1533 = vld [vmem:[%s212 + $0x4c] sm:$0xf]
      %v1534 = vld [vmem:[%s212 + $0x50] sm:$0xf]
      %v1535 = vld [vmem:[%s212 + $0x54] sm:$0xf]
      %v1536 = vld [vmem:[%s212 + $0x58] sm:$0xf]
      %v1537 = vld [vmem:[%s212 + $0x5c] sm:$0xf]
      %v1538 = vld [vmem:[%s212 + $0x60] sm:$0xf]
      %v1539 = vld [vmem:[%s212 + $0x64] sm:$0xf]
      %v1540 = vld [vmem:[%s212 + $0x68] sm:$0xf]
      %v1541 = vld [vmem:[%s212 + $0x6c] sm:$0xf]
      %v1542 = vld [vmem:[%s212 + $0x70] sm:$0xf]
      %v1543 = vld [vmem:[%s212 + $0x74] sm:$0xf]
      %v1544 = vld [vmem:[%s212 + $0x78] sm:$0xf]
      %v1545 = vld [vmem:[%s212 + $0x7c] sm:$0xf]
      %v1546 = vld [vmem:[%s212 + $0x80] sm:$0xf]
      %v1547 = vld [vmem:[%s212 + $0x84] sm:$0xf]
      %s1548 = scalar_lea.vmem %s3, 24
      %v1549 = vld [vmem:[%s1548] sm:$0xf]
      %v1550 = vld [vmem:[%s1548 + $0x4] sm:$0xf]
      %v1551 = vld [vmem:[%s1548 + $0x8] sm:$0xf]
      %v1552 = vld [vmem:[%s1548 + $0xc] sm:$0xf]
      %v1553 = vld [vmem:[%s1548 + $0x10] sm:$0xf]
      %v1554 = vld [vmem:[%s1548 + $0x14] sm:$0xf]
      %v1587 = vunpack.c.l.b16 %v1516
      %v1588 = vunpack.c.l.b16 %v1517
      %v1589 = vunpack.c.l.b16 %v1518
      %v1590 = vunpack.c.l.b16 %v1519
      %v1591 = vunpack.c.l.b16 %v1520
      %v1592 = vunpack.c.l.b16 %v1521
      %v1593 = vunpack.c.l.b16 %v1522
      %v1594 = vunpack.c.l.b16 %v1523
      %v1595 = vunpack.c.l.b16 %v1524
      %v1596 = vunpack.c.l.b16 %v1525
      %v1597 = vunpack.c.l.b16 %v1526
      %v1598 = vunpack.c.l.b16 %v1527
      %v1599 = vunpack.c.l.b16 %v1528
      %v1600 = vunpack.c.l.b16 %v1529
      %v1601 = vunpack.c.l.b16 %v1530
      %v1602 = vunpack.c.l.b16 %v1531
      %v1603 = vunpack.c.l.b16 %v1532
      %v1604 = vunpack.c.l.b16 %v1533
      %v1605 = vunpack.c.l.b16 %v1534
      %v1606 = vunpack.c.l.b16 %v1535
      %v1607 = vunpack.c.l.b16 %v1536
      %v1608 = vunpack.c.l.b16 %v1537
      %v1609 = vunpack.c.l.b16 %v1538
      %v1610 = vunpack.c.l.b16 %v1539
      %v1611 = vunpack.c.l.b16 %v1540
      %v1612 = vunpack.c.l.b16 %v1541
      %v1613 = vunpack.c.l.b16 %v1542
      %v1614 = vunpack.c.l.b16 %v1543
      %v1615 = vunpack.c.l.b16 %v1544
      %v1616 = vunpack.c.l.b16 %v1545
      %v1617 = vunpack.c.l.b16 %v1546
      %v1618 = vunpack.c.l.b16 %v1547
      %v1619 = vpack.c.b16 %v1588, %v1587
      %v1620 = vpack.c.b16 %v1590, %v1589
      %v1621 = vpack.c.b16 %v1592, %v1591
      %v1622 = vpack.c.b16 %v1594, %v1593
      %v1623 = vpack.c.b16 %v1596, %v1595
      %v1624 = vpack.c.b16 %v1598, %v1597
      %v1625 = vpack.c.b16 %v1600, %v1599
      %v1626 = vpack.c.b16 %v1602, %v1601
      %v1627 = vpack.c.b16 %v1604, %v1603
      %v1628 = vpack.c.b16 %v1606, %v1605
      %v1629 = vpack.c.b16 %v1608, %v1607
      %v1630 = vpack.c.b16 %v1610, %v1609
      %v1631 = vpack.c.b16 %v1612, %v1611
      %v1632 = vpack.c.b16 %v1614, %v1613
      %v1633 = vpack.c.b16 %v1616, %v1615
      %v1634 = vpack.c.b16 %v1618, %v1617
      %v1641 = vunpack.c.l.b16 %v1549
      %v1642 = vunpack.c.l.b16 %v1550
      %v1643 = vunpack.c.l.b16 %v1551
      %v1644 = vunpack.c.l.b16 %v1552
      %v1645 = vunpack.c.l.b16 %v1553
      %v1646 = vunpack.c.l.b16 %v1554
      %v1647 = vpack.c.b16 %v1642, %v1641
      %v1648 = vpack.c.b16 %v1644, %v1643
      %v1649 = vpack.c.b16 %v1646, %v1645
      %v1654 = vsel %vm364, %v1619, 0
      %v1657 = vsel %vm364, %v1620, 0
      %v1660 = vsel %vm364, %v1621, 0
      %v1663 = vsel %vm364, %v1622, 0
      %v1666 = vsel %vm364, %v1623, 0
      %v1669 = vsel %vm364, %v1624, 0
      %v1672 = vsel %vm364, %v1625, 0
      %v1675 = vsel %vm364, %v1626, 0
      %v1678 = vsel %vm364, %v1627, 0
      %v1681 = vsel %vm364, %v1628, 0
      %v1684 = vsel %vm364, %v1629, 0
      %v1687 = vsel %vm364, %v1630, 0
      %v1690 = vsel %vm364, %v1631, 0
      %v1693 = vsel %vm364, %v1632, 0
      %v1696 = vsel %vm364, %v1633, 0
      %v1699 = vsel %vm364, %v1634, 0
      %1701 = vmatprep.subr.bf16.mxu0 0
      %1702 = vmatpush1.bf16.msra.mxu0 %v1647
      %1703 = vmatprep.subr.bf16.mxu0 0
      %1704 = vmatpush1.bf16.msra.mxu0 %v1648
      %1705 = vmatprep.subr.bf16.mxu0 0
      %1706 = vmatpush1.bf16.msra.mxu0 %v1649
      %1707 = vmatprep.subr.bf16.mxu0 0
      %1708 = vmatpush1.bf16.msra.mxu0 0
      %1709 = vmatprep.subr.bf16.mxu0 0
      %1710 = vmatpush1.bf16.msra.mxu0 0
      %1711 = vmatprep.subr.bf16.mxu0 0
      %1712 = vmatpush1.bf16.msra.mxu0 0
      %1713 = vmatprep.subr.bf16.mxu0 0
      %1714 = vmatpush1.bf16.msra.mxu0 0
      %1715 = vmatprep.subr.bf16.mxu0 0
      %1716 = vmatpush1.bf16.msra.mxu0 0
      %1717 = vmatprep.subr.bf16.mxu0 0
      %1718 = vmatpush1.bf16.msra.mxu0 0
      %1719 = vmatprep.subr.bf16.mxu0 0
      %1720 = vmatpush1.bf16.msra.mxu0 0
      %1721 = vmatprep.subr.bf16.mxu0 0
      %1722 = vmatpush1.bf16.msra.mxu0 0
      %1723 = vmatprep.subr.bf16.mxu0 0
      %1724 = vmatpush1.bf16.msra.mxu0 0
      %1725 = vmatprep.subr.bf16.mxu0 0
      %1726 = vmatpush1.bf16.msra.mxu0 0
      %1727 = vmatprep.subr.bf16.mxu0 0
      %1728 = vmatpush1.bf16.msra.mxu0 0
      %1729 = vmatprep.subr.bf16.mxu0 0
      %1730 = vmatpush1.bf16.msra.mxu0 0
      %1731 = vmatprep.subr.bf16.mxu0 0
      %1732 = vmatpush1.bf16.msra.mxu0 0
      %1733 = vmatprep.mubr.bf16.mxu0 0
      %1734 = vmatmul.mubr.bf16.gmra.mrb[0].mxu0 %v1654
      %v1735 = vpop.f32.mrb[0].mxu0
      %v1736 = vadd.f32 0.0, %v1735
      %v1737 = vpop.f32.mrb[0].mxu0
      %v1738 = vpop.f32.mrb[0].mxu0
      %v1739 = vadd.f32 0.0, %v1738
      %v1740 = vpop.f32.mrb[0].mxu0
      %1741 = vmatprep.mubr.bf16.mxu0 0
      %1742 = vmatmul.mubr.bf16.gmra.mrb[0].mxu0 %v1657
      %v1743 = vpop.f32.mrb[0].mxu0
      %v1744 = vadd.f32 0.0, %v1743
      %v1745 = vpop.f32.mrb[0].mxu0
      %v1746 = vpop.f32.mrb[0].mxu0
      %v1747 = vadd.f32 0.0, %v1746
      %v1748 = vpop.f32.mrb[0].mxu0
      %1749 = vmatprep.mubr.bf16.mxu0 0
      %1750 = vmatmul.mubr.bf16.gmra.mrb[0].mxu0 %v1660
      %v1751 = vpop.f32.mrb[0].mxu0
      %v1752 = vadd.f32 0.0, %v1751
      %v1753 = vpop.f32.mrb[0].mxu0
      %v1754 = vpop.f32.mrb[0].mxu0
      %v1755 = vadd.f32 0.0, %v1754
      %v1756 = vpop.f32.mrb[0].mxu0
      %1757 = vmatprep.mubr.bf16.mxu0 0
      %1758 = vmatmul.mubr.bf16.gmra.mrb[0].mxu0 %v1663
      %v1759 = vpop.f32.mrb[0].mxu0
      %v1760 = vadd.f32 0.0, %v1759
      %v1761 = vpop.f32.mrb[0].mxu0
      %v1762 = vpop.f32.mrb[0].mxu0
      %v1763 = vadd.f32 0.0, %v1762
      %v1764 = vpop.f32.mrb[0].mxu0
      %1765 = vmatprep.mubr.bf16.mxu0 0
      %1766 = vmatmul.mubr.bf16.gmra.mrb[0].mxu0 %v1666
      %v1767 = vpop.f32.mrb[0].mxu0
      %v1768 = vadd.f32 0.0, %v1767
      %v1769 = vpop.f32.mrb[0].mxu0
      %v1770 = vpop.f32.mrb[0].mxu0
      %v1771 = vadd.f32 0.0, %v1770
      %v1772 = vpop.f32.mrb[0].mxu0
      %1773 = vmatprep.mubr.bf16.mxu0 0
      %1774 = vmatmul.mubr.bf16.gmra.mrb[0].mxu0 %v1669
      %v1775 = vpop.f32.mrb[0].mxu0
      %v1776 = vadd.f32 0.0, %v1775
      %v1777 = vpop.f32.mrb[0].mxu0
      %v1778 = vpop.f32.mrb[0].mxu0
      %v1779 = vadd.f32 0.0, %v1778
      %v1780 = vpop.f32.mrb[0].mxu0
      %1781 = vmatprep.mubr.bf16.mxu0 0
      %1782 = vmatmul.mubr.bf16.gmra.mrb[0].mxu0 %v1672
      %v1783 = vpop.f32.mrb[0].mxu0
      %v1784 = vadd.f32 0.0, %v1783
      %v1785 = vpop.f32.mrb[0].mxu0
      %v1786 = vpop.f32.mrb[0].mxu0
      %v1787 = vadd.f32 0.0, %v1786
      %v1788 = vpop.f32.mrb[0].mxu0
      %1789 = vmatprep.mubr.bf16.mxu0 0
      %1790 = vmatmul.mubr.bf16.gmra.mrb[0].mxu0 %v1675
      %v1791 = vpop.f32.mrb[0].mxu0
      %v1792 = vadd.f32 0.0, %v1791
      %v1793 = vpop.f32.mrb[0].mxu0
      %v1794 = vpop.f32.mrb[0].mxu0
      %v1795 = vadd.f32 0.0, %v1794
      %v1796 = vpop.f32.mrb[0].mxu0
      %1797 = vmatprep.mubr.bf16.mxu0 0
      %1798 = vmatmul.mubr.bf16.gmra.mrb[0].mxu0 %v1678
      %v1799 = vpop.f32.mrb[0].mxu0
      %v1800 = vadd.f32 0.0, %v1799
      %v1801 = vpop.f32.mrb[0].mxu0
      %v1802 = vpop.f32.mrb[0].mxu0
      %v1803 = vadd.f32 0.0, %v1802
      %v1804 = vpop.f32.mrb[0].mxu0
      %1805 = vmatprep.mubr.bf16.mxu0 0
      %1806 = vmatmul.mubr.bf16.gmra.mrb[0].mxu0 %v1681
      %v1807 = vpop.f32.mrb[0].mxu0
      %v1808 = vadd.f32 0.0, %v1807
      %v1809 = vpop.f32.mrb[0].mxu0
      %v1810 = vpop.f32.mrb[0].mxu0
      %v1811 = vadd.f32 0.0, %v1810
      %v1812 = vpop.f32.mrb[0].mxu0
      %1813 = vmatprep.mubr.bf16.mxu0 0
      %1814 = vmatmul.mubr.bf16.gmra.mrb[0].mxu0 %v1684
      %v1815 = vpop.f32.mrb[0].mxu0
      %v1816 = vadd.f32 0.0, %v1815
      %v1817 = vpop.f32.mrb[0].mxu0
      %v1818 = vpop.f32.mrb[0].mxu0
      %v1819 = vadd.f32 0.0, %v1818
      %v1820 = vpop.f32.mrb[0].mxu0
      %1821 = vmatprep.mubr.bf16.mxu0 0
      %1822 = vmatmul.mubr.bf16.gmra.mrb[0].mxu0 %v1687
      %v1823 = vpop.f32.mrb[0].mxu0
      %v1824 = vadd.f32 0.0, %v1823
      %v1825 = vpop.f32.mrb[0].mxu0
      %v1826 = vpop.f32.mrb[0].mxu0
      %v1827 = vadd.f32 0.0, %v1826
      %v1828 = vpop.f32.mrb[0].mxu0
      %1829 = vmatprep.mubr.bf16.mxu0 0
      %1830 = vmatmul.mubr.bf16.gmra.mrb[0].mxu0 %v1690
      %v1831 = vpop.f32.mrb[0].mxu0
      %v1832 = vadd.f32 0.0, %v1831
      %v1833 = vpop.f32.mrb[0].mxu0
      %v1834 = vpop.f32.mrb[0].mxu0
      %v1835 = vadd.f32 0.0, %v1834
      %v1836 = vpop.f32.mrb[0].mxu0
      %1837 = vmatprep.mubr.bf16.mxu0 0
      %1838 = vmatmul.mubr.bf16.gmra.mrb[0].mxu0 %v1693
      %v1839 = vpop.f32.mrb[0].mxu0
      %v1840 = vadd.f32 0.0, %v1839
      %v1841 = vpop.f32.mrb[0].mxu0
      %v1842 = vpop.f32.mrb[0].mxu0
      %v1843 = vadd.f32 0.0, %v1842
      %v1844 = vpop.f32.mrb[0].mxu0
      %1845 = vmatprep.mubr.bf16.mxu0 0
      %1846 = vmatmul.mubr.bf16.gmra.mrb[0].mxu0 %v1696
      %v1847 = vpop.f32.mrb[0].mxu0
      %v1848 = vadd.f32 0.0, %v1847
      %v1849 = vpop.f32.mrb[0].mxu0
      %v1850 = vpop.f32.mrb[0].mxu0
      %v1851 = vadd.f32 0.0, %v1850
      %v1852 = vpop.f32.mrb[0].mxu0
      %1853 = vmatprep.mubr.bf16.mxu0 0
      %1854 = vmatmul.mubr.bf16.gmra.mrb[0].mxu0 %v1699
      %v1855 = vpop.f32.mrb[0].mxu0
      %v1856 = vadd.f32 0.0, %v1855
      %v1857 = vpop.f32.mrb[0].mxu0
      %v1858 = vpop.f32.mrb[0].mxu0
      %v1859 = vadd.f32 0.0, %v1858
      %v1860 = vpop.f32.mrb[0].mxu0
      %1861 = vdwg.mxu0
      %v1862 = vadd.f32 %v1484, %v1736
      %v1863 = vadd.f32 %v1485, %v1739
      %v1864 = vadd.f32 %v1486, %v1744
      %v1865 = vadd.f32 %v1487, %v1747
      %v1866 = vadd.f32 %v1488, %v1752
      %v1867 = vadd.f32 %v1489, %v1755
      %v1868 = vadd.f32 %v1490, %v1760
      %v1869 = vadd.f32 %v1491, %v1763
      %v1870 = vadd.f32 %v1492, %v1768
      %v1871 = vadd.f32 %v1493, %v1771
      %v1872 = vadd.f32 %v1494, %v1776
      %v1873 = vadd.f32 %v1495, %v1779
      %v1874 = vadd.f32 %v1496, %v1784
      %v1875 = vadd.f32 %v1497, %v1787
      %v1876 = vadd.f32 %v1498, %v1792
      %v1877 = vadd.f32 %v1499, %v1795
      %v1878 = vadd.f32 %v1500, %v1800
      %v1879 = vadd.f32 %v1501, %v1803
      %v1880 = vadd.f32 %v1502, %v1808
      %v1881 = vadd.f32 %v1503, %v1811
      %v1882 = vadd.f32 %v1504, %v1816
      %v1883 = vadd.f32 %v1505, %v1819
      %v1884 = vadd.f32 %v1506, %v1824
      %v1885 = vadd.f32 %v1507, %v1827
      %v1886 = vadd.f32 %v1508, %v1832
      %v1887 = vadd.f32 %v1509, %v1835
      %v1888 = vadd.f32 %v1510, %v1840
      %v1889 = vadd.f32 %v1511, %v1843
      %v1890 = vadd.f32 %v1512, %v1848
      %v1891 = vadd.f32 %v1513, %v1851
      %v1892 = vadd.f32 %v1514, %v1856
      %v1893 = vadd.f32 %v1515, %v1859
      %v1894 = vld [vmem:[%s212 + $0x10] sm:$0xf]
      %v1895 = vld [vmem:[%s212 + $0x14] sm:$0xf]
      %v1896 = vld [vmem:[%s212 + $0x18] sm:$0xf]
      %v1897 = vld [vmem:[%s212 + $0x1c] sm:$0xf]
      %v1898 = vld [vmem:[%s212 + $0x20] sm:$0xf]
      %v1899 = vld [vmem:[%s212 + $0x24] sm:$0xf]
      %v1900 = vld [vmem:[%s212 + $0x28] sm:$0xf]
      %v1901 = vld [vmem:[%s212 + $0x2c] sm:$0xf]
      %v1902 = vld [vmem:[%s212 + $0x30] sm:$0xf]
      %v1903 = vld [vmem:[%s212 + $0x34] sm:$0xf]
      %v1904 = vld [vmem:[%s212 + $0x38] sm:$0xf]
      %v1905 = vld [vmem:[%s212 + $0x3c] sm:$0xf]
      %v1906 = vld [vmem:[%s212 + $0x40] sm:$0xf]
      %v1907 = vld [vmem:[%s212 + $0x44] sm:$0xf]
      %v1908 = vld [vmem:[%s212 + $0x48] sm:$0xf]
      %v1909 = vld [vmem:[%s212 + $0x4c] sm:$0xf]
      %v1910 = vld [vmem:[%s212 + $0x50] sm:$0xf]
      %v1911 = vld [vmem:[%s212 + $0x54] sm:$0xf]
      %v1912 = vld [vmem:[%s212 + $0x58] sm:$0xf]
      %v1913 = vld [vmem:[%s212 + $0x5c] sm:$0xf]
      %v1914 = vld [vmem:[%s212 + $0x60] sm:$0xf]
      %v1915 = vld [vmem:[%s212 + $0x64] sm:$0xf]
      %v1916 = vld [vmem:[%s212 + $0x68] sm:$0xf]
      %v1917 = vld [vmem:[%s212 + $0x6c] sm:$0xf]
      %v1918 = vld [vmem:[%s212 + $0x70] sm:$0xf]
      %v1919 = vld [vmem:[%s212 + $0x74] sm:$0xf]
      %v1920 = vld [vmem:[%s212 + $0x78] sm:$0xf]
      %v1921 = vld [vmem:[%s212 + $0x7c] sm:$0xf]
      %v1922 = vld [vmem:[%s212 + $0x80] sm:$0xf]
      %v1923 = vld [vmem:[%s212 + $0x84] sm:$0xf]
      %v1924 = vld [vmem:[%s212 + $0x88] sm:$0xf]
      %v1925 = vld [vmem:[%s212 + $0x8c] sm:$0xf]
      %s1926 = scalar_lea.vmem %s3, 48
      %v1927 = vld [vmem:[%s1926] sm:$0xf]
      %v1928 = vld [vmem:[%s1926 + $0x4] sm:$0xf]
      %v1929 = vld [vmem:[%s1926 + $0x8] sm:$0xf]
      %v1930 = vld [vmem:[%s1926 + $0xc] sm:$0xf]
      %v1931 = vld [vmem:[%s1926 + $0x10] sm:$0xf]
      %v1932 = vld [vmem:[%s1926 + $0x14] sm:$0xf]
      %v1965 = vunpack.c.l.b16 %v1894
      %v1966 = vunpack.c.l.b16 %v1895
      %v1967 = vunpack.c.l.b16 %v1896
      %v1968 = vunpack.c.l.b16 %v1897
      %v1969 = vunpack.c.l.b16 %v1898
      %v1970 = vunpack.c.l.b16 %v1899
      %v1971 = vunpack.c.l.b16 %v1900
      %v1972 = vunpack.c.l.b16 %v1901
      %v1973 = vunpack.c.l.b16 %v1902
      %v1974 = vunpack.c.l.b16 %v1903
      %v1975 = vunpack.c.l.b16 %v1904
      %v1976 = vunpack.c.l.b16 %v1905
      %v1977 = vunpack.c.l.b16 %v1906
      %v1978 = vunpack.c.l.b16 %v1907
      %v1979 = vunpack.c.l.b16 %v1908
      %v1980 = vunpack.c.l.b16 %v1909
      %v1981 = vunpack.c.l.b16 %v1910
      %v1982 = vunpack.c.l.b16 %v1911
      %v1983 = vunpack.c.l.b16 %v1912
      %v1984 = vunpack.c.l.b16 %v1913
      %v1985 = vunpack.c.l.b16 %v1914
      %v1986 = vunpack.c.l.b16 %v1915
      %v1987 = vunpack.c.l.b16 %v1916
      %v1988 = vunpack.c.l.b16 %v1917
      %v1989 = vunpack.c.l.b16 %v1918
      %v1990 = vunpack.c.l.b16 %v1919
      %v1991 = vunpack.c.l.b16 %v1920
      %v1992 = vunpack.c.l.b16 %v1921
      %v1993 = vunpack.c.l.b16 %v1922
      %v1994 = vunpack.c.l.b16 %v1923
      %v1995 = vunpack.c.l.b16 %v1924
      %v1996 = vunpack.c.l.b16 %v1925
      %v1997 = vpack.c.b16 %v1966, %v1965
      %v1998 = vpack.c.b16 %v1968, %v1967
      %v1999 = vpack.c.b16 %v1970, %v1969
      %v2000 = vpack.c.b16 %v1972, %v1971
      %v2001 = vpack.c.b16 %v1974, %v1973
      %v2002 = vpack.c.b16 %v1976, %v1975
      %v2003 = vpack.c.b16 %v1978, %v1977
      %v2004 = vpack.c.b16 %v1980, %v1979
      %v2005 = vpack.c.b16 %v1982, %v1981
      %v2006 = vpack.c.b16 %v1984, %v1983
      %v2007 = vpack.c.b16 %v1986, %v1985
      %v2008 = vpack.c.b16 %v1988, %v1987
      %v2009 = vpack.c.b16 %v1990, %v1989
      %v2010 = vpack.c.b16 %v1992, %v1991
      %v2011 = vpack.c.b16 %v1994, %v1993
      %v2012 = vpack.c.b16 %v1996, %v1995
      %v2019 = vunpack.c.l.b16 %v1927
      %v2020 = vunpack.c.l.b16 %v1928
      %v2021 = vunpack.c.l.b16 %v1929
      %v2022 = vunpack.c.l.b16 %v1930
      %v2023 = vunpack.c.l.b16 %v1931
      %v2024 = vunpack.c.l.b16 %v1932
      %v2025 = vpack.c.b16 %v2020, %v2019
      %v2026 = vpack.c.b16 %v2022, %v2021
      %v2027 = vpack.c.b16 %v2024, %v2023
      %v2032 = vsel %vm364, %v1997, 0
      %v2035 = vsel %vm364, %v1998, 0
      %v2038 = vsel %vm364, %v1999, 0
      %v2041 = vsel %vm364, %v2000, 0
      %v2044 = vsel %vm364, %v2001, 0
      %v2047 = vsel %vm364, %v2002, 0
      %v2050 = vsel %vm364, %v2003, 0
      %v2053 = vsel %vm364, %v2004, 0
      %v2056 = vsel %vm364, %v2005, 0
      %v2059 = vsel %vm364, %v2006, 0
      %v2062 = vsel %vm364, %v2007, 0
      %v2065 = vsel %vm364, %v2008, 0
      %v2068 = vsel %vm364, %v2009, 0
      %v2071 = vsel %vm364, %v2010, 0
      %v2074 = vsel %vm364, %v2011, 0
      %v2077 = vsel %vm364, %v2012, 0
      %2079 = vmatprep.subr.bf16.mxu0 0
      %2080 = vmatpush1.bf16.msra.mxu0 %v2025
      %2081 = vmatprep.subr.bf16.mxu0 0
      %2082 = vmatpush1.bf16.msra.mxu0 %v2026
      %2083 = vmatprep.subr.bf16.mxu0 0
      %2084 = vmatpush1.bf16.msra.mxu0 %v2027
      %2085 = vmatprep.subr.bf16.mxu0 0
      %2086 = vmatpush1.bf16.msra.mxu0 0
      %2087 = vmatprep.subr.bf16.mxu0 0
      %2088 = vmatpush1.bf16.msra.mxu0 0
      %2089 = vmatprep.subr.bf16.mxu0 0
      %2090 = vmatpush1.bf16.msra.mxu0 0
      %2091 = vmatprep.subr.bf16.mxu0 0
      %2092 = vmatpush1.bf16.msra.mxu0 0
      %2093 = vmatprep.subr.bf16.mxu0 0
      %2094 = vmatpush1.bf16.msra.mxu0 0
      %2095 = vmatprep.subr.bf16.mxu0 0
      %2096 = vmatpush1.bf16.msra.mxu0 0
      %2097 = vmatprep.subr.bf16.mxu0 0
      %2098 = vmatpush1.bf16.msra.mxu0 0
      %2099 = vmatprep.subr.bf16.mxu0 0
      %2100 = vmatpush1.bf16.msra.mxu0 0
      %2101 = vmatprep.subr.bf16.mxu0 0
      %2102 = vmatpush1.bf16.msra.mxu0 0
      %2103 = vmatprep.subr.bf16.mxu0 0
      %2104 = vmatpush1.bf16.msra.mxu0 0
      %2105 = vmatprep.subr.bf16.mxu0 0
      %2106 = vmatpush1.bf16.msra.mxu0 0
      %2107 = vmatprep.subr.bf16.mxu0 0
      %2108 = vmatpush1.bf16.msra.mxu0 0
      %2109 = vmatprep.subr.bf16.mxu0 0
      %2110 = vmatpush1.bf16.msra.mxu0 0
      %2111 = vmatprep.mubr.bf16.mxu0 0
      %2112 = vmatmul.mubr.bf16.gmra.mrb[0].mxu0 %v2032
      %v2113 = vpop.f32.mrb[0].mxu0
      %v2114 = vadd.f32 0.0, %v2113
      %v2115 = vpop.f32.mrb[0].mxu0
      %v2116 = vpop.f32.mrb[0].mxu0
      %v2117 = vadd.f32 0.0, %v2116
      %v2118 = vpop.f32.mrb[0].mxu0
      %2119 = vmatprep.mubr.bf16.mxu0 0
      %2120 = vmatmul.mubr.bf16.gmra.mrb[0].mxu0 %v2035
      %v2121 = vpop.f32.mrb[0].mxu0
      %v2122 = vadd.f32 0.0, %v2121
      %v2123 = vpop.f32.mrb[0].mxu0
      %v2124 = vpop.f32.mrb[0].mxu0
      %v2125 = vadd.f32 0.0, %v2124
      %v2126 = vpop.f32.mrb[0].mxu0
      %2127 = vmatprep.mubr.bf16.mxu0 0
      %2128 = vmatmul.mubr.bf16.gmra.mrb[0].mxu0 %v2038
      %v2129 = vpop.f32.mrb[0].mxu0
      %v2130 = vadd.f32 0.0, %v2129
      %v2131 = vpop.f32.mrb[0].mxu0
      %v2132 = vpop.f32.mrb[0].mxu0
      %v2133 = vadd.f32 0.0, %v2132
      %v2134 = vpop.f32.mrb[0].mxu0
      %2135 = vmatprep.mubr.bf16.mxu0 0
      %2136 = vmatmul.mubr.bf16.gmra.mrb[0].mxu0 %v2041
      %v2137 = vpop.f32.mrb[0].mxu0
      %v2138 = vadd.f32 0.0, %v2137
      %v2139 = vpop.f32.mrb[0].mxu0
      %v2140 = vpop.f32.mrb[0].mxu0
      %v2141 = vadd.f32 0.0, %v2140
      %v2142 = vpop.f32.mrb[0].mxu0
      %2143 = vmatprep.mubr.bf16.mxu0 0
      %2144 = vmatmul.mubr.bf16.gmra.mrb[0].mxu0 %v2044
      %v2145 = vpop.f32.mrb[0].mxu0
      %v2146 = vadd.f32 0.0, %v2145
      %v2147 = vpop.f32.mrb[0].mxu0
      %v2148 = vpop.f32.mrb[0].mxu0
      %v2149 = vadd.f32 0.0, %v2148
      %v2150 = vpop.f32.mrb[0].mxu0
      %2151 = vmatprep.mubr.bf16.mxu0 0
      %2152 = vmatmul.mubr.bf16.gmra.mrb[0].mxu0 %v2047
      %v2153 = vpop.f32.mrb[0].mxu0
      %v2154 = vadd.f32 0.0, %v2153
      %v2155 = vpop.f32.mrb[0].mxu0
      %v2156 = vpop.f32.mrb[0].mxu0
      %v2157 = vadd.f32 0.0, %v2156
      %v2158 = vpop.f32.mrb[0].mxu0
      %2159 = vmatprep.mubr.bf16.mxu0 0
      %2160 = vmatmul.mubr.bf16.gmra.mrb[0].mxu0 %v2050
      %v2161 = vpop.f32.mrb[0].mxu0
      %v2162 = vadd.f32 0.0, %v2161
      %v2163 = vpop.f32.mrb[0].mxu0
      %v2164 = vpop.f32.mrb[0].mxu0
      %v2165 = vadd.f32 0.0, %v2164
      %v2166 = vpop.f32.mrb[0].mxu0
      %2167 = vmatprep.mubr.bf16.mxu0 0
      %2168 = vmatmul.mubr.bf16.gmra.mrb[0].mxu0 %v2053
      %v2169 = vpop.f32.mrb[0].mxu0
      %v2170 = vadd.f32 0.0, %v2169
      %v2171 = vpop.f32.mrb[0].mxu0
      %v2172 = vpop.f32.mrb[0].mxu0
      %v2173 = vadd.f32 0.0, %v2172
      %v2174 = vpop.f32.mrb[0].mxu0
      %2175 = vmatprep.mubr.bf16.mxu0 0
      %2176 = vmatmul.mubr.bf16.gmra.mrb[0].mxu0 %v2056
      %v2177 = vpop.f32.mrb[0].mxu0
      %v2178 = vadd.f32 0.0, %v2177
      %v2179 = vpop.f32.mrb[0].mxu0
      %v2180 = vpop.f32.mrb[0].mxu0
      %v2181 = vadd.f32 0.0, %v2180
      %v2182 = vpop.f32.mrb[0].mxu0
      %2183 = vmatprep.mubr.bf16.mxu0 0
      %2184 = vmatmul.mubr.bf16.gmra.mrb[0].mxu0 %v2059
      %v2185 = vpop.f32.mrb[0].mxu0
      %v2186 = vadd.f32 0.0, %v2185
      %v2187 = vpop.f32.mrb[0].mxu0
      %v2188 = vpop.f32.mrb[0].mxu0
      %v2189 = vadd.f32 0.0, %v2188
      %v2190 = vpop.f32.mrb[0].mxu0
      %2191 = vmatprep.mubr.bf16.mxu0 0
      %2192 = vmatmul.mubr.bf16.gmra.mrb[0].mxu0 %v2062
      %v2193 = vpop.f32.mrb[0].mxu0
      %v2194 = vadd.f32 0.0, %v2193
      %v2195 = vpop.f32.mrb[0].mxu0
      %v2196 = vpop.f32.mrb[0].mxu0
      %v2197 = vadd.f32 0.0, %v2196
      %v2198 = vpop.f32.mrb[0].mxu0
      %2199 = vmatprep.mubr.bf16.mxu0 0
      %2200 = vmatmul.mubr.bf16.gmra.mrb[0].mxu0 %v2065
      %v2201 = vpop.f32.mrb[0].mxu0
      %v2202 = vadd.f32 0.0, %v2201
      %v2203 = vpop.f32.mrb[0].mxu0
      %v2204 = vpop.f32.mrb[0].mxu0
      %v2205 = vadd.f32 0.0, %v2204
      %v2206 = vpop.f32.mrb[0].mxu0
      %2207 = vmatprep.mubr.bf16.mxu0 0
      %2208 = vmatmul.mubr.bf16.gmra.mrb[0].mxu0 %v2068
      %v2209 = vpop.f32.mrb[0].mxu0
      %v2210 = vadd.f32 0.0, %v2209
      %v2211 = vpop.f32.mrb[0].mxu0
      %v2212 = vpop.f32.mrb[0].mxu0
      %v2213 = vadd.f32 0.0, %v2212
      %v2214 = vpop.f32.mrb[0].mxu0
      %2215 = vmatprep.mubr.bf16.mxu0 0
      %2216 = vmatmul.mubr.bf16.gmra.mrb[0].mxu0 %v2071
      %v2217 = vpop.f32.mrb[0].mxu0
      %v2218 = vadd.f32 0.0, %v2217
      %v2219 = vpop.f32.mrb[0].mxu0
      %v2220 = vpop.f32.mrb[0].mxu0
      %v2221 = vadd.f32 0.0, %v2220
      %v2222 = vpop.f32.mrb[0].mxu0
      %2223 = vmatprep.mubr.bf16.mxu0 0
      %2224 = vmatmul.mubr.bf16.gmra.mrb[0].mxu0 %v2074
      %v2225 = vpop.f32.mrb[0].mxu0
      %v2226 = vadd.f32 0.0, %v2225
      %v2227 = vpop.f32.mrb[0].mxu0
      %v2228 = vpop.f32.mrb[0].mxu0
      %v2229 = vadd.f32 0.0, %v2228
      %v2230 = vpop.f32.mrb[0].mxu0
      %2231 = vmatprep.mubr.bf16.mxu0 0
      %2232 = vmatmul.mubr.bf16.gmra.mrb[0].mxu0 %v2077
      %v2233 = vpop.f32.mrb[0].mxu0
      %v2234 = vadd.f32 0.0, %v2233
      %v2235 = vpop.f32.mrb[0].mxu0
      %v2236 = vpop.f32.mrb[0].mxu0
      %v2237 = vadd.f32 0.0, %v2236
      %v2238 = vpop.f32.mrb[0].mxu0
      %2239 = vdwg.mxu0
      %v2240 = vadd.f32 %v1862, %v2114
      %v2241 = vadd.f32 %v1863, %v2117
      %v2242 = vadd.f32 %v1864, %v2122
      %v2243 = vadd.f32 %v1865, %v2125
      %v2244 = vadd.f32 %v1866, %v2130
      %v2245 = vadd.f32 %v1867, %v2133
      %v2246 = vadd.f32 %v1868, %v2138
      %v2247 = vadd.f32 %v1869, %v2141
      %v2248 = vadd.f32 %v1870, %v2146
      %v2249 = vadd.f32 %v1871, %v2149
      %v2250 = vadd.f32 %v1872, %v2154
      %v2251 = vadd.f32 %v1873, %v2157
      %v2252 = vadd.f32 %v1874, %v2162
      %v2253 = vadd.f32 %v1875, %v2165
      %v2254 = vadd.f32 %v1876, %v2170
      %v2255 = vadd.f32 %v1877, %v2173
      %v2256 = vadd.f32 %v1878, %v2178
      %v2257 = vadd.f32 %v1879, %v2181
      %v2258 = vadd.f32 %v1880, %v2186
      %v2259 = vadd.f32 %v1881, %v2189
      %v2260 = vadd.f32 %v1882, %v2194
      %v2261 = vadd.f32 %v1883, %v2197
      %v2262 = vadd.f32 %v1884, %v2202
      %v2263 = vadd.f32 %v1885, %v2205
      %v2264 = vadd.f32 %v1886, %v2210
      %v2265 = vadd.f32 %v1887, %v2213
      %v2266 = vadd.f32 %v1888, %v2218
      %v2267 = vadd.f32 %v1889, %v2221
      %v2268 = vadd.f32 %v1890, %v2226
      %v2269 = vadd.f32 %v1891, %v2229
      %v2270 = vadd.f32 %v1892, %v2234
      %v2271 = vadd.f32 %v1893, %v2237
      %v2272 = vmax.f32 %v2240, 0.0
      %v2273 = vmax.f32 %v2241, 0.0
      %v2274 = vmax.f32 %v2242, 0.0
      %v2275 = vmax.f32 %v2243, 0.0
      %v2276 = vmax.f32 %v2244, 0.0
      %v2277 = vmax.f32 %v2245, 0.0
      %v2278 = vmax.f32 %v2246, 0.0
      %v2279 = vmax.f32 %v2247, 0.0
      %v2280 = vmax.f32 %v2248, 0.0
      %v2281 = vmax.f32 %v2249, 0.0
      %v2282 = vmax.f32 %v2250, 0.0
      %v2283 = vmax.f32 %v2251, 0.0
      %v2284 = vmax.f32 %v2252, 0.0
      %v2285 = vmax.f32 %v2253, 0.0
      %v2286 = vmax.f32 %v2254, 0.0
      %v2287 = vmax.f32 %v2255, 0.0
      %v2288 = vmax.f32 %v2256, 0.0
      %v2289 = vmax.f32 %v2257, 0.0
      %v2290 = vmax.f32 %v2258, 0.0
      %v2291 = vmax.f32 %v2259, 0.0
      %v2292 = vmax.f32 %v2260, 0.0
      %v2293 = vmax.f32 %v2261, 0.0
      %v2294 = vmax.f32 %v2262, 0.0
      %v2295 = vmax.f32 %v2263, 0.0
      %v2296 = vmax.f32 %v2264, 0.0
      %v2297 = vmax.f32 %v2265, 0.0
      %v2298 = vmax.f32 %v2266, 0.0
      %v2299 = vmax.f32 %v2267, 0.0
      %v2300 = vmax.f32 %v2268, 0.0
      %v2301 = vmax.f32 %v2269, 0.0
      %v2302 = vmax.f32 %v2270, 0.0
      %v2303 = vmax.f32 %v2271, 0.0
      %vm2304 = vcmask 130048
      %2305 = vst.msk [vmem:[%s217] sm:$0xff] %vm2304, %v2272
      %2306 = vst.msk [vmem:[%s217 + $0x8] sm:$0xff] %vm2304, %v2273
      %2307 = vst.msk [vmem:[%s217 + $0x10] sm:$0xff] %vm2304, %v2274
      %2308 = vst.msk [vmem:[%s217 + $0x18] sm:$0xff] %vm2304, %v2275
      %2309 = vst.msk [vmem:[%s217 + $0x20] sm:$0xff] %vm2304, %v2276
      %2310 = vst.msk [vmem:[%s217 + $0x28] sm:$0xff] %vm2304, %v2277
      %2311 = vst.msk [vmem:[%s217 + $0x30] sm:$0xff] %vm2304, %v2278
      %2312 = vst.msk [vmem:[%s217 + $0x38] sm:$0xff] %vm2304, %v2279
      %2313 = vst.msk [vmem:[%s217 + $0x40] sm:$0xff] %vm2304, %v2280
      %2314 = vst.msk [vmem:[%s217 + $0x48] sm:$0xff] %vm2304, %v2281
      %2315 = vst.msk [vmem:[%s217 + $0x50] sm:$0xff] %vm2304, %v2282
      %2316 = vst.msk [vmem:[%s217 + $0x58] sm:$0xff] %vm2304, %v2283
      %2317 = vst.msk [vmem:[%s217 + $0x60] sm:$0xff] %vm2304, %v2284
      %2318 = vst.msk [vmem:[%s217 + $0x68] sm:$0xff] %vm2304, %v2285
      %2319 = vst.msk [vmem:[%s217 + $0x70] sm:$0xff] %vm2304, %v2286
      %2320 = vst.msk [vmem:[%s217 + $0x78] sm:$0xff] %vm2304, %v2287
      %2321 = vst.msk [vmem:[%s217 + $0x80] sm:$0xff] %vm2304, %v2288
      %2322 = vst.msk [vmem:[%s217 + $0x88] sm:$0xff] %vm2304, %v2289
      %2323 = vst.msk [vmem:[%s217 + $0x90] sm:$0xff] %vm2304, %v2290
      %2324 = vst.msk [vmem:[%s217 + $0x98] sm:$0xff] %vm2304, %v2291
      %2325 = vst.msk [vmem:[%s217 + $0xa0] sm:$0xff] %vm2304, %v2292
      %2326 = vst.msk [vmem:[%s217 + $0xa8] sm:$0xff] %vm2304, %v2293
      %2327 = vst.msk [vmem:[%s217 + $0xb0] sm:$0xff] %vm2304, %v2294
      %2328 = vst.msk [vmem:[%s217 + $0xb8] sm:$0xff] %vm2304, %v2295
      %2329 = vst.msk [vmem:[%s217 + $0xc0] sm:$0xff] %vm2304, %v2296
      %2330 = vst.msk [vmem:[%s217 + $0xc8] sm:$0xff] %vm2304, %v2297
      %2331 = vst.msk [vmem:[%s217 + $0xd0] sm:$0xff] %vm2304, %v2298
      %2332 = vst.msk [vmem:[%s217 + $0xd8] sm:$0xff] %vm2304, %v2299
      %2333 = vst.msk [vmem:[%s217 + $0xe0] sm:$0xff] %vm2304, %v2300
      %2334 = vst.msk [vmem:[%s217 + $0xe8] sm:$0xff] %vm2304, %v2301
      %2335 = vst.msk [vmem:[%s217 + $0xf0] sm:$0xff] %vm2304, %v2302
      %2336 = vst.msk [vmem:[%s217 + $0xf8] sm:$0xff] %vm2304, %v2303
      %p2337 = scmp.lt.s32.totalorder %s15, 1
      %s2338 = scalar_select %p2337, %s15, 1
      %s2339 = smul.addr %s2338, 32
      %s2340 = smul.addr %s2339, 8
      %s2341 = scalar_lea.vmem %s4, %s2340
      // Predicated region
      $region37: #{self_attention_forward.21} parent=35 // pred_check
        %p2342 = pneg %p127
      $region38: #{self_attention_forward.21} parent=35 // pred_check_branch
        %2344 = sbr.rel (%p2342) target = $region40
      $region39: #{self_attention_forward.21} parent=35 // pred_region
        _
      $region40: #{self_attention_forward.21} parent=35 // pred_fallthru
        _
    $region36: #{self_attention_forward.21} parent=5 // pred_fallthru
      _
    %p2345 = scmp.le.s32.totalorder 2, %s10
    // Predicated region
    $region41: #{self_attention_forward.21} parent=5 // pred_check
      %p2346 = pneg %p2345
    $region42: #{self_attention_forward.21} parent=5 // pred_check_branch
      %2348 = sbr.rel (%p2346) target = $region44
    $region43: #{self_attention_forward.21} parent=5 // pred_region
      %s2349 = ssub.s32 %s10, 2
      // Predicated region
      $region45: #{self_attention_forward.21} parent=43 // pred_check
        %p2350 = pneg %p133
      $region46: #{self_attention_forward.21} parent=43 // pred_check_branch
        %2352 = sbr.rel (%p2350) target = $region48
      $region47: #{self_attention_forward.21} parent=43 // pred_region
        %p2353 = scmp.lt.s32.totalorder %s16, 1
        %s2354 = scalar_select %p2353, %s16, 1
        %s2355 = smul.addr %s2354, 32
        %s2356 = smul.addr %s2355, 8
        %s2357 = scalar_lea.vmem %s4, %s2356
      $region48: #{self_attention_forward.21} parent=43 // pred_fallthru
        _
    $region44: #{self_attention_forward.21} parent=5 // pred_fallthru
      _
  $region6: #{self_attention_forward.21} parent=0 // loop_footer
    %s14 = sadd.s32 1, %s10
  $region7: #{self_attention_forward.21} parent=0 // loop_footer_branch
    %9 = sbr.rel target = $region3
  $region8: #{self_attention_forward.21} parent=0 // loop_exit
    _

</llo_original>
